<compile_context>
chip_gen: v6e
topology: v6e:2x2x1
jax: 0.10.0
libtpu: 0.0.40
codegen_flags: <defaults>
</compile_context>

<pallas_src>
import functools

import jax
import jax.numpy as jnp
from jax.experimental import pallas as pl
from jax.experimental.pallas import tpu as pltpu


# Static geometry of Net (28x28 input is forced by fc1's 64*5*5 input size):
#   28 --conv3--> 26 --pool2--> 13 --conv3--> 11 --pool2--> 5
_P1 = 25 * 28 + 26   # 726 : shifted-view rows for conv1 (p = h*28 + w)
_V1 = 24 * 28 + 26   # 698 : rows needing the stage-1 vertical pool max
_P2 = 10 * 13 + 11   # 141 : shifted-view rows for conv2 (p = h*13 + w)
_V2 = 8 * 13 + 10 + 1  # 114 : rows needing the stage-2 vertical pool max


def _net_fused_kernel(x_ref, w1_ref, b1_ref, w2_ref, b2_ref,
                      fc1w_ref, fc1b_ref, fc2w_ref, fc2b_ref,
                      o_ref,
                      acc1_ref, vmax1_ref, pool1_ref,
                      im2_ref, acc2_ref, vmax2_ref, fcin_ref,
                      *, b_tile):
    # x_ref:    (B, 784, 1)  flattened images (row-major over H, W)
    # w1_ref:   (9, 1, 32)   conv1 taps, tap t = 3*i + j
    # w2_ref:   (288, 64)    conv2 taps packed K = (3*i + j)*32 + cin
    # fc1w_ref: (1600, 128)  fc1 weight, input index k' = s*64 + c
    # fc2w_ref: (128, 10)
    # o_ref:    (B, 1, 10)
    for b in range(b_tile):
        # ---- conv1 (3x3 valid, 1->32) + bias + ReLU: vreg accumulation ------
        c1 = None
        for i in range(3):
            for j in range(3):
                xs = x_ref[b, pl.ds(i * 28 + j, _P1), :]        # (726, 1)
                contrib = xs * w1_ref[3 * i + j]                 # (726,1)*(1,32)
                c1 = contrib if c1 is None else c1 + contrib
        acc1_ref[...] = jnp.maximum(c1 + b1_ref[...], 0.0)      # (726, 32)

        # ---- maxpool 2x2/2 over the 26x26 map (rows p = h*28 + w) -----------
        # bulk contiguous vertical max, then stride-2 horizontal per pooled row
        vmax1_ref[...] = jnp.maximum(acc1_ref[pl.ds(0, _V1), :],
                                     acc1_ref[pl.ds(28, _V1), :])
        for r in range(13):
            base = 2 * r * 28
            pool1_ref[pl.ds(r * 13, 13), :] = jnp.maximum(
                vmax1_ref[pl.ds(base, 13, stride=2), :],
                vmax1_ref[pl.ds(base + 1, 13, stride=2), :])     # (13, 32)

        # ---- conv2 (3x3 valid, 32->64): K-packed im2col + ONE MXU dot -------
        for i in range(3):
            for j in range(3):
                t = 3 * i + j
                im2_ref[:, pl.ds(t * 32, 32)] = (
                    pool1_ref[pl.ds(i * 13 + j, _P2), :])        # (141, 32)
        c2 = jnp.dot(im2_ref[...], w2_ref[...],                  # (141, 288)x(288, 64)
                     preferred_element_type=jnp.float32)
        acc2_ref[...] = jnp.maximum(c2 + b2_ref[...], 0.0)       # (141, 64)

        # ---- maxpool 2x2/2 over the 11x11 map, writing the flat FC row ------
        vmax2_ref[...] = jnp.maximum(acc2_ref[pl.ds(0, _V2), :],
                                     acc2_ref[pl.ds(13, _V2), :])
        for r in range(5):
            for u in range(5):
                p = 2 * r * 13 + 2 * u
                v = jnp.maximum(vmax2_ref[pl.ds(p, 1), :],
                                vmax2_ref[pl.ds(p + 1, 1), :])   # (1, 64)
                fcin_ref[pl.ds(b, 1), pl.ds((r * 5 + u) * 64, 64)] = v

    # ---- fc1 + ReLU + fc2 for the whole batch tile (two MXU dots) -----------
    h = jnp.dot(fcin_ref[...], fc1w_ref[...],
                preferred_element_type=jnp.float32)              # (B, 128)
    h = jnp.maximum(h + fc1b_ref[...], 0.0)
    logits = jnp.dot(h, fc2w_ref[...],
                     preferred_element_type=jnp.float32) + fc2b_ref[...]
    o_ref[:, 0, :] = logits                                      # (B, 10)


def net_forward(x_nchw, p, *, b_tile=None):
    """Forward pass of Net.  x_nchw: (N, 1, 28, 28).  Returns (N, 10) f32."""
    n = x_nchw.shape[0]
    assert x_nchw.shape[1:] == (1, 28, 28), x_nchw.shape
    if b_tile is None:
        # Small batches: keep >=2 grid steps so both v7x TensorCores get work;
        # larger batches: amortize the per-step fixed cost over 4 images.
        b_tile = 4 if n >= 8 else max(1, n // 2)
    n_pad = ((n + b_tile - 1) // b_tile) * b_tile

    # conv1 has C_in == 1, so NCHW -> flattened (N, H*W, 1) is a pure reshape.
    x = x_nchw.astype(jnp.float32).reshape(n, 28 * 28, 1)
    if n_pad != n:
        x = jnp.pad(x, ((0, n_pad - n), (0, 0), (0, 0)))

    kernel = functools.partial(_net_fused_kernel, b_tile=b_tile)
    out = pl.pallas_call(
        kernel,
        grid=(n_pad // b_tile,),
        in_specs=[
            pl.BlockSpec((b_tile, 28 * 28, 1), lambda i: (i, 0, 0)),   # x
            pl.BlockSpec((9, 1, 32), lambda i: (0, 0, 0)),             # conv1 w
            pl.BlockSpec((1, 32), lambda i: (0, 0)),                   # conv1 b
            pl.BlockSpec((288, 64), lambda i: (0, 0)),                 # conv2 w
            pl.BlockSpec((1, 64), lambda i: (0, 0)),                   # conv2 b
            pl.BlockSpec((1600, 128), lambda i: (0, 0)),               # fc1 w
            pl.BlockSpec((1, 128), lambda i: (0, 0)),                  # fc1 b
            pl.BlockSpec((128, 10), lambda i: (0, 0)),                 # fc2 w
            pl.BlockSpec((1, 10), lambda i: (0, 0)),                   # fc2 b
        ],
        out_specs=pl.BlockSpec((b_tile, 1, 10), lambda i: (i, 0, 0)),
        out_shape=jax.ShapeDtypeStruct((n_pad, 1, 10), jnp.float32),
        scratch_shapes=[
            pltpu.VMEM((_P1, 32), jnp.float32),        # conv1 post-ReLU map
            pltpu.VMEM((_V1, 32), jnp.float32),        # stage-1 vertical max
            pltpu.VMEM((169, 32), jnp.float32),        # pool1 output (13x13x32)
            pltpu.VMEM((_P2, 288), jnp.float32),       # conv2 K-packed im2col
            pltpu.VMEM((_P2, 64), jnp.float32),        # conv2 post-ReLU map
            pltpu.VMEM((_V2, 64), jnp.float32),        # stage-2 vertical max
            pltpu.VMEM((b_tile, 1600), jnp.float32),   # flat FC input
        ],
        compiler_params=pltpu.CompilerParams(
            dimension_semantics=("parallel",)),
    )(x, p["conv1_w"], p["conv1_b"], p["conv2_w"], p["conv2_b"],
      p["fc1_w"], p["fc1_b"], p["fc2_w"], p["fc2_b"])
    return out[:n, 0, :]


# ---------------------------------------------------------------------------
# One-time weight packing (outside the per-forward path).
# ---------------------------------------------------------------------------
def prepare_params(p):
    # conv weights: PyTorch (Cout, Cin, kh, kw) -> tap-major packing.
    conv1_w = jnp.transpose(p["conv1_w"], (2, 3, 1, 0)).reshape(9, 1, 32)
    conv2_w = jnp.transpose(p["conv2_w"], (2, 3, 1, 0)).reshape(9 * 32, 64)
    # fc1: PyTorch flattens NCHW (k = c*25 + s); the kernel emits HWC order
    # (k' = s*64 + c), so fold that permutation into the packed weight.
    fc1_w = p["fc1_w"].reshape(128, 64, 25)                       # (out, c, s)
    fc1_w = jnp.transpose(fc1_w, (2, 1, 0)).reshape(25 * 64, 128)  # (s*64+c, out)
    return {
        "conv1_w": conv1_w, "conv1_b": p["conv1_b"].reshape(1, 32),
        "conv2_w": conv2_w, "conv2_b": p["conv2_b"].reshape(1, 64),
        "fc1_w": fc1_w, "fc1_b": p["fc1_b"].reshape(1, 128),
        "fc2_w": p["fc2_w"].T, "fc2_b": p["fc2_b"].reshape(1, 10),
    }


def init_params(key):
    ks = jax.random.split(key, 8)
    scale = 0.05
    return {
        "conv1_w": scale * jax.random.normal(ks[0], (32, 1, 3, 3), jnp.float32),
        "conv1_b": scale * jax.random.normal(ks[1], (32,), jnp.float32),
        "conv2_w": scale * jax.random.normal(ks[2], (64, 32, 3, 3), jnp.float32),
        "conv2_b": scale * jax.random.normal(ks[3], (64,), jnp.float32),
        "fc1_w": scale * jax.random.normal(ks[4], (128, 64 * 5 * 5), jnp.float32),
        "fc1_b": scale * jax.random.normal(ks[5], (128,), jnp.float32),
        "fc2_w": scale * jax.random.normal(ks[6], (10, 128), jnp.float32),
        "fc2_b": scale * jax.random.normal(ks[7], (10,), jnp.float32),
    }


if __name__ == "__main__":
    key = jax.random.PRNGKey(0)
    pkey, xkey = jax.random.split(key)
    params = prepare_params(init_params(pkey))  # one-time packing, outside jit
    # Spatial size 28x28 is forced by fc1's 64*5*5 input.
    x = jax.random.normal(xkey, (2, 1, 28, 28), jnp.float32)

    out = jax.jit(net_forward)(x, params)
    out = jax.block_until_ready(out)

    assert out.shape == (2, 10), out.shape
    assert out.dtype == jnp.float32
    assert bool(jnp.all(jnp.isfinite(out)))
    print("KERNEL_OK")
</pallas_src>

<mosaic_0001>
module attributes {stable_mosaic.version = 11 : i64} {
  func.func @_net_fused_kernel(%arg0: i32, %arg1: memref<1x784x1xf32, #tpu.memory_space<vmem>>, %arg2: memref<9x1x32xf32, #tpu.memory_space<vmem>>, %arg3: memref<1x32xf32, #tpu.memory_space<vmem>>, %arg4: memref<288x64xf32, #tpu.memory_space<vmem>>, %arg5: memref<1x64xf32, #tpu.memory_space<vmem>>, %arg6: memref<1600x128xf32, #tpu.memory_space<vmem>>, %arg7: memref<1x128xf32, #tpu.memory_space<vmem>>, %arg8: memref<128x10xf32, #tpu.memory_space<vmem>>, %arg9: memref<1x10xf32, #tpu.memory_space<vmem>>, %arg10: memref<1x1x10xf32, #tpu.memory_space<vmem>>, %arg11: memref<726x32xf32, #tpu.memory_space<vmem>>, %arg12: memref<698x32xf32, #tpu.memory_space<vmem>>, %arg13: memref<169x32xf32, #tpu.memory_space<vmem>>, %arg14: memref<141x288xf32, #tpu.memory_space<vmem>>, %arg15: memref<141x64xf32, #tpu.memory_space<vmem>>, %arg16: memref<115x64xf32, #tpu.memory_space<vmem>>, %arg17: memref<1x1600xf32, #tpu.memory_space<vmem>>) attributes {dimension_semantics = [#tpu.dimension_semantics<parallel>], iteration_bounds = array<i64: 2>, scalar_prefetch = 0 : i64, scratch_operands = 7 : i64, tpu.core_type = #tpu.core_type<tc>, window_params = [{transform_indices = @transform_0, window_bounds = array<i64: 1, 784, 1>}, {pipeline_mode = #tpu.pipeline_mode<synchronous>, transform_indices = @transform_1, window_bounds = array<i64: 9, 1, 32>}, {pipeline_mode = #tpu.pipeline_mode<synchronous>, transform_indices = @transform_2, window_bounds = array<i64: 1, 32>}, {pipeline_mode = #tpu.pipeline_mode<synchronous>, transform_indices = @transform_3, window_bounds = array<i64: 288, 64>}, {pipeline_mode = #tpu.pipeline_mode<synchronous>, transform_indices = @transform_4, window_bounds = array<i64: 1, 64>}, {pipeline_mode = #tpu.pipeline_mode<synchronous>, transform_indices = @transform_5, window_bounds = array<i64: 1600, 128>}, {pipeline_mode = #tpu.pipeline_mode<synchronous>, transform_indices = @transform_6, window_bounds = array<i64: 1, 128>}, {pipeline_mode = #tpu.pipeline_mode<synchronous>, transform_indices = @transform_7, window_bounds = array<i64: 128, 10>}, {pipeline_mode = #tpu.pipeline_mode<synchronous>, transform_indices = @transform_8, window_bounds = array<i64: 1, 10>}, {transform_indices = @transform_9, window_bounds = array<i64: 1, 1, 10>}]} {
    %c0 = arith.constant 0 : index
    %c0_0 = arith.constant 0 : index
    %c0_1 = arith.constant 0 : index
    %0 = vector.load %arg1[%c0, %c0_0, %c0_1] : memref<1x784x1xf32, #tpu.memory_space<vmem>>, vector<1x726x1xf32>
    %1 = vector.shape_cast %0 : vector<1x726x1xf32> to vector<726x1xf32>
    %c0_2 = arith.constant 0 : index
    %c0_3 = arith.constant 0 : index
    %c0_4 = arith.constant 0 : index
    %2 = vector.load %arg2[%c0_2, %c0_3, %c0_4] : memref<9x1x32xf32, #tpu.memory_space<vmem>>, vector<1x1x32xf32>
    %3 = vector.shape_cast %2 : vector<1x1x32xf32> to vector<1x32xf32>
    %4 = vector.broadcast %1 : vector<726x1xf32> to vector<726x32xf32>
    %5 = vector.broadcast %3 : vector<1x32xf32> to vector<726x32xf32>
    %6 = arith.mulf %4, %5 : vector<726x32xf32>
    %c0_5 = arith.constant 0 : index
    %c1 = arith.constant 1 : index
    %c0_6 = arith.constant 0 : index
    %7 = vector.load %arg1[%c0_5, %c1, %c0_6] : memref<1x784x1xf32, #tpu.memory_space<vmem>>, vector<1x726x1xf32>
    %8 = vector.shape_cast %7 : vector<1x726x1xf32> to vector<726x1xf32>
    %c1_7 = arith.constant 1 : index
    %c0_8 = arith.constant 0 : index
    %c0_9 = arith.constant 0 : index
    %9 = vector.load %arg2[%c1_7, %c0_8, %c0_9] : memref<9x1x32xf32, #tpu.memory_space<vmem>>, vector<1x1x32xf32>
    %10 = vector.shape_cast %9 : vector<1x1x32xf32> to vector<1x32xf32>
    %11 = vector.broadcast %8 : vector<726x1xf32> to vector<726x32xf32>
    %12 = vector.broadcast %10 : vector<1x32xf32> to vector<726x32xf32>
    %13 = arith.mulf %11, %12 : vector<726x32xf32>
    %14 = arith.addf %6, %13 : vector<726x32xf32>
    %c0_10 = arith.constant 0 : index
    %c2 = arith.constant 2 : index
    %c0_11 = arith.constant 0 : index
    %15 = vector.load %arg1[%c0_10, %c2, %c0_11] : memref<1x784x1xf32, #tpu.memory_space<vmem>>, vector<1x726x1xf32>
    %16 = vector.shape_cast %15 : vector<1x726x1xf32> to vector<726x1xf32>
    %c2_12 = arith.constant 2 : index
    %c0_13 = arith.constant 0 : index
    %c0_14 = arith.constant 0 : index
    %17 = vector.load %arg2[%c2_12, %c0_13, %c0_14] : memref<9x1x32xf32, #tpu.memory_space<vmem>>, vector<1x1x32xf32>
    %18 = vector.shape_cast %17 : vector<1x1x32xf32> to vector<1x32xf32>
    %19 = vector.broadcast %16 : vector<726x1xf32> to vector<726x32xf32>
    %20 = vector.broadcast %18 : vector<1x32xf32> to vector<726x32xf32>
    %21 = arith.mulf %19, %20 : vector<726x32xf32>
    %22 = arith.addf %14, %21 : vector<726x32xf32>
    %c0_15 = arith.constant 0 : index
    %c28 = arith.constant 28 : index
    %c0_16 = arith.constant 0 : index
    %23 = vector.load %arg1[%c0_15, %c28, %c0_16] : memref<1x784x1xf32, #tpu.memory_space<vmem>>, vector<1x726x1xf32>
    %24 = vector.shape_cast %23 : vector<1x726x1xf32> to vector<726x1xf32>
    %c3 = arith.constant 3 : index
    %c0_17 = arith.constant 0 : index
    %c0_18 = arith.constant 0 : index
    %25 = vector.load %arg2[%c3, %c0_17, %c0_18] : memref<9x1x32xf32, #tpu.memory_space<vmem>>, vector<1x1x32xf32>
    %26 = vector.shape_cast %25 : vector<1x1x32xf32> to vector<1x32xf32>
    %27 = vector.broadcast %24 : vector<726x1xf32> to vector<726x32xf32>
    %28 = vector.broadcast %26 : vector<1x32xf32> to vector<726x32xf32>
    %29 = arith.mulf %27, %28 : vector<726x32xf32>
    %30 = arith.addf %22, %29 : vector<726x32xf32>
    %c0_19 = arith.constant 0 : index
    %c29 = arith.constant 29 : index
    %c0_20 = arith.constant 0 : index
    %31 = vector.load %arg1[%c0_19, %c29, %c0_20] : memref<1x784x1xf32, #tpu.memory_space<vmem>>, vector<1x726x1xf32>
    %32 = vector.shape_cast %31 : vector<1x726x1xf32> to vector<726x1xf32>
    %c4 = arith.constant 4 : index
    %c0_21 = arith.constant 0 : index
    %c0_22 = arith.constant 0 : index
    %33 = vector.load %arg2[%c4, %c0_21, %c0_22] : memref<9x1x32xf32, #tpu.memory_space<vmem>>, vector<1x1x32xf32>
    %34 = vector.shape_cast %33 : vector<1x1x32xf32> to vector<1x32xf32>
    %35 = vector.broadcast %32 : vector<726x1xf32> to vector<726x32xf32>
    %36 = vector.broadcast %34 : vector<1x32xf32> to vector<726x32xf32>
    %37 = arith.mulf %35, %36 : vector<726x32xf32>
    %38 = arith.addf %30, %37 : vector<726x32xf32>
    %c0_23 = arith.constant 0 : index
    %c30 = arith.constant 30 : index
    %c0_24 = arith.constant 0 : index
    %39 = vector.load %arg1[%c0_23, %c30, %c0_24] : memref<1x784x1xf32, #tpu.memory_space<vmem>>, vector<1x726x1xf32>
    %40 = vector.shape_cast %39 : vector<1x726x1xf32> to vector<726x1xf32>
    %c5 = arith.constant 5 : index
    %c0_25 = arith.constant 0 : index
    %c0_26 = arith.constant 0 : index
    %41 = vector.load %arg2[%c5, %c0_25, %c0_26] : memref<9x1x32xf32, #tpu.memory_space<vmem>>, vector<1x1x32xf32>
    %42 = vector.shape_cast %41 : vector<1x1x32xf32> to vector<1x32xf32>
    %43 = vector.broadcast %40 : vector<726x1xf32> to vector<726x32xf32>
    %44 = vector.broadcast %42 : vector<1x32xf32> to vector<726x32xf32>
    %45 = arith.mulf %43, %44 : vector<726x32xf32>
    %46 = arith.addf %38, %45 : vector<726x32xf32>
    %c0_27 = arith.constant 0 : index
    %c56 = arith.constant 56 : index
    %c0_28 = arith.constant 0 : index
    %47 = vector.load %arg1[%c0_27, %c56, %c0_28] : memref<1x784x1xf32, #tpu.memory_space<vmem>>, vector<1x726x1xf32>
    %48 = vector.shape_cast %47 : vector<1x726x1xf32> to vector<726x1xf32>
    %c6 = arith.constant 6 : index
    %c0_29 = arith.constant 0 : index
    %c0_30 = arith.constant 0 : index
    %49 = vector.load %arg2[%c6, %c0_29, %c0_30] : memref<9x1x32xf32, #tpu.memory_space<vmem>>, vector<1x1x32xf32>
    %50 = vector.shape_cast %49 : vector<1x1x32xf32> to vector<1x32xf32>
    %51 = vector.broadcast %48 : vector<726x1xf32> to vector<726x32xf32>
    %52 = vector.broadcast %50 : vector<1x32xf32> to vector<726x32xf32>
    %53 = arith.mulf %51, %52 : vector<726x32xf32>
    %54 = arith.addf %46, %53 : vector<726x32xf32>
    %c0_31 = arith.constant 0 : index
    %c57 = arith.constant 57 : index
    %c0_32 = arith.constant 0 : index
    %55 = vector.load %arg1[%c0_31, %c57, %c0_32] : memref<1x784x1xf32, #tpu.memory_space<vmem>>, vector<1x726x1xf32>
    %56 = vector.shape_cast %55 : vector<1x726x1xf32> to vector<726x1xf32>
    %c7 = arith.constant 7 : index
    %c0_33 = arith.constant 0 : index
    %c0_34 = arith.constant 0 : index
    %57 = vector.load %arg2[%c7, %c0_33, %c0_34] : memref<9x1x32xf32, #tpu.memory_space<vmem>>, vector<1x1x32xf32>
    %58 = vector.shape_cast %57 : vector<1x1x32xf32> to vector<1x32xf32>
    %59 = vector.broadcast %56 : vector<726x1xf32> to vector<726x32xf32>
    %60 = vector.broadcast %58 : vector<1x32xf32> to vector<726x32xf32>
    %61 = arith.mulf %59, %60 : vector<726x32xf32>
    %62 = arith.addf %54, %61 : vector<726x32xf32>
    %c0_35 = arith.constant 0 : index
    %c58 = arith.constant 58 : index
    %c0_36 = arith.constant 0 : index
    %63 = vector.load %arg1[%c0_35, %c58, %c0_36] : memref<1x784x1xf32, #tpu.memory_space<vmem>>, vector<1x726x1xf32>
    %64 = vector.shape_cast %63 : vector<1x726x1xf32> to vector<726x1xf32>
    %c8 = arith.constant 8 : index
    %c0_37 = arith.constant 0 : index
    %c0_38 = arith.constant 0 : index
    %65 = vector.load %arg2[%c8, %c0_37, %c0_38] : memref<9x1x32xf32, #tpu.memory_space<vmem>>, vector<1x1x32xf32>
    %66 = vector.shape_cast %65 : vector<1x1x32xf32> to vector<1x32xf32>
    %67 = vector.broadcast %64 : vector<726x1xf32> to vector<726x32xf32>
    %68 = vector.broadcast %66 : vector<1x32xf32> to vector<726x32xf32>
    %69 = arith.mulf %67, %68 : vector<726x32xf32>
    %70 = arith.addf %62, %69 : vector<726x32xf32>
    %c0_39 = arith.constant 0 : index
    %c0_40 = arith.constant 0 : index
    %71 = vector.load %arg3[%c0_39, %c0_40] : memref<1x32xf32, #tpu.memory_space<vmem>>, vector<1x32xf32>
    %72 = vector.broadcast %71 : vector<1x32xf32> to vector<726x32xf32>
    %73 = arith.addf %70, %72 : vector<726x32xf32>
    %cst = arith.constant 0.000000e+00 : f32
    %74 = vector.broadcast %cst : f32 to vector<726x32xf32>
    %75 = arith.maximumf %73, %74 : vector<726x32xf32>
    %c0_41 = arith.constant 0 : index
    %c0_42 = arith.constant 0 : index
    %76 = vector.load %arg11[%c0_41, %c0_42] : memref<726x32xf32, #tpu.memory_space<vmem>>, vector<726x32xf32>
    tpu.vector_store %arg11[%c0_41, %c0_42], %75 {strides = array<i32>} : memref<726x32xf32, #tpu.memory_space<vmem>>, vector<726x32xf32>,
    %c0_43 = arith.constant 0 : index
    %c0_44 = arith.constant 0 : index
    %77 = vector.load %arg11[%c0_43, %c0_44] : memref<726x32xf32, #tpu.memory_space<vmem>>, vector<698x32xf32>
    %c28_45 = arith.constant 28 : index
    %c0_46 = arith.constant 0 : index
    %78 = vector.load %arg11[%c28_45, %c0_46] : memref<726x32xf32, #tpu.memory_space<vmem>>, vector<698x32xf32>
    %79 = arith.maximumf %77, %78 : vector<698x32xf32>
    %c0_47 = arith.constant 0 : index
    %c0_48 = arith.constant 0 : index
    %80 = vector.load %arg12[%c0_47, %c0_48] : memref<698x32xf32, #tpu.memory_space<vmem>>, vector<698x32xf32>
    tpu.vector_store %arg12[%c0_47, %c0_48], %79 {strides = array<i32>} : memref<698x32xf32, #tpu.memory_space<vmem>>, vector<698x32xf32>,
    %c0_49 = arith.constant 0 : index
    %c0_50 = arith.constant 0 : index
    %81 = tpu.strided_load %arg12[%c0_49, %c0_50] {strides = array<i32: 2, 1>} : memref<698x32xf32, #tpu.memory_space<vmem>>, vector<13x32xf32>
    %c1_51 = arith.constant 1 : index
    %c0_52 = arith.constant 0 : index
    %82 = tpu.strided_load %arg12[%c1_51, %c0_52] {strides = array<i32: 2, 1>} : memref<698x32xf32, #tpu.memory_space<vmem>>, vector<13x32xf32>
    %83 = arith.maximumf %81, %82 : vector<13x32xf32>
    %c0_53 = arith.constant 0 : index
    %c0_54 = arith.constant 0 : index
    %84 = vector.load %arg13[%c0_53, %c0_54] : memref<169x32xf32, #tpu.memory_space<vmem>>, vector<13x32xf32>
    tpu.vector_store %arg13[%c0_53, %c0_54], %83 {strides = array<i32>} : memref<169x32xf32, #tpu.memory_space<vmem>>, vector<13x32xf32>,
    %c56_55 = arith.constant 56 : index
    %c0_56 = arith.constant 0 : index
    %85 = tpu.strided_load %arg12[%c56_55, %c0_56] {strides = array<i32: 2, 1>} : memref<698x32xf32, #tpu.memory_space<vmem>>, vector<13x32xf32>
    %c57_57 = arith.constant 57 : index
    %c0_58 = arith.constant 0 : index
    %86 = tpu.strided_load %arg12[%c57_57, %c0_58] {strides = array<i32: 2, 1>} : memref<698x32xf32, #tpu.memory_space<vmem>>, vector<13x32xf32>
    %87 = arith.maximumf %85, %86 : vector<13x32xf32>
    %c13 = arith.constant 13 : index
    %c0_59 = arith.constant 0 : index
    %88 = vector.load %arg13[%c13, %c0_59] : memref<169x32xf32, #tpu.memory_space<vmem>>, vector<13x32xf32>
    tpu.vector_store %arg13[%c13, %c0_59], %87 {strides = array<i32>} : memref<169x32xf32, #tpu.memory_space<vmem>>, vector<13x32xf32>,
    %c112 = arith.constant 112 : index
    %c0_60 = arith.constant 0 : index
    %89 = tpu.strided_load %arg12[%c112, %c0_60] {strides = array<i32: 2, 1>} : memref<698x32xf32, #tpu.memory_space<vmem>>, vector<13x32xf32>
    %c113 = arith.constant 113 : index
    %c0_61 = arith.constant 0 : index
    %90 = tpu.strided_load %arg12[%c113, %c0_61] {strides = array<i32: 2, 1>} : memref<698x32xf32, #tpu.memory_space<vmem>>, vector<13x32xf32>
    %91 = arith.maximumf %89, %90 : vector<13x32xf32>
    %c26 = arith.constant 26 : index
    %c0_62 = arith.constant 0 : index
    %92 = vector.load %arg13[%c26, %c0_62] : memref<169x32xf32, #tpu.memory_space<vmem>>, vector<13x32xf32>
    tpu.vector_store %arg13[%c26, %c0_62], %91 {strides = array<i32>} : memref<169x32xf32, #tpu.memory_space<vmem>>, vector<13x32xf32>,
    %c168 = arith.constant 168 : index
    %c0_63 = arith.constant 0 : index
    %93 = tpu.strided_load %arg12[%c168, %c0_63] {strides = array<i32: 2, 1>} : memref<698x32xf32, #tpu.memory_space<vmem>>, vector<13x32xf32>
    %c169 = arith.constant 169 : index
    %c0_64 = arith.constant 0 : index
    %94 = tpu.strided_load %arg12[%c169, %c0_64] {strides = array<i32: 2, 1>} : memref<698x32xf32, #tpu.memory_space<vmem>>, vector<13x32xf32>
    %95 = arith.maximumf %93, %94 : vector<13x32xf32>
    %c39 = arith.constant 39 : index
    %c0_65 = arith.constant 0 : index
    %96 = vector.load %arg13[%c39, %c0_65] : memref<169x32xf32, #tpu.memory_space<vmem>>, vector<13x32xf32>
    tpu.vector_store %arg13[%c39, %c0_65], %95 {strides = array<i32>} : memref<169x32xf32, #tpu.memory_space<vmem>>, vector<13x32xf32>,
    %c224 = arith.constant 224 : index
    %c0_66 = arith.constant 0 : index
    %97 = tpu.strided_load %arg12[%c224, %c0_66] {strides = array<i32: 2, 1>} : memref<698x32xf32, #tpu.memory_space<vmem>>, vector<13x32xf32>
    %c225 = arith.constant 225 : index
    %c0_67 = arith.constant 0 : index
    %98 = tpu.strided_load %arg12[%c225, %c0_67] {strides = array<i32: 2, 1>} : memref<698x32xf32, #tpu.memory_space<vmem>>, vector<13x32xf32>
    %99 = arith.maximumf %97, %98 : vector<13x32xf32>
    %c52 = arith.constant 52 : index
    %c0_68 = arith.constant 0 : index
    %100 = vector.load %arg13[%c52, %c0_68] : memref<169x32xf32, #tpu.memory_space<vmem>>, vector<13x32xf32>
    tpu.vector_store %arg13[%c52, %c0_68], %99 {strides = array<i32>} : memref<169x32xf32, #tpu.memory_space<vmem>>, vector<13x32xf32>,
    %c280 = arith.constant 280 : index
    %c0_69 = arith.constant 0 : index
    %101 = tpu.strided_load %arg12[%c280, %c0_69] {strides = array<i32: 2, 1>} : memref<698x32xf32, #tpu.memory_space<vmem>>, vector<13x32xf32>
    %c281 = arith.constant 281 : index
    %c0_70 = arith.constant 0 : index
    %102 = tpu.strided_load %arg12[%c281, %c0_70] {strides = array<i32: 2, 1>} : memref<698x32xf32, #tpu.memory_space<vmem>>, vector<13x32xf32>
    %103 = arith.maximumf %101, %102 : vector<13x32xf32>
    %c65 = arith.constant 65 : index
    %c0_71 = arith.constant 0 : index
    %104 = vector.load %arg13[%c65, %c0_71] : memref<169x32xf32, #tpu.memory_space<vmem>>, vector<13x32xf32>
    tpu.vector_store %arg13[%c65, %c0_71], %103 {strides = array<i32>} : memref<169x32xf32, #tpu.memory_space<vmem>>, vector<13x32xf32>,
    %c336 = arith.constant 336 : index
    %c0_72 = arith.constant 0 : index
    %105 = tpu.strided_load %arg12[%c336, %c0_72] {strides = array<i32: 2, 1>} : memref<698x32xf32, #tpu.memory_space<vmem>>, vector<13x32xf32>
    %c337 = arith.constant 337 : index
    %c0_73 = arith.constant 0 : index
    %106 = tpu.strided_load %arg12[%c337, %c0_73] {strides = array<i32: 2, 1>} : memref<698x32xf32, #tpu.memory_space<vmem>>, vector<13x32xf32>
    %107 = arith.maximumf %105, %106 : vector<13x32xf32>
    %c78 = arith.constant 78 : index
    %c0_74 = arith.constant 0 : index
    %108 = vector.load %arg13[%c78, %c0_74] : memref<169x32xf32, #tpu.memory_space<vmem>>, vector<13x32xf32>
    tpu.vector_store %arg13[%c78, %c0_74], %107 {strides = array<i32>} : memref<169x32xf32, #tpu.memory_space<vmem>>, vector<13x32xf32>,
    %c392 = arith.constant 392 : index
    %c0_75 = arith.constant 0 : index
    %109 = tpu.strided_load %arg12[%c392, %c0_75] {strides = array<i32: 2, 1>} : memref<698x32xf32, #tpu.memory_space<vmem>>, vector<13x32xf32>
    %c393 = arith.constant 393 : index
    %c0_76 = arith.constant 0 : index
    %110 = tpu.strided_load %arg12[%c393, %c0_76] {strides = array<i32: 2, 1>} : memref<698x32xf32, #tpu.memory_space<vmem>>, vector<13x32xf32>
    %111 = arith.maximumf %109, %110 : vector<13x32xf32>
    %c91 = arith.constant 91 : index
    %c0_77 = arith.constant 0 : index
    %112 = vector.load %arg13[%c91, %c0_77] : memref<169x32xf32, #tpu.memory_space<vmem>>, vector<13x32xf32>
    tpu.vector_store %arg13[%c91, %c0_77], %111 {strides = array<i32>} : memref<169x32xf32, #tpu.memory_space<vmem>>, vector<13x32xf32>,
    %c448 = arith.constant 448 : index
    %c0_78 = arith.constant 0 : index
    %113 = tpu.strided_load %arg12[%c448, %c0_78] {strides = array<i32: 2, 1>} : memref<698x32xf32, #tpu.memory_space<vmem>>, vector<13x32xf32>
    %c449 = arith.constant 449 : index
    %c0_79 = arith.constant 0 : index
    %114 = tpu.strided_load %arg12[%c449, %c0_79] {strides = array<i32: 2, 1>} : memref<698x32xf32, #tpu.memory_space<vmem>>, vector<13x32xf32>
    %115 = arith.maximumf %113, %114 : vector<13x32xf32>
    %c104 = arith.constant 104 : index
    %c0_80 = arith.constant 0 : index
    %116 = vector.load %arg13[%c104, %c0_80] : memref<169x32xf32, #tpu.memory_space<vmem>>, vector<13x32xf32>
    tpu.vector_store %arg13[%c104, %c0_80], %115 {strides = array<i32>} : memref<169x32xf32, #tpu.memory_space<vmem>>, vector<13x32xf32>,
    %c504 = arith.constant 504 : index
    %c0_81 = arith.constant 0 : index
    %117 = tpu.strided_load %arg12[%c504, %c0_81] {strides = array<i32: 2, 1>} : memref<698x32xf32, #tpu.memory_space<vmem>>, vector<13x32xf32>
    %c505 = arith.constant 505 : index
    %c0_82 = arith.constant 0 : index
    %118 = tpu.strided_load %arg12[%c505, %c0_82] {strides = array<i32: 2, 1>} : memref<698x32xf32, #tpu.memory_space<vmem>>, vector<13x32xf32>
    %119 = arith.maximumf %117, %118 : vector<13x32xf32>
    %c117 = arith.constant 117 : index
    %c0_83 = arith.constant 0 : index
    %120 = vector.load %arg13[%c117, %c0_83] : memref<169x32xf32, #tpu.memory_space<vmem>>, vector<13x32xf32>
    tpu.vector_store %arg13[%c117, %c0_83], %119 {strides = array<i32>} : memref<169x32xf32, #tpu.memory_space<vmem>>, vector<13x32xf32>,
    %c560 = arith.constant 560 : index
    %c0_84 = arith.constant 0 : index
    %121 = tpu.strided_load %arg12[%c560, %c0_84] {strides = array<i32: 2, 1>} : memref<698x32xf32, #tpu.memory_space<vmem>>, vector<13x32xf32>
    %c561 = arith.constant 561 : index
    %c0_85 = arith.constant 0 : index
    %122 = tpu.strided_load %arg12[%c561, %c0_85] {strides = array<i32: 2, 1>} : memref<698x32xf32, #tpu.memory_space<vmem>>, vector<13x32xf32>
    %123 = arith.maximumf %121, %122 : vector<13x32xf32>
    %c130 = arith.constant 130 : index
    %c0_86 = arith.constant 0 : index
    %124 = vector.load %arg13[%c130, %c0_86] : memref<169x32xf32, #tpu.memory_space<vmem>>, vector<13x32xf32>
    tpu.vector_store %arg13[%c130, %c0_86], %123 {strides = array<i32>} : memref<169x32xf32, #tpu.memory_space<vmem>>, vector<13x32xf32>,
    %c616 = arith.constant 616 : index
    %c0_87 = arith.constant 0 : index
    %125 = tpu.strided_load %arg12[%c616, %c0_87] {strides = array<i32: 2, 1>} : memref<698x32xf32, #tpu.memory_space<vmem>>, vector<13x32xf32>
    %c617 = arith.constant 617 : index
    %c0_88 = arith.constant 0 : index
    %126 = tpu.strided_load %arg12[%c617, %c0_88] {strides = array<i32: 2, 1>} : memref<698x32xf32, #tpu.memory_space<vmem>>, vector<13x32xf32>
    %127 = arith.maximumf %125, %126 : vector<13x32xf32>
    %c143 = arith.constant 143 : index
    %c0_89 = arith.constant 0 : index
    %128 = vector.load %arg13[%c143, %c0_89] : memref<169x32xf32, #tpu.memory_space<vmem>>, vector<13x32xf32>
    tpu.vector_store %arg13[%c143, %c0_89], %127 {strides = array<i32>} : memref<169x32xf32, #tpu.memory_space<vmem>>, vector<13x32xf32>,
    %c672 = arith.constant 672 : index
    %c0_90 = arith.constant 0 : index
    %129 = tpu.strided_load %arg12[%c672, %c0_90] {strides = array<i32: 2, 1>} : memref<698x32xf32, #tpu.memory_space<vmem>>, vector<13x32xf32>
    %c673 = arith.constant 673 : index
    %c0_91 = arith.constant 0 : index
    %130 = tpu.strided_load %arg12[%c673, %c0_91] {strides = array<i32: 2, 1>} : memref<698x32xf32, #tpu.memory_space<vmem>>, vector<13x32xf32>
    %131 = arith.maximumf %129, %130 : vector<13x32xf32>
    %c156 = arith.constant 156 : index
    %c0_92 = arith.constant 0 : index
    %132 = vector.load %arg13[%c156, %c0_92] : memref<169x32xf32, #tpu.memory_space<vmem>>, vector<13x32xf32>
    tpu.vector_store %arg13[%c156, %c0_92], %131 {strides = array<i32>} : memref<169x32xf32, #tpu.memory_space<vmem>>, vector<13x32xf32>,
    %c0_93 = arith.constant 0 : index
    %c0_94 = arith.constant 0 : index
    %133 = vector.load %arg13[%c0_93, %c0_94] : memref<169x32xf32, #tpu.memory_space<vmem>>, vector<141x32xf32>
    %c0_95 = arith.constant 0 : index
    %c0_96 = arith.constant 0 : index
    %134 = vector.load %arg14[%c0_95, %c0_96] : memref<141x288xf32, #tpu.memory_space<vmem>>, vector<141x32xf32>
    tpu.vector_store %arg14[%c0_95, %c0_96], %133 {strides = array<i32>} : memref<141x288xf32, #tpu.memory_space<vmem>>, vector<141x32xf32>,
    %c1_97 = arith.constant 1 : index
    %c0_98 = arith.constant 0 : index
    %135 = vector.load %arg13[%c1_97, %c0_98] : memref<169x32xf32, #tpu.memory_space<vmem>>, vector<141x32xf32>
    %c0_99 = arith.constant 0 : index
    %c32 = arith.constant 32 : index
    %136 = vector.load %arg14[%c0_99, %c32] : memref<141x288xf32, #tpu.memory_space<vmem>>, vector<141x32xf32>
    tpu.vector_store %arg14[%c0_99, %c32], %135 {strides = array<i32>} : memref<141x288xf32, #tpu.memory_space<vmem>>, vector<141x32xf32>,
    %c2_100 = arith.constant 2 : index
    %c0_101 = arith.constant 0 : index
    %137 = vector.load %arg13[%c2_100, %c0_101] : memref<169x32xf32, #tpu.memory_space<vmem>>, vector<141x32xf32>
    %c0_102 = arith.constant 0 : index
    %c64 = arith.constant 64 : index
    %138 = vector.load %arg14[%c0_102, %c64] : memref<141x288xf32, #tpu.memory_space<vmem>>, vector<141x32xf32>
    tpu.vector_store %arg14[%c0_102, %c64], %137 {strides = array<i32>} : memref<141x288xf32, #tpu.memory_space<vmem>>, vector<141x32xf32>,
    %c13_103 = arith.constant 13 : index
    %c0_104 = arith.constant 0 : index
    %139 = vector.load %arg13[%c13_103, %c0_104] : memref<169x32xf32, #tpu.memory_space<vmem>>, vector<141x32xf32>
    %c0_105 = arith.constant 0 : index
    %c96 = arith.constant 96 : index
    %140 = vector.load %arg14[%c0_105, %c96] : memref<141x288xf32, #tpu.memory_space<vmem>>, vector<141x32xf32>
    tpu.vector_store %arg14[%c0_105, %c96], %139 {strides = array<i32>} : memref<141x288xf32, #tpu.memory_space<vmem>>, vector<141x32xf32>,
    %c14 = arith.constant 14 : index
    %c0_106 = arith.constant 0 : index
    %141 = vector.load %arg13[%c14, %c0_106] : memref<169x32xf32, #tpu.memory_space<vmem>>, vector<141x32xf32>
    %c0_107 = arith.constant 0 : index
    %c128 = arith.constant 128 : index
    %142 = vector.load %arg14[%c0_107, %c128] : memref<141x288xf32, #tpu.memory_space<vmem>>, vector<141x32xf32>
    tpu.vector_store %arg14[%c0_107, %c128], %141 {strides = array<i32>} : memref<141x288xf32, #tpu.memory_space<vmem>>, vector<141x32xf32>,
    %c15 = arith.constant 15 : index
    %c0_108 = arith.constant 0 : index
    %143 = vector.load %arg13[%c15, %c0_108] : memref<169x32xf32, #tpu.memory_space<vmem>>, vector<141x32xf32>
    %c0_109 = arith.constant 0 : index
    %c160 = arith.constant 160 : index
    %144 = vector.load %arg14[%c0_109, %c160] : memref<141x288xf32, #tpu.memory_space<vmem>>, vector<141x32xf32>
    tpu.vector_store %arg14[%c0_109, %c160], %143 {strides = array<i32>} : memref<141x288xf32, #tpu.memory_space<vmem>>, vector<141x32xf32>,
    %c26_110 = arith.constant 26 : index
    %c0_111 = arith.constant 0 : index
    %145 = vector.load %arg13[%c26_110, %c0_111] : memref<169x32xf32, #tpu.memory_space<vmem>>, vector<141x32xf32>
    %c0_112 = arith.constant 0 : index
    %c192 = arith.constant 192 : index
    %146 = vector.load %arg14[%c0_112, %c192] : memref<141x288xf32, #tpu.memory_space<vmem>>, vector<141x32xf32>
    tpu.vector_store %arg14[%c0_112, %c192], %145 {strides = array<i32>} : memref<141x288xf32, #tpu.memory_space<vmem>>, vector<141x32xf32>,
    %c27 = arith.constant 27 : index
    %c0_113 = arith.constant 0 : index
    %147 = vector.load %arg13[%c27, %c0_113] : memref<169x32xf32, #tpu.memory_space<vmem>>, vector<141x32xf32>
    %c0_114 = arith.constant 0 : index
    %c224_115 = arith.constant 224 : index
    %148 = vector.load %arg14[%c0_114, %c224_115] : memref<141x288xf32, #tpu.memory_space<vmem>>, vector<141x32xf32>
    tpu.vector_store %arg14[%c0_114, %c224_115], %147 {strides = array<i32>} : memref<141x288xf32, #tpu.memory_space<vmem>>, vector<141x32xf32>,
    %c28_116 = arith.constant 28 : index
    %c0_117 = arith.constant 0 : index
    %149 = vector.load %arg13[%c28_116, %c0_117] : memref<169x32xf32, #tpu.memory_space<vmem>>, vector<141x32xf32>
    %c0_118 = arith.constant 0 : index
    %c256 = arith.constant 256 : index
    %150 = vector.load %arg14[%c0_118, %c256] : memref<141x288xf32, #tpu.memory_space<vmem>>, vector<141x32xf32>
    tpu.vector_store %arg14[%c0_118, %c256], %149 {strides = array<i32>} : memref<141x288xf32, #tpu.memory_space<vmem>>, vector<141x32xf32>,
    %c0_119 = arith.constant 0 : index
    %c0_120 = arith.constant 0 : index
    %151 = vector.load %arg14[%c0_119, %c0_120] : memref<141x288xf32, #tpu.memory_space<vmem>>, vector<141x288xf32>
    %c0_121 = arith.constant 0 : index
    %c0_122 = arith.constant 0 : index
    %152 = vector.load %arg4[%c0_121, %c0_122] : memref<288x64xf32, #tpu.memory_space<vmem>>, vector<288x64xf32>
    %cst_123 = arith.constant dense<0.000000e+00> : vector<141x64xf32>
    %153 = tpu.matmul %151, %152, %cst_123 {dimension_numbers = #tpu.dot_dimension_numbers<[1], [0], [0], [1], [0, 0, 1, 1], [], []>} : vector<141x288xf32>, vector<288x64xf32>, vector<141x64xf32> -> vector<141x64xf32>
    %c0_124 = arith.constant 0 : index
    %c0_125 = arith.constant 0 : index
    %154 = vector.load %arg5[%c0_124, %c0_125] : memref<1x64xf32, #tpu.memory_space<vmem>>, vector<1x64xf32>
    %155 = vector.broadcast %154 : vector<1x64xf32> to vector<141x64xf32>
    %156 = arith.addf %153, %155 : vector<141x64xf32>
    %cst_126 = arith.constant 0.000000e+00 : f32
    %157 = vector.broadcast %cst_126 : f32 to vector<141x64xf32>
    %158 = arith.maximumf %156, %157 : vector<141x64xf32>
    %c0_127 = arith.constant 0 : index
    %c0_128 = arith.constant 0 : index
    %159 = vector.load %arg15[%c0_127, %c0_128] : memref<141x64xf32, #tpu.memory_space<vmem>>, vector<141x64xf32>
    tpu.vector_store %arg15[%c0_127, %c0_128], %158 {strides = array<i32>} : memref<141x64xf32, #tpu.memory_space<vmem>>, vector<141x64xf32>,
    %c0_129 = arith.constant 0 : index
    %c0_130 = arith.constant 0 : index
    %160 = vector.load %arg15[%c0_129, %c0_130] : memref<141x64xf32, #tpu.memory_space<vmem>>, vector<115x64xf32>
    %c13_131 = arith.constant 13 : index
    %c0_132 = arith.constant 0 : index
    %161 = vector.load %arg15[%c13_131, %c0_132] : memref<141x64xf32, #tpu.memory_space<vmem>>, vector<115x64xf32>
    %162 = arith.maximumf %160, %161 : vector<115x64xf32>
    %c0_133 = arith.constant 0 : index
    %c0_134 = arith.constant 0 : index
    %163 = vector.load %arg16[%c0_133, %c0_134] : memref<115x64xf32, #tpu.memory_space<vmem>>, vector<115x64xf32>
    tpu.vector_store %arg16[%c0_133, %c0_134], %162 {strides = array<i32>} : memref<115x64xf32, #tpu.memory_space<vmem>>, vector<115x64xf32>,
    %c0_135 = arith.constant 0 : index
    %c0_136 = arith.constant 0 : index
    %164 = vector.load %arg16[%c0_135, %c0_136] : memref<115x64xf32, #tpu.memory_space<vmem>>, vector<1x64xf32>
    %c1_137 = arith.constant 1 : index
    %c0_138 = arith.constant 0 : index
    %165 = vector.load %arg16[%c1_137, %c0_138] : memref<115x64xf32, #tpu.memory_space<vmem>>, vector<1x64xf32>
    %166 = arith.maximumf %164, %165 : vector<1x64xf32>
    %c0_139 = arith.constant 0 : index
    %c0_140 = arith.constant 0 : index
    %167 = vector.load %arg17[%c0_139, %c0_140] : memref<1x1600xf32, #tpu.memory_space<vmem>>, vector<1x64xf32>
    tpu.vector_store %arg17[%c0_139, %c0_140], %166 {strides = array<i32>} : memref<1x1600xf32, #tpu.memory_space<vmem>>, vector<1x64xf32>,
    %c2_141 = arith.constant 2 : index
    %c0_142 = arith.constant 0 : index
    %168 = vector.load %arg16[%c2_141, %c0_142] : memref<115x64xf32, #tpu.memory_space<vmem>>, vector<1x64xf32>
    %c3_143 = arith.constant 3 : index
    %c0_144 = arith.constant 0 : index
    %169 = vector.load %arg16[%c3_143, %c0_144] : memref<115x64xf32, #tpu.memory_space<vmem>>, vector<1x64xf32>
    %170 = arith.maximumf %168, %169 : vector<1x64xf32>
    %c0_145 = arith.constant 0 : index
    %c64_146 = arith.constant 64 : index
    %171 = vector.load %arg17[%c0_145, %c64_146] : memref<1x1600xf32, #tpu.memory_space<vmem>>, vector<1x64xf32>
    tpu.vector_store %arg17[%c0_145, %c64_146], %170 {strides = array<i32>} : memref<1x1600xf32, #tpu.memory_space<vmem>>, vector<1x64xf32>,
    %c4_147 = arith.constant 4 : index
    %c0_148 = arith.constant 0 : index
    %172 = vector.load %arg16[%c4_147, %c0_148] : memref<115x64xf32, #tpu.memory_space<vmem>>, vector<1x64xf32>
    %c5_149 = arith.constant 5 : index
    %c0_150 = arith.constant 0 : index
    %173 = vector.load %arg16[%c5_149, %c0_150] : memref<115x64xf32, #tpu.memory_space<vmem>>, vector<1x64xf32>
    %174 = arith.maximumf %172, %173 : vector<1x64xf32>
    %c0_151 = arith.constant 0 : index
    %c128_152 = arith.constant 128 : index
    %175 = vector.load %arg17[%c0_151, %c128_152] : memref<1x1600xf32, #tpu.memory_space<vmem>>, vector<1x64xf32>
    tpu.vector_store %arg17[%c0_151, %c128_152], %174 {strides = array<i32>} : memref<1x1600xf32, #tpu.memory_space<vmem>>, vector<1x64xf32>,
    %c6_153 = arith.constant 6 : index
    %c0_154 = arith.constant 0 : index
    %176 = vector.load %arg16[%c6_153, %c0_154] : memref<115x64xf32, #tpu.memory_space<vmem>>, vector<1x64xf32>
    %c7_155 = arith.constant 7 : index
    %c0_156 = arith.constant 0 : index
    %177 = vector.load %arg16[%c7_155, %c0_156] : memref<115x64xf32, #tpu.memory_space<vmem>>, vector<1x64xf32>
    %178 = arith.maximumf %176, %177 : vector<1x64xf32>
    %c0_157 = arith.constant 0 : index
    %c192_158 = arith.constant 192 : index
    %179 = vector.load %arg17[%c0_157, %c192_158] : memref<1x1600xf32, #tpu.memory_space<vmem>>, vector<1x64xf32>
    tpu.vector_store %arg17[%c0_157, %c192_158], %178 {strides = array<i32>} : memref<1x1600xf32, #tpu.memory_space<vmem>>, vector<1x64xf32>,
    %c8_159 = arith.constant 8 : index
    %c0_160 = arith.constant 0 : index
    %180 = vector.load %arg16[%c8_159, %c0_160] : memref<115x64xf32, #tpu.memory_space<vmem>>, vector<1x64xf32>
    %c9 = arith.constant 9 : index
    %c0_161 = arith.constant 0 : index
    %181 = vector.load %arg16[%c9, %c0_161] : memref<115x64xf32, #tpu.memory_space<vmem>>, vector<1x64xf32>
    %182 = arith.maximumf %180, %181 : vector<1x64xf32>
    %c0_162 = arith.constant 0 : index
    %c256_163 = arith.constant 256 : index
    %183 = vector.load %arg17[%c0_162, %c256_163] : memref<1x1600xf32, #tpu.memory_space<vmem>>, vector<1x64xf32>
    tpu.vector_store %arg17[%c0_162, %c256_163], %182 {strides = array<i32>} : memref<1x1600xf32, #tpu.memory_space<vmem>>, vector<1x64xf32>,
    %c26_164 = arith.constant 26 : index
    %c0_165 = arith.constant 0 : index
    %184 = vector.load %arg16[%c26_164, %c0_165] : memref<115x64xf32, #tpu.memory_space<vmem>>, vector<1x64xf32>
    %c27_166 = arith.constant 27 : index
    %c0_167 = arith.constant 0 : index
    %185 = vector.load %arg16[%c27_166, %c0_167] : memref<115x64xf32, #tpu.memory_space<vmem>>, vector<1x64xf32>
    %186 = arith.maximumf %184, %185 : vector<1x64xf32>
    %c0_168 = arith.constant 0 : index
    %c320 = arith.constant 320 : index
    %187 = vector.load %arg17[%c0_168, %c320] : memref<1x1600xf32, #tpu.memory_space<vmem>>, vector<1x64xf32>
    tpu.vector_store %arg17[%c0_168, %c320], %186 {strides = array<i32>} : memref<1x1600xf32, #tpu.memory_space<vmem>>, vector<1x64xf32>,
    %c28_169 = arith.constant 28 : index
    %c0_170 = arith.constant 0 : index
    %188 = vector.load %arg16[%c28_169, %c0_170] : memref<115x64xf32, #tpu.memory_space<vmem>>, vector<1x64xf32>
    %c29_171 = arith.constant 29 : index
    %c0_172 = arith.constant 0 : index
    %189 = vector.load %arg16[%c29_171, %c0_172] : memref<115x64xf32, #tpu.memory_space<vmem>>, vector<1x64xf32>
    %190 = arith.maximumf %188, %189 : vector<1x64xf32>
    %c0_173 = arith.constant 0 : index
    %c384 = arith.constant 384 : index
    %191 = vector.load %arg17[%c0_173, %c384] : memref<1x1600xf32, #tpu.memory_space<vmem>>, vector<1x64xf32>
    tpu.vector_store %arg17[%c0_173, %c384], %190 {strides = array<i32>} : memref<1x1600xf32, #tpu.memory_space<vmem>>, vector<1x64xf32>,
    %c30_174 = arith.constant 30 : index
    %c0_175 = arith.constant 0 : index
    %192 = vector.load %arg16[%c30_174, %c0_175] : memref<115x64xf32, #tpu.memory_space<vmem>>, vector<1x64xf32>
    %c31 = arith.constant 31 : index
    %c0_176 = arith.constant 0 : index
    %193 = vector.load %arg16[%c31, %c0_176] : memref<115x64xf32, #tpu.memory_space<vmem>>, vector<1x64xf32>
    %194 = arith.maximumf %192, %193 : vector<1x64xf32>
    %c0_177 = arith.constant 0 : index
    %c448_178 = arith.constant 448 : index
    %195 = vector.load %arg17[%c0_177, %c448_178] : memref<1x1600xf32, #tpu.memory_space<vmem>>, vector<1x64xf32>
    tpu.vector_store %arg17[%c0_177, %c448_178], %194 {strides = array<i32>} : memref<1x1600xf32, #tpu.memory_space<vmem>>, vector<1x64xf32>,
    %c32_179 = arith.constant 32 : index
    %c0_180 = arith.constant 0 : index
    %196 = vector.load %arg16[%c32_179, %c0_180] : memref<115x64xf32, #tpu.memory_space<vmem>>, vector<1x64xf32>
    %c33 = arith.constant 33 : index
    %c0_181 = arith.constant 0 : index
    %197 = vector.load %arg16[%c33, %c0_181] : memref<115x64xf32, #tpu.memory_space<vmem>>, vector<1x64xf32>
    %198 = arith.maximumf %196, %197 : vector<1x64xf32>
    %c0_182 = arith.constant 0 : index
    %c512 = arith.constant 512 : index
    %199 = vector.load %arg17[%c0_182, %c512] : memref<1x1600xf32, #tpu.memory_space<vmem>>, vector<1x64xf32>
    tpu.vector_store %arg17[%c0_182, %c512], %198 {strides = array<i32>} : memref<1x1600xf32, #tpu.memory_space<vmem>>, vector<1x64xf32>,
    %c34 = arith.constant 34 : index
    %c0_183 = arith.constant 0 : index
    %200 = vector.load %arg16[%c34, %c0_183] : memref<115x64xf32, #tpu.memory_space<vmem>>, vector<1x64xf32>
    %c35 = arith.constant 35 : index
    %c0_184 = arith.constant 0 : index
    %201 = vector.load %arg16[%c35, %c0_184] : memref<115x64xf32, #tpu.memory_space<vmem>>, vector<1x64xf32>
    %202 = arith.maximumf %200, %201 : vector<1x64xf32>
    %c0_185 = arith.constant 0 : index
    %c576 = arith.constant 576 : index
    %203 = vector.load %arg17[%c0_185, %c576] : memref<1x1600xf32, #tpu.memory_space<vmem>>, vector<1x64xf32>
    tpu.vector_store %arg17[%c0_185, %c576], %202 {strides = array<i32>} : memref<1x1600xf32, #tpu.memory_space<vmem>>, vector<1x64xf32>,
    %c52_186 = arith.constant 52 : index
    %c0_187 = arith.constant 0 : index
    %204 = vector.load %arg16[%c52_186, %c0_187] : memref<115x64xf32, #tpu.memory_space<vmem>>, vector<1x64xf32>
    %c53 = arith.constant 53 : index
    %c0_188 = arith.constant 0 : index
    %205 = vector.load %arg16[%c53, %c0_188] : memref<115x64xf32, #tpu.memory_space<vmem>>, vector<1x64xf32>
    %206 = arith.maximumf %204, %205 : vector<1x64xf32>
    %c0_189 = arith.constant 0 : index
    %c640 = arith.constant 640 : index
    %207 = vector.load %arg17[%c0_189, %c640] : memref<1x1600xf32, #tpu.memory_space<vmem>>, vector<1x64xf32>
    tpu.vector_store %arg17[%c0_189, %c640], %206 {strides = array<i32>} : memref<1x1600xf32, #tpu.memory_space<vmem>>, vector<1x64xf32>,
    %c54 = arith.constant 54 : index
    %c0_190 = arith.constant 0 : index
    %208 = vector.load %arg16[%c54, %c0_190] : memref<115x64xf32, #tpu.memory_space<vmem>>, vector<1x64xf32>
    %c55 = arith.constant 55 : index
    %c0_191 = arith.constant 0 : index
    %209 = vector.load %arg16[%c55, %c0_191] : memref<115x64xf32, #tpu.memory_space<vmem>>, vector<1x64xf32>
    %210 = arith.maximumf %208, %209 : vector<1x64xf32>
    %c0_192 = arith.constant 0 : index
    %c704 = arith.constant 704 : index
    %211 = vector.load %arg17[%c0_192, %c704] : memref<1x1600xf32, #tpu.memory_space<vmem>>, vector<1x64xf32>
    tpu.vector_store %arg17[%c0_192, %c704], %210 {strides = array<i32>} : memref<1x1600xf32, #tpu.memory_space<vmem>>, vector<1x64xf32>,
    %c56_193 = arith.constant 56 : index
    %c0_194 = arith.constant 0 : index
    %212 = vector.load %arg16[%c56_193, %c0_194] : memref<115x64xf32, #tpu.memory_space<vmem>>, vector<1x64xf32>
    %c57_195 = arith.constant 57 : index
    %c0_196 = arith.constant 0 : index
    %213 = vector.load %arg16[%c57_195, %c0_196] : memref<115x64xf32, #tpu.memory_space<vmem>>, vector<1x64xf32>
    %214 = arith.maximumf %212, %213 : vector<1x64xf32>
    %c0_197 = arith.constant 0 : index
    %c768 = arith.constant 768 : index
    %215 = vector.load %arg17[%c0_197, %c768] : memref<1x1600xf32, #tpu.memory_space<vmem>>, vector<1x64xf32>
    tpu.vector_store %arg17[%c0_197, %c768], %214 {strides = array<i32>} : memref<1x1600xf32, #tpu.memory_space<vmem>>, vector<1x64xf32>,
    %c58_198 = arith.constant 58 : index
    %c0_199 = arith.constant 0 : index
    %216 = vector.load %arg16[%c58_198, %c0_199] : memref<115x64xf32, #tpu.memory_space<vmem>>, vector<1x64xf32>
    %c59 = arith.constant 59 : index
    %c0_200 = arith.constant 0 : index
    %217 = vector.load %arg16[%c59, %c0_200] : memref<115x64xf32, #tpu.memory_space<vmem>>, vector<1x64xf32>
    %218 = arith.maximumf %216, %217 : vector<1x64xf32>
    %c0_201 = arith.constant 0 : index
    %c832 = arith.constant 832 : index
    %219 = vector.load %arg17[%c0_201, %c832] : memref<1x1600xf32, #tpu.memory_space<vmem>>, vector<1x64xf32>
    tpu.vector_store %arg17[%c0_201, %c832], %218 {strides = array<i32>} : memref<1x1600xf32, #tpu.memory_space<vmem>>, vector<1x64xf32>,
    %c60 = arith.constant 60 : index
    %c0_202 = arith.constant 0 : index
    %220 = vector.load %arg16[%c60, %c0_202] : memref<115x64xf32, #tpu.memory_space<vmem>>, vector<1x64xf32>
    %c61 = arith.constant 61 : index
    %c0_203 = arith.constant 0 : index
    %221 = vector.load %arg16[%c61, %c0_203] : memref<115x64xf32, #tpu.memory_space<vmem>>, vector<1x64xf32>
    %222 = arith.maximumf %220, %221 : vector<1x64xf32>
    %c0_204 = arith.constant 0 : index
    %c896 = arith.constant 896 : index
    %223 = vector.load %arg17[%c0_204, %c896] : memref<1x1600xf32, #tpu.memory_space<vmem>>, vector<1x64xf32>
    tpu.vector_store %arg17[%c0_204, %c896], %222 {strides = array<i32>} : memref<1x1600xf32, #tpu.memory_space<vmem>>, vector<1x64xf32>,
    %c78_205 = arith.constant 78 : index
    %c0_206 = arith.constant 0 : index
    %224 = vector.load %arg16[%c78_205, %c0_206] : memref<115x64xf32, #tpu.memory_space<vmem>>, vector<1x64xf32>
    %c79 = arith.constant 79 : index
    %c0_207 = arith.constant 0 : index
    %225 = vector.load %arg16[%c79, %c0_207] : memref<115x64xf32, #tpu.memory_space<vmem>>, vector<1x64xf32>
    %226 = arith.maximumf %224, %225 : vector<1x64xf32>
    %c0_208 = arith.constant 0 : index
    %c960 = arith.constant 960 : index
    %227 = vector.load %arg17[%c0_208, %c960] : memref<1x1600xf32, #tpu.memory_space<vmem>>, vector<1x64xf32>
    tpu.vector_store %arg17[%c0_208, %c960], %226 {strides = array<i32>} : memref<1x1600xf32, #tpu.memory_space<vmem>>, vector<1x64xf32>,
    %c80 = arith.constant 80 : index
    %c0_209 = arith.constant 0 : index
    %228 = vector.load %arg16[%c80, %c0_209] : memref<115x64xf32, #tpu.memory_space<vmem>>, vector<1x64xf32>
    %c81 = arith.constant 81 : index
    %c0_210 = arith.constant 0 : index
    %229 = vector.load %arg16[%c81, %c0_210] : memref<115x64xf32, #tpu.memory_space<vmem>>, vector<1x64xf32>
    %230 = arith.maximumf %228, %229 : vector<1x64xf32>
    %c0_211 = arith.constant 0 : index
    %c1024 = arith.constant 1024 : index
    %231 = vector.load %arg17[%c0_211, %c1024] : memref<1x1600xf32, #tpu.memory_space<vmem>>, vector<1x64xf32>
    tpu.vector_store %arg17[%c0_211, %c1024], %230 {strides = array<i32>} : memref<1x1600xf32, #tpu.memory_space<vmem>>, vector<1x64xf32>,
    %c82 = arith.constant 82 : index
    %c0_212 = arith.constant 0 : index
    %232 = vector.load %arg16[%c82, %c0_212] : memref<115x64xf32, #tpu.memory_space<vmem>>, vector<1x64xf32>
    %c83 = arith.constant 83 : index
    %c0_213 = arith.constant 0 : index
    %233 = vector.load %arg16[%c83, %c0_213] : memref<115x64xf32, #tpu.memory_space<vmem>>, vector<1x64xf32>
    %234 = arith.maximumf %232, %233 : vector<1x64xf32>
    %c0_214 = arith.constant 0 : index
    %c1088 = arith.constant 1088 : index
    %235 = vector.load %arg17[%c0_214, %c1088] : memref<1x1600xf32, #tpu.memory_space<vmem>>, vector<1x64xf32>
    tpu.vector_store %arg17[%c0_214, %c1088], %234 {strides = array<i32>} : memref<1x1600xf32, #tpu.memory_space<vmem>>, vector<1x64xf32>,
    %c84 = arith.constant 84 : index
    %c0_215 = arith.constant 0 : index
    %236 = vector.load %arg16[%c84, %c0_215] : memref<115x64xf32, #tpu.memory_space<vmem>>, vector<1x64xf32>
    %c85 = arith.constant 85 : index
    %c0_216 = arith.constant 0 : index
    %237 = vector.load %arg16[%c85, %c0_216] : memref<115x64xf32, #tpu.memory_space<vmem>>, vector<1x64xf32>
    %238 = arith.maximumf %236, %237 : vector<1x64xf32>
    %c0_217 = arith.constant 0 : index
    %c1152 = arith.constant 1152 : index
    %239 = vector.load %arg17[%c0_217, %c1152] : memref<1x1600xf32, #tpu.memory_space<vmem>>, vector<1x64xf32>
    tpu.vector_store %arg17[%c0_217, %c1152], %238 {strides = array<i32>} : memref<1x1600xf32, #tpu.memory_space<vmem>>, vector<1x64xf32>,
    %c86 = arith.constant 86 : index
    %c0_218 = arith.constant 0 : index
    %240 = vector.load %arg16[%c86, %c0_218] : memref<115x64xf32, #tpu.memory_space<vmem>>, vector<1x64xf32>
    %c87 = arith.constant 87 : index
    %c0_219 = arith.constant 0 : index
    %241 = vector.load %arg16[%c87, %c0_219] : memref<115x64xf32, #tpu.memory_space<vmem>>, vector<1x64xf32>
    %242 = arith.maximumf %240, %241 : vector<1x64xf32>
    %c0_220 = arith.constant 0 : index
    %c1216 = arith.constant 1216 : index
    %243 = vector.load %arg17[%c0_220, %c1216] : memref<1x1600xf32, #tpu.memory_space<vmem>>, vector<1x64xf32>
    tpu.vector_store %arg17[%c0_220, %c1216], %242 {strides = array<i32>} : memref<1x1600xf32, #tpu.memory_space<vmem>>, vector<1x64xf32>,
    %c104_221 = arith.constant 104 : index
    %c0_222 = arith.constant 0 : index
    %244 = vector.load %arg16[%c104_221, %c0_222] : memref<115x64xf32, #tpu.memory_space<vmem>>, vector<1x64xf32>
    %c105 = arith.constant 105 : index
    %c0_223 = arith.constant 0 : index
    %245 = vector.load %arg16[%c105, %c0_223] : memref<115x64xf32, #tpu.memory_space<vmem>>, vector<1x64xf32>
    %246 = arith.maximumf %244, %245 : vector<1x64xf32>
    %c0_224 = arith.constant 0 : index
    %c1280 = arith.constant 1280 : index
    %247 = vector.load %arg17[%c0_224, %c1280] : memref<1x1600xf32, #tpu.memory_space<vmem>>, vector<1x64xf32>
    tpu.vector_store %arg17[%c0_224, %c1280], %246 {strides = array<i32>} : memref<1x1600xf32, #tpu.memory_space<vmem>>, vector<1x64xf32>,
    %c106 = arith.constant 106 : index
    %c0_225 = arith.constant 0 : index
    %248 = vector.load %arg16[%c106, %c0_225] : memref<115x64xf32, #tpu.memory_space<vmem>>, vector<1x64xf32>
    %c107 = arith.constant 107 : index
    %c0_226 = arith.constant 0 : index
    %249 = vector.load %arg16[%c107, %c0_226] : memref<115x64xf32, #tpu.memory_space<vmem>>, vector<1x64xf32>
    %250 = arith.maximumf %248, %249 : vector<1x64xf32>
    %c0_227 = arith.constant 0 : index
    %c1344 = arith.constant 1344 : index
    %251 = vector.load %arg17[%c0_227, %c1344] : memref<1x1600xf32, #tpu.memory_space<vmem>>, vector<1x64xf32>
    tpu.vector_store %arg17[%c0_227, %c1344], %250 {strides = array<i32>} : memref<1x1600xf32, #tpu.memory_space<vmem>>, vector<1x64xf32>,
    %c108 = arith.constant 108 : index
    %c0_228 = arith.constant 0 : index
    %252 = vector.load %arg16[%c108, %c0_228] : memref<115x64xf32, #tpu.memory_space<vmem>>, vector<1x64xf32>
    %c109 = arith.constant 109 : index
    %c0_229 = arith.constant 0 : index
    %253 = vector.load %arg16[%c109, %c0_229] : memref<115x64xf32, #tpu.memory_space<vmem>>, vector<1x64xf32>
    %254 = arith.maximumf %252, %253 : vector<1x64xf32>
    %c0_230 = arith.constant 0 : index
    %c1408 = arith.constant 1408 : index
    %255 = vector.load %arg17[%c0_230, %c1408] : memref<1x1600xf32, #tpu.memory_space<vmem>>, vector<1x64xf32>
    tpu.vector_store %arg17[%c0_230, %c1408], %254 {strides = array<i32>} : memref<1x1600xf32, #tpu.memory_space<vmem>>, vector<1x64xf32>,
    %c110 = arith.constant 110 : index
    %c0_231 = arith.constant 0 : index
    %256 = vector.load %arg16[%c110, %c0_231] : memref<115x64xf32, #tpu.memory_space<vmem>>, vector<1x64xf32>
    %c111 = arith.constant 111 : index
    %c0_232 = arith.constant 0 : index
    %257 = vector.load %arg16[%c111, %c0_232] : memref<115x64xf32, #tpu.memory_space<vmem>>, vector<1x64xf32>
    %258 = arith.maximumf %256, %257 : vector<1x64xf32>
    %c0_233 = arith.constant 0 : index
    %c1472 = arith.constant 1472 : index
    %259 = vector.load %arg17[%c0_233, %c1472] : memref<1x1600xf32, #tpu.memory_space<vmem>>, vector<1x64xf32>
    tpu.vector_store %arg17[%c0_233, %c1472], %258 {strides = array<i32>} : memref<1x1600xf32, #tpu.memory_space<vmem>>, vector<1x64xf32>,
    %c112_234 = arith.constant 112 : index
    %c0_235 = arith.constant 0 : index
    %260 = vector.load %arg16[%c112_234, %c0_235] : memref<115x64xf32, #tpu.memory_space<vmem>>, vector<1x64xf32>
    %c113_236 = arith.constant 113 : index
    %c0_237 = arith.constant 0 : index
    %261 = vector.load %arg16[%c113_236, %c0_237] : memref<115x64xf32, #tpu.memory_space<vmem>>, vector<1x64xf32>
    %262 = arith.maximumf %260, %261 : vector<1x64xf32>
    %c0_238 = arith.constant 0 : index
    %c1536 = arith.constant 1536 : index
    %263 = vector.load %arg17[%c0_238, %c1536] : memref<1x1600xf32, #tpu.memory_space<vmem>>, vector<1x64xf32>
    tpu.vector_store %arg17[%c0_238, %c1536], %262 {strides = array<i32>} : memref<1x1600xf32, #tpu.memory_space<vmem>>, vector<1x64xf32>,
    %c0_239 = arith.constant 0 : index
    %c0_240 = arith.constant 0 : index
    %264 = vector.load %arg17[%c0_239, %c0_240] : memref<1x1600xf32, #tpu.memory_space<vmem>>, vector<1x1600xf32>
    %c0_241 = arith.constant 0 : index
    %c0_242 = arith.constant 0 : index
    %265 = vector.load %arg6[%c0_241, %c0_242] : memref<1600x128xf32, #tpu.memory_space<vmem>>, vector<1600x128xf32>
    %cst_243 = arith.constant dense<0.000000e+00> : vector<1x128xf32>
    %266 = tpu.matmul %264, %265, %cst_243 {dimension_numbers = #tpu.dot_dimension_numbers<[1], [0], [0], [1], [0, 0, 1, 1], [], []>} : vector<1x1600xf32>, vector<1600x128xf32>, vector<1x128xf32> -> vector<1x128xf32>
    %c0_244 = arith.constant 0 : index
    %c0_245 = arith.constant 0 : index
    %267 = vector.load %arg7[%c0_244, %c0_245] : memref<1x128xf32, #tpu.memory_space<vmem>>, vector<1x128xf32>
    %268 = arith.addf %266, %267 : vector<1x128xf32>
    %cst_246 = arith.constant 0.000000e+00 : f32
    %269 = vector.broadcast %cst_246 : f32 to vector<1x128xf32>
    %270 = arith.maximumf %268, %269 : vector<1x128xf32>
    %c0_247 = arith.constant 0 : index
    %c0_248 = arith.constant 0 : index
    %271 = vector.load %arg8[%c0_247, %c0_248] : memref<128x10xf32, #tpu.memory_space<vmem>>, vector<128x10xf32>
    %cst_249 = arith.constant dense<0.000000e+00> : vector<1x10xf32>
    %272 = tpu.matmul %270, %271, %cst_249 {dimension_numbers = #tpu.dot_dimension_numbers<[1], [0], [0], [1], [0, 0, 1, 1], [], []>} : vector<1x128xf32>, vector<128x10xf32>, vector<1x10xf32> -> vector<1x10xf32>
    %c0_250 = arith.constant 0 : index
    %c0_251 = arith.constant 0 : index
    %273 = vector.load %arg9[%c0_250, %c0_251] : memref<1x10xf32, #tpu.memory_space<vmem>>, vector<1x10xf32>
    %274 = arith.addf %272, %273 : vector<1x10xf32>
    %c0_252 = arith.constant 0 : index
    %c0_253 = arith.constant 0 : index
    %c0_254 = arith.constant 0 : index
    %275 = vector.load %arg10[%c0_252, %c0_253, %c0_254] : memref<1x1x10xf32, #tpu.memory_space<vmem>>, vector<1x1x10xf32>
    %276 = vector.shape_cast %275 : vector<1x1x10xf32> to vector<1x10xf32>
    %277 = vector.shape_cast %274 : vector<1x10xf32> to vector<1x1x10xf32>
    tpu.vector_store %arg10[%c0_252, %c0_253, %c0_254], %277 {strides = array<i32>} : memref<1x1x10xf32, #tpu.memory_space<vmem>>, vector<1x1x10xf32>,
    return
  }
  func.func @transform_0(%arg0: i32) -> (i32, i32, i32) {
    %c0_i32 = arith.constant 0 : i32
    %c0_i32_0 = arith.constant 0 : i32
    %c0_i32_1 = arith.constant 0 : i32
    return %arg0, %c0_i32, %c0_i32_0 : i32, i32, i32
  }
  func.func @transform_1(%arg0: i32) -> (i32, i32, i32) {
    %c0_i32 = arith.constant 0 : i32
    %c0_i32_0 = arith.constant 0 : i32
    %c0_i32_1 = arith.constant 0 : i32
    %c0_i32_2 = arith.constant 0 : i32
    return %c0_i32, %c0_i32_0, %c0_i32_1 : i32, i32, i32
  }
  func.func @transform_2(%arg0: i32) -> (i32, i32) {
    %c0_i32 = arith.constant 0 : i32
    %c0_i32_0 = arith.constant 0 : i32
    %c0_i32_1 = arith.constant 0 : i32
    return %c0_i32, %c0_i32_0 : i32, i32
  }
  func.func @transform_3(%arg0: i32) -> (i32, i32) {
    %c0_i32 = arith.constant 0 : i32
    %c0_i32_0 = arith.constant 0 : i32
    %c0_i32_1 = arith.constant 0 : i32
    return %c0_i32, %c0_i32_0 : i32, i32
  }
  func.func @transform_4(%arg0: i32) -> (i32, i32) {
    %c0_i32 = arith.constant 0 : i32
    %c0_i32_0 = arith.constant 0 : i32
    %c0_i32_1 = arith.constant 0 : i32
    return %c0_i32, %c0_i32_0 : i32, i32
  }
  func.func @transform_5(%arg0: i32) -> (i32, i32) {
    %c0_i32 = arith.constant 0 : i32
    %c0_i32_0 = arith.constant 0 : i32
    %c0_i32_1 = arith.constant 0 : i32
    return %c0_i32, %c0_i32_0 : i32, i32
  }
  func.func @transform_6(%arg0: i32) -> (i32, i32) {
    %c0_i32 = arith.constant 0 : i32
    %c0_i32_0 = arith.constant 0 : i32
    %c0_i32_1 = arith.constant 0 : i32
    return %c0_i32, %c0_i32_0 : i32, i32
  }
  func.func @transform_7(%arg0: i32) -> (i32, i32) {
    %c0_i32 = arith.constant 0 : i32
    %c0_i32_0 = arith.constant 0 : i32
    %c0_i32_1 = arith.constant 0 : i32
    return %c0_i32, %c0_i32_0 : i32, i32
  }
  func.func @transform_8(%arg0: i32) -> (i32, i32) {
    %c0_i32 = arith.constant 0 : i32
    %c0_i32_0 = arith.constant 0 : i32
    %c0_i32_1 = arith.constant 0 : i32
    return %c0_i32, %c0_i32_0 : i32, i32
  }
  func.func @transform_9(%arg0: i32) -> (i32, i32, i32) {
    %c0_i32 = arith.constant 0 : i32
    %c0_i32_0 = arith.constant 0 : i32
    %c0_i32_1 = arith.constant 0 : i32
    return %arg0, %c0_i32, %c0_i32_0 : i32, i32, i32
  }
}

</mosaic_0001>

<llo_original>
// kernel: net_forward.1
$region0: #{net_forward.1}
  #allocation0 [shape = 'u32[]', space=smem, size = 0x4, offset = 0x4, fixed_abs, tag = 'smem constant byte address 0x4 - core index']
  #allocation1 [shape = 'u32[144,128]{1,0:T(1,128)}', space=vmem, size = 0x12000, scoped, tag = 'internal scratch']
  #allocation2 [shape = 'f32[726,32]{1,0:T(8,128)}', space=vmem, size = 0x5b000, scoped, tag = 'scratch operand']
  #allocation3 [shape = 'f32[698,32]{1,0:T(8,128)}', space=vmem, size = 0x58000, scoped, tag = 'scratch operand']
  #allocation4 [shape = 'f32[169,32]{1,0:T(8,128)}', space=vmem, size = 0x16000, scoped, tag = 'scratch operand']
  #allocation5 [shape = 'f32[141,288]{1,0:T(8,128)}', space=vmem, size = 0x36000, scoped, tag = 'scratch operand']
  #allocation6 [shape = 'f32[141,64]{1,0:T(8,128)}', space=vmem, size = 0x12000, scoped, tag = 'scratch operand']
  #allocation7 [shape = 'f32[115,64]{1,0:T(8,128)}', space=vmem, size = 0xf000, scoped, tag = 'scratch operand']
  #allocation8 [shape = 'f32[1,1600]{1,0:T(1,128)}', space=vmem, size = 0x1a00, scoped, tag = 'scratch operand']
  %s0 = inlined_call_operand.vmem [shape: f32[2,784,1], index: 0, kind: input, shape index: {}]
  %s1 = inlined_call_operand.vmem [shape: f32[9,1,32], index: 1, kind: input, shape index: {}]
  %s2 = inlined_call_operand.vmem [shape: f32[1,32], index: 2, kind: input, shape index: {}]
  %s3 = inlined_call_operand.vmem [shape: f32[288,64], index: 3, kind: input, shape index: {}]
  %s4 = inlined_call_operand.vmem [shape: f32[1,64], index: 4, kind: input, shape index: {}]
  %s5 = inlined_call_operand.vmem [shape: f32[1600,128], index: 5, kind: input, shape index: {}]
  %s6 = inlined_call_operand.vmem [shape: f32[1,128], index: 6, kind: input, shape index: {}]
  %s7 = inlined_call_operand.vmem [shape: f32[128,10], index: 7, kind: input, shape index: {}]
  %s8 = inlined_call_operand.vmem [shape: f32[1,10], index: 8, kind: input, shape index: {}]
  %s9 = inlined_call_operand.hbm [shape: f32[2,1,10], index: 9, kind: output, shape index: {}]
  %s10 = sld [smem:[#allocation0]]
  $region69: #{net_forward.1} parent=0
    _
  %s12 = ssub.s32 1, %s10
  %s13 = scalar_select 0, %s12, %s10
  $region1: #{net_forward.1} parent=0
    #allocation9 [shape = 'u8[1024]{0}', space=vmem, size = 0x400, scoped, tag = 'output window, operand 0']
    #allocation10 [shape = 's32[2]{0}', space=sflag, size = 0x8, scoped, tag = 'scoped memory for net_forward.1']
    %14 = vsyncpa [#allocation10], 0
    %s15 = scalar_lea.sflag [#allocation10], 1
    %16 = vsyncpa %s15, 0
    loop: start=0, step=1, limit=4
    $region2: #{net_forward.1} parent=1 // loop_pre_header
      _
    $region3: #{net_forward.1} parent=1 // loop_header
      %s18 = sphi 0, %s22
      %p19 = scmp.ge.s32.totalorder %s18, 4
      %s28 = sphi 0, %s30
      %s31 = sphi 0, %s28
      %s32 = sphi 0, %s31
      %s48 = sphi 0, %s32
      %s52 = sphi 0, %s52
      %s54 = sphi 0, %s52
      %s55 = sphi 0, %s54
      %s69 = sphi 0, %s55
      %s73 = sphi 0, %s73
      %s75 = sphi 0, %s73
      %s76 = sphi 0, %s75
      %s90 = sphi 0, %s76
      %s94 = sphi 0, %s94
      %s96 = sphi 0, %s94
      %s97 = sphi 0, %s96
      %s111 = sphi 0, %s97
      %s115 = sphi 0, %s115
      %s117 = sphi 0, %s115
      %s118 = sphi 0, %s117
      %s132 = sphi 0, %s118
      %s136 = sphi 0, %s136
      %s138 = sphi 0, %s136
      %s139 = sphi 0, %s138
      %s153 = sphi 0, %s139
      %s157 = sphi 0, %s157
      %s159 = sphi 0, %s157
      %s160 = sphi 0, %s159
      %s174 = sphi 0, %s160
      %s178 = sphi 0, %s178
      %s180 = sphi 0, %s178
      %s181 = sphi 0, %s180
      %s195 = sphi 0, %s181
      %s199 = sphi 0, %s199
      %s201 = sphi 0, %s199
      %s202 = sphi 0, %s201
      %s216 = sphi 0, %s202
      %s222 = sphi 0, %s224
      %s225 = sphi 0, %s222
      %s226 = sphi 0, %s225
      %s242 = sphi 0, %s226
    $region4: #{net_forward.1} parent=1 // loop_header_branch
      %21 = sbr.rel (%p19) target = $region8
    $region5: #{net_forward.1} parent=1 // loop_body
      %s23 = ssub.s32 %s18, 1
      %s24 = ssub.s32 %s18, 2
      %s25 = sadd.s32 %s18, 1
      %s26 = ssub.s32 %s18, %s25
      %p27 = scmp.eq.s32.totalorder %s26, 0
      %s29 = sadd.s32 %s28, 1
      %s30 = scalar_select %p27, %s28, %s29
      %p33 = pneg %p27
      %p34 = scmp.eq.s32.totalorder %s18, 1
      %p35 = por %p33, %p34
      %p36 = scmp.ne.s32.totalorder %s28, %s31
      %p37 = scmp.eq.s32.totalorder %s18, 0
      %p38 = por %p36, %p37
      %p39 = scmp.ne.s32.totalorder %s28, %s31
      %p40 = scmp.eq.s32.totalorder %s23, 1
      %p41 = por %p39, %p40
      %p42 = scmp.ne.s32.totalorder %s31, %s32
      %p43 = scmp.eq.s32.totalorder %s23, 0
      %p44 = por %p42, %p43
      %p45 = scmp.ne.s32.totalorder %s31, %s32
      %p46 = scmp.eq.s32.totalorder %s24, 1
      %p47 = por %p45, %p46
      %p49 = scmp.ne.s32.totalorder %s32, %s48
      %p50 = scmp.eq.s32.totalorder %s24, 0
      %p51 = por %p49, %p50
      %s53 = sadd.s32 %s52, 1
      %p56 = scmp.eq.s32.totalorder %s18, 1
      %p57 = scmp.ne.s32.totalorder %s52, %s54
      %p58 = scmp.eq.s32.totalorder %s18, 0
      %p59 = por %p57, %p58
      %p60 = scmp.ne.s32.totalorder %s52, %s54
      %p61 = scmp.eq.s32.totalorder %s23, 1
      %p62 = por %p60, %p61
      %p63 = scmp.ne.s32.totalorder %s54, %s55
      %p64 = scmp.eq.s32.totalorder %s23, 0
      %p65 = por %p63, %p64
      %p66 = scmp.ne.s32.totalorder %s54, %s55
      %p67 = scmp.eq.s32.totalorder %s24, 1
      %p68 = por %p66, %p67
      %p70 = scmp.ne.s32.totalorder %s55, %s69
      %p71 = scmp.eq.s32.totalorder %s24, 0
      %p72 = por %p70, %p71
      %s74 = sadd.s32 %s73, 1
      %p77 = scmp.eq.s32.totalorder %s18, 1
      %p78 = scmp.ne.s32.totalorder %s73, %s75
      %p79 = scmp.eq.s32.totalorder %s18, 0
      %p80 = por %p78, %p79
      %p81 = scmp.ne.s32.totalorder %s73, %s75
      %p82 = scmp.eq.s32.totalorder %s23, 1
      %p83 = por %p81, %p82
      %p84 = scmp.ne.s32.totalorder %s75, %s76
      %p85 = scmp.eq.s32.totalorder %s23, 0
      %p86 = por %p84, %p85
      %p87 = scmp.ne.s32.totalorder %s75, %s76
      %p88 = scmp.eq.s32.totalorder %s24, 1
      %p89 = por %p87, %p88
      %p91 = scmp.ne.s32.totalorder %s76, %s90
      %p92 = scmp.eq.s32.totalorder %s24, 0
      %p93 = por %p91, %p92
      %s95 = sadd.s32 %s94, 1
      %p98 = scmp.eq.s32.totalorder %s18, 1
      %p99 = scmp.ne.s32.totalorder %s94, %s96
      %p100 = scmp.eq.s32.totalorder %s18, 0
      %p101 = por %p99, %p100
      %p102 = scmp.ne.s32.totalorder %s94, %s96
      %p103 = scmp.eq.s32.totalorder %s23, 1
      %p104 = por %p102, %p103
      %p105 = scmp.ne.s32.totalorder %s96, %s97
      %p106 = scmp.eq.s32.totalorder %s23, 0
      %p107 = por %p105, %p106
      %p108 = scmp.ne.s32.totalorder %s96, %s97
      %p109 = scmp.eq.s32.totalorder %s24, 1
      %p110 = por %p108, %p109
      %p112 = scmp.ne.s32.totalorder %s97, %s111
      %p113 = scmp.eq.s32.totalorder %s24, 0
      %p114 = por %p112, %p113
      %s116 = sadd.s32 %s115, 1
      %p119 = scmp.eq.s32.totalorder %s18, 1
      %p120 = scmp.ne.s32.totalorder %s115, %s117
      %p121 = scmp.eq.s32.totalorder %s18, 0
      %p122 = por %p120, %p121
      %p123 = scmp.ne.s32.totalorder %s115, %s117
      %p124 = scmp.eq.s32.totalorder %s23, 1
      %p125 = por %p123, %p124
      %p126 = scmp.ne.s32.totalorder %s117, %s118
      %p127 = scmp.eq.s32.totalorder %s23, 0
      %p128 = por %p126, %p127
      %p129 = scmp.ne.s32.totalorder %s117, %s118
      %p130 = scmp.eq.s32.totalorder %s24, 1
      %p131 = por %p129, %p130
      %p133 = scmp.ne.s32.totalorder %s118, %s132
      %p134 = scmp.eq.s32.totalorder %s24, 0
      %p135 = por %p133, %p134
      %s137 = sadd.s32 %s136, 1
      %p140 = scmp.eq.s32.totalorder %s18, 1
      %p141 = scmp.ne.s32.totalorder %s136, %s138
      %p142 = scmp.eq.s32.totalorder %s18, 0
      %p143 = por %p141, %p142
      %p144 = scmp.ne.s32.totalorder %s136, %s138
      %p145 = scmp.eq.s32.totalorder %s23, 1
      %p146 = por %p144, %p145
      %p147 = scmp.ne.s32.totalorder %s138, %s139
      %p148 = scmp.eq.s32.totalorder %s23, 0
      %p149 = por %p147, %p148
      %p150 = scmp.ne.s32.totalorder %s138, %s139
      %p151 = scmp.eq.s32.totalorder %s24, 1
      %p152 = por %p150, %p151
      %p154 = scmp.ne.s32.totalorder %s139, %s153
      %p155 = scmp.eq.s32.totalorder %s24, 0
      %p156 = por %p154, %p155
      %s158 = sadd.s32 %s157, 1
      %p161 = scmp.eq.s32.totalorder %s18, 1
      %p162 = scmp.ne.s32.totalorder %s157, %s159
      %p163 = scmp.eq.s32.totalorder %s18, 0
      %p164 = por %p162, %p163
      %p165 = scmp.ne.s32.totalorder %s157, %s159
      %p166 = scmp.eq.s32.totalorder %s23, 1
      %p167 = por %p165, %p166
      %p168 = scmp.ne.s32.totalorder %s159, %s160
      %p169 = scmp.eq.s32.totalorder %s23, 0
      %p170 = por %p168, %p169
      %p171 = scmp.ne.s32.totalorder %s159, %s160
      %p172 = scmp.eq.s32.totalorder %s24, 1
      %p173 = por %p171, %p172
      %p175 = scmp.ne.s32.totalorder %s160, %s174
      %p176 = scmp.eq.s32.totalorder %s24, 0
      %p177 = por %p175, %p176
      %s179 = sadd.s32 %s178, 1
      %p182 = scmp.eq.s32.totalorder %s18, 1
      %p183 = scmp.ne.s32.totalorder %s178, %s180
      %p184 = scmp.eq.s32.totalorder %s18, 0
      %p185 = por %p183, %p184
      %p186 = scmp.ne.s32.totalorder %s178, %s180
      %p187 = scmp.eq.s32.totalorder %s23, 1
      %p188 = por %p186, %p187
      %p189 = scmp.ne.s32.totalorder %s180, %s181
      %p190 = scmp.eq.s32.totalorder %s23, 0
      %p191 = por %p189, %p190
      %p192 = scmp.ne.s32.totalorder %s180, %s181
      %p193 = scmp.eq.s32.totalorder %s24, 1
      %p194 = por %p192, %p193
      %p196 = scmp.ne.s32.totalorder %s181, %s195
      %p197 = scmp.eq.s32.totalorder %s24, 0
      %p198 = por %p196, %p197
      %s200 = sadd.s32 %s199, 1
      %p203 = scmp.eq.s32.totalorder %s18, 1
      %p204 = scmp.ne.s32.totalorder %s199, %s201
      %p205 = scmp.eq.s32.totalorder %s18, 0
      %p206 = por %p204, %p205
      %p207 = scmp.ne.s32.totalorder %s199, %s201
      %p208 = scmp.eq.s32.totalorder %s23, 1
      %p209 = por %p207, %p208
      %p210 = scmp.ne.s32.totalorder %s201, %s202
      %p211 = scmp.eq.s32.totalorder %s23, 0
      %p212 = por %p210, %p211
      %p213 = scmp.ne.s32.totalorder %s201, %s202
      %p214 = scmp.eq.s32.totalorder %s24, 1
      %p215 = por %p213, %p214
      %p217 = scmp.ne.s32.totalorder %s202, %s216
      %p218 = scmp.eq.s32.totalorder %s24, 0
      %p219 = por %p217, %p218
      %s220 = ssub.s32 %s18, %s25
      %p221 = scmp.eq.s32.totalorder %s220, 0
      %s223 = sadd.s32 %s222, 1
      %s224 = scalar_select %p221, %s222, %s223
      %p227 = pneg %p221
      %p228 = scmp.eq.s32.totalorder %s18, 1
      %p229 = por %p227, %p228
      %p230 = scmp.ne.s32.totalorder %s222, %s225
      %p231 = scmp.eq.s32.totalorder %s18, 0
      %p232 = por %p230, %p231
      %p233 = scmp.ne.s32.totalorder %s222, %s225
      %p234 = scmp.eq.s32.totalorder %s23, 1
      %p235 = por %p233, %p234
      %p236 = scmp.ne.s32.totalorder %s225, %s226
      %p237 = scmp.eq.s32.totalorder %s23, 0
      %p238 = por %p236, %p237
      %p239 = scmp.ne.s32.totalorder %s225, %s226
      %p240 = scmp.eq.s32.totalorder %s24, 1
      %p241 = por %p239, %p240
      %p243 = scmp.ne.s32.totalorder %s226, %s242
      %p244 = scmp.eq.s32.totalorder %s24, 0
      %p245 = por %p243, %p244
      %p246 = scmp.le.s32.totalorder 1, %s18
      %p247 = scmp.lt.s32.totalorder %s18, 3
      %p248 = pnand %p246, %p247
      %p249 = pneg %p248
      // Predicated region
      $region9: #{net_forward.1} parent=5 // pred_check
        _
      $region10: #{net_forward.1} parent=5 // pred_check_branch
        %251 = sbr.rel (%p248) target = $region12
      $region11: #{net_forward.1} parent=5 // pred_region
        %s252 = ssub.s32 %s18, 1
        // Predicated region
        $region13: #{net_forward.1} parent=11 // pred_check
          %p253 = pneg %p65
        $region14: #{net_forward.1} parent=11 // pred_check_branch
          %255 = sbr.rel (%p253) target = $region16
        $region15: #{net_forward.1} parent=11 // pred_region
          _
        $region16: #{net_forward.1} parent=11 // pred_fallthru
          _
        // Predicated region
        $region17: #{net_forward.1} parent=11 // pred_check
          %p256 = pneg %p86
        $region18: #{net_forward.1} parent=11 // pred_check_branch
          %258 = sbr.rel (%p256) target = $region20
        $region19: #{net_forward.1} parent=11 // pred_region
          _
        $region20: #{net_forward.1} parent=11 // pred_fallthru
          _
        // Predicated region
        $region21: #{net_forward.1} parent=11 // pred_check
          %p259 = pneg %p107
        $region22: #{net_forward.1} parent=11 // pred_check_branch
          %261 = sbr.rel (%p259) target = $region24
        $region23: #{net_forward.1} parent=11 // pred_region
          _
        $region24: #{net_forward.1} parent=11 // pred_fallthru
          _
        // Predicated region
        $region25: #{net_forward.1} parent=11 // pred_check
          %p262 = pneg %p128
        $region26: #{net_forward.1} parent=11 // pred_check_branch
          %264 = sbr.rel (%p262) target = $region28
        $region27: #{net_forward.1} parent=11 // pred_region
          _
        $region28: #{net_forward.1} parent=11 // pred_fallthru
          _
        // Predicated region
        $region29: #{net_forward.1} parent=11 // pred_check
          %p265 = pneg %p149
        $region30: #{net_forward.1} parent=11 // pred_check_branch
          %267 = sbr.rel (%p265) target = $region32
        $region31: #{net_forward.1} parent=11 // pred_region
          _
        $region32: #{net_forward.1} parent=11 // pred_fallthru
          _
        // Predicated region
        $region33: #{net_forward.1} parent=11 // pred_check
          %p268 = pneg %p170
        $region34: #{net_forward.1} parent=11 // pred_check_branch
          %270 = sbr.rel (%p268) target = $region36
        $region35: #{net_forward.1} parent=11 // pred_region
          _
        $region36: #{net_forward.1} parent=11 // pred_fallthru
          _
        // Predicated region
        $region37: #{net_forward.1} parent=11 // pred_check
          %p271 = pneg %p191
        $region38: #{net_forward.1} parent=11 // pred_check_branch
          %273 = sbr.rel (%p271) target = $region40
        $region39: #{net_forward.1} parent=11 // pred_region
          _
        $region40: #{net_forward.1} parent=11 // pred_fallthru
          _
        // Predicated region
        $region41: #{net_forward.1} parent=11 // pred_check
          %p274 = pneg %p212
        $region42: #{net_forward.1} parent=11 // pred_check_branch
          %276 = sbr.rel (%p274) target = $region44
        $region43: #{net_forward.1} parent=11 // pred_region
          _
        $region44: #{net_forward.1} parent=11 // pred_fallthru
          _
      $region12: #{net_forward.1} parent=5 // pred_fallthru
        _
      %p277 = scmp.lt.s32.totalorder %s18, 2
      // Predicated region
      $region45: #{net_forward.1} parent=5 // pred_check
        %p278 = pneg %p277
      $region46: #{net_forward.1} parent=5 // pred_check_branch
        %280 = sbr.rel (%p278) target = $region48
      $region47: #{net_forward.1} parent=5 // pred_region
        // Predicated region
        $region49: #{net_forward.1} parent=47 // pred_check
          %p281 = pneg %p38
        $region50: #{net_forward.1} parent=47 // pred_check_branch
          %283 = sbr.rel (%p281) target = $region52
        $region51: #{net_forward.1} parent=47 // pred_region
          %p284 = scmp.lt.s32.totalorder %s18, 1
          %s285 = scalar_select %p284, %s18, 1
          %s286 = smul.addr %s285, 98
          %s287 = smul.addr %s286, 8
          %s288 = scalar_lea.vmem %s0, %s287
        $region52: #{net_forward.1} parent=47 // pred_fallthru
          _
      $region48: #{net_forward.1} parent=5 // pred_fallthru
        _
      %p289 = scmp.le.s32.totalorder 1, %s18
      %p290 = scmp.lt.s32.totalorder %s18, 3
      %p291 = pnand %p289, %p290
      %p292 = pneg %p291
      // Predicated region
      $region53: #{net_forward.1} parent=5 // pred_check
        _
      $region54: #{net_forward.1} parent=5 // pred_check_branch
        %294 = sbr.rel (%p291) target = $region56
      $region55: #{net_forward.1} parent=5 // pred_region
        %s295 = ssub.s32 %s18, 1
        %p296 = scmp.lt.s32.totalorder %s23, 1
        %s297 = scalar_select %p296, %s23, 1
        %s298 = smul.addr %s297, 98
        %s299 = smul.addr %s298, 8
        %s300 = scalar_lea.vmem %s0, %s299
        %p301 = pneg %p44
        %p302 = pneg %p41
        %p303 = pneg %p65
        %p304 = pneg %p62
        %p305 = pneg %p86
        %p306 = pneg %p83
        %p307 = pneg %p107
        %p308 = pneg %p104
        %p309 = pneg %p128
        %p310 = pneg %p125
        %p311 = pneg %p149
        %p312 = pneg %p146
        %p313 = pneg %p170
        %p314 = pneg %p167
        %p315 = pneg %p191
        %p316 = pneg %p188
        %p317 = pneg %p212
        %p318 = pneg %p209
        %p319 = pneg %p238
        %p320 = pneg %p235
        %s321 = sand.u32 %s225, 1
        %s322 = scalar_lea.sflag [#allocation10], %s321
        %s323 = sand.u32 %s225, 1
        %s324 = scalar_lea.vmem [#allocation9], %s323
        %p325 = scmp.lt.s32.totalorder %s23, 1
        %s326 = scalar_select %p325, %s23, 1
        %s327 = smul.addr %s326, 98
        %s328 = smul.addr %s327, 8
        %s329 = scalar_lea.vmem %s0, %s328
        %v330 = vld [vmem:[%s329] sm:$0xff]
        %v331 = vld [vmem:[%s329 + $0x8] sm:$0xff]
        %v332 = vld [vmem:[%s329 + $0x10] sm:$0xff]
        %v333 = vld [vmem:[%s329 + $0x18] sm:$0xff]
        %v334 = vld [vmem:[%s329 + $0x20] sm:$0xff]
        %v335 = vld [vmem:[%s329 + $0x28] sm:$0xff]
        %v336 = vld [vmem:[%s329 + $0x30] sm:$0xff]
        %v337 = vld [vmem:[%s329 + $0x38] sm:$0xff]
        %v338 = vld [vmem:[%s329 + $0x40] sm:$0xff]
        %v339 = vld [vmem:[%s329 + $0x48] sm:$0xff]
        %v340 = vld [vmem:[%s329 + $0x50] sm:$0xff]
        %v341 = vld [vmem:[%s329 + $0x58] sm:$0xff]
        %v342 = vld [vmem:[%s329 + $0x60] sm:$0xff]
        %v343 = vld [vmem:[%s329 + $0x68] sm:$0xff]
        %v344 = vld [vmem:[%s329 + $0x70] sm:$0xff]
        %v345 = vld [vmem:[%s329 + $0x78] sm:$0xff]
        %v346 = vld [vmem:[%s329 + $0x80] sm:$0xff]
        %v347 = vld [vmem:[%s329 + $0x88] sm:$0xff]
        %v348 = vld [vmem:[%s329 + $0x90] sm:$0xff]
        %v349 = vld [vmem:[%s329 + $0x98] sm:$0xff]
        %v350 = vld [vmem:[%s329 + $0xa0] sm:$0xff]
        %v351 = vld [vmem:[%s329 + $0xa8] sm:$0xff]
        %v352 = vld [vmem:[%s329 + $0xb0] sm:$0xff]
        %v353 = vld [vmem:[%s329 + $0xb8] sm:$0xff]
        %v354 = vld [vmem:[%s329 + $0xc0] sm:$0xff]
        %v355 = vld [vmem:[%s329 + $0xc8] sm:$0xff]
        %v356 = vld [vmem:[%s329 + $0xd0] sm:$0xff]
        %v357 = vld [vmem:[%s329 + $0xd8] sm:$0xff]
        %v358 = vld [vmem:[%s329 + $0xe0] sm:$0xff]
        %v359 = vld [vmem:[%s329 + $0xe8] sm:$0xff]
        %v360 = vld [vmem:[%s329 + $0xf0] sm:$0xff]
        %v361 = vld [vmem:[%s329 + $0xf8] sm:$0xff]
        %v362 = vld [vmem:[%s329 + $0x100] sm:$0xff]
        %v363 = vld [vmem:[%s329 + $0x108] sm:$0xff]
        %v364 = vld [vmem:[%s329 + $0x110] sm:$0xff]
        %v365 = vld [vmem:[%s329 + $0x118] sm:$0xff]
        %v366 = vld [vmem:[%s329 + $0x120] sm:$0xff]
        %v367 = vld [vmem:[%s329 + $0x128] sm:$0xff]
        %v368 = vld [vmem:[%s329 + $0x130] sm:$0xff]
        %v369 = vld [vmem:[%s329 + $0x138] sm:$0xff]
        %v370 = vld [vmem:[%s329 + $0x140] sm:$0xff]
        %v371 = vld [vmem:[%s329 + $0x148] sm:$0xff]
        %v372 = vld [vmem:[%s329 + $0x150] sm:$0xff]
        %v373 = vld [vmem:[%s329 + $0x158] sm:$0xff]
        %v374 = vld [vmem:[%s329 + $0x160] sm:$0xff]
        %v375 = vld [vmem:[%s329 + $0x168] sm:$0xff]
        %v376 = vld [vmem:[%s329 + $0x170] sm:$0xff]
        %v377 = vld [vmem:[%s329 + $0x178] sm:$0xff]
        %v378 = vld [vmem:[%s329 + $0x180] sm:$0xff]
        %v379 = vld [vmem:[%s329 + $0x188] sm:$0xff]
        %v380 = vld [vmem:[%s329 + $0x190] sm:$0xff]
        %v381 = vld [vmem:[%s329 + $0x198] sm:$0xff]
        %v382 = vld [vmem:[%s329 + $0x1a0] sm:$0xff]
        %v383 = vld [vmem:[%s329 + $0x1a8] sm:$0xff]
        %v384 = vld [vmem:[%s329 + $0x1b0] sm:$0xff]
        %v385 = vld [vmem:[%s329 + $0x1b8] sm:$0xff]
        %v386 = vld [vmem:[%s329 + $0x1c0] sm:$0xff]
        %v387 = vld [vmem:[%s329 + $0x1c8] sm:$0xff]
        %v388 = vld [vmem:[%s329 + $0x1d0] sm:$0xff]
        %v389 = vld [vmem:[%s329 + $0x1d8] sm:$0xff]
        %v390 = vld [vmem:[%s329 + $0x1e0] sm:$0xff]
        %v391 = vld [vmem:[%s329 + $0x1e8] sm:$0xff]
        %v392 = vld [vmem:[%s329 + $0x1f0] sm:$0xff]
        %v393 = vld [vmem:[%s329 + $0x1f8] sm:$0xff]
        %v394 = vld [vmem:[%s329 + $0x200] sm:$0xff]
        %v395 = vld [vmem:[%s329 + $0x208] sm:$0xff]
        %v396 = vld [vmem:[%s329 + $0x210] sm:$0xff]
        %v397 = vld [vmem:[%s329 + $0x218] sm:$0xff]
        %v398 = vld [vmem:[%s329 + $0x220] sm:$0xff]
        %v399 = vld [vmem:[%s329 + $0x228] sm:$0xff]
        %v400 = vld [vmem:[%s329 + $0x230] sm:$0xff]
        %v401 = vld [vmem:[%s329 + $0x238] sm:$0xff]
        %v402 = vld [vmem:[%s329 + $0x240] sm:$0xff]
        %v403 = vld [vmem:[%s329 + $0x248] sm:$0xff]
        %v404 = vld [vmem:[%s329 + $0x250] sm:$0xff]
        %v405 = vld [vmem:[%s329 + $0x258] sm:$0xff]
        %v406 = vld [vmem:[%s329 + $0x260] sm:$0xff]
        %v407 = vld [vmem:[%s329 + $0x268] sm:$0xff]
        %v408 = vld [vmem:[%s329 + $0x270] sm:$0xff]
        %v409 = vld [vmem:[%s329 + $0x278] sm:$0xff]
        %v410 = vld [vmem:[%s329 + $0x280] sm:$0xff]
        %v411 = vld [vmem:[%s329 + $0x288] sm:$0xff]
        %v412 = vld [vmem:[%s329 + $0x290] sm:$0xff]
        %v413 = vld [vmem:[%s329 + $0x298] sm:$0xff]
        %v414 = vld [vmem:[%s329 + $0x2a0] sm:$0xff]
        %v415 = vld [vmem:[%s329 + $0x2a8] sm:$0xff]
        %v416 = vld [vmem:[%s329 + $0x2b0] sm:$0xff]
        %v417 = vld [vmem:[%s329 + $0x2b8] sm:$0xff]
        %v418 = vld [vmem:[%s329 + $0x2c0] sm:$0xff]
        %v419 = vld [vmem:[%s329 + $0x2c8] sm:$0xff]
        %v420 = vld [vmem:[%s329 + $0x2d0] sm:$0x3f]
        %v421 = vld [vmem:[%s1] sm:$0x1]
        %423 = vset.pattern.permute.xlu0 0
        %424 = vperm.xlu0 %423, %v330
        %v425 = vpop.permute.xlu0 %424
        %428 = vset.pattern.permute.xlu0 0
        %429 = vperm.xlu0 %428, %v331
        %v430 = vpop.permute.xlu0 %429
        %433 = vset.pattern.permute.xlu0 0
        %434 = vperm.xlu0 %433, %v332
        %v435 = vpop.permute.xlu0 %434
        %438 = vset.pattern.permute.xlu0 0
        %439 = vperm.xlu0 %438, %v333
        %v440 = vpop.permute.xlu0 %439
        %443 = vset.pattern.permute.xlu0 0
        %444 = vperm.xlu0 %443, %v334
        %v445 = vpop.permute.xlu0 %444
        %448 = vset.pattern.permute.xlu0 0
        %449 = vperm.xlu0 %448, %v335
        %v450 = vpop.permute.xlu0 %449
        %453 = vset.pattern.permute.xlu0 0
        %454 = vperm.xlu0 %453, %v336
        %v455 = vpop.permute.xlu0 %454
        %458 = vset.pattern.permute.xlu0 0
        %459 = vperm.xlu0 %458, %v337
        %v460 = vpop.permute.xlu0 %459
        %463 = vset.pattern.permute.xlu0 0
        %464 = vperm.xlu0 %463, %v338
        %v465 = vpop.permute.xlu0 %464
        %468 = vset.pattern.permute.xlu0 0
        %469 = vperm.xlu0 %468, %v339
        %v470 = vpop.permute.xlu0 %469
        %473 = vset.pattern.permute.xlu0 0
        %474 = vperm.xlu0 %473, %v340
        %v475 = vpop.permute.xlu0 %474
        %478 = vset.pattern.permute.xlu0 0
        %479 = vperm.xlu0 %478, %v341
        %v480 = vpop.permute.xlu0 %479
        %483 = vset.pattern.permute.xlu0 0
        %484 = vperm.xlu0 %483, %v342
        %v485 = vpop.permute.xlu0 %484
        %488 = vset.pattern.permute.xlu0 0
        %489 = vperm.xlu0 %488, %v343
        %v490 = vpop.permute.xlu0 %489
        %493 = vset.pattern.permute.xlu0 0
        %494 = vperm.xlu0 %493, %v344
        %v495 = vpop.permute.xlu0 %494
        %498 = vset.pattern.permute.xlu0 0
        %499 = vperm.xlu0 %498, %v345
        %v500 = vpop.permute.xlu0 %499
        %503 = vset.pattern.permute.xlu0 0
        %504 = vperm.xlu0 %503, %v346
        %v505 = vpop.permute.xlu0 %504
        %508 = vset.pattern.permute.xlu0 0
        %509 = vperm.xlu0 %508, %v347
        %v510 = vpop.permute.xlu0 %509
        %513 = vset.pattern.permute.xlu0 0
        %514 = vperm.xlu0 %513, %v348
        %v515 = vpop.permute.xlu0 %514
        %518 = vset.pattern.permute.xlu0 0
        %519 = vperm.xlu0 %518, %v349
        %v520 = vpop.permute.xlu0 %519
        %523 = vset.pattern.permute.xlu0 0
        %524 = vperm.xlu0 %523, %v350
        %v525 = vpop.permute.xlu0 %524
        %528 = vset.pattern.permute.xlu0 0
        %529 = vperm.xlu0 %528, %v351
        %v530 = vpop.permute.xlu0 %529
        %533 = vset.pattern.permute.xlu0 0
        %534 = vperm.xlu0 %533, %v352
        %v535 = vpop.permute.xlu0 %534
        %538 = vset.pattern.permute.xlu0 0
        %539 = vperm.xlu0 %538, %v353
        %v540 = vpop.permute.xlu0 %539
        %543 = vset.pattern.permute.xlu0 0
        %544 = vperm.xlu0 %543, %v354
        %v545 = vpop.permute.xlu0 %544
        %548 = vset.pattern.permute.xlu0 0
        %549 = vperm.xlu0 %548, %v355
        %v550 = vpop.permute.xlu0 %549
        %553 = vset.pattern.permute.xlu0 0
        %554 = vperm.xlu0 %553, %v356
        %v555 = vpop.permute.xlu0 %554
        %558 = vset.pattern.permute.xlu0 0
        %559 = vperm.xlu0 %558, %v357
        %v560 = vpop.permute.xlu0 %559
        %563 = vset.pattern.permute.xlu0 0
        %564 = vperm.xlu0 %563, %v358
        %v565 = vpop.permute.xlu0 %564
        %568 = vset.pattern.permute.xlu0 0
        %569 = vperm.xlu0 %568, %v359
        %v570 = vpop.permute.xlu0 %569
        %573 = vset.pattern.permute.xlu0 0
        %574 = vperm.xlu0 %573, %v360
        %v575 = vpop.permute.xlu0 %574
        %578 = vset.pattern.permute.xlu0 0
        %579 = vperm.xlu0 %578, %v361
        %v580 = vpop.permute.xlu0 %579
        %583 = vset.pattern.permute.xlu0 0
        %584 = vperm.xlu0 %583, %v362
        %v585 = vpop.permute.xlu0 %584
        %588 = vset.pattern.permute.xlu0 0
        %589 = vperm.xlu0 %588, %v363
        %v590 = vpop.permute.xlu0 %589
        %593 = vset.pattern.permute.xlu0 0
        %594 = vperm.xlu0 %593, %v364
        %v595 = vpop.permute.xlu0 %594
        %598 = vset.pattern.permute.xlu0 0
        %599 = vperm.xlu0 %598, %v365
        %v600 = vpop.permute.xlu0 %599
        %603 = vset.pattern.permute.xlu0 0
        %604 = vperm.xlu0 %603, %v366
        %v605 = vpop.permute.xlu0 %604
        %608 = vset.pattern.permute.xlu0 0
        %609 = vperm.xlu0 %608, %v367
        %v610 = vpop.permute.xlu0 %609
        %613 = vset.pattern.permute.xlu0 0
        %614 = vperm.xlu0 %613, %v368
        %v615 = vpop.permute.xlu0 %614
        %618 = vset.pattern.permute.xlu0 0
        %619 = vperm.xlu0 %618, %v369
        %v620 = vpop.permute.xlu0 %619
        %623 = vset.pattern.permute.xlu0 0
        %624 = vperm.xlu0 %623, %v370
        %v625 = vpop.permute.xlu0 %624
        %628 = vset.pattern.permute.xlu0 0
        %629 = vperm.xlu0 %628, %v371
        %v630 = vpop.permute.xlu0 %629
        %633 = vset.pattern.permute.xlu0 0
        %634 = vperm.xlu0 %633, %v372
        %v635 = vpop.permute.xlu0 %634
        %638 = vset.pattern.permute.xlu0 0
        %639 = vperm.xlu0 %638, %v373
        %v640 = vpop.permute.xlu0 %639
        %643 = vset.pattern.permute.xlu0 0
        %644 = vperm.xlu0 %643, %v374
        %v645 = vpop.permute.xlu0 %644
        %648 = vset.pattern.permute.xlu0 0
        %649 = vperm.xlu0 %648, %v375
        %v650 = vpop.permute.xlu0 %649
        %653 = vset.pattern.permute.xlu0 0
        %654 = vperm.xlu0 %653, %v376
        %v655 = vpop.permute.xlu0 %654
        %658 = vset.pattern.permute.xlu0 0
        %659 = vperm.xlu0 %658, %v377
        %v660 = vpop.permute.xlu0 %659
        %663 = vset.pattern.permute.xlu0 0
        %664 = vperm.xlu0 %663, %v378
        %v665 = vpop.permute.xlu0 %664
        %668 = vset.pattern.permute.xlu0 0
        %669 = vperm.xlu0 %668, %v379
        %v670 = vpop.permute.xlu0 %669
        %673 = vset.pattern.permute.xlu0 0
        %674 = vperm.xlu0 %673, %v380
        %v675 = vpop.permute.xlu0 %674
        %678 = vset.pattern.permute.xlu0 0
        %679 = vperm.xlu0 %678, %v381
        %v680 = vpop.permute.xlu0 %679
        %683 = vset.pattern.permute.xlu0 0
        %684 = vperm.xlu0 %683, %v382
        %v685 = vpop.permute.xlu0 %684
        %688 = vset.pattern.permute.xlu0 0
        %689 = vperm.xlu0 %688, %v383
        %v690 = vpop.permute.xlu0 %689
        %693 = vset.pattern.permute.xlu0 0
        %694 = vperm.xlu0 %693, %v384
        %v695 = vpop.permute.xlu0 %694
        %698 = vset.pattern.permute.xlu0 0
        %699 = vperm.xlu0 %698, %v385
        %v700 = vpop.permute.xlu0 %699
        %703 = vset.pattern.permute.xlu0 0
        %704 = vperm.xlu0 %703, %v386
        %v705 = vpop.permute.xlu0 %704
        %708 = vset.pattern.permute.xlu0 0
        %709 = vperm.xlu0 %708, %v387
        %v710 = vpop.permute.xlu0 %709
        %713 = vset.pattern.permute.xlu0 0
        %714 = vperm.xlu0 %713, %v388
        %v715 = vpop.permute.xlu0 %714
        %718 = vset.pattern.permute.xlu0 0
        %719 = vperm.xlu0 %718, %v389
        %v720 = vpop.permute.xlu0 %719
        %723 = vset.pattern.permute.xlu0 0
        %724 = vperm.xlu0 %723, %v390
        %v725 = vpop.permute.xlu0 %724
        %728 = vset.pattern.permute.xlu0 0
        %729 = vperm.xlu0 %728, %v391
        %v730 = vpop.permute.xlu0 %729
        %733 = vset.pattern.permute.xlu0 0
        %734 = vperm.xlu0 %733, %v392
        %v735 = vpop.permute.xlu0 %734
        %738 = vset.pattern.permute.xlu0 0
        %739 = vperm.xlu0 %738, %v393
        %v740 = vpop.permute.xlu0 %739
        %743 = vset.pattern.permute.xlu0 0
        %744 = vperm.xlu0 %743, %v394
        %v745 = vpop.permute.xlu0 %744
        %748 = vset.pattern.permute.xlu0 0
        %749 = vperm.xlu0 %748, %v395
        %v750 = vpop.permute.xlu0 %749
        %753 = vset.pattern.permute.xlu0 0
        %754 = vperm.xlu0 %753, %v396
        %v755 = vpop.permute.xlu0 %754
        %758 = vset.pattern.permute.xlu0 0
        %759 = vperm.xlu0 %758, %v397
        %v760 = vpop.permute.xlu0 %759
        %763 = vset.pattern.permute.xlu0 0
        %764 = vperm.xlu0 %763, %v398
        %v765 = vpop.permute.xlu0 %764
        %768 = vset.pattern.permute.xlu0 0
        %769 = vperm.xlu0 %768, %v399
        %v770 = vpop.permute.xlu0 %769
        %773 = vset.pattern.permute.xlu0 0
        %774 = vperm.xlu0 %773, %v400
        %v775 = vpop.permute.xlu0 %774
        %778 = vset.pattern.permute.xlu0 0
        %779 = vperm.xlu0 %778, %v401
        %v780 = vpop.permute.xlu0 %779
        %783 = vset.pattern.permute.xlu0 0
        %784 = vperm.xlu0 %783, %v402
        %v785 = vpop.permute.xlu0 %784
        %788 = vset.pattern.permute.xlu0 0
        %789 = vperm.xlu0 %788, %v403
        %v790 = vpop.permute.xlu0 %789
        %793 = vset.pattern.permute.xlu0 0
        %794 = vperm.xlu0 %793, %v404
        %v795 = vpop.permute.xlu0 %794
        %798 = vset.pattern.permute.xlu0 0
        %799 = vperm.xlu0 %798, %v405
        %v800 = vpop.permute.xlu0 %799
        %803 = vset.pattern.permute.xlu0 0
        %804 = vperm.xlu0 %803, %v406
        %v805 = vpop.permute.xlu0 %804
        %808 = vset.pattern.permute.xlu0 0
        %809 = vperm.xlu0 %808, %v407
        %v810 = vpop.permute.xlu0 %809
        %813 = vset.pattern.permute.xlu0 0
        %814 = vperm.xlu0 %813, %v408
        %v815 = vpop.permute.xlu0 %814
        %818 = vset.pattern.permute.xlu0 0
        %819 = vperm.xlu0 %818, %v409
        %v820 = vpop.permute.xlu0 %819
        %823 = vset.pattern.permute.xlu0 0
        %824 = vperm.xlu0 %823, %v410
        %v825 = vpop.permute.xlu0 %824
        %828 = vset.pattern.permute.xlu0 0
        %829 = vperm.xlu0 %828, %v411
        %v830 = vpop.permute.xlu0 %829
        %833 = vset.pattern.permute.xlu0 0
        %834 = vperm.xlu0 %833, %v412
        %v835 = vpop.permute.xlu0 %834
        %838 = vset.pattern.permute.xlu0 0
        %839 = vperm.xlu0 %838, %v413
        %v840 = vpop.permute.xlu0 %839
        %843 = vset.pattern.permute.xlu0 0
        %844 = vperm.xlu0 %843, %v414
        %v845 = vpop.permute.xlu0 %844
        %848 = vset.pattern.permute.xlu0 0
        %849 = vperm.xlu0 %848, %v415
        %v850 = vpop.permute.xlu0 %849
        %853 = vset.pattern.permute.xlu0 0
        %854 = vperm.xlu0 %853, %v416
        %v855 = vpop.permute.xlu0 %854
        %858 = vset.pattern.permute.xlu0 0
        %859 = vperm.xlu0 %858, %v417
        %v860 = vpop.permute.xlu0 %859
        %863 = vset.pattern.permute.xlu0 0
        %864 = vperm.xlu0 %863, %v418
        %v865 = vpop.permute.xlu0 %864
        %868 = vset.pattern.permute.xlu0 0
        %869 = vperm.xlu0 %868, %v419
        %v870 = vpop.permute.xlu0 %869
        %873 = vset.pattern.permute.xlu0 0
        %874 = vperm.xlu0 %873, %v420
        %v875 = vpop.permute.xlu0 %874
        %v878 = vlaneseq
        %v879 = vshrl.u32 %v878, 7
        %v880 = vsub.s32 0, %v879
        %v881 = vrot.slane %v421, %v880
        %v883 = vmul.f32 %v425, %v881
        %v884 = vmul.f32 %v430, %v881
        %v885 = vmul.f32 %v435, %v881
        %v886 = vmul.f32 %v440, %v881
        %v887 = vmul.f32 %v445, %v881
        %v888 = vmul.f32 %v450, %v881
        %v889 = vmul.f32 %v455, %v881
        %v890 = vmul.f32 %v460, %v881
        %v891 = vmul.f32 %v465, %v881
        %v892 = vmul.f32 %v470, %v881
        %v893 = vmul.f32 %v475, %v881
        %v894 = vmul.f32 %v480, %v881
        %v895 = vmul.f32 %v485, %v881
        %v896 = vmul.f32 %v490, %v881
        %v897 = vmul.f32 %v495, %v881
        %v898 = vmul.f32 %v500, %v881
        %v899 = vmul.f32 %v505, %v881
        %v900 = vmul.f32 %v510, %v881
        %v901 = vmul.f32 %v515, %v881
        %v902 = vmul.f32 %v520, %v881
        %v903 = vmul.f32 %v525, %v881
        %v904 = vmul.f32 %v530, %v881
        %v905 = vmul.f32 %v535, %v881
        %v906 = vmul.f32 %v540, %v881
        %v907 = vmul.f32 %v545, %v881
        %v908 = vmul.f32 %v550, %v881
        %v909 = vmul.f32 %v555, %v881
        %v910 = vmul.f32 %v560, %v881
        %v911 = vmul.f32 %v565, %v881
        %v912 = vmul.f32 %v570, %v881
        %v913 = vmul.f32 %v575, %v881
        %v914 = vmul.f32 %v580, %v881
        %v915 = vmul.f32 %v585, %v881
        %v916 = vmul.f32 %v590, %v881
        %v917 = vmul.f32 %v595, %v881
        %v918 = vmul.f32 %v600, %v881
        %v919 = vmul.f32 %v605, %v881
        %v920 = vmul.f32 %v610, %v881
        %v921 = vmul.f32 %v615, %v881
        %v922 = vmul.f32 %v620, %v881
        %v923 = vmul.f32 %v625, %v881
        %v924 = vmul.f32 %v630, %v881
        %v925 = vmul.f32 %v635, %v881
        %v926 = vmul.f32 %v640, %v881
        %v927 = vmul.f32 %v645, %v881
        %v928 = vmul.f32 %v650, %v881
        %v929 = vmul.f32 %v655, %v881
        %v930 = vmul.f32 %v660, %v881
        %v931 = vmul.f32 %v665, %v881
        %v932 = vmul.f32 %v670, %v881
        %v933 = vmul.f32 %v675, %v881
        %v934 = vmul.f32 %v680, %v881
        %v935 = vmul.f32 %v685, %v881
        %v936 = vmul.f32 %v690, %v881
        %v937 = vmul.f32 %v695, %v881
        %v938 = vmul.f32 %v700, %v881
        %v939 = vmul.f32 %v705, %v881
        %v940 = vmul.f32 %v710, %v881
        %v941 = vmul.f32 %v715, %v881
        %v942 = vmul.f32 %v720, %v881
        %v943 = vmul.f32 %v725, %v881
        %v944 = vmul.f32 %v730, %v881
        %v945 = vmul.f32 %v735, %v881
        %v946 = vmul.f32 %v740, %v881
        %v947 = vmul.f32 %v745, %v881
        %v948 = vmul.f32 %v750, %v881
        %v949 = vmul.f32 %v755, %v881
        %v950 = vmul.f32 %v760, %v881
        %v951 = vmul.f32 %v765, %v881
        %v952 = vmul.f32 %v770, %v881
        %v953 = vmul.f32 %v775, %v881
        %v954 = vmul.f32 %v780, %v881
        %v955 = vmul.f32 %v785, %v881
        %v956 = vmul.f32 %v790, %v881
        %v957 = vmul.f32 %v795, %v881
        %v958 = vmul.f32 %v800, %v881
        %v959 = vmul.f32 %v805, %v881
        %v960 = vmul.f32 %v810, %v881
        %v961 = vmul.f32 %v815, %v881
        %v962 = vmul.f32 %v820, %v881
        %v963 = vmul.f32 %v825, %v881
        %v964 = vmul.f32 %v830, %v881
        %v965 = vmul.f32 %v835, %v881
        %v966 = vmul.f32 %v840, %v881
        %v967 = vmul.f32 %v845, %v881
        %v968 = vmul.f32 %v850, %v881
        %v969 = vmul.f32 %v855, %v881
        %v970 = vmul.f32 %v860, %v881
        %v971 = vmul.f32 %v865, %v881
        %v972 = vmul.f32 %v870, %v881
        %v973 = vmul.f32 %v875, %v881
        %v974 = vld [vmem:[%s329 + $0x1] sm:$0xff]
        %v975 = vld [vmem:[%s329 + $0x9] sm:$0xff]
        %v976 = vld [vmem:[%s329 + $0x11] sm:$0xff]
        %v977 = vld [vmem:[%s329 + $0x19] sm:$0xff]
        %v978 = vld [vmem:[%s329 + $0x21] sm:$0xff]
        %v979 = vld [vmem:[%s329 + $0x29] sm:$0xff]
        %v980 = vld [vmem:[%s329 + $0x31] sm:$0xff]
        %v981 = vld [vmem:[%s329 + $0x39] sm:$0xff]
        %v982 = vld [vmem:[%s329 + $0x41] sm:$0xff]
        %v983 = vld [vmem:[%s329 + $0x49] sm:$0xff]
        %v984 = vld [vmem:[%s329 + $0x51] sm:$0xff]
        %v985 = vld [vmem:[%s329 + $0x59] sm:$0xff]
        %v986 = vld [vmem:[%s329 + $0x61] sm:$0xff]
        %v987 = vld [vmem:[%s329 + $0x69] sm:$0xff]
        %v988 = vld [vmem:[%s329 + $0x71] sm:$0xff]
        %v989 = vld [vmem:[%s329 + $0x79] sm:$0xff]
        %v990 = vld [vmem:[%s329 + $0x81] sm:$0xff]
        %v991 = vld [vmem:[%s329 + $0x89] sm:$0xff]
        %v992 = vld [vmem:[%s329 + $0x91] sm:$0xff]
        %v993 = vld [vmem:[%s329 + $0x99] sm:$0xff]
        %v994 = vld [vmem:[%s329 + $0xa1] sm:$0xff]
        %v995 = vld [vmem:[%s329 + $0xa9] sm:$0xff]
        %v996 = vld [vmem:[%s329 + $0xb1] sm:$0xff]
        %v997 = vld [vmem:[%s329 + $0xb9] sm:$0xff]
        %v998 = vld [vmem:[%s329 + $0xc1] sm:$0xff]
        %v999 = vld [vmem:[%s329 + $0xc9] sm:$0xff]
        %v1000 = vld [vmem:[%s329 + $0xd1] sm:$0xff]
        %v1001 = vld [vmem:[%s329 + $0xd9] sm:$0xff]
        %v1002 = vld [vmem:[%s329 + $0xe1] sm:$0xff]
        %v1003 = vld [vmem:[%s329 + $0xe9] sm:$0xff]
        %v1004 = vld [vmem:[%s329 + $0xf1] sm:$0xff]
        %v1005 = vld [vmem:[%s329 + $0xf9] sm:$0xff]
        %v1006 = vld [vmem:[%s329 + $0x101] sm:$0xff]
        %v1007 = vld [vmem:[%s329 + $0x109] sm:$0xff]
        %v1008 = vld [vmem:[%s329 + $0x111] sm:$0xff]
        %v1009 = vld [vmem:[%s329 + $0x119] sm:$0xff]
        %v1010 = vld [vmem:[%s329 + $0x121] sm:$0xff]
        %v1011 = vld [vmem:[%s329 + $0x129] sm:$0xff]
        %v1012 = vld [vmem:[%s329 + $0x131] sm:$0xff]
        %v1013 = vld [vmem:[%s329 + $0x139] sm:$0xff]
        %v1014 = vld [vmem:[%s329 + $0x141] sm:$0xff]
        %v1015 = vld [vmem:[%s329 + $0x149] sm:$0xff]
        %v1016 = vld [vmem:[%s329 + $0x151] sm:$0xff]
        %v1017 = vld [vmem:[%s329 + $0x159] sm:$0xff]
        %v1018 = vld [vmem:[%s329 + $0x161] sm:$0xff]
        %v1019 = vld [vmem:[%s329 + $0x169] sm:$0xff]
        %v1020 = vld [vmem:[%s329 + $0x171] sm:$0xff]
        %v1021 = vld [vmem:[%s329 + $0x179] sm:$0xff]
        %v1022 = vld [vmem:[%s329 + $0x181] sm:$0xff]
        %v1023 = vld [vmem:[%s329 + $0x189] sm:$0xff]
        %v1024 = vld [vmem:[%s329 + $0x191] sm:$0xff]
        %v1025 = vld [vmem:[%s329 + $0x199] sm:$0xff]
        %v1026 = vld [vmem:[%s329 + $0x1a1] sm:$0xff]
        %v1027 = vld [vmem:[%s329 + $0x1a9] sm:$0xff]
        %v1028 = vld [vmem:[%s329 + $0x1b1] sm:$0xff]
        %v1029 = vld [vmem:[%s329 + $0x1b9] sm:$0xff]
        %v1030 = vld [vmem:[%s329 + $0x1c1] sm:$0xff]
        %v1031 = vld [vmem:[%s329 + $0x1c9] sm:$0xff]
        %v1032 = vld [vmem:[%s329 + $0x1d1] sm:$0xff]
        %v1033 = vld [vmem:[%s329 + $0x1d9] sm:$0xff]
        %v1034 = vld [vmem:[%s329 + $0x1e1] sm:$0xff]
        %v1035 = vld [vmem:[%s329 + $0x1e9] sm:$0xff]
        %v1036 = vld [vmem:[%s329 + $0x1f1] sm:$0xff]
        %v1037 = vld [vmem:[%s329 + $0x1f9] sm:$0xff]
        %v1038 = vld [vmem:[%s329 + $0x201] sm:$0xff]
        %v1039 = vld [vmem:[%s329 + $0x209] sm:$0xff]
        %v1040 = vld [vmem:[%s329 + $0x211] sm:$0xff]
        %v1041 = vld [vmem:[%s329 + $0x219] sm:$0xff]
        %v1042 = vld [vmem:[%s329 + $0x221] sm:$0xff]
        %v1043 = vld [vmem:[%s329 + $0x229] sm:$0xff]
        %v1044 = vld [vmem:[%s329 + $0x231] sm:$0xff]
        %v1045 = vld [vmem:[%s329 + $0x239] sm:$0xff]
        %v1046 = vld [vmem:[%s329 + $0x241] sm:$0xff]
        %v1047 = vld [vmem:[%s329 + $0x249] sm:$0xff]
        %v1048 = vld [vmem:[%s329 + $0x251] sm:$0xff]
        %v1049 = vld [vmem:[%s329 + $0x259] sm:$0xff]
        %v1050 = vld [vmem:[%s329 + $0x261] sm:$0xff]
        %v1051 = vld [vmem:[%s329 + $0x269] sm:$0xff]
        %v1052 = vld [vmem:[%s329 + $0x271] sm:$0xff]
        %v1053 = vld [vmem:[%s329 + $0x279] sm:$0xff]
        %v1054 = vld [vmem:[%s329 + $0x281] sm:$0xff]
        %v1055 = vld [vmem:[%s329 + $0x289] sm:$0xff]
        %v1056 = vld [vmem:[%s329 + $0x291] sm:$0xff]
        %v1057 = vld [vmem:[%s329 + $0x299] sm:$0xff]
        %v1058 = vld [vmem:[%s329 + $0x2a1] sm:$0xff]
        %v1059 = vld [vmem:[%s329 + $0x2a9] sm:$0xff]
        %v1060 = vld [vmem:[%s329 + $0x2b1] sm:$0xff]
        %v1061 = vld [vmem:[%s329 + $0x2b9] sm:$0xff]
        %v1062 = vld [vmem:[%s329 + $0x2c1] sm:$0xff]
        %v1063 = vld [vmem:[%s329 + $0x2c9] sm:$0xff]
        %v1064 = vld [vmem:[%s329 + $0x2d1] sm:$0x3f]
        %s1065 = scalar_lea.vmem %s1, 1
        %v1066 = vld [vmem:[%s1065] sm:$0x1]
        %1068 = vset.pattern.permute.xlu0 0
        %1069 = vperm.xlu0 %1068, %v974
        %v1070 = vpop.permute.xlu0 %1069
        %1073 = vset.pattern.permute.xlu0 0
        %1074 = vperm.xlu0 %1073, %v975
        %v1075 = vpop.permute.xlu0 %1074
        %1078 = vset.pattern.permute.xlu0 0
        %1079 = vperm.xlu0 %1078, %v976
        %v1080 = vpop.permute.xlu0 %1079
        %1083 = vset.pattern.permute.xlu0 0
        %1084 = vperm.xlu0 %1083, %v977
        %v1085 = vpop.permute.xlu0 %1084
        %1088 = vset.pattern.permute.xlu0 0
        %1089 = vperm.xlu0 %1088, %v978
        %v1090 = vpop.permute.xlu0 %1089
        %1093 = vset.pattern.permute.xlu0 0
        %1094 = vperm.xlu0 %1093, %v979
        %v1095 = vpop.permute.xlu0 %1094
        %1098 = vset.pattern.permute.xlu0 0
        %1099 = vperm.xlu0 %1098, %v980
        %v1100 = vpop.permute.xlu0 %1099
        %1103 = vset.pattern.permute.xlu0 0
        %1104 = vperm.xlu0 %1103, %v981
        %v1105 = vpop.permute.xlu0 %1104
        %1108 = vset.pattern.permute.xlu0 0
        %1109 = vperm.xlu0 %1108, %v982
        %v1110 = vpop.permute.xlu0 %1109
        %1113 = vset.pattern.permute.xlu0 0
        %1114 = vperm.xlu0 %1113, %v983
        %v1115 = vpop.permute.xlu0 %1114
        %1118 = vset.pattern.permute.xlu0 0
        %1119 = vperm.xlu0 %1118, %v984
        %v1120 = vpop.permute.xlu0 %1119
        %1123 = vset.pattern.permute.xlu0 0
        %1124 = vperm.xlu0 %1123, %v985
        %v1125 = vpop.permute.xlu0 %1124
        %1128 = vset.pattern.permute.xlu0 0
        %1129 = vperm.xlu0 %1128, %v986
        %v1130 = vpop.permute.xlu0 %1129
        %1133 = vset.pattern.permute.xlu0 0
        %1134 = vperm.xlu0 %1133, %v987
        %v1135 = vpop.permute.xlu0 %1134
        %1138 = vset.pattern.permute.xlu0 0
        %1139 = vperm.xlu0 %1138, %v988
        %v1140 = vpop.permute.xlu0 %1139
        %1143 = vset.pattern.permute.xlu0 0
        %1144 = vperm.xlu0 %1143, %v989
        %v1145 = vpop.permute.xlu0 %1144
        %1148 = vset.pattern.permute.xlu0 0
        %1149 = vperm.xlu0 %1148, %v990
        %v1150 = vpop.permute.xlu0 %1149
        %1153 = vset.pattern.permute.xlu0 0
        %1154 = vperm.xlu0 %1153, %v991
        %v1155 = vpop.permute.xlu0 %1154
        %1158 = vset.pattern.permute.xlu0 0
        %1159 = vperm.xlu0 %1158, %v992
        %v1160 = vpop.permute.xlu0 %1159
        %1163 = vset.pattern.permute.xlu0 0
        %1164 = vperm.xlu0 %1163, %v993
        %v1165 = vpop.permute.xlu0 %1164
        %1168 = vset.pattern.permute.xlu0 0
        %1169 = vperm.xlu0 %1168, %v994
        %v1170 = vpop.permute.xlu0 %1169
        %1173 = vset.pattern.permute.xlu0 0
        %1174 = vperm.xlu0 %1173, %v995
        %v1175 = vpop.permute.xlu0 %1174
        %1178 = vset.pattern.permute.xlu0 0
        %1179 = vperm.xlu0 %1178, %v996
        %v1180 = vpop.permute.xlu0 %1179
        %1183 = vset.pattern.permute.xlu0 0
        %1184 = vperm.xlu0 %1183, %v997
        %v1185 = vpop.permute.xlu0 %1184
        %1188 = vset.pattern.permute.xlu0 0
        %1189 = vperm.xlu0 %1188, %v998
        %v1190 = vpop.permute.xlu0 %1189
        %1193 = vset.pattern.permute.xlu0 0
        %1194 = vperm.xlu0 %1193, %v999
        %v1195 = vpop.permute.xlu0 %1194
        %1198 = vset.pattern.permute.xlu0 0
        %1199 = vperm.xlu0 %1198, %v1000
        %v1200 = vpop.permute.xlu0 %1199
        %1203 = vset.pattern.permute.xlu0 0
        %1204 = vperm.xlu0 %1203, %v1001
        %v1205 = vpop.permute.xlu0 %1204
        %1208 = vset.pattern.permute.xlu0 0
        %1209 = vperm.xlu0 %1208, %v1002
        %v1210 = vpop.permute.xlu0 %1209
        %1213 = vset.pattern.permute.xlu0 0
        %1214 = vperm.xlu0 %1213, %v1003
        %v1215 = vpop.permute.xlu0 %1214
        %1218 = vset.pattern.permute.xlu0 0
        %1219 = vperm.xlu0 %1218, %v1004
        %v1220 = vpop.permute.xlu0 %1219
        %1223 = vset.pattern.permute.xlu0 0
        %1224 = vperm.xlu0 %1223, %v1005
        %v1225 = vpop.permute.xlu0 %1224
        %1228 = vset.pattern.permute.xlu0 0
        %1229 = vperm.xlu0 %1228, %v1006
        %v1230 = vpop.permute.xlu0 %1229
        %1233 = vset.pattern.permute.xlu0 0
        %1234 = vperm.xlu0 %1233, %v1007
        %v1235 = vpop.permute.xlu0 %1234
        %1238 = vset.pattern.permute.xlu0 0
        %1239 = vperm.xlu0 %1238, %v1008
        %v1240 = vpop.permute.xlu0 %1239
        %1243 = vset.pattern.permute.xlu0 0
        %1244 = vperm.xlu0 %1243, %v1009
        %v1245 = vpop.permute.xlu0 %1244
        %1248 = vset.pattern.permute.xlu0 0
        %1249 = vperm.xlu0 %1248, %v1010
        %v1250 = vpop.permute.xlu0 %1249
        %1253 = vset.pattern.permute.xlu0 0
        %1254 = vperm.xlu0 %1253, %v1011
        %v1255 = vpop.permute.xlu0 %1254
        %1258 = vset.pattern.permute.xlu0 0
        %1259 = vperm.xlu0 %1258, %v1012
        %v1260 = vpop.permute.xlu0 %1259
        %1263 = vset.pattern.permute.xlu0 0
        %1264 = vperm.xlu0 %1263, %v1013
        %v1265 = vpop.permute.xlu0 %1264
        %1268 = vset.pattern.permute.xlu0 0
        %1269 = vperm.xlu0 %1268, %v1014
        %v1270 = vpop.permute.xlu0 %1269
        %1273 = vset.pattern.permute.xlu0 0
        %1274 = vperm.xlu0 %1273, %v1015
        %v1275 = vpop.permute.xlu0 %1274
        %1278 = vset.pattern.permute.xlu0 0
        %1279 = vperm.xlu0 %1278, %v1016
        %v1280 = vpop.permute.xlu0 %1279
        %1283 = vset.pattern.permute.xlu0 0
        %1284 = vperm.xlu0 %1283, %v1017
        %v1285 = vpop.permute.xlu0 %1284
        %1288 = vset.pattern.permute.xlu0 0
        %1289 = vperm.xlu0 %1288, %v1018
        %v1290 = vpop.permute.xlu0 %1289
        %1293 = vset.pattern.permute.xlu0 0
        %1294 = vperm.xlu0 %1293, %v1019
        %v1295 = vpop.permute.xlu0 %1294
        %1298 = vset.pattern.permute.xlu0 0
        %1299 = vperm.xlu0 %1298, %v1020
        %v1300 = vpop.permute.xlu0 %1299
        %1303 = vset.pattern.permute.xlu0 0
        %1304 = vperm.xlu0 %1303, %v1021
        %v1305 = vpop.permute.xlu0 %1304
        %1308 = vset.pattern.permute.xlu0 0
        %1309 = vperm.xlu0 %1308, %v1022
        %v1310 = vpop.permute.xlu0 %1309
        %1313 = vset.pattern.permute.xlu0 0
        %1314 = vperm.xlu0 %1313, %v1023
        %v1315 = vpop.permute.xlu0 %1314
        %1318 = vset.pattern.permute.xlu0 0
        %1319 = vperm.xlu0 %1318, %v1024
        %v1320 = vpop.permute.xlu0 %1319
        %1323 = vset.pattern.permute.xlu0 0
        %1324 = vperm.xlu0 %1323, %v1025
        %v1325 = vpop.permute.xlu0 %1324
        %1328 = vset.pattern.permute.xlu0 0
        %1329 = vperm.xlu0 %1328, %v1026
        %v1330 = vpop.permute.xlu0 %1329
        %1333 = vset.pattern.permute.xlu0 0
        %1334 = vperm.xlu0 %1333, %v1027
        %v1335 = vpop.permute.xlu0 %1334
        %1338 = vset.pattern.permute.xlu0 0
        %1339 = vperm.xlu0 %1338, %v1028
        %v1340 = vpop.permute.xlu0 %1339
        %1343 = vset.pattern.permute.xlu0 0
        %1344 = vperm.xlu0 %1343, %v1029
        %v1345 = vpop.permute.xlu0 %1344
        %1348 = vset.pattern.permute.xlu0 0
        %1349 = vperm.xlu0 %1348, %v1030
        %v1350 = vpop.permute.xlu0 %1349
        %1353 = vset.pattern.permute.xlu0 0
        %1354 = vperm.xlu0 %1353, %v1031
        %v1355 = vpop.permute.xlu0 %1354
        %1358 = vset.pattern.permute.xlu0 0
        %1359 = vperm.xlu0 %1358, %v1032
        %v1360 = vpop.permute.xlu0 %1359
        %1363 = vset.pattern.permute.xlu0 0
        %1364 = vperm.xlu0 %1363, %v1033
        %v1365 = vpop.permute.xlu0 %1364
        %1368 = vset.pattern.permute.xlu0 0
        %1369 = vperm.xlu0 %1368, %v1034
        %v1370 = vpop.permute.xlu0 %1369
        %1373 = vset.pattern.permute.xlu0 0
        %1374 = vperm.xlu0 %1373, %v1035
        %v1375 = vpop.permute.xlu0 %1374
        %1378 = vset.pattern.permute.xlu0 0
        %1379 = vperm.xlu0 %1378, %v1036
        %v1380 = vpop.permute.xlu0 %1379
        %1383 = vset.pattern.permute.xlu0 0
        %1384 = vperm.xlu0 %1383, %v1037
        %v1385 = vpop.permute.xlu0 %1384
        %1388 = vset.pattern.permute.xlu0 0
        %1389 = vperm.xlu0 %1388, %v1038
        %v1390 = vpop.permute.xlu0 %1389
        %1393 = vset.pattern.permute.xlu0 0
        %1394 = vperm.xlu0 %1393, %v1039
        %v1395 = vpop.permute.xlu0 %1394
        %1398 = vset.pattern.permute.xlu0 0
        %1399 = vperm.xlu0 %1398, %v1040
        %v1400 = vpop.permute.xlu0 %1399
        %1403 = vset.pattern.permute.xlu0 0
        %1404 = vperm.xlu0 %1403, %v1041
        %v1405 = vpop.permute.xlu0 %1404
        %1408 = vset.pattern.permute.xlu0 0
        %1409 = vperm.xlu0 %1408, %v1042
        %v1410 = vpop.permute.xlu0 %1409
        %1413 = vset.pattern.permute.xlu0 0
        %1414 = vperm.xlu0 %1413, %v1043
        %v1415 = vpop.permute.xlu0 %1414
        %1418 = vset.pattern.permute.xlu0 0
        %1419 = vperm.xlu0 %1418, %v1044
        %v1420 = vpop.permute.xlu0 %1419
        %1423 = vset.pattern.permute.xlu0 0
        %1424 = vperm.xlu0 %1423, %v1045
        %v1425 = vpop.permute.xlu0 %1424
        %1428 = vset.pattern.permute.xlu0 0
        %1429 = vperm.xlu0 %1428, %v1046
        %v1430 = vpop.permute.xlu0 %1429
        %1433 = vset.pattern.permute.xlu0 0
        %1434 = vperm.xlu0 %1433, %v1047
        %v1435 = vpop.permute.xlu0 %1434
        %1438 = vset.pattern.permute.xlu0 0
        %1439 = vperm.xlu0 %1438, %v1048
        %v1440 = vpop.permute.xlu0 %1439
        %1443 = vset.pattern.permute.xlu0 0
        %1444 = vperm.xlu0 %1443, %v1049
        %v1445 = vpop.permute.xlu0 %1444
        %1448 = vset.pattern.permute.xlu0 0
        %1449 = vperm.xlu0 %1448, %v1050
        %v1450 = vpop.permute.xlu0 %1449
        %1453 = vset.pattern.permute.xlu0 0
        %1454 = vperm.xlu0 %1453, %v1051
        %v1455 = vpop.permute.xlu0 %1454
        %1458 = vset.pattern.permute.xlu0 0
        %1459 = vperm.xlu0 %1458, %v1052
        %v1460 = vpop.permute.xlu0 %1459
        %1463 = vset.pattern.permute.xlu0 0
        %1464 = vperm.xlu0 %1463, %v1053
        %v1465 = vpop.permute.xlu0 %1464
        %1468 = vset.pattern.permute.xlu0 0
        %1469 = vperm.xlu0 %1468, %v1054
        %v1470 = vpop.permute.xlu0 %1469
        %1473 = vset.pattern.permute.xlu0 0
        %1474 = vperm.xlu0 %1473, %v1055
        %v1475 = vpop.permute.xlu0 %1474
        %1478 = vset.pattern.permute.xlu0 0
        %1479 = vperm.xlu0 %1478, %v1056
        %v1480 = vpop.permute.xlu0 %1479
        %1483 = vset.pattern.permute.xlu0 0
        %1484 = vperm.xlu0 %1483, %v1057
        %v1485 = vpop.permute.xlu0 %1484
        %1488 = vset.pattern.permute.xlu0 0
        %1489 = vperm.xlu0 %1488, %v1058
        %v1490 = vpop.permute.xlu0 %1489
        %1493 = vset.pattern.permute.xlu0 0
        %1494 = vperm.xlu0 %1493, %v1059
        %v1495 = vpop.permute.xlu0 %1494
        %1498 = vset.pattern.permute.xlu0 0
        %1499 = vperm.xlu0 %1498, %v1060
        %v1500 = vpop.permute.xlu0 %1499
        %1503 = vset.pattern.permute.xlu0 0
        %1504 = vperm.xlu0 %1503, %v1061
        %v1505 = vpop.permute.xlu0 %1504
        %1508 = vset.pattern.permute.xlu0 0
        %1509 = vperm.xlu0 %1508, %v1062
        %v1510 = vpop.permute.xlu0 %1509
        %1513 = vset.pattern.permute.xlu0 0
        %1514 = vperm.xlu0 %1513, %v1063
        %v1515 = vpop.permute.xlu0 %1514
        %1518 = vset.pattern.permute.xlu0 0
        %1519 = vperm.xlu0 %1518, %v1064
        %v1520 = vpop.permute.xlu0 %1519
        %v1523 = vlaneseq
        %v1524 = vshrl.u32 %v1523, 7
        %v1525 = vsub.s32 0, %v1524
        %v1526 = vrot.slane %v1066, %v1525
        %v1528 = vmul.f32 %v1070, %v1526
        %v1529 = vmul.f32 %v1075, %v1526
        %v1530 = vmul.f32 %v1080, %v1526
        %v1531 = vmul.f32 %v1085, %v1526
        %v1532 = vmul.f32 %v1090, %v1526
        %v1533 = vmul.f32 %v1095, %v1526
        %v1534 = vmul.f32 %v1100, %v1526
        %v1535 = vmul.f32 %v1105, %v1526
        %v1536 = vmul.f32 %v1110, %v1526
        %v1537 = vmul.f32 %v1115, %v1526
        %v1538 = vmul.f32 %v1120, %v1526
        %v1539 = vmul.f32 %v1125, %v1526
        %v1540 = vmul.f32 %v1130, %v1526
        %v1541 = vmul.f32 %v1135, %v1526
        %v1542 = vmul.f32 %v1140, %v1526
        %v1543 = vmul.f32 %v1145, %v1526
        %v1544 = vmul.f32 %v1150, %v1526
        %v1545 = vmul.f32 %v1155, %v1526
        %v1546 = vmul.f32 %v1160, %v1526
        %v1547 = vmul.f32 %v1165, %v1526
        %v1548 = vmul.f32 %v1170, %v1526
        %v1549 = vmul.f32 %v1175, %v1526
        %v1550 = vmul.f32 %v1180, %v1526
        %v1551 = vmul.f32 %v1185, %v1526
        %v1552 = vmul.f32 %v1190, %v1526
        %v1553 = vmul.f32 %v1195, %v1526
        %v1554 = vmul.f32 %v1200, %v1526
        %v1555 = vmul.f32 %v1205, %v1526
        %v1556 = vmul.f32 %v1210, %v1526
        %v1557 = vmul.f32 %v1215, %v1526
        %v1558 = vmul.f32 %v1220, %v1526
        %v1559 = vmul.f32 %v1225, %v1526
        %v1560 = vmul.f32 %v1230, %v1526
        %v1561 = vmul.f32 %v1235, %v1526
        %v1562 = vmul.f32 %v1240, %v1526
        %v1563 = vmul.f32 %v1245, %v1526
        %v1564 = vmul.f32 %v1250, %v1526
        %v1565 = vmul.f32 %v1255, %v1526
        %v1566 = vmul.f32 %v1260, %v1526
        %v1567 = vmul.f32 %v1265, %v1526
        %v1568 = vmul.f32 %v1270, %v1526
        %v1569 = vmul.f32 %v1275, %v1526
        %v1570 = vmul.f32 %v1280, %v1526
        %v1571 = vmul.f32 %v1285, %v1526
        %v1572 = vmul.f32 %v1290, %v1526
        %v1573 = vmul.f32 %v1295, %v1526
        %v1574 = vmul.f32 %v1300, %v1526
        %v1575 = vmul.f32 %v1305, %v1526
        %v1576 = vmul.f32 %v1310, %v1526
        %v1577 = vmul.f32 %v1315, %v1526
        %v1578 = vmul.f32 %v1320, %v1526
        %v1579 = vmul.f32 %v1325, %v1526
        %v1580 = vmul.f32 %v1330, %v1526
        %v1581 = vmul.f32 %v1335, %v1526
        %v1582 = vmul.f32 %v1340, %v1526
        %v1583 = vmul.f32 %v1345, %v1526
        %v1584 = vmul.f32 %v1350, %v1526
        %v1585 = vmul.f32 %v1355, %v1526
        %v1586 = vmul.f32 %v1360, %v1526
        %v1587 = vmul.f32 %v1365, %v1526
        %v1588 = vmul.f32 %v1370, %v1526
        %v1589 = vmul.f32 %v1375, %v1526
        %v1590 = vmul.f32 %v1380, %v1526
        %v1591 = vmul.f32 %v1385, %v1526
        %v1592 = vmul.f32 %v1390, %v1526
        %v1593 = vmul.f32 %v1395, %v1526
        %v1594 = vmul.f32 %v1400, %v1526
        %v1595 = vmul.f32 %v1405, %v1526
        %v1596 = vmul.f32 %v1410, %v1526
        %v1597 = vmul.f32 %v1415, %v1526
        %v1598 = vmul.f32 %v1420, %v1526
        %v1599 = vmul.f32 %v1425, %v1526
        %v1600 = vmul.f32 %v1430, %v1526
        %v1601 = vmul.f32 %v1435, %v1526
        %v1602 = vmul.f32 %v1440, %v1526
        %v1603 = vmul.f32 %v1445, %v1526
        %v1604 = vmul.f32 %v1450, %v1526
        %v1605 = vmul.f32 %v1455, %v1526
        %v1606 = vmul.f32 %v1460, %v1526
        %v1607 = vmul.f32 %v1465, %v1526
        %v1608 = vmul.f32 %v1470, %v1526
        %v1609 = vmul.f32 %v1475, %v1526
        %v1610 = vmul.f32 %v1480, %v1526
        %v1611 = vmul.f32 %v1485, %v1526
        %v1612 = vmul.f32 %v1490, %v1526
        %v1613 = vmul.f32 %v1495, %v1526
        %v1614 = vmul.f32 %v1500, %v1526
        %v1615 = vmul.f32 %v1505, %v1526
        %v1616 = vmul.f32 %v1510, %v1526
        %v1617 = vmul.f32 %v1515, %v1526
        %v1618 = vmul.f32 %v1520, %v1526
        %v1619 = vadd.f32 %v883, %v1528
        %v1620 = vadd.f32 %v884, %v1529
        %v1621 = vadd.f32 %v885, %v1530
        %v1622 = vadd.f32 %v886, %v1531
        %v1623 = vadd.f32 %v887, %v1532
        %v1624 = vadd.f32 %v888, %v1533
        %v1625 = vadd.f32 %v889, %v1534
        %v1626 = vadd.f32 %v890, %v1535
        %v1627 = vadd.f32 %v891, %v1536
        %v1628 = vadd.f32 %v892, %v1537
        %v1629 = vadd.f32 %v893, %v1538
        %v1630 = vadd.f32 %v894, %v1539
        %v1631 = vadd.f32 %v895, %v1540
        %v1632 = vadd.f32 %v896, %v1541
        %v1633 = vadd.f32 %v897, %v1542
        %v1634 = vadd.f32 %v898, %v1543
        %v1635 = vadd.f32 %v899, %v1544
        %v1636 = vadd.f32 %v900, %v1545
        %v1637 = vadd.f32 %v901, %v1546
        %v1638 = vadd.f32 %v902, %v1547
        %v1639 = vadd.f32 %v903, %v1548
        %v1640 = vadd.f32 %v904, %v1549
        %v1641 = vadd.f32 %v905, %v1550
        %v1642 = vadd.f32 %v906, %v1551
        %v1643 = vadd.f32 %v907, %v1552
        %v1644 = vadd.f32 %v908, %v1553
        %v1645 = vadd.f32 %v909, %v1554
        %v1646 = vadd.f32 %v910, %v1555
        %v1647 = vadd.f32 %v911, %v1556
        %v1648 = vadd.f32 %v912, %v1557
        %v1649 = vadd.f32 %v913, %v1558
        %v1650 = vadd.f32 %v914, %v1559
        %v1651 = vadd.f32 %v915, %v1560
        %v1652 = vadd.f32 %v916, %v1561
        %v1653 = vadd.f32 %v917, %v1562
        %v1654 = vadd.f32 %v918, %v1563
        %v1655 = vadd.f32 %v919, %v1564
        %v1656 = vadd.f32 %v920, %v1565
        %v1657 = vadd.f32 %v921, %v1566
        %v1658 = vadd.f32 %v922, %v1567
        %v1659 = vadd.f32 %v923, %v1568
        %v1660 = vadd.f32 %v924, %v1569
        %v1661 = vadd.f32 %v925, %v1570
        %v1662 = vadd.f32 %v926, %v1571
        %v1663 = vadd.f32 %v927, %v1572
        %v1664 = vadd.f32 %v928, %v1573
        %v1665 = vadd.f32 %v929, %v1574
        %v1666 = vadd.f32 %v930, %v1575
        %v1667 = vadd.f32 %v931, %v1576
        %v1668 = vadd.f32 %v932, %v1577
        %v1669 = vadd.f32 %v933, %v1578
        %v1670 = vadd.f32 %v934, %v1579
        %v1671 = vadd.f32 %v935, %v1580
        %v1672 = vadd.f32 %v936, %v1581
        %v1673 = vadd.f32 %v937, %v1582
        %v1674 = vadd.f32 %v938, %v1583
        %v1675 = vadd.f32 %v939, %v1584
        %v1676 = vadd.f32 %v940, %v1585
        %v1677 = vadd.f32 %v941, %v1586
        %v1678 = vadd.f32 %v942, %v1587
        %v1679 = vadd.f32 %v943, %v1588
        %v1680 = vadd.f32 %v944, %v1589
        %v1681 = vadd.f32 %v945, %v1590
        %v1682 = vadd.f32 %v946, %v1591
        %v1683 = vadd.f32 %v947, %v1592
        %v1684 = vadd.f32 %v948, %v1593
        %v1685 = vadd.f32 %v949, %v1594
        %v1686 = vadd.f32 %v950, %v1595
        %v1687 = vadd.f32 %v951, %v1596
        %v1688 = vadd.f32 %v952, %v1597
        %v1689 = vadd.f32 %v953, %v1598
        %v1690 = vadd.f32 %v954, %v1599
        %v1691 = vadd.f32 %v955, %v1600
        %v1692 = vadd.f32 %v956, %v1601
        %v1693 = vadd.f32 %v957, %v1602
        %v1694 = vadd.f32 %v958, %v1603
        %v1695 = vadd.f32 %v959, %v1604
        %v1696 = vadd.f32 %v960, %v1605
        %v1697 = vadd.f32 %v961, %v1606
        %v1698 = vadd.f32 %v962, %v1607
        %v1699 = vadd.f32 %v963, %v1608
        %v1700 = vadd.f32 %v964, %v1609
        %v1701 = vadd.f32 %v965, %v1610
        %v1702 = vadd.f32 %v966, %v1611
        %v1703 = vadd.f32 %v967, %v1612
        %v1704 = vadd.f32 %v968, %v1613
        %v1705 = vadd.f32 %v969, %v1614
        %v1706 = vadd.f32 %v970, %v1615
        %v1707 = vadd.f32 %v971, %v1616
        %v1708 = vadd.f32 %v972, %v1617
        %v1709 = vadd.f32 %v973, %v1618
        %v1710 = vld [vmem:[%s329 + $0x2] sm:$0xff]
        %v1711 = vld [vmem:[%s329 + $0xa] sm:$0xff]
        %v1712 = vld [vmem:[%s329 + $0x12] sm:$0xff]
        %v1713 = vld [vmem:[%s329 + $0x1a] sm:$0xff]
        %v1714 = vld [vmem:[%s329 + $0x22] sm:$0xff]
        %v1715 = vld [vmem:[%s329 + $0x2a] sm:$0xff]
        %v1716 = vld [vmem:[%s329 + $0x32] sm:$0xff]
        %v1717 = vld [vmem:[%s329 + $0x3a] sm:$0xff]
        %v1718 = vld [vmem:[%s329 + $0x42] sm:$0xff]
        %v1719 = vld [vmem:[%s329 + $0x4a] sm:$0xff]
        %v1720 = vld [vmem:[%s329 + $0x52] sm:$0xff]
        %v1721 = vld [vmem:[%s329 + $0x5a] sm:$0xff]
        %v1722 = vld [vmem:[%s329 + $0x62] sm:$0xff]
        %v1723 = vld [vmem:[%s329 + $0x6a] sm:$0xff]
        %v1724 = vld [vmem:[%s329 + $0x72] sm:$0xff]
        %v1725 = vld [vmem:[%s329 + $0x7a] sm:$0xff]
        %v1726 = vld [vmem:[%s329 + $0x82] sm:$0xff]
        %v1727 = vld [vmem:[%s329 + $0x8a] sm:$0xff]
        %v1728 = vld [vmem:[%s329 + $0x92] sm:$0xff]
        %v1729 = vld [vmem:[%s329 + $0x9a] sm:$0xff]
        %v1730 = vld [vmem:[%s329 + $0xa2] sm:$0xff]
        %v1731 = vld [vmem:[%s329 + $0xaa] sm:$0xff]
        %v1732 = vld [vmem:[%s329 + $0xb2] sm:$0xff]
        %v1733 = vld [vmem:[%s329 + $0xba] sm:$0xff]
        %v1734 = vld [vmem:[%s329 + $0xc2] sm:$0xff]
        %v1735 = vld [vmem:[%s329 + $0xca] sm:$0xff]
        %v1736 = vld [vmem:[%s329 + $0xd2] sm:$0xff]
        %v1737 = vld [vmem:[%s329 + $0xda] sm:$0xff]
        %v1738 = vld [vmem:[%s329 + $0xe2] sm:$0xff]
        %v1739 = vld [vmem:[%s329 + $0xea] sm:$0xff]
        %v1740 = vld [vmem:[%s329 + $0xf2] sm:$0xff]
        %v1741 = vld [vmem:[%s329 + $0xfa] sm:$0xff]
        %v1742 = vld [vmem:[%s329 + $0x102] sm:$0xff]
        %v1743 = vld [vmem:[%s329 + $0x10a] sm:$0xff]
        %v1744 = vld [vmem:[%s329 + $0x112] sm:$0xff]
        %v1745 = vld [vmem:[%s329 + $0x11a] sm:$0xff]
        %v1746 = vld [vmem:[%s329 + $0x122] sm:$0xff]
        %v1747 = vld [vmem:[%s329 + $0x12a] sm:$0xff]
        %v1748 = vld [vmem:[%s329 + $0x132] sm:$0xff]
        %v1749 = vld [vmem:[%s329 + $0x13a] sm:$0xff]
        %v1750 = vld [vmem:[%s329 + $0x142] sm:$0xff]
        %v1751 = vld [vmem:[%s329 + $0x14a] sm:$0xff]
        %v1752 = vld [vmem:[%s329 + $0x152] sm:$0xff]
        %v1753 = vld [vmem:[%s329 + $0x15a] sm:$0xff]
        %v1754 = vld [vmem:[%s329 + $0x162] sm:$0xff]
        %v1755 = vld [vmem:[%s329 + $0x16a] sm:$0xff]
        %v1756 = vld [vmem:[%s329 + $0x172] sm:$0xff]
        %v1757 = vld [vmem:[%s329 + $0x17a] sm:$0xff]
        %v1758 = vld [vmem:[%s329 + $0x182] sm:$0xff]
        %v1759 = vld [vmem:[%s329 + $0x18a] sm:$0xff]
        %v1760 = vld [vmem:[%s329 + $0x192] sm:$0xff]
        %v1761 = vld [vmem:[%s329 + $0x19a] sm:$0xff]
        %v1762 = vld [vmem:[%s329 + $0x1a2] sm:$0xff]
        %v1763 = vld [vmem:[%s329 + $0x1aa] sm:$0xff]
        %v1764 = vld [vmem:[%s329 + $0x1b2] sm:$0xff]
        %v1765 = vld [vmem:[%s329 + $0x1ba] sm:$0xff]
        %v1766 = vld [vmem:[%s329 + $0x1c2] sm:$0xff]
        %v1767 = vld [vmem:[%s329 + $0x1ca] sm:$0xff]
        %v1768 = vld [vmem:[%s329 + $0x1d2] sm:$0xff]
        %v1769 = vld [vmem:[%s329 + $0x1da] sm:$0xff]
        %v1770 = vld [vmem:[%s329 + $0x1e2] sm:$0xff]
        %v1771 = vld [vmem:[%s329 + $0x1ea] sm:$0xff]
        %v1772 = vld [vmem:[%s329 + $0x1f2] sm:$0xff]
        %v1773 = vld [vmem:[%s329 + $0x1fa] sm:$0xff]
        %v1774 = vld [vmem:[%s329 + $0x202] sm:$0xff]
        %v1775 = vld [vmem:[%s329 + $0x20a] sm:$0xff]
        %v1776 = vld [vmem:[%s329 + $0x212] sm:$0xff]
        %v1777 = vld [vmem:[%s329 + $0x21a] sm:$0xff]
        %v1778 = vld [vmem:[%s329 + $0x222] sm:$0xff]
        %v1779 = vld [vmem:[%s329 + $0x22a] sm:$0xff]
        %v1780 = vld [vmem:[%s329 + $0x232] sm:$0xff]
        %v1781 = vld [vmem:[%s329 + $0x23a] sm:$0xff]
        %v1782 = vld [vmem:[%s329 + $0x242] sm:$0xff]
        %v1783 = vld [vmem:[%s329 + $0x24a] sm:$0xff]
        %v1784 = vld [vmem:[%s329 + $0x252] sm:$0xff]
        %v1785 = vld [vmem:[%s329 + $0x25a] sm:$0xff]
        %v1786 = vld [vmem:[%s329 + $0x262] sm:$0xff]
        %v1787 = vld [vmem:[%s329 + $0x26a] sm:$0xff]
        %v1788 = vld [vmem:[%s329 + $0x272] sm:$0xff]
        %v1789 = vld [vmem:[%s329 + $0x27a] sm:$0xff]
        %v1790 = vld [vmem:[%s329 + $0x282] sm:$0xff]
        %v1791 = vld [vmem:[%s329 + $0x28a] sm:$0xff]
        %v1792 = vld [vmem:[%s329 + $0x292] sm:$0xff]
        %v1793 = vld [vmem:[%s329 + $0x29a] sm:$0xff]
        %v1794 = vld [vmem:[%s329 + $0x2a2] sm:$0xff]
        %v1795 = vld [vmem:[%s329 + $0x2aa] sm:$0xff]
        %v1796 = vld [vmem:[%s329 + $0x2b2] sm:$0xff]
        %v1797 = vld [vmem:[%s329 + $0x2ba] sm:$0xff]
        %v1798 = vld [vmem:[%s329 + $0x2c2] sm:$0xff]
        %v1799 = vld [vmem:[%s329 + $0x2ca] sm:$0xff]
        %v1800 = vld [vmem:[%s329 + $0x2d2] sm:$0x3f]
        %s1801 = scalar_lea.vmem %s1, 2
        %v1802 = vld [vmem:[%s1801] sm:$0x1]
        %1804 = vset.pattern.permute.xlu0 0
        %1805 = vperm.xlu0 %1804, %v1710
        %v1806 = vpop.permute.xlu0 %1805
        %1809 = vset.pattern.permute.xlu0 0
        %1810 = vperm.xlu0 %1809, %v1711
        %v1811 = vpop.permute.xlu0 %1810
        %1814 = vset.pattern.permute.xlu0 0
        %1815 = vperm.xlu0 %1814, %v1712
        %v1816 = vpop.permute.xlu0 %1815
        %1819 = vset.pattern.permute.xlu0 0
        %1820 = vperm.xlu0 %1819, %v1713
        %v1821 = vpop.permute.xlu0 %1820
        %1824 = vset.pattern.permute.xlu0 0
        %1825 = vperm.xlu0 %1824, %v1714
        %v1826 = vpop.permute.xlu0 %1825
        %1829 = vset.pattern.permute.xlu0 0
        %1830 = vperm.xlu0 %1829, %v1715
        %v1831 = vpop.permute.xlu0 %1830
        %1834 = vset.pattern.permute.xlu0 0
        %1835 = vperm.xlu0 %1834, %v1716
        %v1836 = vpop.permute.xlu0 %1835
        %1839 = vset.pattern.permute.xlu0 0
        %1840 = vperm.xlu0 %1839, %v1717
        %v1841 = vpop.permute.xlu0 %1840
        %1844 = vset.pattern.permute.xlu0 0
        %1845 = vperm.xlu0 %1844, %v1718
        %v1846 = vpop.permute.xlu0 %1845
        %1849 = vset.pattern.permute.xlu0 0
        %1850 = vperm.xlu0 %1849, %v1719
        %v1851 = vpop.permute.xlu0 %1850
        %1854 = vset.pattern.permute.xlu0 0
        %1855 = vperm.xlu0 %1854, %v1720
        %v1856 = vpop.permute.xlu0 %1855
        %1859 = vset.pattern.permute.xlu0 0
        %1860 = vperm.xlu0 %1859, %v1721
        %v1861 = vpop.permute.xlu0 %1860
        %1864 = vset.pattern.permute.xlu0 0
        %1865 = vperm.xlu0 %1864, %v1722
        %v1866 = vpop.permute.xlu0 %1865
        %1869 = vset.pattern.permute.xlu0 0
        %1870 = vperm.xlu0 %1869, %v1723
        %v1871 = vpop.permute.xlu0 %1870
        %1874 = vset.pattern.permute.xlu0 0
        %1875 = vperm.xlu0 %1874, %v1724
        %v1876 = vpop.permute.xlu0 %1875
        %1879 = vset.pattern.permute.xlu0 0
        %1880 = vperm.xlu0 %1879, %v1725
        %v1881 = vpop.permute.xlu0 %1880
        %1884 = vset.pattern.permute.xlu0 0
        %1885 = vperm.xlu0 %1884, %v1726
        %v1886 = vpop.permute.xlu0 %1885
        %1889 = vset.pattern.permute.xlu0 0
        %1890 = vperm.xlu0 %1889, %v1727
        %v1891 = vpop.permute.xlu0 %1890
        %1894 = vset.pattern.permute.xlu0 0
        %1895 = vperm.xlu0 %1894, %v1728
        %v1896 = vpop.permute.xlu0 %1895
        %1899 = vset.pattern.permute.xlu0 0
        %1900 = vperm.xlu0 %1899, %v1729
        %v1901 = vpop.permute.xlu0 %1900
        %1904 = vset.pattern.permute.xlu0 0
        %1905 = vperm.xlu0 %1904, %v1730
        %v1906 = vpop.permute.xlu0 %1905
        %1909 = vset.pattern.permute.xlu0 0
        %1910 = vperm.xlu0 %1909, %v1731
        %v1911 = vpop.permute.xlu0 %1910
        %1914 = vset.pattern.permute.xlu0 0
        %1915 = vperm.xlu0 %1914, %v1732
        %v1916 = vpop.permute.xlu0 %1915
        %1919 = vset.pattern.permute.xlu0 0
        %1920 = vperm.xlu0 %1919, %v1733
        %v1921 = vpop.permute.xlu0 %1920
        %1924 = vset.pattern.permute.xlu0 0
        %1925 = vperm.xlu0 %1924, %v1734
        %v1926 = vpop.permute.xlu0 %1925
        %1929 = vset.pattern.permute.xlu0 0
        %1930 = vperm.xlu0 %1929, %v1735
        %v1931 = vpop.permute.xlu0 %1930
        %1934 = vset.pattern.permute.xlu0 0
        %1935 = vperm.xlu0 %1934, %v1736
        %v1936 = vpop.permute.xlu0 %1935
        %1939 = vset.pattern.permute.xlu0 0
        %1940 = vperm.xlu0 %1939, %v1737
        %v1941 = vpop.permute.xlu0 %1940
        %1944 = vset.pattern.permute.xlu0 0
        %1945 = vperm.xlu0 %1944, %v1738
        %v1946 = vpop.permute.xlu0 %1945
        %1949 = vset.pattern.permute.xlu0 0
        %1950 = vperm.xlu0 %1949, %v1739
        %v1951 = vpop.permute.xlu0 %1950
        %1954 = vset.pattern.permute.xlu0 0
        %1955 = vperm.xlu0 %1954, %v1740
        %v1956 = vpop.permute.xlu0 %1955
        %1959 = vset.pattern.permute.xlu0 0
        %1960 = vperm.xlu0 %1959, %v1741
        %v1961 = vpop.permute.xlu0 %1960
        %1964 = vset.pattern.permute.xlu0 0
        %1965 = vperm.xlu0 %1964, %v1742
        %v1966 = vpop.permute.xlu0 %1965
        %1969 = vset.pattern.permute.xlu0 0
        %1970 = vperm.xlu0 %1969, %v1743
        %v1971 = vpop.permute.xlu0 %1970
        %1974 = vset.pattern.permute.xlu0 0
        %1975 = vperm.xlu0 %1974, %v1744
        %v1976 = vpop.permute.xlu0 %1975
        %1979 = vset.pattern.permute.xlu0 0
        %1980 = vperm.xlu0 %1979, %v1745
        %v1981 = vpop.permute.xlu0 %1980
        %1984 = vset.pattern.permute.xlu0 0
        %1985 = vperm.xlu0 %1984, %v1746
        %v1986 = vpop.permute.xlu0 %1985
        %1989 = vset.pattern.permute.xlu0 0
        %1990 = vperm.xlu0 %1989, %v1747
        %v1991 = vpop.permute.xlu0 %1990
        %1994 = vset.pattern.permute.xlu0 0
        %1995 = vperm.xlu0 %1994, %v1748
        %v1996 = vpop.permute.xlu0 %1995
        %1999 = vset.pattern.permute.xlu0 0
        %2000 = vperm.xlu0 %1999, %v1749
        %v2001 = vpop.permute.xlu0 %2000
        %2004 = vset.pattern.permute.xlu0 0
        %2005 = vperm.xlu0 %2004, %v1750
        %v2006 = vpop.permute.xlu0 %2005
        %2009 = vset.pattern.permute.xlu0 0
        %2010 = vperm.xlu0 %2009, %v1751
        %v2011 = vpop.permute.xlu0 %2010
        %2014 = vset.pattern.permute.xlu0 0
        %2015 = vperm.xlu0 %2014, %v1752
        %v2016 = vpop.permute.xlu0 %2015
        %2019 = vset.pattern.permute.xlu0 0
        %2020 = vperm.xlu0 %2019, %v1753
        %v2021 = vpop.permute.xlu0 %2020
        %2024 = vset.pattern.permute.xlu0 0
        %2025 = vperm.xlu0 %2024, %v1754
        %v2026 = vpop.permute.xlu0 %2025
        %2029 = vset.pattern.permute.xlu0 0
        %2030 = vperm.xlu0 %2029, %v1755
        %v2031 = vpop.permute.xlu0 %2030
        %2034 = vset.pattern.permute.xlu0 0
        %2035 = vperm.xlu0 %2034, %v1756
        %v2036 = vpop.permute.xlu0 %2035
        %2039 = vset.pattern.permute.xlu0 0
        %2040 = vperm.xlu0 %2039, %v1757
        %v2041 = vpop.permute.xlu0 %2040
        %2044 = vset.pattern.permute.xlu0 0
        %2045 = vperm.xlu0 %2044, %v1758
        %v2046 = vpop.permute.xlu0 %2045
        %2049 = vset.pattern.permute.xlu0 0
        %2050 = vperm.xlu0 %2049, %v1759
        %v2051 = vpop.permute.xlu0 %2050
        %2054 = vset.pattern.permute.xlu0 0
        %2055 = vperm.xlu0 %2054, %v1760
        %v2056 = vpop.permute.xlu0 %2055
        %2059 = vset.pattern.permute.xlu0 0
        %2060 = vperm.xlu0 %2059, %v1761
        %v2061 = vpop.permute.xlu0 %2060
        %2064 = vset.pattern.permute.xlu0 0
        %2065 = vperm.xlu0 %2064, %v1762
        %v2066 = vpop.permute.xlu0 %2065
        %2069 = vset.pattern.permute.xlu0 0
        %2070 = vperm.xlu0 %2069, %v1763
        %v2071 = vpop.permute.xlu0 %2070
        %2074 = vset.pattern.permute.xlu0 0
        %2075 = vperm.xlu0 %2074, %v1764
        %v2076 = vpop.permute.xlu0 %2075
        %2079 = vset.pattern.permute.xlu0 0
        %2080 = vperm.xlu0 %2079, %v1765
        %v2081 = vpop.permute.xlu0 %2080
        %2084 = vset.pattern.permute.xlu0 0
        %2085 = vperm.xlu0 %2084, %v1766
        %v2086 = vpop.permute.xlu0 %2085
        %2089 = vset.pattern.permute.xlu0 0
        %2090 = vperm.xlu0 %2089, %v1767
        %v2091 = vpop.permute.xlu0 %2090
        %2094 = vset.pattern.permute.xlu0 0
        %2095 = vperm.xlu0 %2094, %v1768
        %v2096 = vpop.permute.xlu0 %2095
        %2099 = vset.pattern.permute.xlu0 0
        %2100 = vperm.xlu0 %2099, %v1769
        %v2101 = vpop.permute.xlu0 %2100
        %2104 = vset.pattern.permute.xlu0 0
        %2105 = vperm.xlu0 %2104, %v1770
        %v2106 = vpop.permute.xlu0 %2105
        %2109 = vset.pattern.permute.xlu0 0
        %2110 = vperm.xlu0 %2109, %v1771
        %v2111 = vpop.permute.xlu0 %2110
        %2114 = vset.pattern.permute.xlu0 0
        %2115 = vperm.xlu0 %2114, %v1772
        %v2116 = vpop.permute.xlu0 %2115
        %2119 = vset.pattern.permute.xlu0 0
        %2120 = vperm.xlu0 %2119, %v1773
        %v2121 = vpop.permute.xlu0 %2120
        %2124 = vset.pattern.permute.xlu0 0
        %2125 = vperm.xlu0 %2124, %v1774
        %v2126 = vpop.permute.xlu0 %2125
        %2129 = vset.pattern.permute.xlu0 0
        %2130 = vperm.xlu0 %2129, %v1775
        %v2131 = vpop.permute.xlu0 %2130
        %2134 = vset.pattern.permute.xlu0 0
        %2135 = vperm.xlu0 %2134, %v1776
        %v2136 = vpop.permute.xlu0 %2135
        %2139 = vset.pattern.permute.xlu0 0
        %2140 = vperm.xlu0 %2139, %v1777
        %v2141 = vpop.permute.xlu0 %2140
        %2144 = vset.pattern.permute.xlu0 0
        %2145 = vperm.xlu0 %2144, %v1778
        %v2146 = vpop.permute.xlu0 %2145
        %2149 = vset.pattern.permute.xlu0 0
        %2150 = vperm.xlu0 %2149, %v1779
        %v2151 = vpop.permute.xlu0 %2150
        %2154 = vset.pattern.permute.xlu0 0
        %2155 = vperm.xlu0 %2154, %v1780
        %v2156 = vpop.permute.xlu0 %2155
        %2159 = vset.pattern.permute.xlu0 0
        %2160 = vperm.xlu0 %2159, %v1781
        %v2161 = vpop.permute.xlu0 %2160
        %2164 = vset.pattern.permute.xlu0 0
        %2165 = vperm.xlu0 %2164, %v1782
        %v2166 = vpop.permute.xlu0 %2165
        %2169 = vset.pattern.permute.xlu0 0
        %2170 = vperm.xlu0 %2169, %v1783
        %v2171 = vpop.permute.xlu0 %2170
        %2174 = vset.pattern.permute.xlu0 0
        %2175 = vperm.xlu0 %2174, %v1784
        %v2176 = vpop.permute.xlu0 %2175
        %2179 = vset.pattern.permute.xlu0 0
        %2180 = vperm.xlu0 %2179, %v1785
        %v2181 = vpop.permute.xlu0 %2180
        %2184 = vset.pattern.permute.xlu0 0
        %2185 = vperm.xlu0 %2184, %v1786
        %v2186 = vpop.permute.xlu0 %2185
        %2189 = vset.pattern.permute.xlu0 0
        %2190 = vperm.xlu0 %2189, %v1787
        %v2191 = vpop.permute.xlu0 %2190
        %2194 = vset.pattern.permute.xlu0 0
        %2195 = vperm.xlu0 %2194, %v1788
        %v2196 = vpop.permute.xlu0 %2195
        %2199 = vset.pattern.permute.xlu0 0
        %2200 = vperm.xlu0 %2199, %v1789
        %v2201 = vpop.permute.xlu0 %2200
        %2204 = vset.pattern.permute.xlu0 0
        %2205 = vperm.xlu0 %2204, %v1790
        %v2206 = vpop.permute.xlu0 %2205
        %2209 = vset.pattern.permute.xlu0 0
        %2210 = vperm.xlu0 %2209, %v1791
        %v2211 = vpop.permute.xlu0 %2210
        %2214 = vset.pattern.permute.xlu0 0
        %2215 = vperm.xlu0 %2214, %v1792
        %v2216 = vpop.permute.xlu0 %2215
        %2219 = vset.pattern.permute.xlu0 0
        %2220 = vperm.xlu0 %2219, %v1793
        %v2221 = vpop.permute.xlu0 %2220
        %2224 = vset.pattern.permute.xlu0 0
        %2225 = vperm.xlu0 %2224, %v1794
        %v2226 = vpop.permute.xlu0 %2225
        %2229 = vset.pattern.permute.xlu0 0
        %2230 = vperm.xlu0 %2229, %v1795
        %v2231 = vpop.permute.xlu0 %2230
        %2234 = vset.pattern.permute.xlu0 0
        %2235 = vperm.xlu0 %2234, %v1796
        %v2236 = vpop.permute.xlu0 %2235
        %2239 = vset.pattern.permute.xlu0 0
        %2240 = vperm.xlu0 %2239, %v1797
        %v2241 = vpop.permute.xlu0 %2240
        %2244 = vset.pattern.permute.xlu0 0
        %2245 = vperm.xlu0 %2244, %v1798
        %v2246 = vpop.permute.xlu0 %2245
        %2249 = vset.pattern.permute.xlu0 0
        %2250 = vperm.xlu0 %2249, %v1799
        %v2251 = vpop.permute.xlu0 %2250
        %2254 = vset.pattern.permute.xlu0 0
        %2255 = vperm.xlu0 %2254, %v1800
        %v2256 = vpop.permute.xlu0 %2255
        %v2259 = vlaneseq
        %v2260 = vshrl.u32 %v2259, 7
        %v2261 = vsub.s32 0, %v2260
        %v2262 = vrot.slane %v1802, %v2261
        %v2264 = vmul.f32 %v1806, %v2262
        %v2265 = vmul.f32 %v1811, %v2262
        %v2266 = vmul.f32 %v1816, %v2262
        %v2267 = vmul.f32 %v1821, %v2262
        %v2268 = vmul.f32 %v1826, %v2262
        %v2269 = vmul.f32 %v1831, %v2262
        %v2270 = vmul.f32 %v1836, %v2262
        %v2271 = vmul.f32 %v1841, %v2262
        %v2272 = vmul.f32 %v1846, %v2262
        %v2273 = vmul.f32 %v1851, %v2262
        %v2274 = vmul.f32 %v1856, %v2262
        %v2275 = vmul.f32 %v1861, %v2262
        %v2276 = vmul.f32 %v1866, %v2262
        %v2277 = vmul.f32 %v1871, %v2262
        %v2278 = vmul.f32 %v1876, %v2262
        %v2279 = vmul.f32 %v1881, %v2262
        %v2280 = vmul.f32 %v1886, %v2262
        %v2281 = vmul.f32 %v1891, %v2262
        %v2282 = vmul.f32 %v1896, %v2262
        %v2283 = vmul.f32 %v1901, %v2262
        %v2284 = vmul.f32 %v1906, %v2262
        %v2285 = vmul.f32 %v1911, %v2262
        %v2286 = vmul.f32 %v1916, %v2262
        %v2287 = vmul.f32 %v1921, %v2262
        %v2288 = vmul.f32 %v1926, %v2262
        %v2289 = vmul.f32 %v1931, %v2262
        %v2290 = vmul.f32 %v1936, %v2262
        %v2291 = vmul.f32 %v1941, %v2262
        %v2292 = vmul.f32 %v1946, %v2262
        %v2293 = vmul.f32 %v1951, %v2262
        %v2294 = vmul.f32 %v1956, %v2262
        %v2295 = vmul.f32 %v1961, %v2262
        %v2296 = vmul.f32 %v1966, %v2262
        %v2297 = vmul.f32 %v1971, %v2262
        %v2298 = vmul.f32 %v1976, %v2262
        %v2299 = vmul.f32 %v1981, %v2262
        %v2300 = vmul.f32 %v1986, %v2262
        %v2301 = vmul.f32 %v1991, %v2262
        %v2302 = vmul.f32 %v1996, %v2262
        %v2303 = vmul.f32 %v2001, %v2262
        %v2304 = vmul.f32 %v2006, %v2262
        %v2305 = vmul.f32 %v2011, %v2262
        %v2306 = vmul.f32 %v2016, %v2262
        %v2307 = vmul.f32 %v2021, %v2262
        %v2308 = vmul.f32 %v2026, %v2262
        %v2309 = vmul.f32 %v2031, %v2262
        %v2310 = vmul.f32 %v2036, %v2262
        %v2311 = vmul.f32 %v2041, %v2262
        %v2312 = vmul.f32 %v2046, %v2262
        %v2313 = vmul.f32 %v2051, %v2262
        %v2314 = vmul.f32 %v2056, %v2262
        %v2315 = vmul.f32 %v2061, %v2262
        %v2316 = vmul.f32 %v2066, %v2262
        %v2317 = vmul.f32 %v2071, %v2262
        %v2318 = vmul.f32 %v2076, %v2262
        %v2319 = vmul.f32 %v2081, %v2262
        %v2320 = vmul.f32 %v2086, %v2262
        %v2321 = vmul.f32 %v2091, %v2262
        %v2322 = vmul.f32 %v2096, %v2262
        %v2323 = vmul.f32 %v2101, %v2262
        %v2324 = vmul.f32 %v2106, %v2262
        %v2325 = vmul.f32 %v2111, %v2262
        %v2326 = vmul.f32 %v2116, %v2262
        %v2327 = vmul.f32 %v2121, %v2262
        %v2328 = vmul.f32 %v2126, %v2262
        %v2329 = vmul.f32 %v2131, %v2262
        %v2330 = vmul.f32 %v2136, %v2262
        %v2331 = vmul.f32 %v2141, %v2262
        %v2332 = vmul.f32 %v2146, %v2262
        %v2333 = vmul.f32 %v2151, %v2262
        %v2334 = vmul.f32 %v2156, %v2262
        %v2335 = vmul.f32 %v2161, %v2262
        %v2336 = vmul.f32 %v2166, %v2262
        %v2337 = vmul.f32 %v2171, %v2262
        %v2338 = vmul.f32 %v2176, %v2262
        %v2339 = vmul.f32 %v2181, %v2262
        %v2340 = vmul.f32 %v2186, %v2262
        %v2341 = vmul.f32 %v2191, %v2262
        %v2342 = vmul.f32 %v2196, %v2262
        %v2343 = vmul.f32 %v2201, %v2262
        %v2344 = vmul.f32 %v2206, %v2262
        %v2345 = vmul.f32 %v2211, %v2262
        %v2346 = vmul.f32 %v2216, %v2262
        %v2347 = vmul.f32 %v2221, %v2262
        %v2348 = vmul.f32 %v2226, %v2262
        %v2349 = vmul.f32 %v2231, %v2262
        %v2350 = vmul.f32 %v2236, %v2262
        %v2351 = vmul.f32 %v2241, %v2262
        %v2352 = vmul.f32 %v2246, %v2262
        %v2353 = vmul.f32 %v2251, %v2262
        %v2354 = vmul.f32 %v2256, %v2262
        %v2355 = vadd.f32 %v1619, %v2264
        %v2356 = vadd.f32 %v1620, %v2265
        %v2357 = vadd.f32 %v1621, %v2266
        %v2358 = vadd.f32 %v1622, %v2267
        %v2359 = vadd.f32 %v1623, %v2268
        %v2360 = vadd.f32 %v1624, %v2269
        %v2361 = vadd.f32 %v1625, %v2270
        %v2362 = vadd.f32 %v1626, %v2271
        %v2363 = vadd.f32 %v1627, %v2272
        %v2364 = vadd.f32 %v1628, %v2273
        %v2365 = vadd.f32 %v1629, %v2274
        %v2366 = vadd.f32 %v1630, %v2275
        %v2367 = vadd.f32 %v1631, %v2276
        %v2368 = vadd.f32 %v1632, %v2277
        %v2369 = vadd.f32 %v1633, %v2278
        %v2370 = vadd.f32 %v1634, %v2279
        %v2371 = vadd.f32 %v1635, %v2280
        %v2372 = vadd.f32 %v1636, %v2281
        %v2373 = vadd.f32 %v1637, %v2282
        %v2374 = vadd.f32 %v1638, %v2283
        %v2375 = vadd.f32 %v1639, %v2284
        %v2376 = vadd.f32 %v1640, %v2285
        %v2377 = vadd.f32 %v1641, %v2286
        %v2378 = vadd.f32 %v1642, %v2287
        %v2379 = vadd.f32 %v1643, %v2288
        %v2380 = vadd.f32 %v1644, %v2289
        %v2381 = vadd.f32 %v1645, %v2290
        %v2382 = vadd.f32 %v1646, %v2291
        %v2383 = vadd.f32 %v1647, %v2292
        %v2384 = vadd.f32 %v1648, %v2293
        %v2385 = vadd.f32 %v1649, %v2294
        %v2386 = vadd.f32 %v1650, %v2295
        %v2387 = vadd.f32 %v1651, %v2296
        %v2388 = vadd.f32 %v1652, %v2297
        %v2389 = vadd.f32 %v1653, %v2298
        %v2390 = vadd.f32 %v1654, %v2299
        %v2391 = vadd.f32 %v1655, %v2300
        %v2392 = vadd.f32 %v1656, %v2301
        %v2393 = vadd.f32 %v1657, %v2302
        %v2394 = vadd.f32 %v1658, %v2303
        %v2395 = vadd.f32 %v1659, %v2304
        %v2396 = vadd.f32 %v1660, %v2305
        %v2397 = vadd.f32 %v1661, %v2306
        %v2398 = vadd.f32 %v1662, %v2307
        %v2399 = vadd.f32 %v1663, %v2308
        %v2400 = vadd.f32 %v1664, %v2309
        %v2401 = vadd.f32 %v1665, %v2310
        %v2402 = vadd.f32 %v1666, %v2311
        %v2403 = vadd.f32 %v1667, %v2312
        %v2404 = vadd.f32 %v1668, %v2313
        %v2405 = vadd.f32 %v1669, %v2314
        %v2406 = vadd.f32 %v1670, %v2315
        %v2407 = vadd.f32 %v1671, %v2316
        %v2408 = vadd.f32 %v1672, %v2317
        %v2409 = vadd.f32 %v1673, %v2318
        %v2410 = vadd.f32 %v1674, %v2319
        %v2411 = vadd.f32 %v1675, %v2320
        %v2412 = vadd.f32 %v1676, %v2321
        %v2413 = vadd.f32 %v1677, %v2322
        %v2414 = vadd.f32 %v1678, %v2323
        %v2415 = vadd.f32 %v1679, %v2324
        %v2416 = vadd.f32 %v1680, %v2325
        %v2417 = vadd.f32 %v1681, %v2326
        %v2418 = vadd.f32 %v1682, %v2327
        %v2419 = vadd.f32 %v1683, %v2328
        %v2420 = vadd.f32 %v1684, %v2329
        %v2421 = vadd.f32 %v1685, %v2330
        %v2422 = vadd.f32 %v1686, %v2331
        %v2423 = vadd.f32 %v1687, %v2332
        %v2424 = vadd.f32 %v1688, %v2333
        %v2425 = vadd.f32 %v1689, %v2334
        %v2426 = vadd.f32 %v1690, %v2335
        %v2427 = vadd.f32 %v1691, %v2336
        %v2428 = vadd.f32 %v1692, %v2337
        %v2429 = vadd.f32 %v1693, %v2338
        %v2430 = vadd.f32 %v1694, %v2339
        %v2431 = vadd.f32 %v1695, %v2340
        %v2432 = vadd.f32 %v1696, %v2341
        %v2433 = vadd.f32 %v1697, %v2342
        %v2434 = vadd.f32 %v1698, %v2343
        %v2435 = vadd.f32 %v1699, %v2344
        %v2436 = vadd.f32 %v1700, %v2345
        %v2437 = vadd.f32 %v1701, %v2346
        %v2438 = vadd.f32 %v1702, %v2347
        %v2439 = vadd.f32 %v1703, %v2348
        %v2440 = vadd.f32 %v1704, %v2349
        %v2441 = vadd.f32 %v1705, %v2350
        %v2442 = vadd.f32 %v1706, %v2351
        %v2443 = vadd.f32 %v1707, %v2352
        %v2444 = vadd.f32 %v1708, %v2353
        %v2445 = vadd.f32 %v1709, %v2354
        %v2446 = vld [vmem:[%s329 + $0x1c] sm:$0xff]
        %v2447 = vld [vmem:[%s329 + $0x24] sm:$0xff]
        %v2448 = vld [vmem:[%s329 + $0x2c] sm:$0xff]
        %v2449 = vld [vmem:[%s329 + $0x34] sm:$0xff]
        %v2450 = vld [vmem:[%s329 + $0x3c] sm:$0xff]
        %v2451 = vld [vmem:[%s329 + $0x44] sm:$0xff]
        %v2452 = vld [vmem:[%s329 + $0x4c] sm:$0xff]
        %v2453 = vld [vmem:[%s329 + $0x54] sm:$0xff]
        %v2454 = vld [vmem:[%s329 + $0x5c] sm:$0xff]
        %v2455 = vld [vmem:[%s329 + $0x64] sm:$0xff]
        %v2456 = vld [vmem:[%s329 + $0x6c] sm:$0xff]
        %v2457 = vld [vmem:[%s329 + $0x74] sm:$0xff]
        %v2458 = vld [vmem:[%s329 + $0x7c] sm:$0xff]
        %v2459 = vld [vmem:[%s329 + $0x84] sm:$0xff]
        %v2460 = vld [vmem:[%s329 + $0x8c] sm:$0xff]
        %v2461 = vld [vmem:[%s329 + $0x94] sm:$0xff]
        %v2462 = vld [vmem:[%s329 + $0x9c] sm:$0xff]
        %v2463 = vld [vmem:[%s329 + $0xa4] sm:$0xff]
        %v2464 = vld [vmem:[%s329 + $0xac] sm:$0xff]
        %v2465 = vld [vmem:[%s329 + $0xb4] sm:$0xff]
        %v2466 = vld [vmem:[%s329 + $0xbc] sm:$0xff]
        %v2467 = vld [vmem:[%s329 + $0xc4] sm:$0xff]
        %v2468 = vld [vmem:[%s329 + $0xcc] sm:$0xff]
        %v2469 = vld [vmem:[%s329 + $0xd4] sm:$0xff]
        %v2470 = vld [vmem:[%s329 + $0xdc] sm:$0xff]
        %v2471 = vld [vmem:[%s329 + $0xe4] sm:$0xff]
        %v2472 = vld [vmem:[%s329 + $0xec] sm:$0xff]
        %v2473 = vld [vmem:[%s329 + $0xf4] sm:$0xff]
        %v2474 = vld [vmem:[%s329 + $0xfc] sm:$0xff]
        %v2475 = vld [vmem:[%s329 + $0x104] sm:$0xff]
        %v2476 = vld [vmem:[%s329 + $0x10c] sm:$0xff]
        %v2477 = vld [vmem:[%s329 + $0x114] sm:$0xff]
        %v2478 = vld [vmem:[%s329 + $0x11c] sm:$0xff]
        %v2479 = vld [vmem:[%s329 + $0x124] sm:$0xff]
        %v2480 = vld [vmem:[%s329 + $0x12c] sm:$0xff]
        %v2481 = vld [vmem:[%s329 + $0x134] sm:$0xff]
        %v2482 = vld [vmem:[%s329 + $0x13c] sm:$0xff]
        %v2483 = vld [vmem:[%s329 + $0x144] sm:$0xff]
        %v2484 = vld [vmem:[%s329 + $0x14c] sm:$0xff]
        %v2485 = vld [vmem:[%s329 + $0x154] sm:$0xff]
        %v2486 = vld [vmem:[%s329 + $0x15c] sm:$0xff]
        %v2487 = vld [vmem:[%s329 + $0x164] sm:$0xff]
        %v2488 = vld [vmem:[%s329 + $0x16c] sm:$0xff]
        %v2489 = vld [vmem:[%s329 + $0x174] sm:$0xff]
        %v2490 = vld [vmem:[%s329 + $0x17c] sm:$0xff]
        %v2491 = vld [vmem:[%s329 + $0x184] sm:$0xff]
        %v2492 = vld [vmem:[%s329 + $0x18c] sm:$0xff]
        %v2493 = vld [vmem:[%s329 + $0x194] sm:$0xff]
        %v2494 = vld [vmem:[%s329 + $0x19c] sm:$0xff]
        %v2495 = vld [vmem:[%s329 + $0x1a4] sm:$0xff]
        %v2496 = vld [vmem:[%s329 + $0x1ac] sm:$0xff]
        %v2497 = vld [vmem:[%s329 + $0x1b4] sm:$0xff]
        %v2498 = vld [vmem:[%s329 + $0x1bc] sm:$0xff]
        %v2499 = vld [vmem:[%s329 + $0x1c4] sm:$0xff]
        %v2500 = vld [vmem:[%s329 + $0x1cc] sm:$0xff]
        %v2501 = vld [vmem:[%s329 + $0x1d4] sm:$0xff]
        %v2502 = vld [vmem:[%s329 + $0x1dc] sm:$0xff]
        %v2503 = vld [vmem:[%s329 + $0x1e4] sm:$0xff]
        %v2504 = vld [vmem:[%s329 + $0x1ec] sm:$0xff]
        %v2505 = vld [vmem:[%s329 + $0x1f4] sm:$0xff]
        %v2506 = vld [vmem:[%s329 + $0x1fc] sm:$0xff]
        %v2507 = vld [vmem:[%s329 + $0x204] sm:$0xff]
        %v2508 = vld [vmem:[%s329 + $0x20c] sm:$0xff]
        %v2509 = vld [vmem:[%s329 + $0x214] sm:$0xff]
        %v2510 = vld [vmem:[%s329 + $0x21c] sm:$0xff]
        %v2511 = vld [vmem:[%s329 + $0x224] sm:$0xff]
        %v2512 = vld [vmem:[%s329 + $0x22c] sm:$0xff]
        %v2513 = vld [vmem:[%s329 + $0x234] sm:$0xff]
        %v2514 = vld [vmem:[%s329 + $0x23c] sm:$0xff]
        %v2515 = vld [vmem:[%s329 + $0x244] sm:$0xff]
        %v2516 = vld [vmem:[%s329 + $0x24c] sm:$0xff]
        %v2517 = vld [vmem:[%s329 + $0x254] sm:$0xff]
        %v2518 = vld [vmem:[%s329 + $0x25c] sm:$0xff]
        %v2519 = vld [vmem:[%s329 + $0x264] sm:$0xff]
        %v2520 = vld [vmem:[%s329 + $0x26c] sm:$0xff]
        %v2521 = vld [vmem:[%s329 + $0x274] sm:$0xff]
        %v2522 = vld [vmem:[%s329 + $0x27c] sm:$0xff]
        %v2523 = vld [vmem:[%s329 + $0x284] sm:$0xff]
        %v2524 = vld [vmem:[%s329 + $0x28c] sm:$0xff]
        %v2525 = vld [vmem:[%s329 + $0x294] sm:$0xff]
        %v2526 = vld [vmem:[%s329 + $0x29c] sm:$0xff]
        %v2527 = vld [vmem:[%s329 + $0x2a4] sm:$0xff]
        %v2528 = vld [vmem:[%s329 + $0x2ac] sm:$0xff]
        %v2529 = vld [vmem:[%s329 + $0x2b4] sm:$0xff]
        %v2530 = vld [vmem:[%s329 + $0x2bc] sm:$0xff]
        %v2531 = vld [vmem:[%s329 + $0x2c4] sm:$0xff]
        %v2532 = vld [vmem:[%s329 + $0x2cc] sm:$0xff]
        %v2533 = vld [vmem:[%s329 + $0x2d4] sm:$0xff]
        %v2534 = vld [vmem:[%s329 + $0x2dc] sm:$0xff]
        %v2535 = vld [vmem:[%s329 + $0x2e4] sm:$0xff]
        %v2536 = vld [vmem:[%s329 + $0x2ec] sm:$0x3f]
        %s2537 = scalar_lea.vmem %s1, 3
        %v2538 = vld [vmem:[%s2537] sm:$0x1]
        %2540 = vset.pattern.permute.xlu0 0
        %2541 = vperm.xlu0 %2540, %v2446
        %v2542 = vpop.permute.xlu0 %2541
        %2545 = vset.pattern.permute.xlu0 0
        %2546 = vperm.xlu0 %2545, %v2447
        %v2547 = vpop.permute.xlu0 %2546
        %2550 = vset.pattern.permute.xlu0 0
        %2551 = vperm.xlu0 %2550, %v2448
        %v2552 = vpop.permute.xlu0 %2551
        %2555 = vset.pattern.permute.xlu0 0
        %2556 = vperm.xlu0 %2555, %v2449
        %v2557 = vpop.permute.xlu0 %2556
        %2560 = vset.pattern.permute.xlu0 0
        %2561 = vperm.xlu0 %2560, %v2450
        %v2562 = vpop.permute.xlu0 %2561
        %2565 = vset.pattern.permute.xlu0 0
        %2566 = vperm.xlu0 %2565, %v2451
        %v2567 = vpop.permute.xlu0 %2566
        %2570 = vset.pattern.permute.xlu0 0
        %2571 = vperm.xlu0 %2570, %v2452
        %v2572 = vpop.permute.xlu0 %2571
        %2575 = vset.pattern.permute.xlu0 0
        %2576 = vperm.xlu0 %2575, %v2453
        %v2577 = vpop.permute.xlu0 %2576
        %2580 = vset.pattern.permute.xlu0 0
        %2581 = vperm.xlu0 %2580, %v2454
        %v2582 = vpop.permute.xlu0 %2581
        %2585 = vset.pattern.permute.xlu0 0
        %2586 = vperm.xlu0 %2585, %v2455
        %v2587 = vpop.permute.xlu0 %2586
        %2590 = vset.pattern.permute.xlu0 0
        %2591 = vperm.xlu0 %2590, %v2456
        %v2592 = vpop.permute.xlu0 %2591
        %2595 = vset.pattern.permute.xlu0 0
        %2596 = vperm.xlu0 %2595, %v2457
        %v2597 = vpop.permute.xlu0 %2596
        %2600 = vset.pattern.permute.xlu0 0
        %2601 = vperm.xlu0 %2600, %v2458
        %v2602 = vpop.permute.xlu0 %2601
        %2605 = vset.pattern.permute.xlu0 0
        %2606 = vperm.xlu0 %2605, %v2459
        %v2607 = vpop.permute.xlu0 %2606
        %2610 = vset.pattern.permute.xlu0 0
        %2611 = vperm.xlu0 %2610, %v2460
        %v2612 = vpop.permute.xlu0 %2611
        %2615 = vset.pattern.permute.xlu0 0
        %2616 = vperm.xlu0 %2615, %v2461
        %v2617 = vpop.permute.xlu0 %2616
        %2620 = vset.pattern.permute.xlu0 0
        %2621 = vperm.xlu0 %2620, %v2462
        %v2622 = vpop.permute.xlu0 %2621
        %2625 = vset.pattern.permute.xlu0 0
        %2626 = vperm.xlu0 %2625, %v2463
        %v2627 = vpop.permute.xlu0 %2626
        %2630 = vset.pattern.permute.xlu0 0
        %2631 = vperm.xlu0 %2630, %v2464
        %v2632 = vpop.permute.xlu0 %2631
        %2635 = vset.pattern.permute.xlu0 0
        %2636 = vperm.xlu0 %2635, %v2465
        %v2637 = vpop.permute.xlu0 %2636
        %2640 = vset.pattern.permute.xlu0 0
        %2641 = vperm.xlu0 %2640, %v2466
        %v2642 = vpop.permute.xlu0 %2641
        %2645 = vset.pattern.permute.xlu0 0
        %2646 = vperm.xlu0 %2645, %v2467
        %v2647 = vpop.permute.xlu0 %2646
        %2650 = vset.pattern.permute.xlu0 0
        %2651 = vperm.xlu0 %2650, %v2468
        %v2652 = vpop.permute.xlu0 %2651
        %2655 = vset.pattern.permute.xlu0 0
        %2656 = vperm.xlu0 %2655, %v2469
        %v2657 = vpop.permute.xlu0 %2656
        %2660 = vset.pattern.permute.xlu0 0
        %2661 = vperm.xlu0 %2660, %v2470
        %v2662 = vpop.permute.xlu0 %2661
        %2665 = vset.pattern.permute.xlu0 0
        %2666 = vperm.xlu0 %2665, %v2471
        %v2667 = vpop.permute.xlu0 %2666
        %2670 = vset.pattern.permute.xlu0 0
        %2671 = vperm.xlu0 %2670, %v2472
        %v2672 = vpop.permute.xlu0 %2671
        %2675 = vset.pattern.permute.xlu0 0
        %2676 = vperm.xlu0 %2675, %v2473
        %v2677 = vpop.permute.xlu0 %2676
        %2680 = vset.pattern.permute.xlu0 0
        %2681 = vperm.xlu0 %2680, %v2474
        %v2682 = vpop.permute.xlu0 %2681
        %2685 = vset.pattern.permute.xlu0 0
        %2686 = vperm.xlu0 %2685, %v2475
        %v2687 = vpop.permute.xlu0 %2686
        %2690 = vset.pattern.permute.xlu0 0
        %2691 = vperm.xlu0 %2690, %v2476
        %v2692 = vpop.permute.xlu0 %2691
        %2695 = vset.pattern.permute.xlu0 0
        %2696 = vperm.xlu0 %2695, %v2477
        %v2697 = vpop.permute.xlu0 %2696
        %2700 = vset.pattern.permute.xlu0 0
        %2701 = vperm.xlu0 %2700, %v2478
        %v2702 = vpop.permute.xlu0 %2701
        %2705 = vset.pattern.permute.xlu0 0
        %2706 = vperm.xlu0 %2705, %v2479
        %v2707 = vpop.permute.xlu0 %2706
        %2710 = vset.pattern.permute.xlu0 0
        %2711 = vperm.xlu0 %2710, %v2480
        %v2712 = vpop.permute.xlu0 %2711
        %2715 = vset.pattern.permute.xlu0 0
        %2716 = vperm.xlu0 %2715, %v2481
        %v2717 = vpop.permute.xlu0 %2716
        %2720 = vset.pattern.permute.xlu0 0
        %2721 = vperm.xlu0 %2720, %v2482
        %v2722 = vpop.permute.xlu0 %2721
        %2725 = vset.pattern.permute.xlu0 0
        %2726 = vperm.xlu0 %2725, %v2483
        %v2727 = vpop.permute.xlu0 %2726
        %2730 = vset.pattern.permute.xlu0 0
        %2731 = vperm.xlu0 %2730, %v2484
        %v2732 = vpop.permute.xlu0 %2731
        %2735 = vset.pattern.permute.xlu0 0
        %2736 = vperm.xlu0 %2735, %v2485
        %v2737 = vpop.permute.xlu0 %2736
        %2740 = vset.pattern.permute.xlu0 0
        %2741 = vperm.xlu0 %2740, %v2486
        %v2742 = vpop.permute.xlu0 %2741
        %2745 = vset.pattern.permute.xlu0 0
        %2746 = vperm.xlu0 %2745, %v2487
        %v2747 = vpop.permute.xlu0 %2746
        %2750 = vset.pattern.permute.xlu0 0
        %2751 = vperm.xlu0 %2750, %v2488
        %v2752 = vpop.permute.xlu0 %2751
        %2755 = vset.pattern.permute.xlu0 0
        %2756 = vperm.xlu0 %2755, %v2489
        %v2757 = vpop.permute.xlu0 %2756
        %2760 = vset.pattern.permute.xlu0 0
        %2761 = vperm.xlu0 %2760, %v2490
        %v2762 = vpop.permute.xlu0 %2761
        %2765 = vset.pattern.permute.xlu0 0
        %2766 = vperm.xlu0 %2765, %v2491
        %v2767 = vpop.permute.xlu0 %2766
        %2770 = vset.pattern.permute.xlu0 0
        %2771 = vperm.xlu0 %2770, %v2492
        %v2772 = vpop.permute.xlu0 %2771
        %2775 = vset.pattern.permute.xlu0 0
        %2776 = vperm.xlu0 %2775, %v2493
        %v2777 = vpop.permute.xlu0 %2776
        %2780 = vset.pattern.permute.xlu0 0
        %2781 = vperm.xlu0 %2780, %v2494
        %v2782 = vpop.permute.xlu0 %2781
        %2785 = vset.pattern.permute.xlu0 0
        %2786 = vperm.xlu0 %2785, %v2495
        %v2787 = vpop.permute.xlu0 %2786
        %2790 = vset.pattern.permute.xlu0 0
        %2791 = vperm.xlu0 %2790, %v2496
        %v2792 = vpop.permute.xlu0 %2791
        %2795 = vset.pattern.permute.xlu0 0
        %2796 = vperm.xlu0 %2795, %v2497
        %v2797 = vpop.permute.xlu0 %2796
        %2800 = vset.pattern.permute.xlu0 0
        %2801 = vperm.xlu0 %2800, %v2498
        %v2802 = vpop.permute.xlu0 %2801
        %2805 = vset.pattern.permute.xlu0 0
        %2806 = vperm.xlu0 %2805, %v2499
        %v2807 = vpop.permute.xlu0 %2806
        %2810 = vset.pattern.permute.xlu0 0
        %2811 = vperm.xlu0 %2810, %v2500
        %v2812 = vpop.permute.xlu0 %2811
        %2815 = vset.pattern.permute.xlu0 0
        %2816 = vperm.xlu0 %2815, %v2501
        %v2817 = vpop.permute.xlu0 %2816
        %2820 = vset.pattern.permute.xlu0 0
        %2821 = vperm.xlu0 %2820, %v2502
        %v2822 = vpop.permute.xlu0 %2821
        %2825 = vset.pattern.permute.xlu0 0
        %2826 = vperm.xlu0 %2825, %v2503
        %v2827 = vpop.permute.xlu0 %2826
        %2830 = vset.pattern.permute.xlu0 0
        %2831 = vperm.xlu0 %2830, %v2504
        %v2832 = vpop.permute.xlu0 %2831
        %2835 = vset.pattern.permute.xlu0 0
        %2836 = vperm.xlu0 %2835, %v2505
        %v2837 = vpop.permute.xlu0 %2836
        %2840 = vset.pattern.permute.xlu0 0
        %2841 = vperm.xlu0 %2840, %v2506
        %v2842 = vpop.permute.xlu0 %2841
        %2845 = vset.pattern.permute.xlu0 0
        %2846 = vperm.xlu0 %2845, %v2507
        %v2847 = vpop.permute.xlu0 %2846
        %2850 = vset.pattern.permute.xlu0 0
        %2851 = vperm.xlu0 %2850, %v2508
        %v2852 = vpop.permute.xlu0 %2851
        %2855 = vset.pattern.permute.xlu0 0
        %2856 = vperm.xlu0 %2855, %v2509
        %v2857 = vpop.permute.xlu0 %2856
        %2860 = vset.pattern.permute.xlu0 0
        %2861 = vperm.xlu0 %2860, %v2510
        %v2862 = vpop.permute.xlu0 %2861
        %2865 = vset.pattern.permute.xlu0 0
        %2866 = vperm.xlu0 %2865, %v2511
        %v2867 = vpop.permute.xlu0 %2866
        %2870 = vset.pattern.permute.xlu0 0
        %2871 = vperm.xlu0 %2870, %v2512
        %v2872 = vpop.permute.xlu0 %2871
        %2875 = vset.pattern.permute.xlu0 0
        %2876 = vperm.xlu0 %2875, %v2513
        %v2877 = vpop.permute.xlu0 %2876
        %2880 = vset.pattern.permute.xlu0 0
        %2881 = vperm.xlu0 %2880, %v2514
        %v2882 = vpop.permute.xlu0 %2881
        %2885 = vset.pattern.permute.xlu0 0
        %2886 = vperm.xlu0 %2885, %v2515
        %v2887 = vpop.permute.xlu0 %2886
        %2890 = vset.pattern.permute.xlu0 0
        %2891 = vperm.xlu0 %2890, %v2516
        %v2892 = vpop.permute.xlu0 %2891
        %2895 = vset.pattern.permute.xlu0 0
        %2896 = vperm.xlu0 %2895, %v2517
        %v2897 = vpop.permute.xlu0 %2896
        %2900 = vset.pattern.permute.xlu0 0
        %2901 = vperm.xlu0 %2900, %v2518
        %v2902 = vpop.permute.xlu0 %2901
        %2905 = vset.pattern.permute.xlu0 0
        %2906 = vperm.xlu0 %2905, %v2519
        %v2907 = vpop.permute.xlu0 %2906
        %2910 = vset.pattern.permute.xlu0 0
        %2911 = vperm.xlu0 %2910, %v2520
        %v2912 = vpop.permute.xlu0 %2911
        %2915 = vset.pattern.permute.xlu0 0
        %2916 = vperm.xlu0 %2915, %v2521
        %v2917 = vpop.permute.xlu0 %2916
        %2920 = vset.pattern.permute.xlu0 0
        %2921 = vperm.xlu0 %2920, %v2522
        %v2922 = vpop.permute.xlu0 %2921
        %2925 = vset.pattern.permute.xlu0 0
        %2926 = vperm.xlu0 %2925, %v2523
        %v2927 = vpop.permute.xlu0 %2926
        %2930 = vset.pattern.permute.xlu0 0
        %2931 = vperm.xlu0 %2930, %v2524
        %v2932 = vpop.permute.xlu0 %2931
        %2935 = vset.pattern.permute.xlu0 0
        %2936 = vperm.xlu0 %2935, %v2525
        %v2937 = vpop.permute.xlu0 %2936
        %2940 = vset.pattern.permute.xlu0 0
        %2941 = vperm.xlu0 %2940, %v2526
        %v2942 = vpop.permute.xlu0 %2941
        %2945 = vset.pattern.permute.xlu0 0
        %2946 = vperm.xlu0 %2945, %v2527
        %v2947 = vpop.permute.xlu0 %2946
        %2950 = vset.pattern.permute.xlu0 0
        %2951 = vperm.xlu0 %2950, %v2528
        %v2952 = vpop.permute.xlu0 %2951
        %2955 = vset.pattern.permute.xlu0 0
        %2956 = vperm.xlu0 %2955, %v2529
        %v2957 = vpop.permute.xlu0 %2956
        %2960 = vset.pattern.permute.xlu0 0
        %2961 = vperm.xlu0 %2960, %v2530
        %v2962 = vpop.permute.xlu0 %2961
        %2965 = vset.pattern.permute.xlu0 0
        %2966 = vperm.xlu0 %2965, %v2531
        %v2967 = vpop.permute.xlu0 %2966
        %2970 = vset.pattern.permute.xlu0 0
        %2971 = vperm.xlu0 %2970, %v2532
        %v2972 = vpop.permute.xlu0 %2971
        %2975 = vset.pattern.permute.xlu0 0
        %2976 = vperm.xlu0 %2975, %v2533
        %v2977 = vpop.permute.xlu0 %2976
        %2980 = vset.pattern.permute.xlu0 0
        %2981 = vperm.xlu0 %2980, %v2534
        %v2982 = vpop.permute.xlu0 %2981
        %2985 = vset.pattern.permute.xlu0 0
        %2986 = vperm.xlu0 %2985, %v2535
        %v2987 = vpop.permute.xlu0 %2986
        %2990 = vset.pattern.permute.xlu0 0
        %2991 = vperm.xlu0 %2990, %v2536
        %v2992 = vpop.permute.xlu0 %2991
        %v2995 = vlaneseq
        %v2996 = vshrl.u32 %v2995, 7
        %v2997 = vsub.s32 0, %v2996
        %v2998 = vrot.slane %v2538, %v2997
        %v3000 = vmul.f32 %v2542, %v2998
        %v3001 = vmul.f32 %v2547, %v2998
        %v3002 = vmul.f32 %v2552, %v2998
        %v3003 = vmul.f32 %v2557, %v2998
        %v3004 = vmul.f32 %v2562, %v2998
        %v3005 = vmul.f32 %v2567, %v2998
        %v3006 = vmul.f32 %v2572, %v2998
        %v3007 = vmul.f32 %v2577, %v2998
        %v3008 = vmul.f32 %v2582, %v2998
        %v3009 = vmul.f32 %v2587, %v2998
        %v3010 = vmul.f32 %v2592, %v2998
        %v3011 = vmul.f32 %v2597, %v2998
        %v3012 = vmul.f32 %v2602, %v2998
        %v3013 = vmul.f32 %v2607, %v2998
        %v3014 = vmul.f32 %v2612, %v2998
        %v3015 = vmul.f32 %v2617, %v2998
        %v3016 = vmul.f32 %v2622, %v2998
        %v3017 = vmul.f32 %v2627, %v2998
        %v3018 = vmul.f32 %v2632, %v2998
        %v3019 = vmul.f32 %v2637, %v2998
        %v3020 = vmul.f32 %v2642, %v2998
        %v3021 = vmul.f32 %v2647, %v2998
        %v3022 = vmul.f32 %v2652, %v2998
        %v3023 = vmul.f32 %v2657, %v2998
        %v3024 = vmul.f32 %v2662, %v2998
        %v3025 = vmul.f32 %v2667, %v2998
        %v3026 = vmul.f32 %v2672, %v2998
        %v3027 = vmul.f32 %v2677, %v2998
        %v3028 = vmul.f32 %v2682, %v2998
        %v3029 = vmul.f32 %v2687, %v2998
        %v3030 = vmul.f32 %v2692, %v2998
        %v3031 = vmul.f32 %v2697, %v2998
        %v3032 = vmul.f32 %v2702, %v2998
        %v3033 = vmul.f32 %v2707, %v2998
        %v3034 = vmul.f32 %v2712, %v2998
        %v3035 = vmul.f32 %v2717, %v2998
        %v3036 = vmul.f32 %v2722, %v2998
        %v3037 = vmul.f32 %v2727, %v2998
        %v3038 = vmul.f32 %v2732, %v2998
        %v3039 = vmul.f32 %v2737, %v2998
        %v3040 = vmul.f32 %v2742, %v2998
        %v3041 = vmul.f32 %v2747, %v2998
        %v3042 = vmul.f32 %v2752, %v2998
        %v3043 = vmul.f32 %v2757, %v2998
        %v3044 = vmul.f32 %v2762, %v2998
        %v3045 = vmul.f32 %v2767, %v2998
        %v3046 = vmul.f32 %v2772, %v2998
        %v3047 = vmul.f32 %v2777, %v2998
        %v3048 = vmul.f32 %v2782, %v2998
        %v3049 = vmul.f32 %v2787, %v2998
        %v3050 = vmul.f32 %v2792, %v2998
        %v3051 = vmul.f32 %v2797, %v2998
        %v3052 = vmul.f32 %v2802, %v2998
        %v3053 = vmul.f32 %v2807, %v2998
        %v3054 = vmul.f32 %v2812, %v2998
        %v3055 = vmul.f32 %v2817, %v2998
        %v3056 = vmul.f32 %v2822, %v2998
        %v3057 = vmul.f32 %v2827, %v2998
        %v3058 = vmul.f32 %v2832, %v2998
        %v3059 = vmul.f32 %v2837, %v2998
        %v3060 = vmul.f32 %v2842, %v2998
        %v3061 = vmul.f32 %v2847, %v2998
        %v3062 = vmul.f32 %v2852, %v2998
        %v3063 = vmul.f32 %v2857, %v2998
        %v3064 = vmul.f32 %v2862, %v2998
        %v3065 = vmul.f32 %v2867, %v2998
        %v3066 = vmul.f32 %v2872, %v2998
        %v3067 = vmul.f32 %v2877, %v2998
        %v3068 = vmul.f32 %v2882, %v2998
        %v3069 = vmul.f32 %v2887, %v2998
        %v3070 = vmul.f32 %v2892, %v2998
        %v3071 = vmul.f32 %v2897, %v2998
        %v3072 = vmul.f32 %v2902, %v2998
        %v3073 = vmul.f32 %v2907, %v2998
        %v3074 = vmul.f32 %v2912, %v2998
        %v3075 = vmul.f32 %v2917, %v2998
        %v3076 = vmul.f32 %v2922, %v2998
        %v3077 = vmul.f32 %v2927, %v2998
        %v3078 = vmul.f32 %v2932, %v2998
        %v3079 = vmul.f32 %v2937, %v2998
        %v3080 = vmul.f32 %v2942, %v2998
        %v3081 = vmul.f32 %v2947, %v2998
        %v3082 = vmul.f32 %v2952, %v2998
        %v3083 = vmul.f32 %v2957, %v2998
        %v3084 = vmul.f32 %v2962, %v2998
        %v3085 = vmul.f32 %v2967, %v2998
        %v3086 = vmul.f32 %v2972, %v2998
        %v3087 = vmul.f32 %v2977, %v2998
        %v3088 = vmul.f32 %v2982, %v2998
        %v3089 = vmul.f32 %v2987, %v2998
        %v3090 = vmul.f32 %v2992, %v2998
        %v3091 = vadd.f32 %v2355, %v3000
        %v3092 = vadd.f32 %v2356, %v3001
        %v3093 = vadd.f32 %v2357, %v3002
        %v3094 = vadd.f32 %v2358, %v3003
        %v3095 = vadd.f32 %v2359, %v3004
        %v3096 = vadd.f32 %v2360, %v3005
        %v3097 = vadd.f32 %v2361, %v3006
        %v3098 = vadd.f32 %v2362, %v3007
        %v3099 = vadd.f32 %v2363, %v3008
        %v3100 = vadd.f32 %v2364, %v3009
        %v3101 = vadd.f32 %v2365, %v3010
        %v3102 = vadd.f32 %v2366, %v3011
        %v3103 = vadd.f32 %v2367, %v3012
        %v3104 = vadd.f32 %v2368, %v3013
        %v3105 = vadd.f32 %v2369, %v3014
        %v3106 = vadd.f32 %v2370, %v3015
        %v3107 = vadd.f32 %v2371, %v3016
        %v3108 = vadd.f32 %v2372, %v3017
        %v3109 = vadd.f32 %v2373, %v3018
        %v3110 = vadd.f32 %v2374, %v3019
        %v3111 = vadd.f32 %v2375, %v3020
        %v3112 = vadd.f32 %v2376, %v3021
        %v3113 = vadd.f32 %v2377, %v3022
        %v3114 = vadd.f32 %v2378, %v3023
        %v3115 = vadd.f32 %v2379, %v3024
        %v3116 = vadd.f32 %v2380, %v3025
        %v3117 = vadd.f32 %v2381, %v3026
        %v3118 = vadd.f32 %v2382, %v3027
        %v3119 = vadd.f32 %v2383, %v3028
        %v3120 = vadd.f32 %v2384, %v3029
        %v3121 = vadd.f32 %v2385, %v3030
        %v3122 = vadd.f32 %v2386, %v3031
        %v3123 = vadd.f32 %v2387, %v3032
        %v3124 = vadd.f32 %v2388, %v3033
        %v3125 = vadd.f32 %v2389, %v3034
        %v3126 = vadd.f32 %v2390, %v3035
        %v3127 = vadd.f32 %v2391, %v3036
        %v3128 = vadd.f32 %v2392, %v3037
        %v3129 = vadd.f32 %v2393, %v3038
        %v3130 = vadd.f32 %v2394, %v3039
        %v3131 = vadd.f32 %v2395, %v3040
        %v3132 = vadd.f32 %v2396, %v3041
        %v3133 = vadd.f32 %v2397, %v3042
        %v3134 = vadd.f32 %v2398, %v3043
        %v3135 = vadd.f32 %v2399, %v3044
        %v3136 = vadd.f32 %v2400, %v3045
        %v3137 = vadd.f32 %v2401, %v3046
        %v3138 = vadd.f32 %v2402, %v3047
        %v3139 = vadd.f32 %v2403, %v3048
        %v3140 = vadd.f32 %v2404, %v3049
        %v3141 = vadd.f32 %v2405, %v3050
        %v3142 = vadd.f32 %v2406, %v3051
        %v3143 = vadd.f32 %v2407, %v3052
        %v3144 = vadd.f32 %v2408, %v3053
        %v3145 = vadd.f32 %v2409, %v3054
        %v3146 = vadd.f32 %v2410, %v3055
        %v3147 = vadd.f32 %v2411, %v3056
        %v3148 = vadd.f32 %v2412, %v3057
        %v3149 = vadd.f32 %v2413, %v3058
        %v3150 = vadd.f32 %v2414, %v3059
        %v3151 = vadd.f32 %v2415, %v3060
        %v3152 = vadd.f32 %v2416, %v3061
        %v3153 = vadd.f32 %v2417, %v3062
        %v3154 = vadd.f32 %v2418, %v3063
        %v3155 = vadd.f32 %v2419, %v3064
        %v3156 = vadd.f32 %v2420, %v3065
        %v3157 = vadd.f32 %v2421, %v3066
        %v3158 = vadd.f32 %v2422, %v3067
        %v3159 = vadd.f32 %v2423, %v3068
        %v3160 = vadd.f32 %v2424, %v3069
        %v3161 = vadd.f32 %v2425, %v3070
        %v3162 = vadd.f32 %v2426, %v3071
        %v3163 = vadd.f32 %v2427, %v3072
        %v3164 = vadd.f32 %v2428, %v3073
        %v3165 = vadd.f32 %v2429, %v3074
        %v3166 = vadd.f32 %v2430, %v3075
        %v3167 = vadd.f32 %v2431, %v3076
        %v3168 = vadd.f32 %v2432, %v3077
        %v3169 = vadd.f32 %v2433, %v3078
        %v3170 = vadd.f32 %v2434, %v3079
        %v3171 = vadd.f32 %v2435, %v3080
        %v3172 = vadd.f32 %v2436, %v3081
        %v3173 = vadd.f32 %v2437, %v3082
        %v3174 = vadd.f32 %v2438, %v3083
        %v3175 = vadd.f32 %v2439, %v3084
        %v3176 = vadd.f32 %v2440, %v3085
        %v3177 = vadd.f32 %v2441, %v3086
        %v3178 = vadd.f32 %v2442, %v3087
        %v3179 = vadd.f32 %v2443, %v3088
        %v3180 = vadd.f32 %v2444, %v3089
        %v3181 = vadd.f32 %v2445, %v3090
        %v3182 = vld [vmem:[%s329 + $0x1d] sm:$0xff]
        %v3183 = vld [vmem:[%s329 + $0x25] sm:$0xff]
        %v3184 = vld [vmem:[%s329 + $0x2d] sm:$0xff]
        %v3185 = vld [vmem:[%s329 + $0x35] sm:$0xff]
        %v3186 = vld [vmem:[%s329 + $0x3d] sm:$0xff]
        %v3187 = vld [vmem:[%s329 + $0x45] sm:$0xff]
        %v3188 = vld [vmem:[%s329 + $0x4d] sm:$0xff]
        %v3189 = vld [vmem:[%s329 + $0x55] sm:$0xff]
        %v3190 = vld [vmem:[%s329 + $0x5d] sm:$0xff]
        %v3191 = vld [vmem:[%s329 + $0x65] sm:$0xff]
        %v3192 = vld [vmem:[%s329 + $0x6d] sm:$0xff]
        %v3193 = vld [vmem:[%s329 + $0x75] sm:$0xff]
        %v3194 = vld [vmem:[%s329 + $0x7d] sm:$0xff]
        %v3195 = vld [vmem:[%s329 + $0x85] sm:$0xff]
        %v3196 = vld [vmem:[%s329 + $0x8d] sm:$0xff]
        %v3197 = vld [vmem:[%s329 + $0x95] sm:$0xff]
        %v3198 = vld [vmem:[%s329 + $0x9d] sm:$0xff]
        %v3199 = vld [vmem:[%s329 + $0xa5] sm:$0xff]
        %v3200 = vld [vmem:[%s329 + $0xad] sm:$0xff]
        %v3201 = vld [vmem:[%s329 + $0xb5] sm:$0xff]
        %v3202 = vld [vmem:[%s329 + $0xbd] sm:$0xff]
        %v3203 = vld [vmem:[%s329 + $0xc5] sm:$0xff]
        %v3204 = vld [vmem:[%s329 + $0xcd] sm:$0xff]
        %v3205 = vld [vmem:[%s329 + $0xd5] sm:$0xff]
        %v3206 = vld [vmem:[%s329 + $0xdd] sm:$0xff]
        %v3207 = vld [vmem:[%s329 + $0xe5] sm:$0xff]
        %v3208 = vld [vmem:[%s329 + $0xed] sm:$0xff]
        %v3209 = vld [vmem:[%s329 + $0xf5] sm:$0xff]
        %v3210 = vld [vmem:[%s329 + $0xfd] sm:$0xff]
        %v3211 = vld [vmem:[%s329 + $0x105] sm:$0xff]
        %v3212 = vld [vmem:[%s329 + $0x10d] sm:$0xff]
        %v3213 = vld [vmem:[%s329 + $0x115] sm:$0xff]
        %v3214 = vld [vmem:[%s329 + $0x11d] sm:$0xff]
        %v3215 = vld [vmem:[%s329 + $0x125] sm:$0xff]
        %v3216 = vld [vmem:[%s329 + $0x12d] sm:$0xff]
        %v3217 = vld [vmem:[%s329 + $0x135] sm:$0xff]
        %v3218 = vld [vmem:[%s329 + $0x13d] sm:$0xff]
        %v3219 = vld [vmem:[%s329 + $0x145] sm:$0xff]
        %v3220 = vld [vmem:[%s329 + $0x14d] sm:$0xff]
        %v3221 = vld [vmem:[%s329 + $0x155] sm:$0xff]
        %v3222 = vld [vmem:[%s329 + $0x15d] sm:$0xff]
        %v3223 = vld [vmem:[%s329 + $0x165] sm:$0xff]
        %v3224 = vld [vmem:[%s329 + $0x16d] sm:$0xff]
        %v3225 = vld [vmem:[%s329 + $0x175] sm:$0xff]
        %v3226 = vld [vmem:[%s329 + $0x17d] sm:$0xff]
        %v3227 = vld [vmem:[%s329 + $0x185] sm:$0xff]
        %v3228 = vld [vmem:[%s329 + $0x18d] sm:$0xff]
        %v3229 = vld [vmem:[%s329 + $0x195] sm:$0xff]
        %v3230 = vld [vmem:[%s329 + $0x19d] sm:$0xff]
        %v3231 = vld [vmem:[%s329 + $0x1a5] sm:$0xff]
        %v3232 = vld [vmem:[%s329 + $0x1ad] sm:$0xff]
        %v3233 = vld [vmem:[%s329 + $0x1b5] sm:$0xff]
        %v3234 = vld [vmem:[%s329 + $0x1bd] sm:$0xff]
        %v3235 = vld [vmem:[%s329 + $0x1c5] sm:$0xff]
        %v3236 = vld [vmem:[%s329 + $0x1cd] sm:$0xff]
        %v3237 = vld [vmem:[%s329 + $0x1d5] sm:$0xff]
        %v3238 = vld [vmem:[%s329 + $0x1dd] sm:$0xff]
        %v3239 = vld [vmem:[%s329 + $0x1e5] sm:$0xff]
        %v3240 = vld [vmem:[%s329 + $0x1ed] sm:$0xff]
        %v3241 = vld [vmem:[%s329 + $0x1f5] sm:$0xff]
        %v3242 = vld [vmem:[%s329 + $0x1fd] sm:$0xff]
        %v3243 = vld [vmem:[%s329 + $0x205] sm:$0xff]
        %v3244 = vld [vmem:[%s329 + $0x20d] sm:$0xff]
        %v3245 = vld [vmem:[%s329 + $0x215] sm:$0xff]
        %v3246 = vld [vmem:[%s329 + $0x21d] sm:$0xff]
        %v3247 = vld [vmem:[%s329 + $0x225] sm:$0xff]
        %v3248 = vld [vmem:[%s329 + $0x22d] sm:$0xff]
        %v3249 = vld [vmem:[%s329 + $0x235] sm:$0xff]
        %v3250 = vld [vmem:[%s329 + $0x23d] sm:$0xff]
        %v3251 = vld [vmem:[%s329 + $0x245] sm:$0xff]
        %v3252 = vld [vmem:[%s329 + $0x24d] sm:$0xff]
        %v3253 = vld [vmem:[%s329 + $0x255] sm:$0xff]
        %v3254 = vld [vmem:[%s329 + $0x25d] sm:$0xff]
        %v3255 = vld [vmem:[%s329 + $0x265] sm:$0xff]
        %v3256 = vld [vmem:[%s329 + $0x26d] sm:$0xff]
        %v3257 = vld [vmem:[%s329 + $0x275] sm:$0xff]
        %v3258 = vld [vmem:[%s329 + $0x27d] sm:$0xff]
        %v3259 = vld [vmem:[%s329 + $0x285] sm:$0xff]
        %v3260 = vld [vmem:[%s329 + $0x28d] sm:$0xff]
        %v3261 = vld [vmem:[%s329 + $0x295] sm:$0xff]
        %v3262 = vld [vmem:[%s329 + $0x29d] sm:$0xff]
        %v3263 = vld [vmem:[%s329 + $0x2a5] sm:$0xff]
        %v3264 = vld [vmem:[%s329 + $0x2ad] sm:$0xff]
        %v3265 = vld [vmem:[%s329 + $0x2b5] sm:$0xff]
        %v3266 = vld [vmem:[%s329 + $0x2bd] sm:$0xff]
        %v3267 = vld [vmem:[%s329 + $0x2c5] sm:$0xff]
        %v3268 = vld [vmem:[%s329 + $0x2cd] sm:$0xff]
        %v3269 = vld [vmem:[%s329 + $0x2d5] sm:$0xff]
        %v3270 = vld [vmem:[%s329 + $0x2dd] sm:$0xff]
        %v3271 = vld [vmem:[%s329 + $0x2e5] sm:$0xff]
        %v3272 = vld [vmem:[%s329 + $0x2ed] sm:$0x3f]
        %s3273 = scalar_lea.vmem %s1, 4
        %v3274 = vld [vmem:[%s3273] sm:$0x1]
        %3276 = vset.pattern.permute.xlu0 0
        %3277 = vperm.xlu0 %3276, %v3182
        %v3278 = vpop.permute.xlu0 %3277
        %3281 = vset.pattern.permute.xlu0 0
        %3282 = vperm.xlu0 %3281, %v3183
        %v3283 = vpop.permute.xlu0 %3282
        %3286 = vset.pattern.permute.xlu0 0
        %3287 = vperm.xlu0 %3286, %v3184
        %v3288 = vpop.permute.xlu0 %3287
        %3291 = vset.pattern.permute.xlu0 0
        %3292 = vperm.xlu0 %3291, %v3185
        %v3293 = vpop.permute.xlu0 %3292
        %3296 = vset.pattern.permute.xlu0 0
        %3297 = vperm.xlu0 %3296, %v3186
        %v3298 = vpop.permute.xlu0 %3297
        %3301 = vset.pattern.permute.xlu0 0
        %3302 = vperm.xlu0 %3301, %v3187
        %v3303 = vpop.permute.xlu0 %3302
        %3306 = vset.pattern.permute.xlu0 0
        %3307 = vperm.xlu0 %3306, %v3188
        %v3308 = vpop.permute.xlu0 %3307
        %3311 = vset.pattern.permute.xlu0 0
        %3312 = vperm.xlu0 %3311, %v3189
        %v3313 = vpop.permute.xlu0 %3312
        %3316 = vset.pattern.permute.xlu0 0
        %3317 = vperm.xlu0 %3316, %v3190
        %v3318 = vpop.permute.xlu0 %3317
        %3321 = vset.pattern.permute.xlu0 0
        %3322 = vperm.xlu0 %3321, %v3191
        %v3323 = vpop.permute.xlu0 %3322
        %3326 = vset.pattern.permute.xlu0 0
        %3327 = vperm.xlu0 %3326, %v3192
        %v3328 = vpop.permute.xlu0 %3327
        %3331 = vset.pattern.permute.xlu0 0
        %3332 = vperm.xlu0 %3331, %v3193
        %v3333 = vpop.permute.xlu0 %3332
        %3336 = vset.pattern.permute.xlu0 0
        %3337 = vperm.xlu0 %3336, %v3194
        %v3338 = vpop.permute.xlu0 %3337
        %3341 = vset.pattern.permute.xlu0 0
        %3342 = vperm.xlu0 %3341, %v3195
        %v3343 = vpop.permute.xlu0 %3342
        %3346 = vset.pattern.permute.xlu0 0
        %3347 = vperm.xlu0 %3346, %v3196
        %v3348 = vpop.permute.xlu0 %3347
        %3351 = vset.pattern.permute.xlu0 0
        %3352 = vperm.xlu0 %3351, %v3197
        %v3353 = vpop.permute.xlu0 %3352
        %3356 = vset.pattern.permute.xlu0 0
        %3357 = vperm.xlu0 %3356, %v3198
        %v3358 = vpop.permute.xlu0 %3357
        %3361 = vset.pattern.permute.xlu0 0
        %3362 = vperm.xlu0 %3361, %v3199
        %v3363 = vpop.permute.xlu0 %3362
        %3366 = vset.pattern.permute.xlu0 0
        %3367 = vperm.xlu0 %3366, %v3200
        %v3368 = vpop.permute.xlu0 %3367
        %3371 = vset.pattern.permute.xlu0 0
        %3372 = vperm.xlu0 %3371, %v3201
        %v3373 = vpop.permute.xlu0 %3372
        %3376 = vset.pattern.permute.xlu0 0
        %3377 = vperm.xlu0 %3376, %v3202
        %v3378 = vpop.permute.xlu0 %3377
        %3381 = vset.pattern.permute.xlu0 0
        %3382 = vperm.xlu0 %3381, %v3203
        %v3383 = vpop.permute.xlu0 %3382
        %3386 = vset.pattern.permute.xlu0 0
        %3387 = vperm.xlu0 %3386, %v3204
        %v3388 = vpop.permute.xlu0 %3387
        %3391 = vset.pattern.permute.xlu0 0
        %3392 = vperm.xlu0 %3391, %v3205
        %v3393 = vpop.permute.xlu0 %3392
        %3396 = vset.pattern.permute.xlu0 0
        %3397 = vperm.xlu0 %3396, %v3206
        %v3398 = vpop.permute.xlu0 %3397
        %3401 = vset.pattern.permute.xlu0 0
        %3402 = vperm.xlu0 %3401, %v3207
        %v3403 = vpop.permute.xlu0 %3402
        %3406 = vset.pattern.permute.xlu0 0
        %3407 = vperm.xlu0 %3406, %v3208
        %v3408 = vpop.permute.xlu0 %3407
        %3411 = vset.pattern.permute.xlu0 0
        %3412 = vperm.xlu0 %3411, %v3209
        %v3413 = vpop.permute.xlu0 %3412
        %3416 = vset.pattern.permute.xlu0 0
        %3417 = vperm.xlu0 %3416, %v3210
        %v3418 = vpop.permute.xlu0 %3417
        %3421 = vset.pattern.permute.xlu0 0
        %3422 = vperm.xlu0 %3421, %v3211
        %v3423 = vpop.permute.xlu0 %3422
        %3426 = vset.pattern.permute.xlu0 0
        %3427 = vperm.xlu0 %3426, %v3212
        %v3428 = vpop.permute.xlu0 %3427
        %3431 = vset.pattern.permute.xlu0 0
        %3432 = vperm.xlu0 %3431, %v3213
        %v3433 = vpop.permute.xlu0 %3432
        %3436 = vset.pattern.permute.xlu0 0
        %3437 = vperm.xlu0 %3436, %v3214
        %v3438 = vpop.permute.xlu0 %3437
        %3441 = vset.pattern.permute.xlu0 0
        %3442 = vperm.xlu0 %3441, %v3215
        %v3443 = vpop.permute.xlu0 %3442
        %3446 = vset.pattern.permute.xlu0 0
        %3447 = vperm.xlu0 %3446, %v3216
        %v3448 = vpop.permute.xlu0 %3447
        %3451 = vset.pattern.permute.xlu0 0
        %3452 = vperm.xlu0 %3451, %v3217
        %v3453 = vpop.permute.xlu0 %3452
        %3456 = vset.pattern.permute.xlu0 0
        %3457 = vperm.xlu0 %3456, %v3218
        %v3458 = vpop.permute.xlu0 %3457
        %3461 = vset.pattern.permute.xlu0 0
        %3462 = vperm.xlu0 %3461, %v3219
        %v3463 = vpop.permute.xlu0 %3462
        %3466 = vset.pattern.permute.xlu0 0
        %3467 = vperm.xlu0 %3466, %v3220
        %v3468 = vpop.permute.xlu0 %3467
        %3471 = vset.pattern.permute.xlu0 0
        %3472 = vperm.xlu0 %3471, %v3221
        %v3473 = vpop.permute.xlu0 %3472
        %3476 = vset.pattern.permute.xlu0 0
        %3477 = vperm.xlu0 %3476, %v3222
        %v3478 = vpop.permute.xlu0 %3477
        %3481 = vset.pattern.permute.xlu0 0
        %3482 = vperm.xlu0 %3481, %v3223
        %v3483 = vpop.permute.xlu0 %3482
        %3486 = vset.pattern.permute.xlu0 0
        %3487 = vperm.xlu0 %3486, %v3224
        %v3488 = vpop.permute.xlu0 %3487
        %3491 = vset.pattern.permute.xlu0 0
        %3492 = vperm.xlu0 %3491, %v3225
        %v3493 = vpop.permute.xlu0 %3492
        %3496 = vset.pattern.permute.xlu0 0
        %3497 = vperm.xlu0 %3496, %v3226
        %v3498 = vpop.permute.xlu0 %3497
        %3501 = vset.pattern.permute.xlu0 0
        %3502 = vperm.xlu0 %3501, %v3227
        %v3503 = vpop.permute.xlu0 %3502
        %3506 = vset.pattern.permute.xlu0 0
        %3507 = vperm.xlu0 %3506, %v3228
        %v3508 = vpop.permute.xlu0 %3507
        %3511 = vset.pattern.permute.xlu0 0
        %3512 = vperm.xlu0 %3511, %v3229
        %v3513 = vpop.permute.xlu0 %3512
        %3516 = vset.pattern.permute.xlu0 0
        %3517 = vperm.xlu0 %3516, %v3230
        %v3518 = vpop.permute.xlu0 %3517
        %3521 = vset.pattern.permute.xlu0 0
        %3522 = vperm.xlu0 %3521, %v3231
        %v3523 = vpop.permute.xlu0 %3522
        %3526 = vset.pattern.permute.xlu0 0
        %3527 = vperm.xlu0 %3526, %v3232
        %v3528 = vpop.permute.xlu0 %3527
        %3531 = vset.pattern.permute.xlu0 0
        %3532 = vperm.xlu0 %3531, %v3233
        %v3533 = vpop.permute.xlu0 %3532
        %3536 = vset.pattern.permute.xlu0 0
        %3537 = vperm.xlu0 %3536, %v3234
        %v3538 = vpop.permute.xlu0 %3537
        %3541 = vset.pattern.permute.xlu0 0
        %3542 = vperm.xlu0 %3541, %v3235
        %v3543 = vpop.permute.xlu0 %3542
        %3546 = vset.pattern.permute.xlu0 0
        %3547 = vperm.xlu0 %3546, %v3236
        %v3548 = vpop.permute.xlu0 %3547
        %3551 = vset.pattern.permute.xlu0 0
        %3552 = vperm.xlu0 %3551, %v3237
        %v3553 = vpop.permute.xlu0 %3552
        %3556 = vset.pattern.permute.xlu0 0
        %3557 = vperm.xlu0 %3556, %v3238
        %v3558 = vpop.permute.xlu0 %3557
        %3561 = vset.pattern.permute.xlu0 0
        %3562 = vperm.xlu0 %3561, %v3239
        %v3563 = vpop.permute.xlu0 %3562
        %3566 = vset.pattern.permute.xlu0 0
        %3567 = vperm.xlu0 %3566, %v3240
        %v3568 = vpop.permute.xlu0 %3567
        %3571 = vset.pattern.permute.xlu0 0
        %3572 = vperm.xlu0 %3571, %v3241
        %v3573 = vpop.permute.xlu0 %3572
        %3576 = vset.pattern.permute.xlu0 0
        %3577 = vperm.xlu0 %3576, %v3242
        %v3578 = vpop.permute.xlu0 %3577
        %3581 = vset.pattern.permute.xlu0 0
        %3582 = vperm.xlu0 %3581, %v3243
        %v3583 = vpop.permute.xlu0 %3582
        %3586 = vset.pattern.permute.xlu0 0
        %3587 = vperm.xlu0 %3586, %v3244
        %v3588 = vpop.permute.xlu0 %3587
        %3591 = vset.pattern.permute.xlu0 0
        %3592 = vperm.xlu0 %3591, %v3245
        %v3593 = vpop.permute.xlu0 %3592
        %3596 = vset.pattern.permute.xlu0 0
        %3597 = vperm.xlu0 %3596, %v3246
        %v3598 = vpop.permute.xlu0 %3597
        %3601 = vset.pattern.permute.xlu0 0
        %3602 = vperm.xlu0 %3601, %v3247
        %v3603 = vpop.permute.xlu0 %3602
        %3606 = vset.pattern.permute.xlu0 0
        %3607 = vperm.xlu0 %3606, %v3248
        %v3608 = vpop.permute.xlu0 %3607
        %3611 = vset.pattern.permute.xlu0 0
        %3612 = vperm.xlu0 %3611, %v3249
        %v3613 = vpop.permute.xlu0 %3612
        %3616 = vset.pattern.permute.xlu0 0
        %3617 = vperm.xlu0 %3616, %v3250
        %v3618 = vpop.permute.xlu0 %3617
        %3621 = vset.pattern.permute.xlu0 0
        %3622 = vperm.xlu0 %3621, %v3251
        %v3623 = vpop.permute.xlu0 %3622
        %3626 = vset.pattern.permute.xlu0 0
        %3627 = vperm.xlu0 %3626, %v3252
        %v3628 = vpop.permute.xlu0 %3627
        %3631 = vset.pattern.permute.xlu0 0
        %3632 = vperm.xlu0 %3631, %v3253
        %v3633 = vpop.permute.xlu0 %3632
        %3636 = vset.pattern.permute.xlu0 0
        %3637 = vperm.xlu0 %3636, %v3254
        %v3638 = vpop.permute.xlu0 %3637
        %3641 = vset.pattern.permute.xlu0 0
        %3642 = vperm.xlu0 %3641, %v3255
        %v3643 = vpop.permute.xlu0 %3642
        %3646 = vset.pattern.permute.xlu0 0
        %3647 = vperm.xlu0 %3646, %v3256
        %v3648 = vpop.permute.xlu0 %3647
        %3651 = vset.pattern.permute.xlu0 0
        %3652 = vperm.xlu0 %3651, %v3257
        %v3653 = vpop.permute.xlu0 %3652
        %3656 = vset.pattern.permute.xlu0 0
        %3657 = vperm.xlu0 %3656, %v3258
        %v3658 = vpop.permute.xlu0 %3657
        %3661 = vset.pattern.permute.xlu0 0
        %3662 = vperm.xlu0 %3661, %v3259
        %v3663 = vpop.permute.xlu0 %3662
        %3666 = vset.pattern.permute.xlu0 0
        %3667 = vperm.xlu0 %3666, %v3260
        %v3668 = vpop.permute.xlu0 %3667
        %3671 = vset.pattern.permute.xlu0 0
        %3672 = vperm.xlu0 %3671, %v3261
        %v3673 = vpop.permute.xlu0 %3672
        %3676 = vset.pattern.permute.xlu0 0
        %3677 = vperm.xlu0 %3676, %v3262
        %v3678 = vpop.permute.xlu0 %3677
        %3681 = vset.pattern.permute.xlu0 0
        %3682 = vperm.xlu0 %3681, %v3263
        %v3683 = vpop.permute.xlu0 %3682
        %3686 = vset.pattern.permute.xlu0 0
        %3687 = vperm.xlu0 %3686, %v3264
        %v3688 = vpop.permute.xlu0 %3687
        %3691 = vset.pattern.permute.xlu0 0
        %3692 = vperm.xlu0 %3691, %v3265
        %v3693 = vpop.permute.xlu0 %3692
        %3696 = vset.pattern.permute.xlu0 0
        %3697 = vperm.xlu0 %3696, %v3266
        %v3698 = vpop.permute.xlu0 %3697
        %3701 = vset.pattern.permute.xlu0 0
        %3702 = vperm.xlu0 %3701, %v3267
        %v3703 = vpop.permute.xlu0 %3702
        %3706 = vset.pattern.permute.xlu0 0
        %3707 = vperm.xlu0 %3706, %v3268
        %v3708 = vpop.permute.xlu0 %3707
        %3711 = vset.pattern.permute.xlu0 0
        %3712 = vperm.xlu0 %3711, %v3269
        %v3713 = vpop.permute.xlu0 %3712
        %3716 = vset.pattern.permute.xlu0 0
        %3717 = vperm.xlu0 %3716, %v3270
        %v3718 = vpop.permute.xlu0 %3717
        %3721 = vset.pattern.permute.xlu0 0
        %3722 = vperm.xlu0 %3721, %v3271
        %v3723 = vpop.permute.xlu0 %3722
        %3726 = vset.pattern.permute.xlu0 0
        %3727 = vperm.xlu0 %3726, %v3272
        %v3728 = vpop.permute.xlu0 %3727
        %v3731 = vlaneseq
        %v3732 = vshrl.u32 %v3731, 7
        %v3733 = vsub.s32 0, %v3732
        %v3734 = vrot.slane %v3274, %v3733
        %v3736 = vmul.f32 %v3278, %v3734
        %v3737 = vmul.f32 %v3283, %v3734
        %v3738 = vmul.f32 %v3288, %v3734
        %v3739 = vmul.f32 %v3293, %v3734
        %v3740 = vmul.f32 %v3298, %v3734
        %v3741 = vmul.f32 %v3303, %v3734
        %v3742 = vmul.f32 %v3308, %v3734
        %v3743 = vmul.f32 %v3313, %v3734
        %v3744 = vmul.f32 %v3318, %v3734
        %v3745 = vmul.f32 %v3323, %v3734
        %v3746 = vmul.f32 %v3328, %v3734
        %v3747 = vmul.f32 %v3333, %v3734
        %v3748 = vmul.f32 %v3338, %v3734
        %v3749 = vmul.f32 %v3343, %v3734
        %v3750 = vmul.f32 %v3348, %v3734
        %v3751 = vmul.f32 %v3353, %v3734
        %v3752 = vmul.f32 %v3358, %v3734
        %v3753 = vmul.f32 %v3363, %v3734
        %v3754 = vmul.f32 %v3368, %v3734
        %v3755 = vmul.f32 %v3373, %v3734
        %v3756 = vmul.f32 %v3378, %v3734
        %v3757 = vmul.f32 %v3383, %v3734
        %v3758 = vmul.f32 %v3388, %v3734
        %v3759 = vmul.f32 %v3393, %v3734
        %v3760 = vmul.f32 %v3398, %v3734
        %v3761 = vmul.f32 %v3403, %v3734
        %v3762 = vmul.f32 %v3408, %v3734
        %v3763 = vmul.f32 %v3413, %v3734
        %v3764 = vmul.f32 %v3418, %v3734
        %v3765 = vmul.f32 %v3423, %v3734
        %v3766 = vmul.f32 %v3428, %v3734
        %v3767 = vmul.f32 %v3433, %v3734
        %v3768 = vmul.f32 %v3438, %v3734
        %v3769 = vmul.f32 %v3443, %v3734
        %v3770 = vmul.f32 %v3448, %v3734
        %v3771 = vmul.f32 %v3453, %v3734
        %v3772 = vmul.f32 %v3458, %v3734
        %v3773 = vmul.f32 %v3463, %v3734
        %v3774 = vmul.f32 %v3468, %v3734
        %v3775 = vmul.f32 %v3473, %v3734
        %v3776 = vmul.f32 %v3478, %v3734
        %v3777 = vmul.f32 %v3483, %v3734
        %v3778 = vmul.f32 %v3488, %v3734
        %v3779 = vmul.f32 %v3493, %v3734
        %v3780 = vmul.f32 %v3498, %v3734
        %v3781 = vmul.f32 %v3503, %v3734
        %v3782 = vmul.f32 %v3508, %v3734
        %v3783 = vmul.f32 %v3513, %v3734
        %v3784 = vmul.f32 %v3518, %v3734
        %v3785 = vmul.f32 %v3523, %v3734
        %v3786 = vmul.f32 %v3528, %v3734
        %v3787 = vmul.f32 %v3533, %v3734
        %v3788 = vmul.f32 %v3538, %v3734
        %v3789 = vmul.f32 %v3543, %v3734
        %v3790 = vmul.f32 %v3548, %v3734
        %v3791 = vmul.f32 %v3553, %v3734
        %v3792 = vmul.f32 %v3558, %v3734
        %v3793 = vmul.f32 %v3563, %v3734
        %v3794 = vmul.f32 %v3568, %v3734
        %v3795 = vmul.f32 %v3573, %v3734
        %v3796 = vmul.f32 %v3578, %v3734
        %v3797 = vmul.f32 %v3583, %v3734
        %v3798 = vmul.f32 %v3588, %v3734
        %v3799 = vmul.f32 %v3593, %v3734
        %v3800 = vmul.f32 %v3598, %v3734
        %v3801 = vmul.f32 %v3603, %v3734
        %v3802 = vmul.f32 %v3608, %v3734
        %v3803 = vmul.f32 %v3613, %v3734
        %v3804 = vmul.f32 %v3618, %v3734
        %v3805 = vmul.f32 %v3623, %v3734
        %v3806 = vmul.f32 %v3628, %v3734
        %v3807 = vmul.f32 %v3633, %v3734
        %v3808 = vmul.f32 %v3638, %v3734
        %v3809 = vmul.f32 %v3643, %v3734
        %v3810 = vmul.f32 %v3648, %v3734
        %v3811 = vmul.f32 %v3653, %v3734
        %v3812 = vmul.f32 %v3658, %v3734
        %v3813 = vmul.f32 %v3663, %v3734
        %v3814 = vmul.f32 %v3668, %v3734
        %v3815 = vmul.f32 %v3673, %v3734
        %v3816 = vmul.f32 %v3678, %v3734
        %v3817 = vmul.f32 %v3683, %v3734
        %v3818 = vmul.f32 %v3688, %v3734
        %v3819 = vmul.f32 %v3693, %v3734
        %v3820 = vmul.f32 %v3698, %v3734
        %v3821 = vmul.f32 %v3703, %v3734
        %v3822 = vmul.f32 %v3708, %v3734
        %v3823 = vmul.f32 %v3713, %v3734
        %v3824 = vmul.f32 %v3718, %v3734
        %v3825 = vmul.f32 %v3723, %v3734
        %v3826 = vmul.f32 %v3728, %v3734
        %v3827 = vadd.f32 %v3091, %v3736
        %v3828 = vadd.f32 %v3092, %v3737
        %v3829 = vadd.f32 %v3093, %v3738
        %v3830 = vadd.f32 %v3094, %v3739
        %v3831 = vadd.f32 %v3095, %v3740
        %v3832 = vadd.f32 %v3096, %v3741
        %v3833 = vadd.f32 %v3097, %v3742
        %v3834 = vadd.f32 %v3098, %v3743
        %v3835 = vadd.f32 %v3099, %v3744
        %v3836 = vadd.f32 %v3100, %v3745
        %v3837 = vadd.f32 %v3101, %v3746
        %v3838 = vadd.f32 %v3102, %v3747
        %v3839 = vadd.f32 %v3103, %v3748
        %v3840 = vadd.f32 %v3104, %v3749
        %v3841 = vadd.f32 %v3105, %v3750
        %v3842 = vadd.f32 %v3106, %v3751
        %v3843 = vadd.f32 %v3107, %v3752
        %v3844 = vadd.f32 %v3108, %v3753
        %v3845 = vadd.f32 %v3109, %v3754
        %v3846 = vadd.f32 %v3110, %v3755
        %v3847 = vadd.f32 %v3111, %v3756
        %v3848 = vadd.f32 %v3112, %v3757
        %v3849 = vadd.f32 %v3113, %v3758
        %v3850 = vadd.f32 %v3114, %v3759
        %v3851 = vadd.f32 %v3115, %v3760
        %v3852 = vadd.f32 %v3116, %v3761
        %v3853 = vadd.f32 %v3117, %v3762
        %v3854 = vadd.f32 %v3118, %v3763
        %v3855 = vadd.f32 %v3119, %v3764
        %v3856 = vadd.f32 %v3120, %v3765
        %v3857 = vadd.f32 %v3121, %v3766
        %v3858 = vadd.f32 %v3122, %v3767
        %v3859 = vadd.f32 %v3123, %v3768
        %v3860 = vadd.f32 %v3124, %v3769
        %v3861 = vadd.f32 %v3125, %v3770
        %v3862 = vadd.f32 %v3126, %v3771
        %v3863 = vadd.f32 %v3127, %v3772
        %v3864 = vadd.f32 %v3128, %v3773
        %v3865 = vadd.f32 %v3129, %v3774
        %v3866 = vadd.f32 %v3130, %v3775
        %v3867 = vadd.f32 %v3131, %v3776
        %v3868 = vadd.f32 %v3132, %v3777
        %v3869 = vadd.f32 %v3133, %v3778
        %v3870 = vadd.f32 %v3134, %v3779
        %v3871 = vadd.f32 %v3135, %v3780
        %v3872 = vadd.f32 %v3136, %v3781
        %v3873 = vadd.f32 %v3137, %v3782
        %v3874 = vadd.f32 %v3138, %v3783
        %v3875 = vadd.f32 %v3139, %v3784
        %v3876 = vadd.f32 %v3140, %v3785
        %v3877 = vadd.f32 %v3141, %v3786
        %v3878 = vadd.f32 %v3142, %v3787
        %v3879 = vadd.f32 %v3143, %v3788
        %v3880 = vadd.f32 %v3144, %v3789
        %v3881 = vadd.f32 %v3145, %v3790
        %v3882 = vadd.f32 %v3146, %v3791
        %v3883 = vadd.f32 %v3147, %v3792
        %v3884 = vadd.f32 %v3148, %v3793
        %v3885 = vadd.f32 %v3149, %v3794
        %v3886 = vadd.f32 %v3150, %v3795
        %v3887 = vadd.f32 %v3151, %v3796
        %v3888 = vadd.f32 %v3152, %v3797
        %v3889 = vadd.f32 %v3153, %v3798
        %v3890 = vadd.f32 %v3154, %v3799
        %v3891 = vadd.f32 %v3155, %v3800
        %v3892 = vadd.f32 %v3156, %v3801
        %v3893 = vadd.f32 %v3157, %v3802
        %v3894 = vadd.f32 %v3158, %v3803
        %v3895 = vadd.f32 %v3159, %v3804
        %v3896 = vadd.f32 %v3160, %v3805
        %v3897 = vadd.f32 %v3161, %v3806
        %v3898 = vadd.f32 %v3162, %v3807
        %v3899 = vadd.f32 %v3163, %v3808
        %v3900 = vadd.f32 %v3164, %v3809
        %v3901 = vadd.f32 %v3165, %v3810
        %v3902 = vadd.f32 %v3166, %v3811
        %v3903 = vadd.f32 %v3167, %v3812
        %v3904 = vadd.f32 %v3168, %v3813
        %v3905 = vadd.f32 %v3169, %v3814
        %v3906 = vadd.f32 %v3170, %v3815
        %v3907 = vadd.f32 %v3171, %v3816
        %v3908 = vadd.f32 %v3172, %v3817
        %v3909 = vadd.f32 %v3173, %v3818
        %v3910 = vadd.f32 %v3174, %v3819
        %v3911 = vadd.f32 %v3175, %v3820
        %v3912 = vadd.f32 %v3176, %v3821
        %v3913 = vadd.f32 %v3177, %v3822
        %v3914 = vadd.f32 %v3178, %v3823
        %v3915 = vadd.f32 %v3179, %v3824
        %v3916 = vadd.f32 %v3180, %v3825
        %v3917 = vadd.f32 %v3181, %v3826
        %v3918 = vld [vmem:[%s329 + $0x1e] sm:$0xff]
        %v3919 = vld [vmem:[%s329 + $0x26] sm:$0xff]
        %v3920 = vld [vmem:[%s329 + $0x2e] sm:$0xff]
        %v3921 = vld [vmem:[%s329 + $0x36] sm:$0xff]
        %v3922 = vld [vmem:[%s329 + $0x3e] sm:$0xff]
        %v3923 = vld [vmem:[%s329 + $0x46] sm:$0xff]
        %v3924 = vld [vmem:[%s329 + $0x4e] sm:$0xff]
        %v3925 = vld [vmem:[%s329 + $0x56] sm:$0xff]
        %v3926 = vld [vmem:[%s329 + $0x5e] sm:$0xff]
        %v3927 = vld [vmem:[%s329 + $0x66] sm:$0xff]
        %v3928 = vld [vmem:[%s329 + $0x6e] sm:$0xff]
        %v3929 = vld [vmem:[%s329 + $0x76] sm:$0xff]
        %v3930 = vld [vmem:[%s329 + $0x7e] sm:$0xff]
        %v3931 = vld [vmem:[%s329 + $0x86] sm:$0xff]
        %v3932 = vld [vmem:[%s329 + $0x8e] sm:$0xff]
        %v3933 = vld [vmem:[%s329 + $0x96] sm:$0xff]
        %v3934 = vld [vmem:[%s329 + $0x9e] sm:$0xff]
        %v3935 = vld [vmem:[%s329 + $0xa6] sm:$0xff]
        %v3936 = vld [vmem:[%s329 + $0xae] sm:$0xff]
        %v3937 = vld [vmem:[%s329 + $0xb6] sm:$0xff]
        %v3938 = vld [vmem:[%s329 + $0xbe] sm:$0xff]
        %v3939 = vld [vmem:[%s329 + $0xc6] sm:$0xff]
        %v3940 = vld [vmem:[%s329 + $0xce] sm:$0xff]
        %v3941 = vld [vmem:[%s329 + $0xd6] sm:$0xff]
        %v3942 = vld [vmem:[%s329 + $0xde] sm:$0xff]
        %v3943 = vld [vmem:[%s329 + $0xe6] sm:$0xff]
        %v3944 = vld [vmem:[%s329 + $0xee] sm:$0xff]
        %v3945 = vld [vmem:[%s329 + $0xf6] sm:$0xff]
        %v3946 = vld [vmem:[%s329 + $0xfe] sm:$0xff]
        %v3947 = vld [vmem:[%s329 + $0x106] sm:$0xff]
        %v3948 = vld [vmem:[%s329 + $0x10e] sm:$0xff]
        %v3949 = vld [vmem:[%s329 + $0x116] sm:$0xff]
        %v3950 = vld [vmem:[%s329 + $0x11e] sm:$0xff]
        %v3951 = vld [vmem:[%s329 + $0x126] sm:$0xff]
        %v3952 = vld [vmem:[%s329 + $0x12e] sm:$0xff]
        %v3953 = vld [vmem:[%s329 + $0x136] sm:$0xff]
        %v3954 = vld [vmem:[%s329 + $0x13e] sm:$0xff]
        %v3955 = vld [vmem:[%s329 + $0x146] sm:$0xff]
        %v3956 = vld [vmem:[%s329 + $0x14e] sm:$0xff]
        %v3957 = vld [vmem:[%s329 + $0x156] sm:$0xff]
        %v3958 = vld [vmem:[%s329 + $0x15e] sm:$0xff]
        %v3959 = vld [vmem:[%s329 + $0x166] sm:$0xff]
        %v3960 = vld [vmem:[%s329 + $0x16e] sm:$0xff]
        %v3961 = vld [vmem:[%s329 + $0x176] sm:$0xff]
        %v3962 = vld [vmem:[%s329 + $0x17e] sm:$0xff]
        %v3963 = vld [vmem:[%s329 + $0x186] sm:$0xff]
        %v3964 = vld [vmem:[%s329 + $0x18e] sm:$0xff]
        %v3965 = vld [vmem:[%s329 + $0x196] sm:$0xff]
        %v3966 = vld [vmem:[%s329 + $0x19e] sm:$0xff]
        %v3967 = vld [vmem:[%s329 + $0x1a6] sm:$0xff]
        %v3968 = vld [vmem:[%s329 + $0x1ae] sm:$0xff]
        %v3969 = vld [vmem:[%s329 + $0x1b6] sm:$0xff]
        %v3970 = vld [vmem:[%s329 + $0x1be] sm:$0xff]
        %v3971 = vld [vmem:[%s329 + $0x1c6] sm:$0xff]
        %v3972 = vld [vmem:[%s329 + $0x1ce] sm:$0xff]
        %v3973 = vld [vmem:[%s329 + $0x1d6] sm:$0xff]
        %v3974 = vld [vmem:[%s329 + $0x1de] sm:$0xff]
        %v3975 = vld [vmem:[%s329 + $0x1e6] sm:$0xff]
        %v3976 = vld [vmem:[%s329 + $0x1ee] sm:$0xff]
        %v3977 = vld [vmem:[%s329 + $0x1f6] sm:$0xff]
        %v3978 = vld [vmem:[%s329 + $0x1fe] sm:$0xff]
        %v3979 = vld [vmem:[%s329 + $0x206] sm:$0xff]
        %v3980 = vld [vmem:[%s329 + $0x20e] sm:$0xff]
        %v3981 = vld [vmem:[%s329 + $0x216] sm:$0xff]
        %v3982 = vld [vmem:[%s329 + $0x21e] sm:$0xff]
        %v3983 = vld [vmem:[%s329 + $0x226] sm:$0xff]
        %v3984 = vld [vmem:[%s329 + $0x22e] sm:$0xff]
        %v3985 = vld [vmem:[%s329 + $0x236] sm:$0xff]
        %v3986 = vld [vmem:[%s329 + $0x23e] sm:$0xff]
        %v3987 = vld [vmem:[%s329 + $0x246] sm:$0xff]
        %v3988 = vld [vmem:[%s329 + $0x24e] sm:$0xff]
        %v3989 = vld [vmem:[%s329 + $0x256] sm:$0xff]
        %v3990 = vld [vmem:[%s329 + $0x25e] sm:$0xff]
        %v3991 = vld [vmem:[%s329 + $0x266] sm:$0xff]
        %v3992 = vld [vmem:[%s329 + $0x26e] sm:$0xff]
        %v3993 = vld [vmem:[%s329 + $0x276] sm:$0xff]
        %v3994 = vld [vmem:[%s329 + $0x27e] sm:$0xff]
        %v3995 = vld [vmem:[%s329 + $0x286] sm:$0xff]
        %v3996 = vld [vmem:[%s329 + $0x28e] sm:$0xff]
        %v3997 = vld [vmem:[%s329 + $0x296] sm:$0xff]
        %v3998 = vld [vmem:[%s329 + $0x29e] sm:$0xff]
        %v3999 = vld [vmem:[%s329 + $0x2a6] sm:$0xff]
        %v4000 = vld [vmem:[%s329 + $0x2ae] sm:$0xff]
        %v4001 = vld [vmem:[%s329 + $0x2b6] sm:$0xff]
        %v4002 = vld [vmem:[%s329 + $0x2be] sm:$0xff]
        %v4003 = vld [vmem:[%s329 + $0x2c6] sm:$0xff]
        %v4004 = vld [vmem:[%s329 + $0x2ce] sm:$0xff]
        %v4005 = vld [vmem:[%s329 + $0x2d6] sm:$0xff]
        %v4006 = vld [vmem:[%s329 + $0x2de] sm:$0xff]
        %v4007 = vld [vmem:[%s329 + $0x2e6] sm:$0xff]
        %v4008 = vld [vmem:[%s329 + $0x2ee] sm:$0x3f]
        %s4009 = scalar_lea.vmem %s1, 5
        %v4010 = vld [vmem:[%s4009] sm:$0x1]
        %4012 = vset.pattern.permute.xlu0 0
        %4013 = vperm.xlu0 %4012, %v3918
        %v4014 = vpop.permute.xlu0 %4013
        %4017 = vset.pattern.permute.xlu0 0
        %4018 = vperm.xlu0 %4017, %v3919
        %v4019 = vpop.permute.xlu0 %4018
        %4022 = vset.pattern.permute.xlu0 0
        %4023 = vperm.xlu0 %4022, %v3920
        %v4024 = vpop.permute.xlu0 %4023
        %4027 = vset.pattern.permute.xlu0 0
        %4028 = vperm.xlu0 %4027, %v3921
        %v4029 = vpop.permute.xlu0 %4028
        %4032 = vset.pattern.permute.xlu0 0
        %4033 = vperm.xlu0 %4032, %v3922
        %v4034 = vpop.permute.xlu0 %4033
        %4037 = vset.pattern.permute.xlu0 0
        %4038 = vperm.xlu0 %4037, %v3923
        %v4039 = vpop.permute.xlu0 %4038
        %4042 = vset.pattern.permute.xlu0 0
        %4043 = vperm.xlu0 %4042, %v3924
        %v4044 = vpop.permute.xlu0 %4043
        %4047 = vset.pattern.permute.xlu0 0
        %4048 = vperm.xlu0 %4047, %v3925
        %v4049 = vpop.permute.xlu0 %4048
        %4052 = vset.pattern.permute.xlu0 0
        %4053 = vperm.xlu0 %4052, %v3926
        %v4054 = vpop.permute.xlu0 %4053
        %4057 = vset.pattern.permute.xlu0 0
        %4058 = vperm.xlu0 %4057, %v3927
        %v4059 = vpop.permute.xlu0 %4058
        %4062 = vset.pattern.permute.xlu0 0
        %4063 = vperm.xlu0 %4062, %v3928
        %v4064 = vpop.permute.xlu0 %4063
        %4067 = vset.pattern.permute.xlu0 0
        %4068 = vperm.xlu0 %4067, %v3929
        %v4069 = vpop.permute.xlu0 %4068
        %4072 = vset.pattern.permute.xlu0 0
        %4073 = vperm.xlu0 %4072, %v3930
        %v4074 = vpop.permute.xlu0 %4073
        %4077 = vset.pattern.permute.xlu0 0
        %4078 = vperm.xlu0 %4077, %v3931
        %v4079 = vpop.permute.xlu0 %4078
        %4082 = vset.pattern.permute.xlu0 0
        %4083 = vperm.xlu0 %4082, %v3932
        %v4084 = vpop.permute.xlu0 %4083
        %4087 = vset.pattern.permute.xlu0 0
        %4088 = vperm.xlu0 %4087, %v3933
        %v4089 = vpop.permute.xlu0 %4088
        %4092 = vset.pattern.permute.xlu0 0
        %4093 = vperm.xlu0 %4092, %v3934
        %v4094 = vpop.permute.xlu0 %4093
        %4097 = vset.pattern.permute.xlu0 0
        %4098 = vperm.xlu0 %4097, %v3935
        %v4099 = vpop.permute.xlu0 %4098
        %4102 = vset.pattern.permute.xlu0 0
        %4103 = vperm.xlu0 %4102, %v3936
        %v4104 = vpop.permute.xlu0 %4103
        %4107 = vset.pattern.permute.xlu0 0
        %4108 = vperm.xlu0 %4107, %v3937
        %v4109 = vpop.permute.xlu0 %4108
        %4112 = vset.pattern.permute.xlu0 0
        %4113 = vperm.xlu0 %4112, %v3938
        %v4114 = vpop.permute.xlu0 %4113
        %4117 = vset.pattern.permute.xlu0 0
        %4118 = vperm.xlu0 %4117, %v3939
        %v4119 = vpop.permute.xlu0 %4118
        %4122 = vset.pattern.permute.xlu0 0
        %4123 = vperm.xlu0 %4122, %v3940
        %v4124 = vpop.permute.xlu0 %4123
        %4127 = vset.pattern.permute.xlu0 0
        %4128 = vperm.xlu0 %4127, %v3941
        %v4129 = vpop.permute.xlu0 %4128
        %4132 = vset.pattern.permute.xlu0 0
        %4133 = vperm.xlu0 %4132, %v3942
        %v4134 = vpop.permute.xlu0 %4133
        %4137 = vset.pattern.permute.xlu0 0
        %4138 = vperm.xlu0 %4137, %v3943
        %v4139 = vpop.permute.xlu0 %4138
        %4142 = vset.pattern.permute.xlu0 0
        %4143 = vperm.xlu0 %4142, %v3944
        %v4144 = vpop.permute.xlu0 %4143
        %4147 = vset.pattern.permute.xlu0 0
        %4148 = vperm.xlu0 %4147, %v3945
        %v4149 = vpop.permute.xlu0 %4148
        %4152 = vset.pattern.permute.xlu0 0
        %4153 = vperm.xlu0 %4152, %v3946
        %v4154 = vpop.permute.xlu0 %4153
        %4157 = vset.pattern.permute.xlu0 0
        %4158 = vperm.xlu0 %4157, %v3947
        %v4159 = vpop.permute.xlu0 %4158
        %4162 = vset.pattern.permute.xlu0 0
        %4163 = vperm.xlu0 %4162, %v3948
        %v4164 = vpop.permute.xlu0 %4163
        %4167 = vset.pattern.permute.xlu0 0
        %4168 = vperm.xlu0 %4167, %v3949
        %v4169 = vpop.permute.xlu0 %4168
        %4172 = vset.pattern.permute.xlu0 0
        %4173 = vperm.xlu0 %4172, %v3950
        %v4174 = vpop.permute.xlu0 %4173
        %4177 = vset.pattern.permute.xlu0 0
        %4178 = vperm.xlu0 %4177, %v3951
        %v4179 = vpop.permute.xlu0 %4178
        %4182 = vset.pattern.permute.xlu0 0
        %4183 = vperm.xlu0 %4182, %v3952
        %v4184 = vpop.permute.xlu0 %4183
        %4187 = vset.pattern.permute.xlu0 0
        %4188 = vperm.xlu0 %4187, %v3953
        %v4189 = vpop.permute.xlu0 %4188
        %4192 = vset.pattern.permute.xlu0 0
        %4193 = vperm.xlu0 %4192, %v3954
        %v4194 = vpop.permute.xlu0 %4193
        %4197 = vset.pattern.permute.xlu0 0
        %4198 = vperm.xlu0 %4197, %v3955
        %v4199 = vpop.permute.xlu0 %4198
        %4202 = vset.pattern.permute.xlu0 0
        %4203 = vperm.xlu0 %4202, %v3956
        %v4204 = vpop.permute.xlu0 %4203
        %4207 = vset.pattern.permute.xlu0 0
        %4208 = vperm.xlu0 %4207, %v3957
        %v4209 = vpop.permute.xlu0 %4208
        %4212 = vset.pattern.permute.xlu0 0
        %4213 = vperm.xlu0 %4212, %v3958
        %v4214 = vpop.permute.xlu0 %4213
        %4217 = vset.pattern.permute.xlu0 0
        %4218 = vperm.xlu0 %4217, %v3959
        %v4219 = vpop.permute.xlu0 %4218
        %4222 = vset.pattern.permute.xlu0 0
        %4223 = vperm.xlu0 %4222, %v3960
        %v4224 = vpop.permute.xlu0 %4223
        %4227 = vset.pattern.permute.xlu0 0
        %4228 = vperm.xlu0 %4227, %v3961
        %v4229 = vpop.permute.xlu0 %4228
        %4232 = vset.pattern.permute.xlu0 0
        %4233 = vperm.xlu0 %4232, %v3962
        %v4234 = vpop.permute.xlu0 %4233
        %4237 = vset.pattern.permute.xlu0 0
        %4238 = vperm.xlu0 %4237, %v3963
        %v4239 = vpop.permute.xlu0 %4238
        %4242 = vset.pattern.permute.xlu0 0
        %4243 = vperm.xlu0 %4242, %v3964
        %v4244 = vpop.permute.xlu0 %4243
        %4247 = vset.pattern.permute.xlu0 0
        %4248 = vperm.xlu0 %4247, %v3965
        %v4249 = vpop.permute.xlu0 %4248
        %4252 = vset.pattern.permute.xlu0 0
        %4253 = vperm.xlu0 %4252, %v3966
        %v4254 = vpop.permute.xlu0 %4253
        %4257 = vset.pattern.permute.xlu0 0
        %4258 = vperm.xlu0 %4257, %v3967
        %v4259 = vpop.permute.xlu0 %4258
        %4262 = vset.pattern.permute.xlu0 0
        %4263 = vperm.xlu0 %4262, %v3968
        %v4264 = vpop.permute.xlu0 %4263
        %4267 = vset.pattern.permute.xlu0 0
        %4268 = vperm.xlu0 %4267, %v3969
        %v4269 = vpop.permute.xlu0 %4268
        %4272 = vset.pattern.permute.xlu0 0
        %4273 = vperm.xlu0 %4272, %v3970
        %v4274 = vpop.permute.xlu0 %4273
        %4277 = vset.pattern.permute.xlu0 0
        %4278 = vperm.xlu0 %4277, %v3971
        %v4279 = vpop.permute.xlu0 %4278
        %4282 = vset.pattern.permute.xlu0 0
        %4283 = vperm.xlu0 %4282, %v3972
        %v4284 = vpop.permute.xlu0 %4283
        %4287 = vset.pattern.permute.xlu0 0
        %4288 = vperm.xlu0 %4287, %v3973
        %v4289 = vpop.permute.xlu0 %4288
        %4292 = vset.pattern.permute.xlu0 0
        %4293 = vperm.xlu0 %4292, %v3974
        %v4294 = vpop.permute.xlu0 %4293
        %4297 = vset.pattern.permute.xlu0 0
        %4298 = vperm.xlu0 %4297, %v3975
        %v4299 = vpop.permute.xlu0 %4298
        %4302 = vset.pattern.permute.xlu0 0
        %4303 = vperm.xlu0 %4302, %v3976
        %v4304 = vpop.permute.xlu0 %4303
        %4307 = vset.pattern.permute.xlu0 0
        %4308 = vperm.xlu0 %4307, %v3977
        %v4309 = vpop.permute.xlu0 %4308
        %4312 = vset.pattern.permute.xlu0 0
        %4313 = vperm.xlu0 %4312, %v3978
        %v4314 = vpop.permute.xlu0 %4313
        %4317 = vset.pattern.permute.xlu0 0
        %4318 = vperm.xlu0 %4317, %v3979
        %v4319 = vpop.permute.xlu0 %4318
        %4322 = vset.pattern.permute.xlu0 0
        %4323 = vperm.xlu0 %4322, %v3980
        %v4324 = vpop.permute.xlu0 %4323
        %4327 = vset.pattern.permute.xlu0 0
        %4328 = vperm.xlu0 %4327, %v3981
        %v4329 = vpop.permute.xlu0 %4328
        %4332 = vset.pattern.permute.xlu0 0
        %4333 = vperm.xlu0 %4332, %v3982
        %v4334 = vpop.permute.xlu0 %4333
        %4337 = vset.pattern.permute.xlu0 0
        %4338 = vperm.xlu0 %4337, %v3983
        %v4339 = vpop.permute.xlu0 %4338
        %4342 = vset.pattern.permute.xlu0 0
        %4343 = vperm.xlu0 %4342, %v3984
        %v4344 = vpop.permute.xlu0 %4343
        %4347 = vset.pattern.permute.xlu0 0
        %4348 = vperm.xlu0 %4347, %v3985
        %v4349 = vpop.permute.xlu0 %4348
        %4352 = vset.pattern.permute.xlu0 0
        %4353 = vperm.xlu0 %4352, %v3986
        %v4354 = vpop.permute.xlu0 %4353
        %4357 = vset.pattern.permute.xlu0 0
        %4358 = vperm.xlu0 %4357, %v3987
        %v4359 = vpop.permute.xlu0 %4358
        %4362 = vset.pattern.permute.xlu0 0
        %4363 = vperm.xlu0 %4362, %v3988
        %v4364 = vpop.permute.xlu0 %4363
        %4367 = vset.pattern.permute.xlu0 0
        %4368 = vperm.xlu0 %4367, %v3989
        %v4369 = vpop.permute.xlu0 %4368
        %4372 = vset.pattern.permute.xlu0 0
        %4373 = vperm.xlu0 %4372, %v3990
        %v4374 = vpop.permute.xlu0 %4373
        %4377 = vset.pattern.permute.xlu0 0
        %4378 = vperm.xlu0 %4377, %v3991
        %v4379 = vpop.permute.xlu0 %4378
        %4382 = vset.pattern.permute.xlu0 0
        %4383 = vperm.xlu0 %4382, %v3992
        %v4384 = vpop.permute.xlu0 %4383
        %4387 = vset.pattern.permute.xlu0 0
        %4388 = vperm.xlu0 %4387, %v3993
        %v4389 = vpop.permute.xlu0 %4388
        %4392 = vset.pattern.permute.xlu0 0
        %4393 = vperm.xlu0 %4392, %v3994
        %v4394 = vpop.permute.xlu0 %4393
        %4397 = vset.pattern.permute.xlu0 0
        %4398 = vperm.xlu0 %4397, %v3995
        %v4399 = vpop.permute.xlu0 %4398
        %4402 = vset.pattern.permute.xlu0 0
        %4403 = vperm.xlu0 %4402, %v3996
        %v4404 = vpop.permute.xlu0 %4403
        %4407 = vset.pattern.permute.xlu0 0
        %4408 = vperm.xlu0 %4407, %v3997
        %v4409 = vpop.permute.xlu0 %4408
        %4412 = vset.pattern.permute.xlu0 0
        %4413 = vperm.xlu0 %4412, %v3998
        %v4414 = vpop.permute.xlu0 %4413
        %4417 = vset.pattern.permute.xlu0 0
        %4418 = vperm.xlu0 %4417, %v3999
        %v4419 = vpop.permute.xlu0 %4418
        %4422 = vset.pattern.permute.xlu0 0
        %4423 = vperm.xlu0 %4422, %v4000
        %v4424 = vpop.permute.xlu0 %4423
        %4427 = vset.pattern.permute.xlu0 0
        %4428 = vperm.xlu0 %4427, %v4001
        %v4429 = vpop.permute.xlu0 %4428
        %4432 = vset.pattern.permute.xlu0 0
        %4433 = vperm.xlu0 %4432, %v4002
        %v4434 = vpop.permute.xlu0 %4433
        %4437 = vset.pattern.permute.xlu0 0
        %4438 = vperm.xlu0 %4437, %v4003
        %v4439 = vpop.permute.xlu0 %4438
        %4442 = vset.pattern.permute.xlu0 0
        %4443 = vperm.xlu0 %4442, %v4004
        %v4444 = vpop.permute.xlu0 %4443
        %4447 = vset.pattern.permute.xlu0 0
        %4448 = vperm.xlu0 %4447, %v4005
        %v4449 = vpop.permute.xlu0 %4448
        %4452 = vset.pattern.permute.xlu0 0
        %4453 = vperm.xlu0 %4452, %v4006
        %v4454 = vpop.permute.xlu0 %4453
        %4457 = vset.pattern.permute.xlu0 0
        %4458 = vperm.xlu0 %4457, %v4007
        %v4459 = vpop.permute.xlu0 %4458
        %4462 = vset.pattern.permute.xlu0 0
        %4463 = vperm.xlu0 %4462, %v4008
        %v4464 = vpop.permute.xlu0 %4463
        %v4467 = vlaneseq
        %v4468 = vshrl.u32 %v4467, 7
        %v4469 = vsub.s32 0, %v4468
        %v4470 = vrot.slane %v4010, %v4469
        %v4472 = vmul.f32 %v4014, %v4470
        %v4473 = vmul.f32 %v4019, %v4470
        %v4474 = vmul.f32 %v4024, %v4470
        %v4475 = vmul.f32 %v4029, %v4470
        %v4476 = vmul.f32 %v4034, %v4470
        %v4477 = vmul.f32 %v4039, %v4470
        %v4478 = vmul.f32 %v4044, %v4470
        %v4479 = vmul.f32 %v4049, %v4470
        %v4480 = vmul.f32 %v4054, %v4470
        %v4481 = vmul.f32 %v4059, %v4470
        %v4482 = vmul.f32 %v4064, %v4470
        %v4483 = vmul.f32 %v4069, %v4470
        %v4484 = vmul.f32 %v4074, %v4470
        %v4485 = vmul.f32 %v4079, %v4470
        %v4486 = vmul.f32 %v4084, %v4470
        %v4487 = vmul.f32 %v4089, %v4470
        %v4488 = vmul.f32 %v4094, %v4470
        %v4489 = vmul.f32 %v4099, %v4470
        %v4490 = vmul.f32 %v4104, %v4470
        %v4491 = vmul.f32 %v4109, %v4470
        %v4492 = vmul.f32 %v4114, %v4470
        %v4493 = vmul.f32 %v4119, %v4470
        %v4494 = vmul.f32 %v4124, %v4470
        %v4495 = vmul.f32 %v4129, %v4470
        %v4496 = vmul.f32 %v4134, %v4470
        %v4497 = vmul.f32 %v4139, %v4470
        %v4498 = vmul.f32 %v4144, %v4470
        %v4499 = vmul.f32 %v4149, %v4470
        %v4500 = vmul.f32 %v4154, %v4470
        %v4501 = vmul.f32 %v4159, %v4470
        %v4502 = vmul.f32 %v4164, %v4470
        %v4503 = vmul.f32 %v4169, %v4470
        %v4504 = vmul.f32 %v4174, %v4470
        %v4505 = vmul.f32 %v4179, %v4470
        %v4506 = vmul.f32 %v4184, %v4470
        %v4507 = vmul.f32 %v4189, %v4470
        %v4508 = vmul.f32 %v4194, %v4470
        %v4509 = vmul.f32 %v4199, %v4470
        %v4510 = vmul.f32 %v4204, %v4470
        %v4511 = vmul.f32 %v4209, %v4470
        %v4512 = vmul.f32 %v4214, %v4470
        %v4513 = vmul.f32 %v4219, %v4470
        %v4514 = vmul.f32 %v4224, %v4470
        %v4515 = vmul.f32 %v4229, %v4470
        %v4516 = vmul.f32 %v4234, %v4470
        %v4517 = vmul.f32 %v4239, %v4470
        %v4518 = vmul.f32 %v4244, %v4470
        %v4519 = vmul.f32 %v4249, %v4470
        %v4520 = vmul.f32 %v4254, %v4470
        %v4521 = vmul.f32 %v4259, %v4470
        %v4522 = vmul.f32 %v4264, %v4470
        %v4523 = vmul.f32 %v4269, %v4470
        %v4524 = vmul.f32 %v4274, %v4470
        %v4525 = vmul.f32 %v4279, %v4470
        %v4526 = vmul.f32 %v4284, %v4470
        %v4527 = vmul.f32 %v4289, %v4470
        %v4528 = vmul.f32 %v4294, %v4470
        %v4529 = vmul.f32 %v4299, %v4470
        %v4530 = vmul.f32 %v4304, %v4470
        %v4531 = vmul.f32 %v4309, %v4470
        %v4532 = vmul.f32 %v4314, %v4470
        %v4533 = vmul.f32 %v4319, %v4470
        %v4534 = vmul.f32 %v4324, %v4470
        %v4535 = vmul.f32 %v4329, %v4470
        %v4536 = vmul.f32 %v4334, %v4470
        %v4537 = vmul.f32 %v4339, %v4470
        %v4538 = vmul.f32 %v4344, %v4470
        %v4539 = vmul.f32 %v4349, %v4470
        %v4540 = vmul.f32 %v4354, %v4470
        %v4541 = vmul.f32 %v4359, %v4470
        %v4542 = vmul.f32 %v4364, %v4470
        %v4543 = vmul.f32 %v4369, %v4470
        %v4544 = vmul.f32 %v4374, %v4470
        %v4545 = vmul.f32 %v4379, %v4470
        %v4546 = vmul.f32 %v4384, %v4470
        %v4547 = vmul.f32 %v4389, %v4470
        %v4548 = vmul.f32 %v4394, %v4470
        %v4549 = vmul.f32 %v4399, %v4470
        %v4550 = vmul.f32 %v4404, %v4470
        %v4551 = vmul.f32 %v4409, %v4470
        %v4552 = vmul.f32 %v4414, %v4470
        %v4553 = vmul.f32 %v4419, %v4470
        %v4554 = vmul.f32 %v4424, %v4470
        %v4555 = vmul.f32 %v4429, %v4470
        %v4556 = vmul.f32 %v4434, %v4470
        %v4557 = vmul.f32 %v4439, %v4470
        %v4558 = vmul.f32 %v4444, %v4470
        %v4559 = vmul.f32 %v4449, %v4470
        %v4560 = vmul.f32 %v4454, %v4470
        %v4561 = vmul.f32 %v4459, %v4470
        %v4562 = vmul.f32 %v4464, %v4470
        %v4563 = vadd.f32 %v3827, %v4472
        %v4564 = vadd.f32 %v3828, %v4473
        %v4565 = vadd.f32 %v3829, %v4474
        %v4566 = vadd.f32 %v3830, %v4475
        %v4567 = vadd.f32 %v3831, %v4476
        %v4568 = vadd.f32 %v3832, %v4477
        %v4569 = vadd.f32 %v3833, %v4478
        %v4570 = vadd.f32 %v3834, %v4479
        %v4571 = vadd.f32 %v3835, %v4480
        %v4572 = vadd.f32 %v3836, %v4481
        %v4573 = vadd.f32 %v3837, %v4482
        %v4574 = vadd.f32 %v3838, %v4483
        %v4575 = vadd.f32 %v3839, %v4484
        %v4576 = vadd.f32 %v3840, %v4485
        %v4577 = vadd.f32 %v3841, %v4486
        %v4578 = vadd.f32 %v3842, %v4487
        %v4579 = vadd.f32 %v3843, %v4488
        %v4580 = vadd.f32 %v3844, %v4489
        %v4581 = vadd.f32 %v3845, %v4490
        %v4582 = vadd.f32 %v3846, %v4491
        %v4583 = vadd.f32 %v3847, %v4492
        %v4584 = vadd.f32 %v3848, %v4493
        %v4585 = vadd.f32 %v3849, %v4494
        %v4586 = vadd.f32 %v3850, %v4495
        %v4587 = vadd.f32 %v3851, %v4496
        %v4588 = vadd.f32 %v3852, %v4497
        %v4589 = vadd.f32 %v3853, %v4498
        %v4590 = vadd.f32 %v3854, %v4499
        %v4591 = vadd.f32 %v3855, %v4500
        %v4592 = vadd.f32 %v3856, %v4501
        %v4593 = vadd.f32 %v3857, %v4502
        %v4594 = vadd.f32 %v3858, %v4503
        %v4595 = vadd.f32 %v3859, %v4504
        %v4596 = vadd.f32 %v3860, %v4505
        %v4597 = vadd.f32 %v3861, %v4506
        %v4598 = vadd.f32 %v3862, %v4507
        %v4599 = vadd.f32 %v3863, %v4508
        %v4600 = vadd.f32 %v3864, %v4509
        %v4601 = vadd.f32 %v3865, %v4510
        %v4602 = vadd.f32 %v3866, %v4511
        %v4603 = vadd.f32 %v3867, %v4512
        %v4604 = vadd.f32 %v3868, %v4513
        %v4605 = vadd.f32 %v3869, %v4514
        %v4606 = vadd.f32 %v3870, %v4515
        %v4607 = vadd.f32 %v3871, %v4516
        %v4608 = vadd.f32 %v3872, %v4517
        %v4609 = vadd.f32 %v3873, %v4518
        %v4610 = vadd.f32 %v3874, %v4519
        %v4611 = vadd.f32 %v3875, %v4520
        %v4612 = vadd.f32 %v3876, %v4521
        %v4613 = vadd.f32 %v3877, %v4522
        %v4614 = vadd.f32 %v3878, %v4523
        %v4615 = vadd.f32 %v3879, %v4524
        %v4616 = vadd.f32 %v3880, %v4525
        %v4617 = vadd.f32 %v3881, %v4526
        %v4618 = vadd.f32 %v3882, %v4527
        %v4619 = vadd.f32 %v3883, %v4528
        %v4620 = vadd.f32 %v3884, %v4529
        %v4621 = vadd.f32 %v3885, %v4530
        %v4622 = vadd.f32 %v3886, %v4531
        %v4623 = vadd.f32 %v3887, %v4532
        %v4624 = vadd.f32 %v3888, %v4533
        %v4625 = vadd.f32 %v3889, %v4534
        %v4626 = vadd.f32 %v3890, %v4535
        %v4627 = vadd.f32 %v3891, %v4536
        %v4628 = vadd.f32 %v3892, %v4537
        %v4629 = vadd.f32 %v3893, %v4538
        %v4630 = vadd.f32 %v3894, %v4539
        %v4631 = vadd.f32 %v3895, %v4540
        %v4632 = vadd.f32 %v3896, %v4541
        %v4633 = vadd.f32 %v3897, %v4542
        %v4634 = vadd.f32 %v3898, %v4543
        %v4635 = vadd.f32 %v3899, %v4544
        %v4636 = vadd.f32 %v3900, %v4545
        %v4637 = vadd.f32 %v3901, %v4546
        %v4638 = vadd.f32 %v3902, %v4547
        %v4639 = vadd.f32 %v3903, %v4548
        %v4640 = vadd.f32 %v3904, %v4549
        %v4641 = vadd.f32 %v3905, %v4550
        %v4642 = vadd.f32 %v3906, %v4551
        %v4643 = vadd.f32 %v3907, %v4552
        %v4644 = vadd.f32 %v3908, %v4553
        %v4645 = vadd.f32 %v3909, %v4554
        %v4646 = vadd.f32 %v3910, %v4555
        %v4647 = vadd.f32 %v3911, %v4556
        %v4648 = vadd.f32 %v3912, %v4557
        %v4649 = vadd.f32 %v3913, %v4558
        %v4650 = vadd.f32 %v3914, %v4559
        %v4651 = vadd.f32 %v3915, %v4560
        %v4652 = vadd.f32 %v3916, %v4561
        %v4653 = vadd.f32 %v3917, %v4562
        %v4654 = vld [vmem:[%s329 + $0x38] sm:$0xff]
        %v4655 = vld [vmem:[%s329 + $0x40] sm:$0xff]
        %v4656 = vld [vmem:[%s329 + $0x48] sm:$0xff]
        %v4657 = vld [vmem:[%s329 + $0x50] sm:$0xff]
        %v4658 = vld [vmem:[%s329 + $0x58] sm:$0xff]
        %v4659 = vld [vmem:[%s329 + $0x60] sm:$0xff]
        %v4660 = vld [vmem:[%s329 + $0x68] sm:$0xff]
        %v4661 = vld [vmem:[%s329 + $0x70] sm:$0xff]
        %v4662 = vld [vmem:[%s329 + $0x78] sm:$0xff]
        %v4663 = vld [vmem:[%s329 + $0x80] sm:$0xff]
        %v4664 = vld [vmem:[%s329 + $0x88] sm:$0xff]
        %v4665 = vld [vmem:[%s329 + $0x90] sm:$0xff]
        %v4666 = vld [vmem:[%s329 + $0x98] sm:$0xff]
        %v4667 = vld [vmem:[%s329 + $0xa0] sm:$0xff]
        %v4668 = vld [vmem:[%s329 + $0xa8] sm:$0xff]
        %v4669 = vld [vmem:[%s329 + $0xb0] sm:$0xff]
        %v4670 = vld [vmem:[%s329 + $0xb8] sm:$0xff]
        %v4671 = vld [vmem:[%s329 + $0xc0] sm:$0xff]
        %v4672 = vld [vmem:[%s329 + $0xc8] sm:$0xff]
        %v4673 = vld [vmem:[%s329 + $0xd0] sm:$0xff]
        %v4674 = vld [vmem:[%s329 + $0xd8] sm:$0xff]
        %v4675 = vld [vmem:[%s329 + $0xe0] sm:$0xff]
        %v4676 = vld [vmem:[%s329 + $0xe8] sm:$0xff]
        %v4677 = vld [vmem:[%s329 + $0xf0] sm:$0xff]
        %v4678 = vld [vmem:[%s329 + $0xf8] sm:$0xff]
        %v4679 = vld [vmem:[%s329 + $0x100] sm:$0xff]
        %v4680 = vld [vmem:[%s329 + $0x108] sm:$0xff]
        %v4681 = vld [vmem:[%s329 + $0x110] sm:$0xff]
        %v4682 = vld [vmem:[%s329 + $0x118] sm:$0xff]
        %v4683 = vld [vmem:[%s329 + $0x120] sm:$0xff]
        %v4684 = vld [vmem:[%s329 + $0x128] sm:$0xff]
        %v4685 = vld [vmem:[%s329 + $0x130] sm:$0xff]
        %v4686 = vld [vmem:[%s329 + $0x138] sm:$0xff]
        %v4687 = vld [vmem:[%s329 + $0x140] sm:$0xff]
        %v4688 = vld [vmem:[%s329 + $0x148] sm:$0xff]
        %v4689 = vld [vmem:[%s329 + $0x150] sm:$0xff]
        %v4690 = vld [vmem:[%s329 + $0x158] sm:$0xff]
        %v4691 = vld [vmem:[%s329 + $0x160] sm:$0xff]
        %v4692 = vld [vmem:[%s329 + $0x168] sm:$0xff]
        %v4693 = vld [vmem:[%s329 + $0x170] sm:$0xff]
        %v4694 = vld [vmem:[%s329 + $0x178] sm:$0xff]
        %v4695 = vld [vmem:[%s329 + $0x180] sm:$0xff]
        %v4696 = vld [vmem:[%s329 + $0x188] sm:$0xff]
        %v4697 = vld [vmem:[%s329 + $0x190] sm:$0xff]
        %v4698 = vld [vmem:[%s329 + $0x198] sm:$0xff]
        %v4699 = vld [vmem:[%s329 + $0x1a0] sm:$0xff]
        %v4700 = vld [vmem:[%s329 + $0x1a8] sm:$0xff]
        %v4701 = vld [vmem:[%s329 + $0x1b0] sm:$0xff]
        %v4702 = vld [vmem:[%s329 + $0x1b8] sm:$0xff]
        %v4703 = vld [vmem:[%s329 + $0x1c0] sm:$0xff]
        %v4704 = vld [vmem:[%s329 + $0x1c8] sm:$0xff]
        %v4705 = vld [vmem:[%s329 + $0x1d0] sm:$0xff]
        %v4706 = vld [vmem:[%s329 + $0x1d8] sm:$0xff]
        %v4707 = vld [vmem:[%s329 + $0x1e0] sm:$0xff]
        %v4708 = vld [vmem:[%s329 + $0x1e8] sm:$0xff]
        %v4709 = vld [vmem:[%s329 + $0x1f0] sm:$0xff]
        %v4710 = vld [vmem:[%s329 + $0x1f8] sm:$0xff]
        %v4711 = vld [vmem:[%s329 + $0x200] sm:$0xff]
        %v4712 = vld [vmem:[%s329 + $0x208] sm:$0xff]
        %v4713 = vld [vmem:[%s329 + $0x210] sm:$0xff]
        %v4714 = vld [vmem:[%s329 + $0x218] sm:$0xff]
        %v4715 = vld [vmem:[%s329 + $0x220] sm:$0xff]
        %v4716 = vld [vmem:[%s329 + $0x228] sm:$0xff]
        %v4717 = vld [vmem:[%s329 + $0x230] sm:$0xff]
        %v4718 = vld [vmem:[%s329 + $0x238] sm:$0xff]
        %v4719 = vld [vmem:[%s329 + $0x240] sm:$0xff]
        %v4720 = vld [vmem:[%s329 + $0x248] sm:$0xff]
        %v4721 = vld [vmem:[%s329 + $0x250] sm:$0xff]
        %v4722 = vld [vmem:[%s329 + $0x258] sm:$0xff]
        %v4723 = vld [vmem:[%s329 + $0x260] sm:$0xff]
        %v4724 = vld [vmem:[%s329 + $0x268] sm:$0xff]
        %v4725 = vld [vmem:[%s329 + $0x270] sm:$0xff]
        %v4726 = vld [vmem:[%s329 + $0x278] sm:$0xff]
        %v4727 = vld [vmem:[%s329 + $0x280] sm:$0xff]
        %v4728 = vld [vmem:[%s329 + $0x288] sm:$0xff]
        %v4729 = vld [vmem:[%s329 + $0x290] sm:$0xff]
        %v4730 = vld [vmem:[%s329 + $0x298] sm:$0xff]
        %v4731 = vld [vmem:[%s329 + $0x2a0] sm:$0xff]
        %v4732 = vld [vmem:[%s329 + $0x2a8] sm:$0xff]
        %v4733 = vld [vmem:[%s329 + $0x2b0] sm:$0xff]
        %v4734 = vld [vmem:[%s329 + $0x2b8] sm:$0xff]
        %v4735 = vld [vmem:[%s329 + $0x2c0] sm:$0xff]
        %v4736 = vld [vmem:[%s329 + $0x2c8] sm:$0xff]
        %v4737 = vld [vmem:[%s329 + $0x2d0] sm:$0xff]
        %v4738 = vld [vmem:[%s329 + $0x2d8] sm:$0xff]
        %v4739 = vld [vmem:[%s329 + $0x2e0] sm:$0xff]
        %v4740 = vld [vmem:[%s329 + $0x2e8] sm:$0xff]
        %v4741 = vld [vmem:[%s329 + $0x2f0] sm:$0xff]
        %v4742 = vld [vmem:[%s329 + $0x2f8] sm:$0xff]
        %v4743 = vld [vmem:[%s329 + $0x300] sm:$0xff]
        %v4744 = vld [vmem:[%s329 + $0x308] sm:$0x3f]
        %s4745 = scalar_lea.vmem %s1, 6
        %v4746 = vld [vmem:[%s4745] sm:$0x1]
        %4748 = vset.pattern.permute.xlu0 0
        %4749 = vperm.xlu0 %4748, %v4654
        %v4750 = vpop.permute.xlu0 %4749
        %4753 = vset.pattern.permute.xlu0 0
        %4754 = vperm.xlu0 %4753, %v4655
        %v4755 = vpop.permute.xlu0 %4754
        %4758 = vset.pattern.permute.xlu0 0
        %4759 = vperm.xlu0 %4758, %v4656
        %v4760 = vpop.permute.xlu0 %4759
        %4763 = vset.pattern.permute.xlu0 0
        %4764 = vperm.xlu0 %4763, %v4657
        %v4765 = vpop.permute.xlu0 %4764
        %4768 = vset.pattern.permute.xlu0 0
        %4769 = vperm.xlu0 %4768, %v4658
        %v4770 = vpop.permute.xlu0 %4769
        %4773 = vset.pattern.permute.xlu0 0
        %4774 = vperm.xlu0 %4773, %v4659
        %v4775 = vpop.permute.xlu0 %4774
        %4778 = vset.pattern.permute.xlu0 0
        %4779 = vperm.xlu0 %4778, %v4660
        %v4780 = vpop.permute.xlu0 %4779
        %4783 = vset.pattern.permute.xlu0 0
        %4784 = vperm.xlu0 %4783, %v4661
        %v4785 = vpop.permute.xlu0 %4784
        %4788 = vset.pattern.permute.xlu0 0
        %4789 = vperm.xlu0 %4788, %v4662
        %v4790 = vpop.permute.xlu0 %4789
        %4793 = vset.pattern.permute.xlu0 0
        %4794 = vperm.xlu0 %4793, %v4663
        %v4795 = vpop.permute.xlu0 %4794
        %4798 = vset.pattern.permute.xlu0 0
        %4799 = vperm.xlu0 %4798, %v4664
        %v4800 = vpop.permute.xlu0 %4799
        %4803 = vset.pattern.permute.xlu0 0
        %4804 = vperm.xlu0 %4803, %v4665
        %v4805 = vpop.permute.xlu0 %4804
        %4808 = vset.pattern.permute.xlu0 0
        %4809 = vperm.xlu0 %4808, %v4666
        %v4810 = vpop.permute.xlu0 %4809
        %4813 = vset.pattern.permute.xlu0 0
        %4814 = vperm.xlu0 %4813, %v4667
        %v4815 = vpop.permute.xlu0 %4814
        %4818 = vset.pattern.permute.xlu0 0
        %4819 = vperm.xlu0 %4818, %v4668
        %v4820 = vpop.permute.xlu0 %4819
        %4823 = vset.pattern.permute.xlu0 0
        %4824 = vperm.xlu0 %4823, %v4669
        %v4825 = vpop.permute.xlu0 %4824
        %4828 = vset.pattern.permute.xlu0 0
        %4829 = vperm.xlu0 %4828, %v4670
        %v4830 = vpop.permute.xlu0 %4829
        %4833 = vset.pattern.permute.xlu0 0
        %4834 = vperm.xlu0 %4833, %v4671
        %v4835 = vpop.permute.xlu0 %4834
        %4838 = vset.pattern.permute.xlu0 0
        %4839 = vperm.xlu0 %4838, %v4672
        %v4840 = vpop.permute.xlu0 %4839
        %4843 = vset.pattern.permute.xlu0 0
        %4844 = vperm.xlu0 %4843, %v4673
        %v4845 = vpop.permute.xlu0 %4844
        %4848 = vset.pattern.permute.xlu0 0
        %4849 = vperm.xlu0 %4848, %v4674
        %v4850 = vpop.permute.xlu0 %4849
        %4853 = vset.pattern.permute.xlu0 0
        %4854 = vperm.xlu0 %4853, %v4675
        %v4855 = vpop.permute.xlu0 %4854
        %4858 = vset.pattern.permute.xlu0 0
        %4859 = vperm.xlu0 %4858, %v4676
        %v4860 = vpop.permute.xlu0 %4859
        %4863 = vset.pattern.permute.xlu0 0
        %4864 = vperm.xlu0 %4863, %v4677
        %v4865 = vpop.permute.xlu0 %4864
        %4868 = vset.pattern.permute.xlu0 0
        %4869 = vperm.xlu0 %4868, %v4678
        %v4870 = vpop.permute.xlu0 %4869
        %4873 = vset.pattern.permute.xlu0 0
        %4874 = vperm.xlu0 %4873, %v4679
        %v4875 = vpop.permute.xlu0 %4874
        %4878 = vset.pattern.permute.xlu0 0
        %4879 = vperm.xlu0 %4878, %v4680
        %v4880 = vpop.permute.xlu0 %4879
        %4883 = vset.pattern.permute.xlu0 0
        %4884 = vperm.xlu0 %4883, %v4681
        %v4885 = vpop.permute.xlu0 %4884
        %4888 = vset.pattern.permute.xlu0 0
        %4889 = vperm.xlu0 %4888, %v4682
        %v4890 = vpop.permute.xlu0 %4889
        %4893 = vset.pattern.permute.xlu0 0
        %4894 = vperm.xlu0 %4893, %v4683
        %v4895 = vpop.permute.xlu0 %4894
        %4898 = vset.pattern.permute.xlu0 0
        %4899 = vperm.xlu0 %4898, %v4684
        %v4900 = vpop.permute.xlu0 %4899
        %4903 = vset.pattern.permute.xlu0 0
        %4904 = vperm.xlu0 %4903, %v4685
        %v4905 = vpop.permute.xlu0 %4904
        %4908 = vset.pattern.permute.xlu0 0
        %4909 = vperm.xlu0 %4908, %v4686
        %v4910 = vpop.permute.xlu0 %4909
        %4913 = vset.pattern.permute.xlu0 0
        %4914 = vperm.xlu0 %4913, %v4687
        %v4915 = vpop.permute.xlu0 %4914
        %4918 = vset.pattern.permute.xlu0 0
        %4919 = vperm.xlu0 %4918, %v4688
        %v4920 = vpop.permute.xlu0 %4919
        %4923 = vset.pattern.permute.xlu0 0
        %4924 = vperm.xlu0 %4923, %v4689
        %v4925 = vpop.permute.xlu0 %4924
        %4928 = vset.pattern.permute.xlu0 0
        %4929 = vperm.xlu0 %4928, %v4690
        %v4930 = vpop.permute.xlu0 %4929
        %4933 = vset.pattern.permute.xlu0 0
        %4934 = vperm.xlu0 %4933, %v4691
        %v4935 = vpop.permute.xlu0 %4934
        %4938 = vset.pattern.permute.xlu0 0
        %4939 = vperm.xlu0 %4938, %v4692
        %v4940 = vpop.permute.xlu0 %4939
        %4943 = vset.pattern.permute.xlu0 0
        %4944 = vperm.xlu0 %4943, %v4693
        %v4945 = vpop.permute.xlu0 %4944
        %4948 = vset.pattern.permute.xlu0 0
        %4949 = vperm.xlu0 %4948, %v4694
        %v4950 = vpop.permute.xlu0 %4949
        %4953 = vset.pattern.permute.xlu0 0
        %4954 = vperm.xlu0 %4953, %v4695
        %v4955 = vpop.permute.xlu0 %4954
        %4958 = vset.pattern.permute.xlu0 0
        %4959 = vperm.xlu0 %4958, %v4696
        %v4960 = vpop.permute.xlu0 %4959
        %4963 = vset.pattern.permute.xlu0 0
        %4964 = vperm.xlu0 %4963, %v4697
        %v4965 = vpop.permute.xlu0 %4964
        %4968 = vset.pattern.permute.xlu0 0
        %4969 = vperm.xlu0 %4968, %v4698
        %v4970 = vpop.permute.xlu0 %4969
        %4973 = vset.pattern.permute.xlu0 0
        %4974 = vperm.xlu0 %4973, %v4699
        %v4975 = vpop.permute.xlu0 %4974
        %4978 = vset.pattern.permute.xlu0 0
        %4979 = vperm.xlu0 %4978, %v4700
        %v4980 = vpop.permute.xlu0 %4979
        %4983 = vset.pattern.permute.xlu0 0
        %4984 = vperm.xlu0 %4983, %v4701
        %v4985 = vpop.permute.xlu0 %4984
        %4988 = vset.pattern.permute.xlu0 0
        %4989 = vperm.xlu0 %4988, %v4702
        %v4990 = vpop.permute.xlu0 %4989
        %4993 = vset.pattern.permute.xlu0 0
        %4994 = vperm.xlu0 %4993, %v4703
        %v4995 = vpop.permute.xlu0 %4994
        %4998 = vset.pattern.permute.xlu0 0
        %4999 = vperm.xlu0 %4998, %v4704
        %v5000 = vpop.permute.xlu0 %4999
        %5003 = vset.pattern.permute.xlu0 0
        %5004 = vperm.xlu0 %5003, %v4705
        %v5005 = vpop.permute.xlu0 %5004
        %5008 = vset.pattern.permute.xlu0 0
        %5009 = vperm.xlu0 %5008, %v4706
        %v5010 = vpop.permute.xlu0 %5009
        %5013 = vset.pattern.permute.xlu0 0
        %5014 = vperm.xlu0 %5013, %v4707
        %v5015 = vpop.permute.xlu0 %5014
        %5018 = vset.pattern.permute.xlu0 0
        %5019 = vperm.xlu0 %5018, %v4708
        %v5020 = vpop.permute.xlu0 %5019
        %5023 = vset.pattern.permute.xlu0 0
        %5024 = vperm.xlu0 %5023, %v4709
        %v5025 = vpop.permute.xlu0 %5024
        %5028 = vset.pattern.permute.xlu0 0
        %5029 = vperm.xlu0 %5028, %v4710
        %v5030 = vpop.permute.xlu0 %5029
        %5033 = vset.pattern.permute.xlu0 0
        %5034 = vperm.xlu0 %5033, %v4711
        %v5035 = vpop.permute.xlu0 %5034
        %5038 = vset.pattern.permute.xlu0 0
        %5039 = vperm.xlu0 %5038, %v4712
        %v5040 = vpop.permute.xlu0 %5039
        %5043 = vset.pattern.permute.xlu0 0
        %5044 = vperm.xlu0 %5043, %v4713
        %v5045 = vpop.permute.xlu0 %5044
        %5048 = vset.pattern.permute.xlu0 0
        %5049 = vperm.xlu0 %5048, %v4714
        %v5050 = vpop.permute.xlu0 %5049
        %5053 = vset.pattern.permute.xlu0 0
        %5054 = vperm.xlu0 %5053, %v4715
        %v5055 = vpop.permute.xlu0 %5054
        %5058 = vset.pattern.permute.xlu0 0
        %5059 = vperm.xlu0 %5058, %v4716
        %v5060 = vpop.permute.xlu0 %5059
        %5063 = vset.pattern.permute.xlu0 0
        %5064 = vperm.xlu0 %5063, %v4717
        %v5065 = vpop.permute.xlu0 %5064
        %5068 = vset.pattern.permute.xlu0 0
        %5069 = vperm.xlu0 %5068, %v4718
        %v5070 = vpop.permute.xlu0 %5069
        %5073 = vset.pattern.permute.xlu0 0
        %5074 = vperm.xlu0 %5073, %v4719
        %v5075 = vpop.permute.xlu0 %5074
        %5078 = vset.pattern.permute.xlu0 0
        %5079 = vperm.xlu0 %5078, %v4720
        %v5080 = vpop.permute.xlu0 %5079
        %5083 = vset.pattern.permute.xlu0 0
        %5084 = vperm.xlu0 %5083, %v4721
        %v5085 = vpop.permute.xlu0 %5084
        %5088 = vset.pattern.permute.xlu0 0
        %5089 = vperm.xlu0 %5088, %v4722
        %v5090 = vpop.permute.xlu0 %5089
        %5093 = vset.pattern.permute.xlu0 0
        %5094 = vperm.xlu0 %5093, %v4723
        %v5095 = vpop.permute.xlu0 %5094
        %5098 = vset.pattern.permute.xlu0 0
        %5099 = vperm.xlu0 %5098, %v4724
        %v5100 = vpop.permute.xlu0 %5099
        %5103 = vset.pattern.permute.xlu0 0
        %5104 = vperm.xlu0 %5103, %v4725
        %v5105 = vpop.permute.xlu0 %5104
        %5108 = vset.pattern.permute.xlu0 0
        %5109 = vperm.xlu0 %5108, %v4726
        %v5110 = vpop.permute.xlu0 %5109
        %5113 = vset.pattern.permute.xlu0 0
        %5114 = vperm.xlu0 %5113, %v4727
        %v5115 = vpop.permute.xlu0 %5114
        %5118 = vset.pattern.permute.xlu0 0
        %5119 = vperm.xlu0 %5118, %v4728
        %v5120 = vpop.permute.xlu0 %5119
        %5123 = vset.pattern.permute.xlu0 0
        %5124 = vperm.xlu0 %5123, %v4729
        %v5125 = vpop.permute.xlu0 %5124
        %5128 = vset.pattern.permute.xlu0 0
        %5129 = vperm.xlu0 %5128, %v4730
        %v5130 = vpop.permute.xlu0 %5129
        %5133 = vset.pattern.permute.xlu0 0
        %5134 = vperm.xlu0 %5133, %v4731
        %v5135 = vpop.permute.xlu0 %5134
        %5138 = vset.pattern.permute.xlu0 0
        %5139 = vperm.xlu0 %5138, %v4732
        %v5140 = vpop.permute.xlu0 %5139
        %5143 = vset.pattern.permute.xlu0 0
        %5144 = vperm.xlu0 %5143, %v4733
        %v5145 = vpop.permute.xlu0 %5144
        %5148 = vset.pattern.permute.xlu0 0
        %5149 = vperm.xlu0 %5148, %v4734
        %v5150 = vpop.permute.xlu0 %5149
        %5153 = vset.pattern.permute.xlu0 0
        %5154 = vperm.xlu0 %5153, %v4735
        %v5155 = vpop.permute.xlu0 %5154
        %5158 = vset.pattern.permute.xlu0 0
        %5159 = vperm.xlu0 %5158, %v4736
        %v5160 = vpop.permute.xlu0 %5159
        %5163 = vset.pattern.permute.xlu0 0
        %5164 = vperm.xlu0 %5163, %v4737
        %v5165 = vpop.permute.xlu0 %5164
        %5168 = vset.pattern.permute.xlu0 0
        %5169 = vperm.xlu0 %5168, %v4738
        %v5170 = vpop.permute.xlu0 %5169
        %5173 = vset.pattern.permute.xlu0 0
        %5174 = vperm.xlu0 %5173, %v4739
        %v5175 = vpop.permute.xlu0 %5174
        %5178 = vset.pattern.permute.xlu0 0
        %5179 = vperm.xlu0 %5178, %v4740
        %v5180 = vpop.permute.xlu0 %5179
        %5183 = vset.pattern.permute.xlu0 0
        %5184 = vperm.xlu0 %5183, %v4741
        %v5185 = vpop.permute.xlu0 %5184
        %5188 = vset.pattern.permute.xlu0 0
        %5189 = vperm.xlu0 %5188, %v4742
        %v5190 = vpop.permute.xlu0 %5189
        %5193 = vset.pattern.permute.xlu0 0
        %5194 = vperm.xlu0 %5193, %v4743
        %v5195 = vpop.permute.xlu0 %5194
        %5198 = vset.pattern.permute.xlu0 0
        %5199 = vperm.xlu0 %5198, %v4744
        %v5200 = vpop.permute.xlu0 %5199
        %v5203 = vlaneseq
        %v5204 = vshrl.u32 %v5203, 7
        %v5205 = vsub.s32 0, %v5204
        %v5206 = vrot.slane %v4746, %v5205
        %v5208 = vmul.f32 %v4750, %v5206
        %v5209 = vmul.f32 %v4755, %v5206
        %v5210 = vmul.f32 %v4760, %v5206
        %v5211 = vmul.f32 %v4765, %v5206
        %v5212 = vmul.f32 %v4770, %v5206
        %v5213 = vmul.f32 %v4775, %v5206
        %v5214 = vmul.f32 %v4780, %v5206
        %v5215 = vmul.f32 %v4785, %v5206
        %v5216 = vmul.f32 %v4790, %v5206
        %v5217 = vmul.f32 %v4795, %v5206
        %v5218 = vmul.f32 %v4800, %v5206
        %v5219 = vmul.f32 %v4805, %v5206
        %v5220 = vmul.f32 %v4810, %v5206
        %v5221 = vmul.f32 %v4815, %v5206
        %v5222 = vmul.f32 %v4820, %v5206
        %v5223 = vmul.f32 %v4825, %v5206
        %v5224 = vmul.f32 %v4830, %v5206
        %v5225 = vmul.f32 %v4835, %v5206
        %v5226 = vmul.f32 %v4840, %v5206
        %v5227 = vmul.f32 %v4845, %v5206
        %v5228 = vmul.f32 %v4850, %v5206
        %v5229 = vmul.f32 %v4855, %v5206
        %v5230 = vmul.f32 %v4860, %v5206
        %v5231 = vmul.f32 %v4865, %v5206
        %v5232 = vmul.f32 %v4870, %v5206
        %v5233 = vmul.f32 %v4875, %v5206
        %v5234 = vmul.f32 %v4880, %v5206
        %v5235 = vmul.f32 %v4885, %v5206
        %v5236 = vmul.f32 %v4890, %v5206
        %v5237 = vmul.f32 %v4895, %v5206
        %v5238 = vmul.f32 %v4900, %v5206
        %v5239 = vmul.f32 %v4905, %v5206
        %v5240 = vmul.f32 %v4910, %v5206
        %v5241 = vmul.f32 %v4915, %v5206
        %v5242 = vmul.f32 %v4920, %v5206
        %v5243 = vmul.f32 %v4925, %v5206
        %v5244 = vmul.f32 %v4930, %v5206
        %v5245 = vmul.f32 %v4935, %v5206
        %v5246 = vmul.f32 %v4940, %v5206
        %v5247 = vmul.f32 %v4945, %v5206
        %v5248 = vmul.f32 %v4950, %v5206
        %v5249 = vmul.f32 %v4955, %v5206
        %v5250 = vmul.f32 %v4960, %v5206
        %v5251 = vmul.f32 %v4965, %v5206
        %v5252 = vmul.f32 %v4970, %v5206
        %v5253 = vmul.f32 %v4975, %v5206
        %v5254 = vmul.f32 %v4980, %v5206
        %v5255 = vmul.f32 %v4985, %v5206
        %v5256 = vmul.f32 %v4990, %v5206
        %v5257 = vmul.f32 %v4995, %v5206
        %v5258 = vmul.f32 %v5000, %v5206
        %v5259 = vmul.f32 %v5005, %v5206
        %v5260 = vmul.f32 %v5010, %v5206
        %v5261 = vmul.f32 %v5015, %v5206
        %v5262 = vmul.f32 %v5020, %v5206
        %v5263 = vmul.f32 %v5025, %v5206
        %v5264 = vmul.f32 %v5030, %v5206
        %v5265 = vmul.f32 %v5035, %v5206
        %v5266 = vmul.f32 %v5040, %v5206
        %v5267 = vmul.f32 %v5045, %v5206
        %v5268 = vmul.f32 %v5050, %v5206
        %v5269 = vmul.f32 %v5055, %v5206
        %v5270 = vmul.f32 %v5060, %v5206
        %v5271 = vmul.f32 %v5065, %v5206
        %v5272 = vmul.f32 %v5070, %v5206
        %v5273 = vmul.f32 %v5075, %v5206
        %v5274 = vmul.f32 %v5080, %v5206
        %v5275 = vmul.f32 %v5085, %v5206
        %v5276 = vmul.f32 %v5090, %v5206
        %v5277 = vmul.f32 %v5095, %v5206
        %v5278 = vmul.f32 %v5100, %v5206
        %v5279 = vmul.f32 %v5105, %v5206
        %v5280 = vmul.f32 %v5110, %v5206
        %v5281 = vmul.f32 %v5115, %v5206
        %v5282 = vmul.f32 %v5120, %v5206
        %v5283 = vmul.f32 %v5125, %v5206
        %v5284 = vmul.f32 %v5130, %v5206
        %v5285 = vmul.f32 %v5135, %v5206
        %v5286 = vmul.f32 %v5140, %v5206
        %v5287 = vmul.f32 %v5145, %v5206
        %v5288 = vmul.f32 %v5150, %v5206
        %v5289 = vmul.f32 %v5155, %v5206
        %v5290 = vmul.f32 %v5160, %v5206
        %v5291 = vmul.f32 %v5165, %v5206
        %v5292 = vmul.f32 %v5170, %v5206
        %v5293 = vmul.f32 %v5175, %v5206
        %v5294 = vmul.f32 %v5180, %v5206
        %v5295 = vmul.f32 %v5185, %v5206
        %v5296 = vmul.f32 %v5190, %v5206
        %v5297 = vmul.f32 %v5195, %v5206
        %v5298 = vmul.f32 %v5200, %v5206
        %v5299 = vadd.f32 %v4563, %v5208
        %v5300 = vadd.f32 %v4564, %v5209
        %v5301 = vadd.f32 %v4565, %v5210
        %v5302 = vadd.f32 %v4566, %v5211
        %v5303 = vadd.f32 %v4567, %v5212
        %v5304 = vadd.f32 %v4568, %v5213
        %v5305 = vadd.f32 %v4569, %v5214
        %v5306 = vadd.f32 %v4570, %v5215
        %v5307 = vadd.f32 %v4571, %v5216
        %v5308 = vadd.f32 %v4572, %v5217
        %v5309 = vadd.f32 %v4573, %v5218
        %v5310 = vadd.f32 %v4574, %v5219
        %v5311 = vadd.f32 %v4575, %v5220
        %v5312 = vadd.f32 %v4576, %v5221
        %v5313 = vadd.f32 %v4577, %v5222
        %v5314 = vadd.f32 %v4578, %v5223
        %v5315 = vadd.f32 %v4579, %v5224
        %v5316 = vadd.f32 %v4580, %v5225
        %v5317 = vadd.f32 %v4581, %v5226
        %v5318 = vadd.f32 %v4582, %v5227
        %v5319 = vadd.f32 %v4583, %v5228
        %v5320 = vadd.f32 %v4584, %v5229
        %v5321 = vadd.f32 %v4585, %v5230
        %v5322 = vadd.f32 %v4586, %v5231
        %v5323 = vadd.f32 %v4587, %v5232
        %v5324 = vadd.f32 %v4588, %v5233
        %v5325 = vadd.f32 %v4589, %v5234
        %v5326 = vadd.f32 %v4590, %v5235
        %v5327 = vadd.f32 %v4591, %v5236
        %v5328 = vadd.f32 %v4592, %v5237
        %v5329 = vadd.f32 %v4593, %v5238
        %v5330 = vadd.f32 %v4594, %v5239
        %v5331 = vadd.f32 %v4595, %v5240
        %v5332 = vadd.f32 %v4596, %v5241
        %v5333 = vadd.f32 %v4597, %v5242
        %v5334 = vadd.f32 %v4598, %v5243
        %v5335 = vadd.f32 %v4599, %v5244
        %v5336 = vadd.f32 %v4600, %v5245
        %v5337 = vadd.f32 %v4601, %v5246
        %v5338 = vadd.f32 %v4602, %v5247
        %v5339 = vadd.f32 %v4603, %v5248
        %v5340 = vadd.f32 %v4604, %v5249
        %v5341 = vadd.f32 %v4605, %v5250
        %v5342 = vadd.f32 %v4606, %v5251
        %v5343 = vadd.f32 %v4607, %v5252
        %v5344 = vadd.f32 %v4608, %v5253
        %v5345 = vadd.f32 %v4609, %v5254
        %v5346 = vadd.f32 %v4610, %v5255
        %v5347 = vadd.f32 %v4611, %v5256
        %v5348 = vadd.f32 %v4612, %v5257
        %v5349 = vadd.f32 %v4613, %v5258
        %v5350 = vadd.f32 %v4614, %v5259
        %v5351 = vadd.f32 %v4615, %v5260
        %v5352 = vadd.f32 %v4616, %v5261
        %v5353 = vadd.f32 %v4617, %v5262
        %v5354 = vadd.f32 %v4618, %v5263
        %v5355 = vadd.f32 %v4619, %v5264
        %v5356 = vadd.f32 %v4620, %v5265
        %v5357 = vadd.f32 %v4621, %v5266
        %v5358 = vadd.f32 %v4622, %v5267
        %v5359 = vadd.f32 %v4623, %v5268
        %v5360 = vadd.f32 %v4624, %v5269
        %v5361 = vadd.f32 %v4625, %v5270
        %v5362 = vadd.f32 %v4626, %v5271
        %v5363 = vadd.f32 %v4627, %v5272
        %v5364 = vadd.f32 %v4628, %v5273
        %v5365 = vadd.f32 %v4629, %v5274
        %v5366 = vadd.f32 %v4630, %v5275
        %v5367 = vadd.f32 %v4631, %v5276
        %v5368 = vadd.f32 %v4632, %v5277
        %v5369 = vadd.f32 %v4633, %v5278
        %v5370 = vadd.f32 %v4634, %v5279
        %v5371 = vadd.f32 %v4635, %v5280
        %v5372 = vadd.f32 %v4636, %v5281
        %v5373 = vadd.f32 %v4637, %v5282
        %v5374 = vadd.f32 %v4638, %v5283
        %v5375 = vadd.f32 %v4639, %v5284
        %v5376 = vadd.f32 %v4640, %v5285
        %v5377 = vadd.f32 %v4641, %v5286
        %v5378 = vadd.f32 %v4642, %v5287
        %v5379 = vadd.f32 %v4643, %v5288
        %v5380 = vadd.f32 %v4644, %v5289
        %v5381 = vadd.f32 %v4645, %v5290
        %v5382 = vadd.f32 %v4646, %v5291
        %v5383 = vadd.f32 %v4647, %v5292
        %v5384 = vadd.f32 %v4648, %v5293
        %v5385 = vadd.f32 %v4649, %v5294
        %v5386 = vadd.f32 %v4650, %v5295
        %v5387 = vadd.f32 %v4651, %v5296
        %v5388 = vadd.f32 %v4652, %v5297
        %v5389 = vadd.f32 %v4653, %v5298
        %v5390 = vld [vmem:[%s329 + $0x39] sm:$0xff]
        %v5391 = vld [vmem:[%s329 + $0x41] sm:$0xff]
        %v5392 = vld [vmem:[%s329 + $0x49] sm:$0xff]
        %v5393 = vld [vmem:[%s329 + $0x51] sm:$0xff]
        %v5394 = vld [vmem:[%s329 + $0x59] sm:$0xff]
        %v5395 = vld [vmem:[%s329 + $0x61] sm:$0xff]
        %v5396 = vld [vmem:[%s329 + $0x69] sm:$0xff]
        %v5397 = vld [vmem:[%s329 + $0x71] sm:$0xff]
        %v5398 = vld [vmem:[%s329 + $0x79] sm:$0xff]
        %v5399 = vld [vmem:[%s329 + $0x81] sm:$0xff]
        %v5400 = vld [vmem:[%s329 + $0x89] sm:$0xff]
        %v5401 = vld [vmem:[%s329 + $0x91] sm:$0xff]
        %v5402 = vld [vmem:[%s329 + $0x99] sm:$0xff]
        %v5403 = vld [vmem:[%s329 + $0xa1] sm:$0xff]
        %v5404 = vld [vmem:[%s329 + $0xa9] sm:$0xff]
        %v5405 = vld [vmem:[%s329 + $0xb1] sm:$0xff]
        %v5406 = vld [vmem:[%s329 + $0xb9] sm:$0xff]
        %v5407 = vld [vmem:[%s329 + $0xc1] sm:$0xff]
        %v5408 = vld [vmem:[%s329 + $0xc9] sm:$0xff]
        %v5409 = vld [vmem:[%s329 + $0xd1] sm:$0xff]
        %v5410 = vld [vmem:[%s329 + $0xd9] sm:$0xff]
        %v5411 = vld [vmem:[%s329 + $0xe1] sm:$0xff]
        %v5412 = vld [vmem:[%s329 + $0xe9] sm:$0xff]
        %v5413 = vld [vmem:[%s329 + $0xf1] sm:$0xff]
        %v5414 = vld [vmem:[%s329 + $0xf9] sm:$0xff]
        %v5415 = vld [vmem:[%s329 + $0x101] sm:$0xff]
        %v5416 = vld [vmem:[%s329 + $0x109] sm:$0xff]
        %v5417 = vld [vmem:[%s329 + $0x111] sm:$0xff]
        %v5418 = vld [vmem:[%s329 + $0x119] sm:$0xff]
        %v5419 = vld [vmem:[%s329 + $0x121] sm:$0xff]
        %v5420 = vld [vmem:[%s329 + $0x129] sm:$0xff]
        %v5421 = vld [vmem:[%s329 + $0x131] sm:$0xff]
        %v5422 = vld [vmem:[%s329 + $0x139] sm:$0xff]
        %v5423 = vld [vmem:[%s329 + $0x141] sm:$0xff]
        %v5424 = vld [vmem:[%s329 + $0x149] sm:$0xff]
        %v5425 = vld [vmem:[%s329 + $0x151] sm:$0xff]
        %v5426 = vld [vmem:[%s329 + $0x159] sm:$0xff]
        %v5427 = vld [vmem:[%s329 + $0x161] sm:$0xff]
        %v5428 = vld [vmem:[%s329 + $0x169] sm:$0xff]
        %v5429 = vld [vmem:[%s329 + $0x171] sm:$0xff]
        %v5430 = vld [vmem:[%s329 + $0x179] sm:$0xff]
        %v5431 = vld [vmem:[%s329 + $0x181] sm:$0xff]
        %v5432 = vld [vmem:[%s329 + $0x189] sm:$0xff]
        %v5433 = vld [vmem:[%s329 + $0x191] sm:$0xff]
        %v5434 = vld [vmem:[%s329 + $0x199] sm:$0xff]
        %v5435 = vld [vmem:[%s329 + $0x1a1] sm:$0xff]
        %v5436 = vld [vmem:[%s329 + $0x1a9] sm:$0xff]
        %v5437 = vld [vmem:[%s329 + $0x1b1] sm:$0xff]
        %v5438 = vld [vmem:[%s329 + $0x1b9] sm:$0xff]
        %v5439 = vld [vmem:[%s329 + $0x1c1] sm:$0xff]
        %v5440 = vld [vmem:[%s329 + $0x1c9] sm:$0xff]
        %v5441 = vld [vmem:[%s329 + $0x1d1] sm:$0xff]
        %v5442 = vld [vmem:[%s329 + $0x1d9] sm:$0xff]
        %v5443 = vld [vmem:[%s329 + $0x1e1] sm:$0xff]
        %v5444 = vld [vmem:[%s329 + $0x1e9] sm:$0xff]
        %v5445 = vld [vmem:[%s329 + $0x1f1] sm:$0xff]
        %v5446 = vld [vmem:[%s329 + $0x1f9] sm:$0xff]
        %v5447 = vld [vmem:[%s329 + $0x201] sm:$0xff]
        %v5448 = vld [vmem:[%s329 + $0x209] sm:$0xff]
        %v5449 = vld [vmem:[%s329 + $0x211] sm:$0xff]
        %v5450 = vld [vmem:[%s329 + $0x219] sm:$0xff]
        %v5451 = vld [vmem:[%s329 + $0x221] sm:$0xff]
        %v5452 = vld [vmem:[%s329 + $0x229] sm:$0xff]
        %v5453 = vld [vmem:[%s329 + $0x231] sm:$0xff]
        %v5454 = vld [vmem:[%s329 + $0x239] sm:$0xff]
        %v5455 = vld [vmem:[%s329 + $0x241] sm:$0xff]
        %v5456 = vld [vmem:[%s329 + $0x249] sm:$0xff]
        %v5457 = vld [vmem:[%s329 + $0x251] sm:$0xff]
        %v5458 = vld [vmem:[%s329 + $0x259] sm:$0xff]
        %v5459 = vld [vmem:[%s329 + $0x261] sm:$0xff]
        %v5460 = vld [vmem:[%s329 + $0x269] sm:$0xff]
        %v5461 = vld [vmem:[%s329 + $0x271] sm:$0xff]
        %v5462 = vld [vmem:[%s329 + $0x279] sm:$0xff]
        %v5463 = vld [vmem:[%s329 + $0x281] sm:$0xff]
        %v5464 = vld [vmem:[%s329 + $0x289] sm:$0xff]
        %v5465 = vld [vmem:[%s329 + $0x291] sm:$0xff]
        %v5466 = vld [vmem:[%s329 + $0x299] sm:$0xff]
        %v5467 = vld [vmem:[%s329 + $0x2a1] sm:$0xff]
        %v5468 = vld [vmem:[%s329 + $0x2a9] sm:$0xff]
        %v5469 = vld [vmem:[%s329 + $0x2b1] sm:$0xff]
        %v5470 = vld [vmem:[%s329 + $0x2b9] sm:$0xff]
        %v5471 = vld [vmem:[%s329 + $0x2c1] sm:$0xff]
        %v5472 = vld [vmem:[%s329 + $0x2c9] sm:$0xff]
        %v5473 = vld [vmem:[%s329 + $0x2d1] sm:$0xff]
        %v5474 = vld [vmem:[%s329 + $0x2d9] sm:$0xff]
        %v5475 = vld [vmem:[%s329 + $0x2e1] sm:$0xff]
        %v5476 = vld [vmem:[%s329 + $0x2e9] sm:$0xff]
        %v5477 = vld [vmem:[%s329 + $0x2f1] sm:$0xff]
        %v5478 = vld [vmem:[%s329 + $0x2f9] sm:$0xff]
        %v5479 = vld [vmem:[%s329 + $0x301] sm:$0xff]
        %v5480 = vld [vmem:[%s329 + $0x309] sm:$0x3f]
        %s5481 = scalar_lea.vmem %s1, 7
        %v5482 = vld [vmem:[%s5481] sm:$0x1]
        %5484 = vset.pattern.permute.xlu0 0
        %5485 = vperm.xlu0 %5484, %v5390
        %v5486 = vpop.permute.xlu0 %5485
        %5489 = vset.pattern.permute.xlu0 0
        %5490 = vperm.xlu0 %5489, %v5391
        %v5491 = vpop.permute.xlu0 %5490
        %5494 = vset.pattern.permute.xlu0 0
        %5495 = vperm.xlu0 %5494, %v5392
        %v5496 = vpop.permute.xlu0 %5495
        %5499 = vset.pattern.permute.xlu0 0
        %5500 = vperm.xlu0 %5499, %v5393
        %v5501 = vpop.permute.xlu0 %5500
        %5504 = vset.pattern.permute.xlu0 0
        %5505 = vperm.xlu0 %5504, %v5394
        %v5506 = vpop.permute.xlu0 %5505
        %5509 = vset.pattern.permute.xlu0 0
        %5510 = vperm.xlu0 %5509, %v5395
        %v5511 = vpop.permute.xlu0 %5510
        %5514 = vset.pattern.permute.xlu0 0
        %5515 = vperm.xlu0 %5514, %v5396
        %v5516 = vpop.permute.xlu0 %5515
        %5519 = vset.pattern.permute.xlu0 0
        %5520 = vperm.xlu0 %5519, %v5397
        %v5521 = vpop.permute.xlu0 %5520
        %5524 = vset.pattern.permute.xlu0 0
        %5525 = vperm.xlu0 %5524, %v5398
        %v5526 = vpop.permute.xlu0 %5525
        %5529 = vset.pattern.permute.xlu0 0
        %5530 = vperm.xlu0 %5529, %v5399
        %v5531 = vpop.permute.xlu0 %5530
        %5534 = vset.pattern.permute.xlu0 0
        %5535 = vperm.xlu0 %5534, %v5400
        %v5536 = vpop.permute.xlu0 %5535
        %5539 = vset.pattern.permute.xlu0 0
        %5540 = vperm.xlu0 %5539, %v5401
        %v5541 = vpop.permute.xlu0 %5540
        %5544 = vset.pattern.permute.xlu0 0
        %5545 = vperm.xlu0 %5544, %v5402
        %v5546 = vpop.permute.xlu0 %5545
        %5549 = vset.pattern.permute.xlu0 0
        %5550 = vperm.xlu0 %5549, %v5403
        %v5551 = vpop.permute.xlu0 %5550
        %5554 = vset.pattern.permute.xlu0 0
        %5555 = vperm.xlu0 %5554, %v5404
        %v5556 = vpop.permute.xlu0 %5555
        %5559 = vset.pattern.permute.xlu0 0
        %5560 = vperm.xlu0 %5559, %v5405
        %v5561 = vpop.permute.xlu0 %5560
        %5564 = vset.pattern.permute.xlu0 0
        %5565 = vperm.xlu0 %5564, %v5406
        %v5566 = vpop.permute.xlu0 %5565
        %5569 = vset.pattern.permute.xlu0 0
        %5570 = vperm.xlu0 %5569, %v5407
        %v5571 = vpop.permute.xlu0 %5570
        %5574 = vset.pattern.permute.xlu0 0
        %5575 = vperm.xlu0 %5574, %v5408
        %v5576 = vpop.permute.xlu0 %5575
        %5579 = vset.pattern.permute.xlu0 0
        %5580 = vperm.xlu0 %5579, %v5409
        %v5581 = vpop.permute.xlu0 %5580
        %5584 = vset.pattern.permute.xlu0 0
        %5585 = vperm.xlu0 %5584, %v5410
        %v5586 = vpop.permute.xlu0 %5585
        %5589 = vset.pattern.permute.xlu0 0
        %5590 = vperm.xlu0 %5589, %v5411
        %v5591 = vpop.permute.xlu0 %5590
        %5594 = vset.pattern.permute.xlu0 0
        %5595 = vperm.xlu0 %5594, %v5412
        %v5596 = vpop.permute.xlu0 %5595
        %5599 = vset.pattern.permute.xlu0 0
        %5600 = vperm.xlu0 %5599, %v5413
        %v5601 = vpop.permute.xlu0 %5600
        %5604 = vset.pattern.permute.xlu0 0
        %5605 = vperm.xlu0 %5604, %v5414
        %v5606 = vpop.permute.xlu0 %5605
        %5609 = vset.pattern.permute.xlu0 0
        %5610 = vperm.xlu0 %5609, %v5415
        %v5611 = vpop.permute.xlu0 %5610
        %5614 = vset.pattern.permute.xlu0 0
        %5615 = vperm.xlu0 %5614, %v5416
        %v5616 = vpop.permute.xlu0 %5615
        %5619 = vset.pattern.permute.xlu0 0
        %5620 = vperm.xlu0 %5619, %v5417
        %v5621 = vpop.permute.xlu0 %5620
        %5624 = vset.pattern.permute.xlu0 0
        %5625 = vperm.xlu0 %5624, %v5418
        %v5626 = vpop.permute.xlu0 %5625
        %5629 = vset.pattern.permute.xlu0 0
        %5630 = vperm.xlu0 %5629, %v5419
        %v5631 = vpop.permute.xlu0 %5630
        %5634 = vset.pattern.permute.xlu0 0
        %5635 = vperm.xlu0 %5634, %v5420
        %v5636 = vpop.permute.xlu0 %5635
        %5639 = vset.pattern.permute.xlu0 0
        %5640 = vperm.xlu0 %5639, %v5421
        %v5641 = vpop.permute.xlu0 %5640
        %5644 = vset.pattern.permute.xlu0 0
        %5645 = vperm.xlu0 %5644, %v5422
        %v5646 = vpop.permute.xlu0 %5645
        %5649 = vset.pattern.permute.xlu0 0
        %5650 = vperm.xlu0 %5649, %v5423
        %v5651 = vpop.permute.xlu0 %5650
        %5654 = vset.pattern.permute.xlu0 0
        %5655 = vperm.xlu0 %5654, %v5424
        %v5656 = vpop.permute.xlu0 %5655
        %5659 = vset.pattern.permute.xlu0 0
        %5660 = vperm.xlu0 %5659, %v5425
        %v5661 = vpop.permute.xlu0 %5660
        %5664 = vset.pattern.permute.xlu0 0
        %5665 = vperm.xlu0 %5664, %v5426
        %v5666 = vpop.permute.xlu0 %5665
        %5669 = vset.pattern.permute.xlu0 0
        %5670 = vperm.xlu0 %5669, %v5427
        %v5671 = vpop.permute.xlu0 %5670
        %5674 = vset.pattern.permute.xlu0 0
        %5675 = vperm.xlu0 %5674, %v5428
        %v5676 = vpop.permute.xlu0 %5675
        %5679 = vset.pattern.permute.xlu0 0
        %5680 = vperm.xlu0 %5679, %v5429
        %v5681 = vpop.permute.xlu0 %5680
        %5684 = vset.pattern.permute.xlu0 0
        %5685 = vperm.xlu0 %5684, %v5430
        %v5686 = vpop.permute.xlu0 %5685
        %5689 = vset.pattern.permute.xlu0 0
        %5690 = vperm.xlu0 %5689, %v5431
        %v5691 = vpop.permute.xlu0 %5690
        %5694 = vset.pattern.permute.xlu0 0
        %5695 = vperm.xlu0 %5694, %v5432
        %v5696 = vpop.permute.xlu0 %5695
        %5699 = vset.pattern.permute.xlu0 0
        %5700 = vperm.xlu0 %5699, %v5433
        %v5701 = vpop.permute.xlu0 %5700
        %5704 = vset.pattern.permute.xlu0 0
        %5705 = vperm.xlu0 %5704, %v5434
        %v5706 = vpop.permute.xlu0 %5705
        %5709 = vset.pattern.permute.xlu0 0
        %5710 = vperm.xlu0 %5709, %v5435
        %v5711 = vpop.permute.xlu0 %5710
        %5714 = vset.pattern.permute.xlu0 0
        %5715 = vperm.xlu0 %5714, %v5436
        %v5716 = vpop.permute.xlu0 %5715
        %5719 = vset.pattern.permute.xlu0 0
        %5720 = vperm.xlu0 %5719, %v5437
        %v5721 = vpop.permute.xlu0 %5720
        %5724 = vset.pattern.permute.xlu0 0
        %5725 = vperm.xlu0 %5724, %v5438
        %v5726 = vpop.permute.xlu0 %5725
        %5729 = vset.pattern.permute.xlu0 0
        %5730 = vperm.xlu0 %5729, %v5439
        %v5731 = vpop.permute.xlu0 %5730
        %5734 = vset.pattern.permute.xlu0 0
        %5735 = vperm.xlu0 %5734, %v5440
        %v5736 = vpop.permute.xlu0 %5735
        %5739 = vset.pattern.permute.xlu0 0
        %5740 = vperm.xlu0 %5739, %v5441
        %v5741 = vpop.permute.xlu0 %5740
        %5744 = vset.pattern.permute.xlu0 0
        %5745 = vperm.xlu0 %5744, %v5442
        %v5746 = vpop.permute.xlu0 %5745
        %5749 = vset.pattern.permute.xlu0 0
        %5750 = vperm.xlu0 %5749, %v5443
        %v5751 = vpop.permute.xlu0 %5750
        %5754 = vset.pattern.permute.xlu0 0
        %5755 = vperm.xlu0 %5754, %v5444
        %v5756 = vpop.permute.xlu0 %5755
        %5759 = vset.pattern.permute.xlu0 0
        %5760 = vperm.xlu0 %5759, %v5445
        %v5761 = vpop.permute.xlu0 %5760
        %5764 = vset.pattern.permute.xlu0 0
        %5765 = vperm.xlu0 %5764, %v5446
        %v5766 = vpop.permute.xlu0 %5765
        %5769 = vset.pattern.permute.xlu0 0
        %5770 = vperm.xlu0 %5769, %v5447
        %v5771 = vpop.permute.xlu0 %5770
        %5774 = vset.pattern.permute.xlu0 0
        %5775 = vperm.xlu0 %5774, %v5448
        %v5776 = vpop.permute.xlu0 %5775
        %5779 = vset.pattern.permute.xlu0 0
        %5780 = vperm.xlu0 %5779, %v5449
        %v5781 = vpop.permute.xlu0 %5780
        %5784 = vset.pattern.permute.xlu0 0
        %5785 = vperm.xlu0 %5784, %v5450
        %v5786 = vpop.permute.xlu0 %5785
        %5789 = vset.pattern.permute.xlu0 0
        %5790 = vperm.xlu0 %5789, %v5451
        %v5791 = vpop.permute.xlu0 %5790
        %5794 = vset.pattern.permute.xlu0 0
        %5795 = vperm.xlu0 %5794, %v5452
        %v5796 = vpop.permute.xlu0 %5795
        %5799 = vset.pattern.permute.xlu0 0
        %5800 = vperm.xlu0 %5799, %v5453
        %v5801 = vpop.permute.xlu0 %5800
        %5804 = vset.pattern.permute.xlu0 0
        %5805 = vperm.xlu0 %5804, %v5454
        %v5806 = vpop.permute.xlu0 %5805
        %5809 = vset.pattern.permute.xlu0 0
        %5810 = vperm.xlu0 %5809, %v5455
        %v5811 = vpop.permute.xlu0 %5810
        %5814 = vset.pattern.permute.xlu0 0
        %5815 = vperm.xlu0 %5814, %v5456
        %v5816 = vpop.permute.xlu0 %5815
        %5819 = vset.pattern.permute.xlu0 0
        %5820 = vperm.xlu0 %5819, %v5457
        %v5821 = vpop.permute.xlu0 %5820
        %5824 = vset.pattern.permute.xlu0 0
        %5825 = vperm.xlu0 %5824, %v5458
        %v5826 = vpop.permute.xlu0 %5825
        %5829 = vset.pattern.permute.xlu0 0
        %5830 = vperm.xlu0 %5829, %v5459
        %v5831 = vpop.permute.xlu0 %5830
        %5834 = vset.pattern.permute.xlu0 0
        %5835 = vperm.xlu0 %5834, %v5460
        %v5836 = vpop.permute.xlu0 %5835
        %5839 = vset.pattern.permute.xlu0 0
        %5840 = vperm.xlu0 %5839, %v5461
        %v5841 = vpop.permute.xlu0 %5840
        %5844 = vset.pattern.permute.xlu0 0
        %5845 = vperm.xlu0 %5844, %v5462
        %v5846 = vpop.permute.xlu0 %5845
        %5849 = vset.pattern.permute.xlu0 0
        %5850 = vperm.xlu0 %5849, %v5463
        %v5851 = vpop.permute.xlu0 %5850
        %5854 = vset.pattern.permute.xlu0 0
        %5855 = vperm.xlu0 %5854, %v5464
        %v5856 = vpop.permute.xlu0 %5855
        %5859 = vset.pattern.permute.xlu0 0
        %5860 = vperm.xlu0 %5859, %v5465
        %v5861 = vpop.permute.xlu0 %5860
        %5864 = vset.pattern.permute.xlu0 0
        %5865 = vperm.xlu0 %5864, %v5466
        %v5866 = vpop.permute.xlu0 %5865
        %5869 = vset.pattern.permute.xlu0 0
        %5870 = vperm.xlu0 %5869, %v5467
        %v5871 = vpop.permute.xlu0 %5870
        %5874 = vset.pattern.permute.xlu0 0
        %5875 = vperm.xlu0 %5874, %v5468
        %v5876 = vpop.permute.xlu0 %5875
        %5879 = vset.pattern.permute.xlu0 0
        %5880 = vperm.xlu0 %5879, %v5469
        %v5881 = vpop.permute.xlu0 %5880
        %5884 = vset.pattern.permute.xlu0 0
        %5885 = vperm.xlu0 %5884, %v5470
        %v5886 = vpop.permute.xlu0 %5885
        %5889 = vset.pattern.permute.xlu0 0
        %5890 = vperm.xlu0 %5889, %v5471
        %v5891 = vpop.permute.xlu0 %5890
        %5894 = vset.pattern.permute.xlu0 0
        %5895 = vperm.xlu0 %5894, %v5472
        %v5896 = vpop.permute.xlu0 %5895
        %5899 = vset.pattern.permute.xlu0 0
        %5900 = vperm.xlu0 %5899, %v5473
        %v5901 = vpop.permute.xlu0 %5900
        %5904 = vset.pattern.permute.xlu0 0
        %5905 = vperm.xlu0 %5904, %v5474
        %v5906 = vpop.permute.xlu0 %5905
        %5909 = vset.pattern.permute.xlu0 0
        %5910 = vperm.xlu0 %5909, %v5475
        %v5911 = vpop.permute.xlu0 %5910
        %5914 = vset.pattern.permute.xlu0 0
        %5915 = vperm.xlu0 %5914, %v5476
        %v5916 = vpop.permute.xlu0 %5915
        %5919 = vset.pattern.permute.xlu0 0
        %5920 = vperm.xlu0 %5919, %v5477
        %v5921 = vpop.permute.xlu0 %5920
        %5924 = vset.pattern.permute.xlu0 0
        %5925 = vperm.xlu0 %5924, %v5478
        %v5926 = vpop.permute.xlu0 %5925
        %5929 = vset.pattern.permute.xlu0 0
        %5930 = vperm.xlu0 %5929, %v5479
        %v5931 = vpop.permute.xlu0 %5930
        %5934 = vset.pattern.permute.xlu0 0
        %5935 = vperm.xlu0 %5934, %v5480
        %v5936 = vpop.permute.xlu0 %5935
        %v5939 = vlaneseq
        %v5940 = vshrl.u32 %v5939, 7
        %v5941 = vsub.s32 0, %v5940
        %v5942 = vrot.slane %v5482, %v5941
        %v5944 = vmul.f32 %v5486, %v5942
        %v5945 = vmul.f32 %v5491, %v5942
        %v5946 = vmul.f32 %v5496, %v5942
        %v5947 = vmul.f32 %v5501, %v5942
        %v5948 = vmul.f32 %v5506, %v5942
        %v5949 = vmul.f32 %v5511, %v5942
        %v5950 = vmul.f32 %v5516, %v5942
        %v5951 = vmul.f32 %v5521, %v5942
        %v5952 = vmul.f32 %v5526, %v5942
        %v5953 = vmul.f32 %v5531, %v5942
        %v5954 = vmul.f32 %v5536, %v5942
        %v5955 = vmul.f32 %v5541, %v5942
        %v5956 = vmul.f32 %v5546, %v5942
        %v5957 = vmul.f32 %v5551, %v5942
        %v5958 = vmul.f32 %v5556, %v5942
        %v5959 = vmul.f32 %v5561, %v5942
        %v5960 = vmul.f32 %v5566, %v5942
        %v5961 = vmul.f32 %v5571, %v5942
        %v5962 = vmul.f32 %v5576, %v5942
        %v5963 = vmul.f32 %v5581, %v5942
        %v5964 = vmul.f32 %v5586, %v5942
        %v5965 = vmul.f32 %v5591, %v5942
        %v5966 = vmul.f32 %v5596, %v5942
        %v5967 = vmul.f32 %v5601, %v5942
        %v5968 = vmul.f32 %v5606, %v5942
        %v5969 = vmul.f32 %v5611, %v5942
        %v5970 = vmul.f32 %v5616, %v5942
        %v5971 = vmul.f32 %v5621, %v5942
        %v5972 = vmul.f32 %v5626, %v5942
        %v5973 = vmul.f32 %v5631, %v5942
        %v5974 = vmul.f32 %v5636, %v5942
        %v5975 = vmul.f32 %v5641, %v5942
        %v5976 = vmul.f32 %v5646, %v5942
        %v5977 = vmul.f32 %v5651, %v5942
        %v5978 = vmul.f32 %v5656, %v5942
        %v5979 = vmul.f32 %v5661, %v5942
        %v5980 = vmul.f32 %v5666, %v5942
        %v5981 = vmul.f32 %v5671, %v5942
        %v5982 = vmul.f32 %v5676, %v5942
        %v5983 = vmul.f32 %v5681, %v5942
        %v5984 = vmul.f32 %v5686, %v5942
        %v5985 = vmul.f32 %v5691, %v5942
        %v5986 = vmul.f32 %v5696, %v5942
        %v5987 = vmul.f32 %v5701, %v5942
        %v5988 = vmul.f32 %v5706, %v5942
        %v5989 = vmul.f32 %v5711, %v5942
        %v5990 = vmul.f32 %v5716, %v5942
        %v5991 = vmul.f32 %v5721, %v5942
        %v5992 = vmul.f32 %v5726, %v5942
        %v5993 = vmul.f32 %v5731, %v5942
        %v5994 = vmul.f32 %v5736, %v5942
        %v5995 = vmul.f32 %v5741, %v5942
        %v5996 = vmul.f32 %v5746, %v5942
        %v5997 = vmul.f32 %v5751, %v5942
        %v5998 = vmul.f32 %v5756, %v5942
        %v5999 = vmul.f32 %v5761, %v5942
        %v6000 = vmul.f32 %v5766, %v5942
        %v6001 = vmul.f32 %v5771, %v5942
        %v6002 = vmul.f32 %v5776, %v5942
        %v6003 = vmul.f32 %v5781, %v5942
        %v6004 = vmul.f32 %v5786, %v5942
        %v6005 = vmul.f32 %v5791, %v5942
        %v6006 = vmul.f32 %v5796, %v5942
        %v6007 = vmul.f32 %v5801, %v5942
        %v6008 = vmul.f32 %v5806, %v5942
        %v6009 = vmul.f32 %v5811, %v5942
        %v6010 = vmul.f32 %v5816, %v5942
        %v6011 = vmul.f32 %v5821, %v5942
        %v6012 = vmul.f32 %v5826, %v5942
        %v6013 = vmul.f32 %v5831, %v5942
        %v6014 = vmul.f32 %v5836, %v5942
        %v6015 = vmul.f32 %v5841, %v5942
        %v6016 = vmul.f32 %v5846, %v5942
        %v6017 = vmul.f32 %v5851, %v5942
        %v6018 = vmul.f32 %v5856, %v5942
        %v6019 = vmul.f32 %v5861, %v5942
        %v6020 = vmul.f32 %v5866, %v5942
        %v6021 = vmul.f32 %v5871, %v5942
        %v6022 = vmul.f32 %v5876, %v5942
        %v6023 = vmul.f32 %v5881, %v5942
        %v6024 = vmul.f32 %v5886, %v5942
        %v6025 = vmul.f32 %v5891, %v5942
        %v6026 = vmul.f32 %v5896, %v5942
        %v6027 = vmul.f32 %v5901, %v5942
        %v6028 = vmul.f32 %v5906, %v5942
        %v6029 = vmul.f32 %v5911, %v5942
        %v6030 = vmul.f32 %v5916, %v5942
        %v6031 = vmul.f32 %v5921, %v5942
        %v6032 = vmul.f32 %v5926, %v5942
        %v6033 = vmul.f32 %v5931, %v5942
        %v6034 = vmul.f32 %v5936, %v5942
        %v6035 = vadd.f32 %v5299, %v5944
        %v6036 = vadd.f32 %v5300, %v5945
        %v6037 = vadd.f32 %v5301, %v5946
        %v6038 = vadd.f32 %v5302, %v5947
        %v6039 = vadd.f32 %v5303, %v5948
        %v6040 = vadd.f32 %v5304, %v5949
        %v6041 = vadd.f32 %v5305, %v5950
        %v6042 = vadd.f32 %v5306, %v5951
        %v6043 = vadd.f32 %v5307, %v5952
        %v6044 = vadd.f32 %v5308, %v5953
        %v6045 = vadd.f32 %v5309, %v5954
        %v6046 = vadd.f32 %v5310, %v5955
        %v6047 = vadd.f32 %v5311, %v5956
        %v6048 = vadd.f32 %v5312, %v5957
        %v6049 = vadd.f32 %v5313, %v5958
        %v6050 = vadd.f32 %v5314, %v5959
        %v6051 = vadd.f32 %v5315, %v5960
        %v6052 = vadd.f32 %v5316, %v5961
        %v6053 = vadd.f32 %v5317, %v5962
        %v6054 = vadd.f32 %v5318, %v5963
        %v6055 = vadd.f32 %v5319, %v5964
        %v6056 = vadd.f32 %v5320, %v5965
        %v6057 = vadd.f32 %v5321, %v5966
        %v6058 = vadd.f32 %v5322, %v5967
        %v6059 = vadd.f32 %v5323, %v5968
        %v6060 = vadd.f32 %v5324, %v5969
        %v6061 = vadd.f32 %v5325, %v5970
        %v6062 = vadd.f32 %v5326, %v5971
        %v6063 = vadd.f32 %v5327, %v5972
        %v6064 = vadd.f32 %v5328, %v5973
        %v6065 = vadd.f32 %v5329, %v5974
        %v6066 = vadd.f32 %v5330, %v5975
        %v6067 = vadd.f32 %v5331, %v5976
        %v6068 = vadd.f32 %v5332, %v5977
        %v6069 = vadd.f32 %v5333, %v5978
        %v6070 = vadd.f32 %v5334, %v5979
        %v6071 = vadd.f32 %v5335, %v5980
        %v6072 = vadd.f32 %v5336, %v5981
        %v6073 = vadd.f32 %v5337, %v5982
        %v6074 = vadd.f32 %v5338, %v5983
        %v6075 = vadd.f32 %v5339, %v5984
        %v6076 = vadd.f32 %v5340, %v5985
        %v6077 = vadd.f32 %v5341, %v5986
        %v6078 = vadd.f32 %v5342, %v5987
        %v6079 = vadd.f32 %v5343, %v5988
        %v6080 = vadd.f32 %v5344, %v5989
        %v6081 = vadd.f32 %v5345, %v5990
        %v6082 = vadd.f32 %v5346, %v5991
        %v6083 = vadd.f32 %v5347, %v5992
        %v6084 = vadd.f32 %v5348, %v5993
        %v6085 = vadd.f32 %v5349, %v5994
        %v6086 = vadd.f32 %v5350, %v5995
        %v6087 = vadd.f32 %v5351, %v5996
        %v6088 = vadd.f32 %v5352, %v5997
        %v6089 = vadd.f32 %v5353, %v5998
        %v6090 = vadd.f32 %v5354, %v5999
        %v6091 = vadd.f32 %v5355, %v6000
        %v6092 = vadd.f32 %v5356, %v6001
        %v6093 = vadd.f32 %v5357, %v6002
        %v6094 = vadd.f32 %v5358, %v6003
        %v6095 = vadd.f32 %v5359, %v6004
        %v6096 = vadd.f32 %v5360, %v6005
        %v6097 = vadd.f32 %v5361, %v6006
        %v6098 = vadd.f32 %v5362, %v6007
        %v6099 = vadd.f32 %v5363, %v6008
        %v6100 = vadd.f32 %v5364, %v6009
        %v6101 = vadd.f32 %v5365, %v6010
        %v6102 = vadd.f32 %v5366, %v6011
        %v6103 = vadd.f32 %v5367, %v6012
        %v6104 = vadd.f32 %v5368, %v6013
        %v6105 = vadd.f32 %v5369, %v6014
        %v6106 = vadd.f32 %v5370, %v6015
        %v6107 = vadd.f32 %v5371, %v6016
        %v6108 = vadd.f32 %v5372, %v6017
        %v6109 = vadd.f32 %v5373, %v6018
        %v6110 = vadd.f32 %v5374, %v6019
        %v6111 = vadd.f32 %v5375, %v6020
        %v6112 = vadd.f32 %v5376, %v6021
        %v6113 = vadd.f32 %v5377, %v6022
        %v6114 = vadd.f32 %v5378, %v6023
        %v6115 = vadd.f32 %v5379, %v6024
        %v6116 = vadd.f32 %v5380, %v6025
        %v6117 = vadd.f32 %v5381, %v6026
        %v6118 = vadd.f32 %v5382, %v6027
        %v6119 = vadd.f32 %v5383, %v6028
        %v6120 = vadd.f32 %v5384, %v6029
        %v6121 = vadd.f32 %v5385, %v6030
        %v6122 = vadd.f32 %v5386, %v6031
        %v6123 = vadd.f32 %v5387, %v6032
        %v6124 = vadd.f32 %v5388, %v6033
        %v6125 = vadd.f32 %v5389, %v6034
        %v6126 = vld [vmem:[%s329 + $0x3a] sm:$0xff]
        %v6127 = vld [vmem:[%s329 + $0x42] sm:$0xff]
        %v6128 = vld [vmem:[%s329 + $0x4a] sm:$0xff]
        %v6129 = vld [vmem:[%s329 + $0x52] sm:$0xff]
        %v6130 = vld [vmem:[%s329 + $0x5a] sm:$0xff]
        %v6131 = vld [vmem:[%s329 + $0x62] sm:$0xff]
        %v6132 = vld [vmem:[%s329 + $0x6a] sm:$0xff]
        %v6133 = vld [vmem:[%s329 + $0x72] sm:$0xff]
        %v6134 = vld [vmem:[%s329 + $0x7a] sm:$0xff]
        %v6135 = vld [vmem:[%s329 + $0x82] sm:$0xff]
        %v6136 = vld [vmem:[%s329 + $0x8a] sm:$0xff]
        %v6137 = vld [vmem:[%s329 + $0x92] sm:$0xff]
        %v6138 = vld [vmem:[%s329 + $0x9a] sm:$0xff]
        %v6139 = vld [vmem:[%s329 + $0xa2] sm:$0xff]
        %v6140 = vld [vmem:[%s329 + $0xaa] sm:$0xff]
        %v6141 = vld [vmem:[%s329 + $0xb2] sm:$0xff]
        %v6142 = vld [vmem:[%s329 + $0xba] sm:$0xff]
        %v6143 = vld [vmem:[%s329 + $0xc2] sm:$0xff]
        %v6144 = vld [vmem:[%s329 + $0xca] sm:$0xff]
        %v6145 = vld [vmem:[%s329 + $0xd2] sm:$0xff]
        %v6146 = vld [vmem:[%s329 + $0xda] sm:$0xff]
        %v6147 = vld [vmem:[%s329 + $0xe2] sm:$0xff]
        %v6148 = vld [vmem:[%s329 + $0xea] sm:$0xff]
        %v6149 = vld [vmem:[%s329 + $0xf2] sm:$0xff]
        %v6150 = vld [vmem:[%s329 + $0xfa] sm:$0xff]
        %v6151 = vld [vmem:[%s329 + $0x102] sm:$0xff]
        %v6152 = vld [vmem:[%s329 + $0x10a] sm:$0xff]
        %v6153 = vld [vmem:[%s329 + $0x112] sm:$0xff]
        %v6154 = vld [vmem:[%s329 + $0x11a] sm:$0xff]
        %v6155 = vld [vmem:[%s329 + $0x122] sm:$0xff]
        %v6156 = vld [vmem:[%s329 + $0x12a] sm:$0xff]
        %v6157 = vld [vmem:[%s329 + $0x132] sm:$0xff]
        %v6158 = vld [vmem:[%s329 + $0x13a] sm:$0xff]
        %v6159 = vld [vmem:[%s329 + $0x142] sm:$0xff]
        %v6160 = vld [vmem:[%s329 + $0x14a] sm:$0xff]
        %v6161 = vld [vmem:[%s329 + $0x152] sm:$0xff]
        %v6162 = vld [vmem:[%s329 + $0x15a] sm:$0xff]
        %v6163 = vld [vmem:[%s329 + $0x162] sm:$0xff]
        %v6164 = vld [vmem:[%s329 + $0x16a] sm:$0xff]
        %v6165 = vld [vmem:[%s329 + $0x172] sm:$0xff]
        %v6166 = vld [vmem:[%s329 + $0x17a] sm:$0xff]
        %v6167 = vld [vmem:[%s329 + $0x182] sm:$0xff]
        %v6168 = vld [vmem:[%s329 + $0x18a] sm:$0xff]
        %v6169 = vld [vmem:[%s329 + $0x192] sm:$0xff]
        %v6170 = vld [vmem:[%s329 + $0x19a] sm:$0xff]
        %v6171 = vld [vmem:[%s329 + $0x1a2] sm:$0xff]
        %v6172 = vld [vmem:[%s329 + $0x1aa] sm:$0xff]
        %v6173 = vld [vmem:[%s329 + $0x1b2] sm:$0xff]
        %v6174 = vld [vmem:[%s329 + $0x1ba] sm:$0xff]
        %v6175 = vld [vmem:[%s329 + $0x1c2] sm:$0xff]
        %v6176 = vld [vmem:[%s329 + $0x1ca] sm:$0xff]
        %v6177 = vld [vmem:[%s329 + $0x1d2] sm:$0xff]
        %v6178 = vld [vmem:[%s329 + $0x1da] sm:$0xff]
        %v6179 = vld [vmem:[%s329 + $0x1e2] sm:$0xff]
        %v6180 = vld [vmem:[%s329 + $0x1ea] sm:$0xff]
        %v6181 = vld [vmem:[%s329 + $0x1f2] sm:$0xff]
        %v6182 = vld [vmem:[%s329 + $0x1fa] sm:$0xff]
        %v6183 = vld [vmem:[%s329 + $0x202] sm:$0xff]
        %v6184 = vld [vmem:[%s329 + $0x20a] sm:$0xff]
        %v6185 = vld [vmem:[%s329 + $0x212] sm:$0xff]
        %v6186 = vld [vmem:[%s329 + $0x21a] sm:$0xff]
        %v6187 = vld [vmem:[%s329 + $0x222] sm:$0xff]
        %v6188 = vld [vmem:[%s329 + $0x22a] sm:$0xff]
        %v6189 = vld [vmem:[%s329 + $0x232] sm:$0xff]
        %v6190 = vld [vmem:[%s329 + $0x23a] sm:$0xff]
        %v6191 = vld [vmem:[%s329 + $0x242] sm:$0xff]
        %v6192 = vld [vmem:[%s329 + $0x24a] sm:$0xff]
        %v6193 = vld [vmem:[%s329 + $0x252] sm:$0xff]
        %v6194 = vld [vmem:[%s329 + $0x25a] sm:$0xff]
        %v6195 = vld [vmem:[%s329 + $0x262] sm:$0xff]
        %v6196 = vld [vmem:[%s329 + $0x26a] sm:$0xff]
        %v6197 = vld [vmem:[%s329 + $0x272] sm:$0xff]
        %v6198 = vld [vmem:[%s329 + $0x27a] sm:$0xff]
        %v6199 = vld [vmem:[%s329 + $0x282] sm:$0xff]
        %v6200 = vld [vmem:[%s329 + $0x28a] sm:$0xff]
        %v6201 = vld [vmem:[%s329 + $0x292] sm:$0xff]
        %v6202 = vld [vmem:[%s329 + $0x29a] sm:$0xff]
        %v6203 = vld [vmem:[%s329 + $0x2a2] sm:$0xff]
        %v6204 = vld [vmem:[%s329 + $0x2aa] sm:$0xff]
        %v6205 = vld [vmem:[%s329 + $0x2b2] sm:$0xff]
        %v6206 = vld [vmem:[%s329 + $0x2ba] sm:$0xff]
        %v6207 = vld [vmem:[%s329 + $0x2c2] sm:$0xff]
        %v6208 = vld [vmem:[%s329 + $0x2ca] sm:$0xff]
        %v6209 = vld [vmem:[%s329 + $0x2d2] sm:$0xff]
        %v6210 = vld [vmem:[%s329 + $0x2da] sm:$0xff]
        %v6211 = vld [vmem:[%s329 + $0x2e2] sm:$0xff]
        %v6212 = vld [vmem:[%s329 + $0x2ea] sm:$0xff]
        %v6213 = vld [vmem:[%s329 + $0x2f2] sm:$0xff]
        %v6214 = vld [vmem:[%s329 + $0x2fa] sm:$0xff]
        %v6215 = vld [vmem:[%s329 + $0x302] sm:$0xff]
        %v6216 = vld [vmem:[%s329 + $0x30a] sm:$0x3f]
        %s6217 = scalar_lea.vmem %s1, 8
        %v6218 = vld [vmem:[%s6217] sm:$0x1]
        %6220 = vset.pattern.permute.xlu0 0
        %6221 = vperm.xlu0 %6220, %v6126
        %v6222 = vpop.permute.xlu0 %6221
        %6225 = vset.pattern.permute.xlu0 0
        %6226 = vperm.xlu0 %6225, %v6127
        %v6227 = vpop.permute.xlu0 %6226
        %6230 = vset.pattern.permute.xlu0 0
        %6231 = vperm.xlu0 %6230, %v6128
        %v6232 = vpop.permute.xlu0 %6231
        %6235 = vset.pattern.permute.xlu0 0
        %6236 = vperm.xlu0 %6235, %v6129
        %v6237 = vpop.permute.xlu0 %6236
        %6240 = vset.pattern.permute.xlu0 0
        %6241 = vperm.xlu0 %6240, %v6130
        %v6242 = vpop.permute.xlu0 %6241
        %6245 = vset.pattern.permute.xlu0 0
        %6246 = vperm.xlu0 %6245, %v6131
        %v6247 = vpop.permute.xlu0 %6246
        %6250 = vset.pattern.permute.xlu0 0
        %6251 = vperm.xlu0 %6250, %v6132
        %v6252 = vpop.permute.xlu0 %6251
        %6255 = vset.pattern.permute.xlu0 0
        %6256 = vperm.xlu0 %6255, %v6133
        %v6257 = vpop.permute.xlu0 %6256
        %6260 = vset.pattern.permute.xlu0 0
        %6261 = vperm.xlu0 %6260, %v6134
        %v6262 = vpop.permute.xlu0 %6261
        %6265 = vset.pattern.permute.xlu0 0
        %6266 = vperm.xlu0 %6265, %v6135
        %v6267 = vpop.permute.xlu0 %6266
        %6270 = vset.pattern.permute.xlu0 0
        %6271 = vperm.xlu0 %6270, %v6136
        %v6272 = vpop.permute.xlu0 %6271
        %6275 = vset.pattern.permute.xlu0 0
        %6276 = vperm.xlu0 %6275, %v6137
        %v6277 = vpop.permute.xlu0 %6276
        %6280 = vset.pattern.permute.xlu0 0
        %6281 = vperm.xlu0 %6280, %v6138
        %v6282 = vpop.permute.xlu0 %6281
        %6285 = vset.pattern.permute.xlu0 0
        %6286 = vperm.xlu0 %6285, %v6139
        %v6287 = vpop.permute.xlu0 %6286
        %6290 = vset.pattern.permute.xlu0 0
        %6291 = vperm.xlu0 %6290, %v6140
        %v6292 = vpop.permute.xlu0 %6291
        %6295 = vset.pattern.permute.xlu0 0
        %6296 = vperm.xlu0 %6295, %v6141
        %v6297 = vpop.permute.xlu0 %6296
        %6300 = vset.pattern.permute.xlu0 0
        %6301 = vperm.xlu0 %6300, %v6142
        %v6302 = vpop.permute.xlu0 %6301
        %6305 = vset.pattern.permute.xlu0 0
        %6306 = vperm.xlu0 %6305, %v6143
        %v6307 = vpop.permute.xlu0 %6306
        %6310 = vset.pattern.permute.xlu0 0
        %6311 = vperm.xlu0 %6310, %v6144
        %v6312 = vpop.permute.xlu0 %6311
        %6315 = vset.pattern.permute.xlu0 0
        %6316 = vperm.xlu0 %6315, %v6145
        %v6317 = vpop.permute.xlu0 %6316
        %6320 = vset.pattern.permute.xlu0 0
        %6321 = vperm.xlu0 %6320, %v6146
        %v6322 = vpop.permute.xlu0 %6321
        %6325 = vset.pattern.permute.xlu0 0
        %6326 = vperm.xlu0 %6325, %v6147
        %v6327 = vpop.permute.xlu0 %6326
        %6330 = vset.pattern.permute.xlu0 0
        %6331 = vperm.xlu0 %6330, %v6148
        %v6332 = vpop.permute.xlu0 %6331
        %6335 = vset.pattern.permute.xlu0 0
        %6336 = vperm.xlu0 %6335, %v6149
        %v6337 = vpop.permute.xlu0 %6336
        %6340 = vset.pattern.permute.xlu0 0
        %6341 = vperm.xlu0 %6340, %v6150
        %v6342 = vpop.permute.xlu0 %6341
        %6345 = vset.pattern.permute.xlu0 0
        %6346 = vperm.xlu0 %6345, %v6151
        %v6347 = vpop.permute.xlu0 %6346
        %6350 = vset.pattern.permute.xlu0 0
        %6351 = vperm.xlu0 %6350, %v6152
        %v6352 = vpop.permute.xlu0 %6351
        %6355 = vset.pattern.permute.xlu0 0
        %6356 = vperm.xlu0 %6355, %v6153
        %v6357 = vpop.permute.xlu0 %6356
        %6360 = vset.pattern.permute.xlu0 0
        %6361 = vperm.xlu0 %6360, %v6154
        %v6362 = vpop.permute.xlu0 %6361
        %6365 = vset.pattern.permute.xlu0 0
        %6366 = vperm.xlu0 %6365, %v6155
        %v6367 = vpop.permute.xlu0 %6366
        %6370 = vset.pattern.permute.xlu0 0
        %6371 = vperm.xlu0 %6370, %v6156
        %v6372 = vpop.permute.xlu0 %6371
        %6375 = vset.pattern.permute.xlu0 0
        %6376 = vperm.xlu0 %6375, %v6157
        %v6377 = vpop.permute.xlu0 %6376
        %6380 = vset.pattern.permute.xlu0 0
        %6381 = vperm.xlu0 %6380, %v6158
        %v6382 = vpop.permute.xlu0 %6381
        %6385 = vset.pattern.permute.xlu0 0
        %6386 = vperm.xlu0 %6385, %v6159
        %v6387 = vpop.permute.xlu0 %6386
        %6390 = vset.pattern.permute.xlu0 0
        %6391 = vperm.xlu0 %6390, %v6160
        %v6392 = vpop.permute.xlu0 %6391
        %6395 = vset.pattern.permute.xlu0 0
        %6396 = vperm.xlu0 %6395, %v6161
        %v6397 = vpop.permute.xlu0 %6396
        %6400 = vset.pattern.permute.xlu0 0
        %6401 = vperm.xlu0 %6400, %v6162
        %v6402 = vpop.permute.xlu0 %6401
        %6405 = vset.pattern.permute.xlu0 0
        %6406 = vperm.xlu0 %6405, %v6163
        %v6407 = vpop.permute.xlu0 %6406
        %6410 = vset.pattern.permute.xlu0 0
        %6411 = vperm.xlu0 %6410, %v6164
        %v6412 = vpop.permute.xlu0 %6411
        %6415 = vset.pattern.permute.xlu0 0
        %6416 = vperm.xlu0 %6415, %v6165
        %v6417 = vpop.permute.xlu0 %6416
        %6420 = vset.pattern.permute.xlu0 0
        %6421 = vperm.xlu0 %6420, %v6166
        %v6422 = vpop.permute.xlu0 %6421
        %6425 = vset.pattern.permute.xlu0 0
        %6426 = vperm.xlu0 %6425, %v6167
        %v6427 = vpop.permute.xlu0 %6426
        %6430 = vset.pattern.permute.xlu0 0
        %6431 = vperm.xlu0 %6430, %v6168
        %v6432 = vpop.permute.xlu0 %6431
        %6435 = vset.pattern.permute.xlu0 0
        %6436 = vperm.xlu0 %6435, %v6169
        %v6437 = vpop.permute.xlu0 %6436
        %6440 = vset.pattern.permute.xlu0 0
        %6441 = vperm.xlu0 %6440, %v6170
        %v6442 = vpop.permute.xlu0 %6441
        %6445 = vset.pattern.permute.xlu0 0
        %6446 = vperm.xlu0 %6445, %v6171
        %v6447 = vpop.permute.xlu0 %6446
        %6450 = vset.pattern.permute.xlu0 0
        %6451 = vperm.xlu0 %6450, %v6172
        %v6452 = vpop.permute.xlu0 %6451
        %6455 = vset.pattern.permute.xlu0 0
        %6456 = vperm.xlu0 %6455, %v6173
        %v6457 = vpop.permute.xlu0 %6456
        %6460 = vset.pattern.permute.xlu0 0
        %6461 = vperm.xlu0 %6460, %v6174
        %v6462 = vpop.permute.xlu0 %6461
        %6465 = vset.pattern.permute.xlu0 0
        %6466 = vperm.xlu0 %6465, %v6175
        %v6467 = vpop.permute.xlu0 %6466
        %6470 = vset.pattern.permute.xlu0 0
        %6471 = vperm.xlu0 %6470, %v6176
        %v6472 = vpop.permute.xlu0 %6471
        %6475 = vset.pattern.permute.xlu0 0
        %6476 = vperm.xlu0 %6475, %v6177
        %v6477 = vpop.permute.xlu0 %6476
        %6480 = vset.pattern.permute.xlu0 0
        %6481 = vperm.xlu0 %6480, %v6178
        %v6482 = vpop.permute.xlu0 %6481
        %6485 = vset.pattern.permute.xlu0 0
        %6486 = vperm.xlu0 %6485, %v6179
        %v6487 = vpop.permute.xlu0 %6486
        %6490 = vset.pattern.permute.xlu0 0
        %6491 = vperm.xlu0 %6490, %v6180
        %v6492 = vpop.permute.xlu0 %6491
        %6495 = vset.pattern.permute.xlu0 0
        %6496 = vperm.xlu0 %6495, %v6181
        %v6497 = vpop.permute.xlu0 %6496
        %6500 = vset.pattern.permute.xlu0 0
        %6501 = vperm.xlu0 %6500, %v6182
        %v6502 = vpop.permute.xlu0 %6501
        %6505 = vset.pattern.permute.xlu0 0
        %6506 = vperm.xlu0 %6505, %v6183
        %v6507 = vpop.permute.xlu0 %6506
        %6510 = vset.pattern.permute.xlu0 0
        %6511 = vperm.xlu0 %6510, %v6184
        %v6512 = vpop.permute.xlu0 %6511
        %6515 = vset.pattern.permute.xlu0 0
        %6516 = vperm.xlu0 %6515, %v6185
        %v6517 = vpop.permute.xlu0 %6516
        %6520 = vset.pattern.permute.xlu0 0
        %6521 = vperm.xlu0 %6520, %v6186
        %v6522 = vpop.permute.xlu0 %6521
        %6525 = vset.pattern.permute.xlu0 0
        %6526 = vperm.xlu0 %6525, %v6187
        %v6527 = vpop.permute.xlu0 %6526
        %6530 = vset.pattern.permute.xlu0 0
        %6531 = vperm.xlu0 %6530, %v6188
        %v6532 = vpop.permute.xlu0 %6531
        %6535 = vset.pattern.permute.xlu0 0
        %6536 = vperm.xlu0 %6535, %v6189
        %v6537 = vpop.permute.xlu0 %6536
        %6540 = vset.pattern.permute.xlu0 0
        %6541 = vperm.xlu0 %6540, %v6190
        %v6542 = vpop.permute.xlu0 %6541
        %6545 = vset.pattern.permute.xlu0 0
        %6546 = vperm.xlu0 %6545, %v6191
        %v6547 = vpop.permute.xlu0 %6546
        %6550 = vset.pattern.permute.xlu0 0
        %6551 = vperm.xlu0 %6550, %v6192
        %v6552 = vpop.permute.xlu0 %6551
        %6555 = vset.pattern.permute.xlu0 0
        %6556 = vperm.xlu0 %6555, %v6193
        %v6557 = vpop.permute.xlu0 %6556
        %6560 = vset.pattern.permute.xlu0 0
        %6561 = vperm.xlu0 %6560, %v6194
        %v6562 = vpop.permute.xlu0 %6561
        %6565 = vset.pattern.permute.xlu0 0
        %6566 = vperm.xlu0 %6565, %v6195
        %v6567 = vpop.permute.xlu0 %6566
        %6570 = vset.pattern.permute.xlu0 0
        %6571 = vperm.xlu0 %6570, %v6196
        %v6572 = vpop.permute.xlu0 %6571
        %6575 = vset.pattern.permute.xlu0 0
        %6576 = vperm.xlu0 %6575, %v6197
        %v6577 = vpop.permute.xlu0 %6576
        %6580 = vset.pattern.permute.xlu0 0
        %6581 = vperm.xlu0 %6580, %v6198
        %v6582 = vpop.permute.xlu0 %6581
        %6585 = vset.pattern.permute.xlu0 0
        %6586 = vperm.xlu0 %6585, %v6199
        %v6587 = vpop.permute.xlu0 %6586
        %6590 = vset.pattern.permute.xlu0 0
        %6591 = vperm.xlu0 %6590, %v6200
        %v6592 = vpop.permute.xlu0 %6591
        %6595 = vset.pattern.permute.xlu0 0
        %6596 = vperm.xlu0 %6595, %v6201
        %v6597 = vpop.permute.xlu0 %6596
        %6600 = vset.pattern.permute.xlu0 0
        %6601 = vperm.xlu0 %6600, %v6202
        %v6602 = vpop.permute.xlu0 %6601
        %6605 = vset.pattern.permute.xlu0 0
        %6606 = vperm.xlu0 %6605, %v6203
        %v6607 = vpop.permute.xlu0 %6606
        %6610 = vset.pattern.permute.xlu0 0
        %6611 = vperm.xlu0 %6610, %v6204
        %v6612 = vpop.permute.xlu0 %6611
        %6615 = vset.pattern.permute.xlu0 0
        %6616 = vperm.xlu0 %6615, %v6205
        %v6617 = vpop.permute.xlu0 %6616
        %6620 = vset.pattern.permute.xlu0 0
        %6621 = vperm.xlu0 %6620, %v6206
        %v6622 = vpop.permute.xlu0 %6621
        %6625 = vset.pattern.permute.xlu0 0
        %6626 = vperm.xlu0 %6625, %v6207
        %v6627 = vpop.permute.xlu0 %6626
        %6630 = vset.pattern.permute.xlu0 0
        %6631 = vperm.xlu0 %6630, %v6208
        %v6632 = vpop.permute.xlu0 %6631
        %6635 = vset.pattern.permute.xlu0 0
        %6636 = vperm.xlu0 %6635, %v6209
        %v6637 = vpop.permute.xlu0 %6636
        %6640 = vset.pattern.permute.xlu0 0
        %6641 = vperm.xlu0 %6640, %v6210
        %v6642 = vpop.permute.xlu0 %6641
        %6645 = vset.pattern.permute.xlu0 0
        %6646 = vperm.xlu0 %6645, %v6211
        %v6647 = vpop.permute.xlu0 %6646
        %6650 = vset.pattern.permute.xlu0 0
        %6651 = vperm.xlu0 %6650, %v6212
        %v6652 = vpop.permute.xlu0 %6651
        %6655 = vset.pattern.permute.xlu0 0
        %6656 = vperm.xlu0 %6655, %v6213
        %v6657 = vpop.permute.xlu0 %6656
        %6660 = vset.pattern.permute.xlu0 0
        %6661 = vperm.xlu0 %6660, %v6214
        %v6662 = vpop.permute.xlu0 %6661
        %6665 = vset.pattern.permute.xlu0 0
        %6666 = vperm.xlu0 %6665, %v6215
        %v6667 = vpop.permute.xlu0 %6666
        %6670 = vset.pattern.permute.xlu0 0
        %6671 = vperm.xlu0 %6670, %v6216
        %v6672 = vpop.permute.xlu0 %6671
        %v6675 = vlaneseq
        %v6676 = vshrl.u32 %v6675, 7
        %v6677 = vsub.s32 0, %v6676
        %v6678 = vrot.slane %v6218, %v6677
        %v6680 = vmul.f32 %v6222, %v6678
        %v6681 = vmul.f32 %v6227, %v6678
        %v6682 = vmul.f32 %v6232, %v6678
        %v6683 = vmul.f32 %v6237, %v6678
        %v6684 = vmul.f32 %v6242, %v6678
        %v6685 = vmul.f32 %v6247, %v6678
        %v6686 = vmul.f32 %v6252, %v6678
        %v6687 = vmul.f32 %v6257, %v6678
        %v6688 = vmul.f32 %v6262, %v6678
        %v6689 = vmul.f32 %v6267, %v6678
        %v6690 = vmul.f32 %v6272, %v6678
        %v6691 = vmul.f32 %v6277, %v6678
        %v6692 = vmul.f32 %v6282, %v6678
        %v6693 = vmul.f32 %v6287, %v6678
        %v6694 = vmul.f32 %v6292, %v6678
        %v6695 = vmul.f32 %v6297, %v6678
        %v6696 = vmul.f32 %v6302, %v6678
        %v6697 = vmul.f32 %v6307, %v6678
        %v6698 = vmul.f32 %v6312, %v6678
        %v6699 = vmul.f32 %v6317, %v6678
        %v6700 = vmul.f32 %v6322, %v6678
        %v6701 = vmul.f32 %v6327, %v6678
        %v6702 = vmul.f32 %v6332, %v6678
        %v6703 = vmul.f32 %v6337, %v6678
        %v6704 = vmul.f32 %v6342, %v6678
        %v6705 = vmul.f32 %v6347, %v6678
        %v6706 = vmul.f32 %v6352, %v6678
        %v6707 = vmul.f32 %v6357, %v6678
        %v6708 = vmul.f32 %v6362, %v6678
        %v6709 = vmul.f32 %v6367, %v6678
        %v6710 = vmul.f32 %v6372, %v6678
        %v6711 = vmul.f32 %v6377, %v6678
        %v6712 = vmul.f32 %v6382, %v6678
        %v6713 = vmul.f32 %v6387, %v6678
        %v6714 = vmul.f32 %v6392, %v6678
        %v6715 = vmul.f32 %v6397, %v6678
        %v6716 = vmul.f32 %v6402, %v6678
        %v6717 = vmul.f32 %v6407, %v6678
        %v6718 = vmul.f32 %v6412, %v6678
        %v6719 = vmul.f32 %v6417, %v6678
        %v6720 = vmul.f32 %v6422, %v6678
        %v6721 = vmul.f32 %v6427, %v6678
        %v6722 = vmul.f32 %v6432, %v6678
        %v6723 = vmul.f32 %v6437, %v6678
        %v6724 = vmul.f32 %v6442, %v6678
        %v6725 = vmul.f32 %v6447, %v6678
        %v6726 = vmul.f32 %v6452, %v6678
        %v6727 = vmul.f32 %v6457, %v6678
        %v6728 = vmul.f32 %v6462, %v6678
        %v6729 = vmul.f32 %v6467, %v6678
        %v6730 = vmul.f32 %v6472, %v6678
        %v6731 = vmul.f32 %v6477, %v6678
        %v6732 = vmul.f32 %v6482, %v6678
        %v6733 = vmul.f32 %v6487, %v6678
        %v6734 = vmul.f32 %v6492, %v6678
        %v6735 = vmul.f32 %v6497, %v6678
        %v6736 = vmul.f32 %v6502, %v6678
        %v6737 = vmul.f32 %v6507, %v6678
        %v6738 = vmul.f32 %v6512, %v6678
        %v6739 = vmul.f32 %v6517, %v6678
        %v6740 = vmul.f32 %v6522, %v6678
        %v6741 = vmul.f32 %v6527, %v6678
        %v6742 = vmul.f32 %v6532, %v6678
        %v6743 = vmul.f32 %v6537, %v6678
        %v6744 = vmul.f32 %v6542, %v6678
        %v6745 = vmul.f32 %v6547, %v6678
        %v6746 = vmul.f32 %v6552, %v6678
        %v6747 = vmul.f32 %v6557, %v6678
        %v6748 = vmul.f32 %v6562, %v6678
        %v6749 = vmul.f32 %v6567, %v6678
        %v6750 = vmul.f32 %v6572, %v6678
        %v6751 = vmul.f32 %v6577, %v6678
        %v6752 = vmul.f32 %v6582, %v6678
        %v6753 = vmul.f32 %v6587, %v6678
        %v6754 = vmul.f32 %v6592, %v6678
        %v6755 = vmul.f32 %v6597, %v6678
        %v6756 = vmul.f32 %v6602, %v6678
        %v6757 = vmul.f32 %v6607, %v6678
        %v6758 = vmul.f32 %v6612, %v6678
        %v6759 = vmul.f32 %v6617, %v6678
        %v6760 = vmul.f32 %v6622, %v6678
        %v6761 = vmul.f32 %v6627, %v6678
        %v6762 = vmul.f32 %v6632, %v6678
        %v6763 = vmul.f32 %v6637, %v6678
        %v6764 = vmul.f32 %v6642, %v6678
        %v6765 = vmul.f32 %v6647, %v6678
        %v6766 = vmul.f32 %v6652, %v6678
        %v6767 = vmul.f32 %v6657, %v6678
        %v6768 = vmul.f32 %v6662, %v6678
        %v6769 = vmul.f32 %v6667, %v6678
        %v6770 = vmul.f32 %v6672, %v6678
        %v6771 = vadd.f32 %v6035, %v6680
        %v6772 = vadd.f32 %v6036, %v6681
        %v6773 = vadd.f32 %v6037, %v6682
        %v6774 = vadd.f32 %v6038, %v6683
        %v6775 = vadd.f32 %v6039, %v6684
        %v6776 = vadd.f32 %v6040, %v6685
        %v6777 = vadd.f32 %v6041, %v6686
        %v6778 = vadd.f32 %v6042, %v6687
        %v6779 = vadd.f32 %v6043, %v6688
        %v6780 = vadd.f32 %v6044, %v6689
        %v6781 = vadd.f32 %v6045, %v6690
        %v6782 = vadd.f32 %v6046, %v6691
        %v6783 = vadd.f32 %v6047, %v6692
        %v6784 = vadd.f32 %v6048, %v6693
        %v6785 = vadd.f32 %v6049, %v6694
        %v6786 = vadd.f32 %v6050, %v6695
        %v6787 = vadd.f32 %v6051, %v6696
        %v6788 = vadd.f32 %v6052, %v6697
        %v6789 = vadd.f32 %v6053, %v6698
        %v6790 = vadd.f32 %v6054, %v6699
        %v6791 = vadd.f32 %v6055, %v6700
        %v6792 = vadd.f32 %v6056, %v6701
        %v6793 = vadd.f32 %v6057, %v6702
        %v6794 = vadd.f32 %v6058, %v6703
        %v6795 = vadd.f32 %v6059, %v6704
        %v6796 = vadd.f32 %v6060, %v6705
        %v6797 = vadd.f32 %v6061, %v6706
        %v6798 = vadd.f32 %v6062, %v6707
        %v6799 = vadd.f32 %v6063, %v6708
        %v6800 = vadd.f32 %v6064, %v6709
        %v6801 = vadd.f32 %v6065, %v6710
        %v6802 = vadd.f32 %v6066, %v6711
        %v6803 = vadd.f32 %v6067, %v6712
        %v6804 = vadd.f32 %v6068, %v6713
        %v6805 = vadd.f32 %v6069, %v6714
        %v6806 = vadd.f32 %v6070, %v6715
        %v6807 = vadd.f32 %v6071, %v6716
        %v6808 = vadd.f32 %v6072, %v6717
        %v6809 = vadd.f32 %v6073, %v6718
        %v6810 = vadd.f32 %v6074, %v6719
        %v6811 = vadd.f32 %v6075, %v6720
        %v6812 = vadd.f32 %v6076, %v6721
        %v6813 = vadd.f32 %v6077, %v6722
        %v6814 = vadd.f32 %v6078, %v6723
        %v6815 = vadd.f32 %v6079, %v6724
        %v6816 = vadd.f32 %v6080, %v6725
        %v6817 = vadd.f32 %v6081, %v6726
        %v6818 = vadd.f32 %v6082, %v6727
        %v6819 = vadd.f32 %v6083, %v6728
        %v6820 = vadd.f32 %v6084, %v6729
        %v6821 = vadd.f32 %v6085, %v6730
        %v6822 = vadd.f32 %v6086, %v6731
        %v6823 = vadd.f32 %v6087, %v6732
        %v6824 = vadd.f32 %v6088, %v6733
        %v6825 = vadd.f32 %v6089, %v6734
        %v6826 = vadd.f32 %v6090, %v6735
        %v6827 = vadd.f32 %v6091, %v6736
        %v6828 = vadd.f32 %v6092, %v6737
        %v6829 = vadd.f32 %v6093, %v6738
        %v6830 = vadd.f32 %v6094, %v6739
        %v6831 = vadd.f32 %v6095, %v6740
        %v6832 = vadd.f32 %v6096, %v6741
        %v6833 = vadd.f32 %v6097, %v6742
        %v6834 = vadd.f32 %v6098, %v6743
        %v6835 = vadd.f32 %v6099, %v6744
        %v6836 = vadd.f32 %v6100, %v6745
        %v6837 = vadd.f32 %v6101, %v6746
        %v6838 = vadd.f32 %v6102, %v6747
        %v6839 = vadd.f32 %v6103, %v6748
        %v6840 = vadd.f32 %v6104, %v6749
        %v6841 = vadd.f32 %v6105, %v6750
        %v6842 = vadd.f32 %v6106, %v6751
        %v6843 = vadd.f32 %v6107, %v6752
        %v6844 = vadd.f32 %v6108, %v6753
        %v6845 = vadd.f32 %v6109, %v6754
        %v6846 = vadd.f32 %v6110, %v6755
        %v6847 = vadd.f32 %v6111, %v6756
        %v6848 = vadd.f32 %v6112, %v6757
        %v6849 = vadd.f32 %v6113, %v6758
        %v6850 = vadd.f32 %v6114, %v6759
        %v6851 = vadd.f32 %v6115, %v6760
        %v6852 = vadd.f32 %v6116, %v6761
        %v6853 = vadd.f32 %v6117, %v6762
        %v6854 = vadd.f32 %v6118, %v6763
        %v6855 = vadd.f32 %v6119, %v6764
        %v6856 = vadd.f32 %v6120, %v6765
        %v6857 = vadd.f32 %v6121, %v6766
        %v6858 = vadd.f32 %v6122, %v6767
        %v6859 = vadd.f32 %v6123, %v6768
        %v6860 = vadd.f32 %v6124, %v6769
        %v6861 = vadd.f32 %v6125, %v6770
        %v6862 = vld [vmem:[%s2] sm:$0x1]
        %v6864 = vlaneseq
        %v6865 = vshrl.u32 %v6864, 7
        %v6866 = vsub.s32 0, %v6865
        %v6867 = vrot.slane %v6862, %v6866
        %v6869 = vadd.f32 %v6771, %v6867
        %v6870 = vadd.f32 %v6772, %v6867
        %v6871 = vadd.f32 %v6773, %v6867
        %v6872 = vadd.f32 %v6774, %v6867
        %v6873 = vadd.f32 %v6775, %v6867
        %v6874 = vadd.f32 %v6776, %v6867
        %v6875 = vadd.f32 %v6777, %v6867
        %v6876 = vadd.f32 %v6778, %v6867
        %v6877 = vadd.f32 %v6779, %v6867
        %v6878 = vadd.f32 %v6780, %v6867
        %v6879 = vadd.f32 %v6781, %v6867
        %v6880 = vadd.f32 %v6782, %v6867
        %v6881 = vadd.f32 %v6783, %v6867
        %v6882 = vadd.f32 %v6784, %v6867
        %v6883 = vadd.f32 %v6785, %v6867
        %v6884 = vadd.f32 %v6786, %v6867
        %v6885 = vadd.f32 %v6787, %v6867
        %v6886 = vadd.f32 %v6788, %v6867
        %v6887 = vadd.f32 %v6789, %v6867
        %v6888 = vadd.f32 %v6790, %v6867
        %v6889 = vadd.f32 %v6791, %v6867
        %v6890 = vadd.f32 %v6792, %v6867
        %v6891 = vadd.f32 %v6793, %v6867
        %v6892 = vadd.f32 %v6794, %v6867
        %v6893 = vadd.f32 %v6795, %v6867
        %v6894 = vadd.f32 %v6796, %v6867
        %v6895 = vadd.f32 %v6797, %v6867
        %v6896 = vadd.f32 %v6798, %v6867
        %v6897 = vadd.f32 %v6799, %v6867
        %v6898 = vadd.f32 %v6800, %v6867
        %v6899 = vadd.f32 %v6801, %v6867
        %v6900 = vadd.f32 %v6802, %v6867
        %v6901 = vadd.f32 %v6803, %v6867
        %v6902 = vadd.f32 %v6804, %v6867
        %v6903 = vadd.f32 %v6805, %v6867
        %v6904 = vadd.f32 %v6806, %v6867
        %v6905 = vadd.f32 %v6807, %v6867
        %v6906 = vadd.f32 %v6808, %v6867
        %v6907 = vadd.f32 %v6809, %v6867
        %v6908 = vadd.f32 %v6810, %v6867
        %v6909 = vadd.f32 %v6811, %v6867
        %v6910 = vadd.f32 %v6812, %v6867
        %v6911 = vadd.f32 %v6813, %v6867
        %v6912 = vadd.f32 %v6814, %v6867
        %v6913 = vadd.f32 %v6815, %v6867
        %v6914 = vadd.f32 %v6816, %v6867
        %v6915 = vadd.f32 %v6817, %v6867
        %v6916 = vadd.f32 %v6818, %v6867
        %v6917 = vadd.f32 %v6819, %v6867
        %v6918 = vadd.f32 %v6820, %v6867
        %v6919 = vadd.f32 %v6821, %v6867
        %v6920 = vadd.f32 %v6822, %v6867
        %v6921 = vadd.f32 %v6823, %v6867
        %v6922 = vadd.f32 %v6824, %v6867
        %v6923 = vadd.f32 %v6825, %v6867
        %v6924 = vadd.f32 %v6826, %v6867
        %v6925 = vadd.f32 %v6827, %v6867
        %v6926 = vadd.f32 %v6828, %v6867
        %v6927 = vadd.f32 %v6829, %v6867
        %v6928 = vadd.f32 %v6830, %v6867
        %v6929 = vadd.f32 %v6831, %v6867
        %v6930 = vadd.f32 %v6832, %v6867
        %v6931 = vadd.f32 %v6833, %v6867
        %v6932 = vadd.f32 %v6834, %v6867
        %v6933 = vadd.f32 %v6835, %v6867
        %v6934 = vadd.f32 %v6836, %v6867
        %v6935 = vadd.f32 %v6837, %v6867
        %v6936 = vadd.f32 %v6838, %v6867
        %v6937 = vadd.f32 %v6839, %v6867
        %v6938 = vadd.f32 %v6840, %v6867
        %v6939 = vadd.f32 %v6841, %v6867
        %v6940 = vadd.f32 %v6842, %v6867
        %v6941 = vadd.f32 %v6843, %v6867
        %v6942 = vadd.f32 %v6844, %v6867
        %v6943 = vadd.f32 %v6845, %v6867
        %v6944 = vadd.f32 %v6846, %v6867
        %v6945 = vadd.f32 %v6847, %v6867
        %v6946 = vadd.f32 %v6848, %v6867
        %v6947 = vadd.f32 %v6849, %v6867
        %v6948 = vadd.f32 %v6850, %v6867
        %v6949 = vadd.f32 %v6851, %v6867
        %v6950 = vadd.f32 %v6852, %v6867
        %v6951 = vadd.f32 %v6853, %v6867
        %v6952 = vadd.f32 %v6854, %v6867
        %v6953 = vadd.f32 %v6855, %v6867
        %v6954 = vadd.f32 %v6856, %v6867
        %v6955 = vadd.f32 %v6857, %v6867
        %v6956 = vadd.f32 %v6858, %v6867
        %v6957 = vadd.f32 %v6859, %v6867
        %v6958 = vadd.f32 %v6860, %v6867
        %v6959 = vadd.f32 %v6861, %v6867
        %v6960 = vmax.f32 %v6869, 0.0
        %v6961 = vmax.f32 %v6870, 0.0
        %v6962 = vmax.f32 %v6871, 0.0
        %v6963 = vmax.f32 %v6872, 0.0
        %v6964 = vmax.f32 %v6873, 0.0
        %v6965 = vmax.f32 %v6874, 0.0
        %v6966 = vmax.f32 %v6875, 0.0
        %v6967 = vmax.f32 %v6876, 0.0
        %v6968 = vmax.f32 %v6877, 0.0
        %v6969 = vmax.f32 %v6878, 0.0
        %v6970 = vmax.f32 %v6879, 0.0
        %v6971 = vmax.f32 %v6880, 0.0
        %v6972 = vmax.f32 %v6881, 0.0
        %v6973 = vmax.f32 %v6882, 0.0
        %v6974 = vmax.f32 %v6883, 0.0
        %v6975 = vmax.f32 %v6884, 0.0
        %v6976 = vmax.f32 %v6885, 0.0
        %v6977 = vmax.f32 %v6886, 0.0
        %v6978 = vmax.f32 %v6887, 0.0
        %v6979 = vmax.f32 %v6888, 0.0
        %v6980 = vmax.f32 %v6889, 0.0
        %v6981 = vmax.f32 %v6890, 0.0
        %v6982 = vmax.f32 %v6891, 0.0
        %v6983 = vmax.f32 %v6892, 0.0
        %v6984 = vmax.f32 %v6893, 0.0
        %v6985 = vmax.f32 %v6894, 0.0
        %v6986 = vmax.f32 %v6895, 0.0
        %v6987 = vmax.f32 %v6896, 0.0
        %v6988 = vmax.f32 %v6897, 0.0
        %v6989 = vmax.f32 %v6898, 0.0
        %v6990 = vmax.f32 %v6899, 0.0
        %v6991 = vmax.f32 %v6900, 0.0
        %v6992 = vmax.f32 %v6901, 0.0
        %v6993 = vmax.f32 %v6902, 0.0
        %v6994 = vmax.f32 %v6903, 0.0
        %v6995 = vmax.f32 %v6904, 0.0
        %v6996 = vmax.f32 %v6905, 0.0
        %v6997 = vmax.f32 %v6906, 0.0
        %v6998 = vmax.f32 %v6907, 0.0
        %v6999 = vmax.f32 %v6908, 0.0
        %v7000 = vmax.f32 %v6909, 0.0
        %v7001 = vmax.f32 %v6910, 0.0
        %v7002 = vmax.f32 %v6911, 0.0
        %v7003 = vmax.f32 %v6912, 0.0
        %v7004 = vmax.f32 %v6913, 0.0
        %v7005 = vmax.f32 %v6914, 0.0
        %v7006 = vmax.f32 %v6915, 0.0
        %v7007 = vmax.f32 %v6916, 0.0
        %v7008 = vmax.f32 %v6917, 0.0
        %v7009 = vmax.f32 %v6918, 0.0
        %v7010 = vmax.f32 %v6919, 0.0
        %v7011 = vmax.f32 %v6920, 0.0
        %v7012 = vmax.f32 %v6921, 0.0
        %v7013 = vmax.f32 %v6922, 0.0
        %v7014 = vmax.f32 %v6923, 0.0
        %v7015 = vmax.f32 %v6924, 0.0
        %v7016 = vmax.f32 %v6925, 0.0
        %v7017 = vmax.f32 %v6926, 0.0
        %v7018 = vmax.f32 %v6927, 0.0
        %v7019 = vmax.f32 %v6928, 0.0
        %v7020 = vmax.f32 %v6929, 0.0
        %v7021 = vmax.f32 %v6930, 0.0
        %v7022 = vmax.f32 %v6931, 0.0
        %v7023 = vmax.f32 %v6932, 0.0
        %v7024 = vmax.f32 %v6933, 0.0
        %v7025 = vmax.f32 %v6934, 0.0
        %v7026 = vmax.f32 %v6935, 0.0
        %v7027 = vmax.f32 %v6936, 0.0
        %v7028 = vmax.f32 %v6937, 0.0
        %v7029 = vmax.f32 %v6938, 0.0
        %v7030 = vmax.f32 %v6939, 0.0
        %v7031 = vmax.f32 %v6940, 0.0
        %v7032 = vmax.f32 %v6941, 0.0
        %v7033 = vmax.f32 %v6942, 0.0
        %v7034 = vmax.f32 %v6943, 0.0
        %v7035 = vmax.f32 %v6944, 0.0
        %v7036 = vmax.f32 %v6945, 0.0
        %v7037 = vmax.f32 %v6946, 0.0
        %v7038 = vmax.f32 %v6947, 0.0
        %v7039 = vmax.f32 %v6948, 0.0
        %v7040 = vmax.f32 %v6949, 0.0
        %v7041 = vmax.f32 %v6950, 0.0
        %v7042 = vmax.f32 %v6951, 0.0
        %v7043 = vmax.f32 %v6952, 0.0
        %v7044 = vmax.f32 %v6953, 0.0
        %v7045 = vmax.f32 %v6954, 0.0
        %v7046 = vmax.f32 %v6955, 0.0
        %v7047 = vmax.f32 %v6956, 0.0
        %v7048 = vmax.f32 %v6957, 0.0
        %v7049 = vmax.f32 %v6958, 0.0
        %v7050 = vmax.f32 %v6959, 0.0
        %vm7051 = vcmask 261120
        %7052 = vst.msk [vmem:[#allocation2] sm:$0xff] %vm7051, %v6960
        %7053 = vst.msk [vmem:[#allocation2 + $0x8] sm:$0xff] %vm7051, %v6961
        %7054 = vst.msk [vmem:[#allocation2 + $0x10] sm:$0xff] %vm7051, %v6962
        %7055 = vst.msk [vmem:[#allocation2 + $0x18] sm:$0xff] %vm7051, %v6963
        %7056 = vst.msk [vmem:[#allocation2 + $0x20] sm:$0xff] %vm7051, %v6964
        %7057 = vst.msk [vmem:[#allocation2 + $0x28] sm:$0xff] %vm7051, %v6965
        %7058 = vst.msk [vmem:[#allocation2 + $0x30] sm:$0xff] %vm7051, %v6966
        %7059 = vst.msk [vmem:[#allocation2 + $0x38] sm:$0xff] %vm7051, %v6967
        %7060 = vst.msk [vmem:[#allocation2 + $0x40] sm:$0xff] %vm7051, %v6968
        %7061 = vst.msk [vmem:[#allocation2 + $0x48] sm:$0xff] %vm7051, %v6969
        %7062 = vst.msk [vmem:[#allocation2 + $0x50] sm:$0xff] %vm7051, %v6970
        %7063 = vst.msk [vmem:[#allocation2 + $0x58] sm:$0xff] %vm7051, %v6971
        %7064 = vst.msk [vmem:[#allocation2 + $0x60] sm:$0xff] %vm7051, %v6972
        %7065 = vst.msk [vmem:[#allocation2 + $0x68] sm:$0xff] %vm7051, %v6973
        %7066 = vst.msk [vmem:[#allocation2 + $0x70] sm:$0xff] %vm7051, %v6974
        %7067 = vst.msk [vmem:[#allocation2 + $0x78] sm:$0xff] %vm7051, %v6975
        %7068 = vst.msk [vmem:[#allocation2 + $0x80] sm:$0xff] %vm7051, %v6976
        %7069 = vst.msk [vmem:[#allocation2 + $0x88] sm:$0xff] %vm7051, %v6977
        %7070 = vst.msk [vmem:[#allocation2 + $0x90] sm:$0xff] %vm7051, %v6978
        %7071 = vst.msk [vmem:[#allocation2 + $0x98] sm:$0xff] %vm7051, %v6979
        %7072 = vst.msk [vmem:[#allocation2 + $0xa0] sm:$0xff] %vm7051, %v6980
        %7073 = vst.msk [vmem:[#allocation2 + $0xa8] sm:$0xff] %vm7051, %v6981
        %7074 = vst.msk [vmem:[#allocation2 + $0xb0] sm:$0xff] %vm7051, %v6982
        %7075 = vst.msk [vmem:[#allocation2 + $0xb8] sm:$0xff] %vm7051, %v6983
        %7076 = vst.msk [vmem:[#allocation2 + $0xc0] sm:$0xff] %vm7051, %v6984
        %7077 = vst.msk [vmem:[#allocation2 + $0xc8] sm:$0xff] %vm7051, %v6985
        %7078 = vst.msk [vmem:[#allocation2 + $0xd0] sm:$0xff] %vm7051, %v6986
        %7079 = vst.msk [vmem:[#allocation2 + $0xd8] sm:$0xff] %vm7051, %v6987
        %7080 = vst.msk [vmem:[#allocation2 + $0xe0] sm:$0xff] %vm7051, %v6988
        %7081 = vst.msk [vmem:[#allocation2 + $0xe8] sm:$0xff] %vm7051, %v6989
        %7082 = vst.msk [vmem:[#allocation2 + $0xf0] sm:$0xff] %vm7051, %v6990
        %7083 = vst.msk [vmem:[#allocation2 + $0xf8] sm:$0xff] %vm7051, %v6991
        %7084 = vst.msk [vmem:[#allocation2 + $0x100] sm:$0xff] %vm7051, %v6992
        %7085 = vst.msk [vmem:[#allocation2 + $0x108] sm:$0xff] %vm7051, %v6993
        %7086 = vst.msk [vmem:[#allocation2 + $0x110] sm:$0xff] %vm7051, %v6994
        %7087 = vst.msk [vmem:[#allocation2 + $0x118] sm:$0xff] %vm7051, %v6995
        %7088 = vst.msk [vmem:[#allocation2 + $0x120] sm:$0xff] %vm7051, %v6996
        %7089 = vst.msk [vmem:[#allocation2 + $0x128] sm:$0xff] %vm7051, %v6997
        %7090 = vst.msk [vmem:[#allocation2 + $0x130] sm:$0xff] %vm7051, %v6998
        %7091 = vst.msk [vmem:[#allocation2 + $0x138] sm:$0xff] %vm7051, %v6999
        %7092 = vst.msk [vmem:[#allocation2 + $0x140] sm:$0xff] %vm7051, %v7000
        %7093 = vst.msk [vmem:[#allocation2 + $0x148] sm:$0xff] %vm7051, %v7001
        %7094 = vst.msk [vmem:[#allocation2 + $0x150] sm:$0xff] %vm7051, %v7002
        %7095 = vst.msk [vmem:[#allocation2 + $0x158] sm:$0xff] %vm7051, %v7003
        %7096 = vst.msk [vmem:[#allocation2 + $0x160] sm:$0xff] %vm7051, %v7004
        %7097 = vst.msk [vmem:[#allocation2 + $0x168] sm:$0xff] %vm7051, %v7005
        %7098 = vst.msk [vmem:[#allocation2 + $0x170] sm:$0xff] %vm7051, %v7006
        %7099 = vst.msk [vmem:[#allocation2 + $0x178] sm:$0xff] %vm7051, %v7007
        %7100 = vst.msk [vmem:[#allocation2 + $0x180] sm:$0xff] %vm7051, %v7008
        %7101 = vst.msk [vmem:[#allocation2 + $0x188] sm:$0xff] %vm7051, %v7009
        %7102 = vst.msk [vmem:[#allocation2 + $0x190] sm:$0xff] %vm7051, %v7010
        %7103 = vst.msk [vmem:[#allocation2 + $0x198] sm:$0xff] %vm7051, %v7011
        %7104 = vst.msk [vmem:[#allocation2 + $0x1a0] sm:$0xff] %vm7051, %v7012
        %7105 = vst.msk [vmem:[#allocation2 + $0x1a8] sm:$0xff] %vm7051, %v7013
        %7106 = vst.msk [vmem:[#allocation2 + $0x1b0] sm:$0xff] %vm7051, %v7014
        %7107 = vst.msk [vmem:[#allocation2 + $0x1b8] sm:$0xff] %vm7051, %v7015
        %7108 = vst.msk [vmem:[#allocation2 + $0x1c0] sm:$0xff] %vm7051, %v7016
        %7109 = vst.msk [vmem:[#allocation2 + $0x1c8] sm:$0xff] %vm7051, %v7017
        %7110 = vst.msk [vmem:[#allocation2 + $0x1d0] sm:$0xff] %vm7051, %v7018
        %7111 = vst.msk [vmem:[#allocation2 + $0x1d8] sm:$0xff] %vm7051, %v7019
        %7112 = vst.msk [vmem:[#allocation2 + $0x1e0] sm:$0xff] %vm7051, %v7020
        %7113 = vst.msk [vmem:[#allocation2 + $0x1e8] sm:$0xff] %vm7051, %v7021
        %7114 = vst.msk [vmem:[#allocation2 + $0x1f0] sm:$0xff] %vm7051, %v7022
        %7115 = vst.msk [vmem:[#allocation2 + $0x1f8] sm:$0xff] %vm7051, %v7023
        %7116 = vst.msk [vmem:[#allocation2 + $0x200] sm:$0xff] %vm7051, %v7024
        %7117 = vst.msk [vmem:[#allocation2 + $0x208] sm:$0xff] %vm7051, %v7025
        %7118 = vst.msk [vmem:[#allocation2 + $0x210] sm:$0xff] %vm7051, %v7026
        %7119 = vst.msk [vmem:[#allocation2 + $0x218] sm:$0xff] %vm7051, %v7027
        %7120 = vst.msk [vmem:[#allocation2 + $0x220] sm:$0xff] %vm7051, %v7028
        %7121 = vst.msk [vmem:[#allocation2 + $0x228] sm:$0xff] %vm7051, %v7029
        %7122 = vst.msk [vmem:[#allocation2 + $0x230] sm:$0xff] %vm7051, %v7030
        %7123 = vst.msk [vmem:[#allocation2 + $0x238] sm:$0xff] %vm7051, %v7031
        %7124 = vst.msk [vmem:[#allocation2 + $0x240] sm:$0xff] %vm7051, %v7032
        %7125 = vst.msk [vmem:[#allocation2 + $0x248] sm:$0xff] %vm7051, %v7033
        %7126 = vst.msk [vmem:[#allocation2 + $0x250] sm:$0xff] %vm7051, %v7034
        %7127 = vst.msk [vmem:[#allocation2 + $0x258] sm:$0xff] %vm7051, %v7035
        %7128 = vst.msk [vmem:[#allocation2 + $0x260] sm:$0xff] %vm7051, %v7036
        %7129 = vst.msk [vmem:[#allocation2 + $0x268] sm:$0xff] %vm7051, %v7037
        %7130 = vst.msk [vmem:[#allocation2 + $0x270] sm:$0xff] %vm7051, %v7038
        %7131 = vst.msk [vmem:[#allocation2 + $0x278] sm:$0xff] %vm7051, %v7039
        %7132 = vst.msk [vmem:[#allocation2 + $0x280] sm:$0xff] %vm7051, %v7040
        %7133 = vst.msk [vmem:[#allocation2 + $0x288] sm:$0xff] %vm7051, %v7041
        %7134 = vst.msk [vmem:[#allocation2 + $0x290] sm:$0xff] %vm7051, %v7042
        %7135 = vst.msk [vmem:[#allocation2 + $0x298] sm:$0xff] %vm7051, %v7043
        %7136 = vst.msk [vmem:[#allocation2 + $0x2a0] sm:$0xff] %vm7051, %v7044
        %7137 = vst.msk [vmem:[#allocation2 + $0x2a8] sm:$0xff] %vm7051, %v7045
        %7138 = vst.msk [vmem:[#allocation2 + $0x2b0] sm:$0xff] %vm7051, %v7046
        %7139 = vst.msk [vmem:[#allocation2 + $0x2b8] sm:$0xff] %vm7051, %v7047
        %7140 = vst.msk [vmem:[#allocation2 + $0x2c0] sm:$0xff] %vm7051, %v7048
        %7141 = vst.msk [vmem:[#allocation2 + $0x2c8] sm:$0xff] %vm7051, %v7049
        %vm7142 = vcmask 259072
        %7143 = vst.msk [vmem:[#allocation2 + $0x2d0] sm:$0x3f] %vm7142, %v7050
        %v7144 = vld [vmem:[#allocation2] sm:$0xff]
        %v7145 = vld [vmem:[#allocation2 + $0x8] sm:$0xff]
        %v7146 = vld [vmem:[#allocation2 + $0x10] sm:$0xff]
        %v7147 = vld [vmem:[#allocation2 + $0x18] sm:$0xff]
        %v7148 = vld [vmem:[#allocation2 + $0x20] sm:$0xff]
        %v7149 = vld [vmem:[#allocation2 + $0x28] sm:$0xff]
        %v7150 = vld [vmem:[#allocation2 + $0x30] sm:$0xff]
        %v7151 = vld [vmem:[#allocation2 + $0x38] sm:$0xff]
        %v7152 = vld [vmem:[#allocation2 + $0x40] sm:$0xff]
        %v7153 = vld [vmem:[#allocation2 + $0x48] sm:$0xff]
        %v7154 = vld [vmem:[#allocation2 + $0x50] sm:$0xff]
        %v7155 = vld [vmem:[#allocation2 + $0x58] sm:$0xff]
        %v7156 = vld [vmem:[#allocation2 + $0x60] sm:$0xff]
        %v7157 = vld [vmem:[#allocation2 + $0x68] sm:$0xff]
        %v7158 = vld [vmem:[#allocation2 + $0x70] sm:$0xff]
        %v7159 = vld [vmem:[#allocation2 + $0x78] sm:$0xff]
        %v7160 = vld [vmem:[#allocation2 + $0x80] sm:$0xff]
        %v7161 = vld [vmem:[#allocation2 + $0x88] sm:$0xff]
        %v7162 = vld [vmem:[#allocation2 + $0x90] sm:$0xff]
        %v7163 = vld [vmem:[#allocation2 + $0x98] sm:$0xff]
        %v7164 = vld [vmem:[#allocation2 + $0xa0] sm:$0xff]
        %v7165 = vld [vmem:[#allocation2 + $0xa8] sm:$0xff]
        %v7166 = vld [vmem:[#allocation2 + $0xb0] sm:$0xff]
        %v7167 = vld [vmem:[#allocation2 + $0xb8] sm:$0xff]
        %v7168 = vld [vmem:[#allocation2 + $0xc0] sm:$0xff]
        %v7169 = vld [vmem:[#allocation2 + $0xc8] sm:$0xff]
        %v7170 = vld [vmem:[#allocation2 + $0xd0] sm:$0xff]
        %v7171 = vld [vmem:[#allocation2 + $0xd8] sm:$0xff]
        %v7172 = vld [vmem:[#allocation2 + $0xe0] sm:$0xff]
        %v7173 = vld [vmem:[#allocation2 + $0xe8] sm:$0xff]
        %v7174 = vld [vmem:[#allocation2 + $0xf0] sm:$0xff]
        %v7175 = vld [vmem:[#allocation2 + $0xf8] sm:$0xff]
        %v7176 = vld [vmem:[#allocation2 + $0x100] sm:$0xff]
        %v7177 = vld [vmem:[#allocation2 + $0x108] sm:$0xff]
        %v7178 = vld [vmem:[#allocation2 + $0x110] sm:$0xff]
        %v7179 = vld [vmem:[#allocation2 + $0x118] sm:$0xff]
        %v7180 = vld [vmem:[#allocation2 + $0x120] sm:$0xff]
        %v7181 = vld [vmem:[#allocation2 + $0x128] sm:$0xff]
        %v7182 = vld [vmem:[#allocation2 + $0x130] sm:$0xff]
        %v7183 = vld [vmem:[#allocation2 + $0x138] sm:$0xff]
        %v7184 = vld [vmem:[#allocation2 + $0x140] sm:$0xff]
        %v7185 = vld [vmem:[#allocation2 + $0x148] sm:$0xff]
        %v7186 = vld [vmem:[#allocation2 + $0x150] sm:$0xff]
        %v7187 = vld [vmem:[#allocation2 + $0x158] sm:$0xff]
        %v7188 = vld [vmem:[#allocation2 + $0x160] sm:$0xff]
        %v7189 = vld [vmem:[#allocation2 + $0x168] sm:$0xff]
        %v7190 = vld [vmem:[#allocation2 + $0x170] sm:$0xff]
        %v7191 = vld [vmem:[#allocation2 + $0x178] sm:$0xff]
        %v7192 = vld [vmem:[#allocation2 + $0x180] sm:$0xff]
        %v7193 = vld [vmem:[#allocation2 + $0x188] sm:$0xff]
        %v7194 = vld [vmem:[#allocation2 + $0x190] sm:$0xff]
        %v7195 = vld [vmem:[#allocation2 + $0x198] sm:$0xff]
        %v7196 = vld [vmem:[#allocation2 + $0x1a0] sm:$0xff]
        %v7197 = vld [vmem:[#allocation2 + $0x1a8] sm:$0xff]
        %v7198 = vld [vmem:[#allocation2 + $0x1b0] sm:$0xff]
        %v7199 = vld [vmem:[#allocation2 + $0x1b8] sm:$0xff]
        %v7200 = vld [vmem:[#allocation2 + $0x1c0] sm:$0xff]
        %v7201 = vld [vmem:[#allocation2 + $0x1c8] sm:$0xff]
        %v7202 = vld [vmem:[#allocation2 + $0x1d0] sm:$0xff]
        %v7203 = vld [vmem:[#allocation2 + $0x1d8] sm:$0xff]
        %v7204 = vld [vmem:[#allocation2 + $0x1e0] sm:$0xff]
        %v7205 = vld [vmem:[#allocation2 + $0x1e8] sm:$0xff]
        %v7206 = vld [vmem:[#allocation2 + $0x1f0] sm:$0xff]
        %v7207 = vld [vmem:[#allocation2 + $0x1f8] sm:$0xff]
        %v7208 = vld [vmem:[#allocation2 + $0x200] sm:$0xff]
        %v7209 = vld [vmem:[#allocation2 + $0x208] sm:$0xff]
        %v7210 = vld [vmem:[#allocation2 + $0x210] sm:$0xff]
        %v7211 = vld [vmem:[#allocation2 + $0x218] sm:$0xff]
        %v7212 = vld [vmem:[#allocation2 + $0x220] sm:$0xff]
        %v7213 = vld [vmem:[#allocation2 + $0x228] sm:$0xff]
        %v7214 = vld [vmem:[#allocation2 + $0x230] sm:$0xff]
        %v7215 = vld [vmem:[#allocation2 + $0x238] sm:$0xff]
        %v7216 = vld [vmem:[#allocation2 + $0x240] sm:$0xff]
        %v7217 = vld [vmem:[#allocation2 + $0x248] sm:$0xff]
        %v7218 = vld [vmem:[#allocation2 + $0x250] sm:$0xff]
        %v7219 = vld [vmem:[#allocation2 + $0x258] sm:$0xff]
        %v7220 = vld [vmem:[#allocation2 + $0x260] sm:$0xff]
        %v7221 = vld [vmem:[#allocation2 + $0x268] sm:$0xff]
        %v7222 = vld [vmem:[#allocation2 + $0x270] sm:$0xff]
        %v7223 = vld [vmem:[#allocation2 + $0x278] sm:$0xff]
        %v7224 = vld [vmem:[#allocation2 + $0x280] sm:$0xff]
        %v7225 = vld [vmem:[#allocation2 + $0x288] sm:$0xff]
        %v7226 = vld [vmem:[#allocation2 + $0x290] sm:$0xff]
        %v7227 = vld [vmem:[#allocation2 + $0x298] sm:$0xff]
        %v7228 = vld [vmem:[#allocation2 + $0x2a0] sm:$0xff]
        %v7229 = vld [vmem:[#allocation2 + $0x2a8] sm:$0xff]
        %v7230 = vld [vmem:[#allocation2 + $0x2b0] sm:$0xff]
        %v7231 = vld [vmem:[#allocation2 + $0x2b8] sm:$0x3]
        %v7232 = vld [vmem:[#allocation2 + $0x1c] sm:$0xff]
        %v7233 = vld [vmem:[#allocation2 + $0x24] sm:$0xff]
        %v7234 = vld [vmem:[#allocation2 + $0x2c] sm:$0xff]
        %v7235 = vld [vmem:[#allocation2 + $0x34] sm:$0xff]
        %v7236 = vld [vmem:[#allocation2 + $0x3c] sm:$0xff]
        %v7237 = vld [vmem:[#allocation2 + $0x44] sm:$0xff]
        %v7238 = vld [vmem:[#allocation2 + $0x4c] sm:$0xff]
        %v7239 = vld [vmem:[#allocation2 + $0x54] sm:$0xff]
        %v7240 = vld [vmem:[#allocation2 + $0x5c] sm:$0xff]
        %v7241 = vld [vmem:[#allocation2 + $0x64] sm:$0xff]
        %v7242 = vld [vmem:[#allocation2 + $0x6c] sm:$0xff]
        %v7243 = vld [vmem:[#allocation2 + $0x74] sm:$0xff]
        %v7244 = vld [vmem:[#allocation2 + $0x7c] sm:$0xff]
        %v7245 = vld [vmem:[#allocation2 + $0x84] sm:$0xff]
        %v7246 = vld [vmem:[#allocation2 + $0x8c] sm:$0xff]
        %v7247 = vld [vmem:[#allocation2 + $0x94] sm:$0xff]
        %v7248 = vld [vmem:[#allocation2 + $0x9c] sm:$0xff]
        %v7249 = vld [vmem:[#allocation2 + $0xa4] sm:$0xff]
        %v7250 = vld [vmem:[#allocation2 + $0xac] sm:$0xff]
        %v7251 = vld [vmem:[#allocation2 + $0xb4] sm:$0xff]
        %v7252 = vld [vmem:[#allocation2 + $0xbc] sm:$0xff]
        %v7253 = vld [vmem:[#allocation2 + $0xc4] sm:$0xff]
        %v7254 = vld [vmem:[#allocation2 + $0xcc] sm:$0xff]
        %v7255 = vld [vmem:[#allocation2 + $0xd4] sm:$0xff]
        %v7256 = vld [vmem:[#allocation2 + $0xdc] sm:$0xff]
        %v7257 = vld [vmem:[#allocation2 + $0xe4] sm:$0xff]
        %v7258 = vld [vmem:[#allocation2 + $0xec] sm:$0xff]
        %v7259 = vld [vmem:[#allocation2 + $0xf4] sm:$0xff]
        %v7260 = vld [vmem:[#allocation2 + $0xfc] sm:$0xff]
        %v7261 = vld [vmem:[#allocation2 + $0x104] sm:$0xff]
        %v7262 = vld [vmem:[#allocation2 + $0x10c] sm:$0xff]
        %v7263 = vld [vmem:[#allocation2 + $0x114] sm:$0xff]
        %v7264 = vld [vmem:[#allocation2 + $0x11c] sm:$0xff]
        %v7265 = vld [vmem:[#allocation2 + $0x124] sm:$0xff]
        %v7266 = vld [vmem:[#allocation2 + $0x12c] sm:$0xff]
        %v7267 = vld [vmem:[#allocation2 + $0x134] sm:$0xff]
        %v7268 = vld [vmem:[#allocation2 + $0x13c] sm:$0xff]
        %v7269 = vld [vmem:[#allocation2 + $0x144] sm:$0xff]
        %v7270 = vld [vmem:[#allocation2 + $0x14c] sm:$0xff]
        %v7271 = vld [vmem:[#allocation2 + $0x154] sm:$0xff]
        %v7272 = vld [vmem:[#allocation2 + $0x15c] sm:$0xff]
        %v7273 = vld [vmem:[#allocation2 + $0x164] sm:$0xff]
        %v7274 = vld [vmem:[#allocation2 + $0x16c] sm:$0xff]
        %v7275 = vld [vmem:[#allocation2 + $0x174] sm:$0xff]
        %v7276 = vld [vmem:[#allocation2 + $0x17c] sm:$0xff]
        %v7277 = vld [vmem:[#allocation2 + $0x184] sm:$0xff]
        %v7278 = vld [vmem:[#allocation2 + $0x18c] sm:$0xff]
        %v7279 = vld [vmem:[#allocation2 + $0x194] sm:$0xff]
        %v7280 = vld [vmem:[#allocation2 + $0x19c] sm:$0xff]
        %v7281 = vld [vmem:[#allocation2 + $0x1a4] sm:$0xff]
        %v7282 = vld [vmem:[#allocation2 + $0x1ac] sm:$0xff]
        %v7283 = vld [vmem:[#allocation2 + $0x1b4] sm:$0xff]
        %v7284 = vld [vmem:[#allocation2 + $0x1bc] sm:$0xff]
        %v7285 = vld [vmem:[#allocation2 + $0x1c4] sm:$0xff]
        %v7286 = vld [vmem:[#allocation2 + $0x1cc] sm:$0xff]
        %v7287 = vld [vmem:[#allocation2 + $0x1d4] sm:$0xff]
        %v7288 = vld [vmem:[#allocation2 + $0x1dc] sm:$0xff]
        %v7289 = vld [vmem:[#allocation2 + $0x1e4] sm:$0xff]
        %v7290 = vld [vmem:[#allocation2 + $0x1ec] sm:$0xff]
        %v7291 = vld [vmem:[#allocation2 + $0x1f4] sm:$0xff]
        %v7292 = vld [vmem:[#allocation2 + $0x1fc] sm:$0xff]
        %v7293 = vld [vmem:[#allocation2 + $0x204] sm:$0xff]
        %v7294 = vld [vmem:[#allocation2 + $0x20c] sm:$0xff]
        %v7295 = vld [vmem:[#allocation2 + $0x214] sm:$0xff]
        %v7296 = vld [vmem:[#allocation2 + $0x21c] sm:$0xff]
        %v7297 = vld [vmem:[#allocation2 + $0x224] sm:$0xff]
        %v7298 = vld [vmem:[#allocation2 + $0x22c] sm:$0xff]
        %v7299 = vld [vmem:[#allocation2 + $0x234] sm:$0xff]
        %v7300 = vld [vmem:[#allocation2 + $0x23c] sm:$0xff]
        %v7301 = vld [vmem:[#allocation2 + $0x244] sm:$0xff]
        %v7302 = vld [vmem:[#allocation2 + $0x24c] sm:$0xff]
        %v7303 = vld [vmem:[#allocation2 + $0x254] sm:$0xff]
        %v7304 = vld [vmem:[#allocation2 + $0x25c] sm:$0xff]
        %v7305 = vld [vmem:[#allocation2 + $0x264] sm:$0xff]
        %v7306 = vld [vmem:[#allocation2 + $0x26c] sm:$0xff]
        %v7307 = vld [vmem:[#allocation2 + $0x274] sm:$0xff]
        %v7308 = vld [vmem:[#allocation2 + $0x27c] sm:$0xff]
        %v7309 = vld [vmem:[#allocation2 + $0x284] sm:$0xff]
        %v7310 = vld [vmem:[#allocation2 + $0x28c] sm:$0xff]
        %v7311 = vld [vmem:[#allocation2 + $0x294] sm:$0xff]
        %v7312 = vld [vmem:[#allocation2 + $0x29c] sm:$0xff]
        %v7313 = vld [vmem:[#allocation2 + $0x2a4] sm:$0xff]
        %v7314 = vld [vmem:[#allocation2 + $0x2ac] sm:$0xff]
        %v7315 = vld [vmem:[#allocation2 + $0x2b4] sm:$0xff]
        %v7316 = vld [vmem:[#allocation2 + $0x2bc] sm:$0xff]
        %v7317 = vld [vmem:[#allocation2 + $0x2c4] sm:$0xff]
        %v7318 = vld [vmem:[#allocation2 + $0x2cc] sm:$0xff]
        %v7319 = vld [vmem:[#allocation2 + $0x2d4] sm:$0x3]
        %v7320 = vmax.f32 %v7144, %v7232
        %v7321 = vmax.f32 %v7145, %v7233
        %v7322 = vmax.f32 %v7146, %v7234
        %v7323 = vmax.f32 %v7147, %v7235
        %v7324 = vmax.f32 %v7148, %v7236
        %v7325 = vmax.f32 %v7149, %v7237
        %v7326 = vmax.f32 %v7150, %v7238
        %v7327 = vmax.f32 %v7151, %v7239
        %v7328 = vmax.f32 %v7152, %v7240
        %v7329 = vmax.f32 %v7153, %v7241
        %v7330 = vmax.f32 %v7154, %v7242
        %v7331 = vmax.f32 %v7155, %v7243
        %v7332 = vmax.f32 %v7156, %v7244
        %v7333 = vmax.f32 %v7157, %v7245
        %v7334 = vmax.f32 %v7158, %v7246
        %v7335 = vmax.f32 %v7159, %v7247
        %v7336 = vmax.f32 %v7160, %v7248
        %v7337 = vmax.f32 %v7161, %v7249
        %v7338 = vmax.f32 %v7162, %v7250
        %v7339 = vmax.f32 %v7163, %v7251
        %v7340 = vmax.f32 %v7164, %v7252
        %v7341 = vmax.f32 %v7165, %v7253
        %v7342 = vmax.f32 %v7166, %v7254
        %v7343 = vmax.f32 %v7167, %v7255
        %v7344 = vmax.f32 %v7168, %v7256
        %v7345 = vmax.f32 %v7169, %v7257
        %v7346 = vmax.f32 %v7170, %v7258
        %v7347 = vmax.f32 %v7171, %v7259
        %v7348 = vmax.f32 %v7172, %v7260
        %v7349 = vmax.f32 %v7173, %v7261
        %v7350 = vmax.f32 %v7174, %v7262
        %v7351 = vmax.f32 %v7175, %v7263
        %v7352 = vmax.f32 %v7176, %v7264
        %v7353 = vmax.f32 %v7177, %v7265
        %v7354 = vmax.f32 %v7178, %v7266
        %v7355 = vmax.f32 %v7179, %v7267
        %v7356 = vmax.f32 %v7180, %v7268
        %v7357 = vmax.f32 %v7181, %v7269
        %v7358 = vmax.f32 %v7182, %v7270
        %v7359 = vmax.f32 %v7183, %v7271
        %v7360 = vmax.f32 %v7184, %v7272
        %v7361 = vmax.f32 %v7185, %v7273
        %v7362 = vmax.f32 %v7186, %v7274
        %v7363 = vmax.f32 %v7187, %v7275
        %v7364 = vmax.f32 %v7188, %v7276
        %v7365 = vmax.f32 %v7189, %v7277
        %v7366 = vmax.f32 %v7190, %v7278
        %v7367 = vmax.f32 %v7191, %v7279
        %v7368 = vmax.f32 %v7192, %v7280
        %v7369 = vmax.f32 %v7193, %v7281
        %v7370 = vmax.f32 %v7194, %v7282
        %v7371 = vmax.f32 %v7195, %v7283
        %v7372 = vmax.f32 %v7196, %v7284
        %v7373 = vmax.f32 %v7197, %v7285
        %v7374 = vmax.f32 %v7198, %v7286
        %v7375 = vmax.f32 %v7199, %v7287
        %v7376 = vmax.f32 %v7200, %v7288
        %v7377 = vmax.f32 %v7201, %v7289
        %v7378 = vmax.f32 %v7202, %v7290
        %v7379 = vmax.f32 %v7203, %v7291
        %v7380 = vmax.f32 %v7204, %v7292
        %v7381 = vmax.f32 %v7205, %v7293
        %v7382 = vmax.f32 %v7206, %v7294
        %v7383 = vmax.f32 %v7207, %v7295
        %v7384 = vmax.f32 %v7208, %v7296
        %v7385 = vmax.f32 %v7209, %v7297
        %v7386 = vmax.f32 %v7210, %v7298
        %v7387 = vmax.f32 %v7211, %v7299
        %v7388 = vmax.f32 %v7212, %v7300
        %v7389 = vmax.f32 %v7213, %v7301
        %v7390 = vmax.f32 %v7214, %v7302
        %v7391 = vmax.f32 %v7215, %v7303
        %v7392 = vmax.f32 %v7216, %v7304
        %v7393 = vmax.f32 %v7217, %v7305
        %v7394 = vmax.f32 %v7218, %v7306
        %v7395 = vmax.f32 %v7219, %v7307
        %v7396 = vmax.f32 %v7220, %v7308
        %v7397 = vmax.f32 %v7221, %v7309
        %v7398 = vmax.f32 %v7222, %v7310
        %v7399 = vmax.f32 %v7223, %v7311
        %v7400 = vmax.f32 %v7224, %v7312
        %v7401 = vmax.f32 %v7225, %v7313
        %v7402 = vmax.f32 %v7226, %v7314
        %v7403 = vmax.f32 %v7227, %v7315
        %v7404 = vmax.f32 %v7228, %v7316
        %v7405 = vmax.f32 %v7229, %v7317
        %v7406 = vmax.f32 %v7230, %v7318
        %v7407 = vmax.f32 %v7231, %v7319
        %7408 = vst.msk [vmem:[#allocation3] sm:$0xff] %vm7051, %v7320
        %7409 = vst.msk [vmem:[#allocation3 + $0x8] sm:$0xff] %vm7051, %v7321
        %7410 = vst.msk [vmem:[#allocation3 + $0x10] sm:$0xff] %vm7051, %v7322
        %7411 = vst.msk [vmem:[#allocation3 + $0x18] sm:$0xff] %vm7051, %v7323
        %7412 = vst.msk [vmem:[#allocation3 + $0x20] sm:$0xff] %vm7051, %v7324
        %7413 = vst.msk [vmem:[#allocation3 + $0x28] sm:$0xff] %vm7051, %v7325
        %7414 = vst.msk [vmem:[#allocation3 + $0x30] sm:$0xff] %vm7051, %v7326
        %7415 = vst.msk [vmem:[#allocation3 + $0x38] sm:$0xff] %vm7051, %v7327
        %7416 = vst.msk [vmem:[#allocation3 + $0x40] sm:$0xff] %vm7051, %v7328
        %7417 = vst.msk [vmem:[#allocation3 + $0x48] sm:$0xff] %vm7051, %v7329
        %7418 = vst.msk [vmem:[#allocation3 + $0x50] sm:$0xff] %vm7051, %v7330
        %7419 = vst.msk [vmem:[#allocation3 + $0x58] sm:$0xff] %vm7051, %v7331
        %7420 = vst.msk [vmem:[#allocation3 + $0x60] sm:$0xff] %vm7051, %v7332
        %7421 = vst.msk [vmem:[#allocation3 + $0x68] sm:$0xff] %vm7051, %v7333
        %7422 = vst.msk [vmem:[#allocation3 + $0x70] sm:$0xff] %vm7051, %v7334
        %7423 = vst.msk [vmem:[#allocation3 + $0x78] sm:$0xff] %vm7051, %v7335
        %7424 = vst.msk [vmem:[#allocation3 + $0x80] sm:$0xff] %vm7051, %v7336
        %7425 = vst.msk [vmem:[#allocation3 + $0x88] sm:$0xff] %vm7051, %v7337
        %7426 = vst.msk [vmem:[#allocation3 + $0x90] sm:$0xff] %vm7051, %v7338
        %7427 = vst.msk [vmem:[#allocation3 + $0x98] sm:$0xff] %vm7051, %v7339
        %7428 = vst.msk [vmem:[#allocation3 + $0xa0] sm:$0xff] %vm7051, %v7340
        %7429 = vst.msk [vmem:[#allocation3 + $0xa8] sm:$0xff] %vm7051, %v7341
        %7430 = vst.msk [vmem:[#allocation3 + $0xb0] sm:$0xff] %vm7051, %v7342
        %7431 = vst.msk [vmem:[#allocation3 + $0xb8] sm:$0xff] %vm7051, %v7343
        %7432 = vst.msk [vmem:[#allocation3 + $0xc0] sm:$0xff] %vm7051, %v7344
        %7433 = vst.msk [vmem:[#allocation3 + $0xc8] sm:$0xff] %vm7051, %v7345
        %7434 = vst.msk [vmem:[#allocation3 + $0xd0] sm:$0xff] %vm7051, %v7346
        %7435 = vst.msk [vmem:[#allocation3 + $0xd8] sm:$0xff] %vm7051, %v7347
        %7436 = vst.msk [vmem:[#allocation3 + $0xe0] sm:$0xff] %vm7051, %v7348
        %7437 = vst.msk [vmem:[#allocation3 + $0xe8] sm:$0xff] %vm7051, %v7349
        %7438 = vst.msk [vmem:[#allocation3 + $0xf0] sm:$0xff] %vm7051, %v7350
        %7439 = vst.msk [vmem:[#allocation3 + $0xf8] sm:$0xff] %vm7051, %v7351
        %7440 = vst.msk [vmem:[#allocation3 + $0x100] sm:$0xff] %vm7051, %v7352
        %7441 = vst.msk [vmem:[#allocation3 + $0x108] sm:$0xff] %vm7051, %v7353
        %7442 = vst.msk [vmem:[#allocation3 + $0x110] sm:$0xff] %vm7051, %v7354
        %7443 = vst.msk [vmem:[#allocation3 + $0x118] sm:$0xff] %vm7051, %v7355
        %7444 = vst.msk [vmem:[#allocation3 + $0x120] sm:$0xff] %vm7051, %v7356
        %7445 = vst.msk [vmem:[#allocation3 + $0x128] sm:$0xff] %vm7051, %v7357
        %7446 = vst.msk [vmem:[#allocation3 + $0x130] sm:$0xff] %vm7051, %v7358
        %7447 = vst.msk [vmem:[#allocation3 + $0x138] sm:$0xff] %vm7051, %v7359
        %7448 = vst.msk [vmem:[#allocation3 + $0x140] sm:$0xff] %vm7051, %v7360
        %7449 = vst.msk [vmem:[#allocation3 + $0x148] sm:$0xff] %vm7051, %v7361
        %7450 = vst.msk [vmem:[#allocation3 + $0x150] sm:$0xff] %vm7051, %v7362
        %7451 = vst.msk [vmem:[#allocation3 + $0x158] sm:$0xff] %vm7051, %v7363
        %7452 = vst.msk [vmem:[#allocation3 + $0x160] sm:$0xff] %vm7051, %v7364
        %7453 = vst.msk [vmem:[#allocation3 + $0x168] sm:$0xff] %vm7051, %v7365
        %7454 = vst.msk [vmem:[#allocation3 + $0x170] sm:$0xff] %vm7051, %v7366
        %7455 = vst.msk [vmem:[#allocation3 + $0x178] sm:$0xff] %vm7051, %v7367
        %7456 = vst.msk [vmem:[#allocation3 + $0x180] sm:$0xff] %vm7051, %v7368
        %7457 = vst.msk [vmem:[#allocation3 + $0x188] sm:$0xff] %vm7051, %v7369
        %7458 = vst.msk [vmem:[#allocation3 + $0x190] sm:$0xff] %vm7051, %v7370
        %7459 = vst.msk [vmem:[#allocation3 + $0x198] sm:$0xff] %vm7051, %v7371
        %7460 = vst.msk [vmem:[#allocation3 + $0x1a0] sm:$0xff] %vm7051, %v7372
        %7461 = vst.msk [vmem:[#allocation3 + $0x1a8] sm:$0xff] %vm7051, %v7373
        %7462 = vst.msk [vmem:[#allocation3 + $0x1b0] sm:$0xff] %vm7051, %v7374
        %7463 = vst.msk [vmem:[#allocation3 + $0x1b8] sm:$0xff] %vm7051, %v7375
        %7464 = vst.msk [vmem:[#allocation3 + $0x1c0] sm:$0xff] %vm7051, %v7376
        %7465 = vst.msk [vmem:[#allocation3 + $0x1c8] sm:$0xff] %vm7051, %v7377
        %7466 = vst.msk [vmem:[#allocation3 + $0x1d0] sm:$0xff] %vm7051, %v7378
        %7467 = vst.msk [vmem:[#allocation3 + $0x1d8] sm:$0xff] %vm7051, %v7379
        %7468 = vst.msk [vmem:[#allocation3 + $0x1e0] sm:$0xff] %vm7051, %v7380
        %7469 = vst.msk [vmem:[#allocation3 + $0x1e8] sm:$0xff] %vm7051, %v7381
        %7470 = vst.msk [vmem:[#allocation3 + $0x1f0] sm:$0xff] %vm7051, %v7382
        %7471 = vst.msk [vmem:[#allocation3 + $0x1f8] sm:$0xff] %vm7051, %v7383
        %7472 = vst.msk [vmem:[#allocation3 + $0x200] sm:$0xff] %vm7051, %v7384
        %7473 = vst.msk [vmem:[#allocation3 + $0x208] sm:$0xff] %vm7051, %v7385
        %7474 = vst.msk [vmem:[#allocation3 + $0x210] sm:$0xff] %vm7051, %v7386
        %7475 = vst.msk [vmem:[#allocation3 + $0x218] sm:$0xff] %vm7051, %v7387
        %7476 = vst.msk [vmem:[#allocation3 + $0x220] sm:$0xff] %vm7051, %v7388
        %7477 = vst.msk [vmem:[#allocation3 + $0x228] sm:$0xff] %vm7051, %v7389
        %7478 = vst.msk [vmem:[#allocation3 + $0x230] sm:$0xff] %vm7051, %v7390
        %7479 = vst.msk [vmem:[#allocation3 + $0x238] sm:$0xff] %vm7051, %v7391
        %7480 = vst.msk [vmem:[#allocation3 + $0x240] sm:$0xff] %vm7051, %v7392
        %7481 = vst.msk [vmem:[#allocation3 + $0x248] sm:$0xff] %vm7051, %v7393
        %7482 = vst.msk [vmem:[#allocation3 + $0x250] sm:$0xff] %vm7051, %v7394
        %7483 = vst.msk [vmem:[#allocation3 + $0x258] sm:$0xff] %vm7051, %v7395
        %7484 = vst.msk [vmem:[#allocation3 + $0x260] sm:$0xff] %vm7051, %v7396
        %7485 = vst.msk [vmem:[#allocation3 + $0x268] sm:$0xff] %vm7051, %v7397
        %7486 = vst.msk [vmem:[#allocation3 + $0x270] sm:$0xff] %vm7051, %v7398
        %7487 = vst.msk [vmem:[#allocation3 + $0x278] sm:$0xff] %vm7051, %v7399
        %7488 = vst.msk [vmem:[#allocation3 + $0x280] sm:$0xff] %vm7051, %v7400
        %7489 = vst.msk [vmem:[#allocation3 + $0x288] sm:$0xff] %vm7051, %v7401
        %7490 = vst.msk [vmem:[#allocation3 + $0x290] sm:$0xff] %vm7051, %v7402
        %7491 = vst.msk [vmem:[#allocation3 + $0x298] sm:$0xff] %vm7051, %v7403
        %7492 = vst.msk [vmem:[#allocation3 + $0x2a0] sm:$0xff] %vm7051, %v7404
        %7493 = vst.msk [vmem:[#allocation3 + $0x2a8] sm:$0xff] %vm7051, %v7405
        %7494 = vst.msk [vmem:[#allocation3 + $0x2b0] sm:$0xff] %vm7051, %v7406
        %vm7495 = vcmask 254976
        %7496 = vst.msk [vmem:[#allocation3 + $0x2b8] sm:$0x3] %vm7495, %v7407
        %v7497 = vld [vmem:[#allocation3] ss:$2 sm:$0xff]
        %s7498 = scalar_lea.vmem [#allocation3], 16
        %v7499 = vld [vmem:[%s7498] ss:$2 sm:$0x1f]
        %s7500 = scalar_lea.vmem [#allocation3], 1
        %v7501 = vld [vmem:[%s7500] ss:$2 sm:$0xff]
        %s7502 = scalar_lea.vmem [#allocation3], 17
        %v7503 = vld [vmem:[%s7502] ss:$2 sm:$0x1f]
        %v7504 = vmax.f32 %v7497, %v7501
        %v7505 = vmax.f32 %v7499, %v7503
        %7506 = vst.msk [vmem:[#allocation4] sm:$0xff] %vm7051, %v7504
        %vm7507 = vcmask 258048
        %7508 = vst.msk [vmem:[#allocation4 + $0x8] sm:$0x1f] %vm7507, %v7505
        %s7509 = scalar_lea.vmem [#allocation3], 56
        %v7510 = vld [vmem:[%s7509] ss:$2 sm:$0xff]
        %s7511 = scalar_lea.vmem [#allocation3], 72
        %v7512 = vld [vmem:[%s7511] ss:$2 sm:$0x1f]
        %s7513 = scalar_lea.vmem [#allocation3], 57
        %v7514 = vld [vmem:[%s7513] ss:$2 sm:$0xff]
        %s7515 = scalar_lea.vmem [#allocation3], 73
        %v7516 = vld [vmem:[%s7515] ss:$2 sm:$0x1f]
        %v7517 = vmax.f32 %v7510, %v7514
        %v7518 = vmax.f32 %v7512, %v7516
        %7519 = vst.msk [vmem:[#allocation4 + $0xd] sm:$0xff] %vm7051, %v7517
        %7520 = vst.msk [vmem:[#allocation4 + $0x15] sm:$0x1f] %vm7507, %v7518
        %s7521 = scalar_lea.vmem [#allocation3], 112
        %v7522 = vld [vmem:[%s7521] ss:$2 sm:$0xff]
        %s7523 = scalar_lea.vmem [#allocation3], 128
        %v7524 = vld [vmem:[%s7523] ss:$2 sm:$0x1f]
        %s7525 = scalar_lea.vmem [#allocation3], 113
        %v7526 = vld [vmem:[%s7525] ss:$2 sm:$0xff]
        %s7527 = scalar_lea.vmem [#allocation3], 129
        %v7528 = vld [vmem:[%s7527] ss:$2 sm:$0x1f]
        %v7529 = vmax.f32 %v7522, %v7526
        %v7530 = vmax.f32 %v7524, %v7528
        %7531 = vst.msk [vmem:[#allocation4 + $0x1a] sm:$0xff] %vm7051, %v7529
        %7532 = vst.msk [vmem:[#allocation4 + $0x22] sm:$0x1f] %vm7507, %v7530
        %s7533 = scalar_lea.vmem [#allocation3], 168
        %v7534 = vld [vmem:[%s7533] ss:$2 sm:$0xff]
        %s7535 = scalar_lea.vmem [#allocation3], 184
        %v7536 = vld [vmem:[%s7535] ss:$2 sm:$0x1f]
        %s7537 = scalar_lea.vmem [#allocation3], 169
        %v7538 = vld [vmem:[%s7537] ss:$2 sm:$0xff]
        %s7539 = scalar_lea.vmem [#allocation3], 185
        %v7540 = vld [vmem:[%s7539] ss:$2 sm:$0x1f]
        %v7541 = vmax.f32 %v7534, %v7538
        %v7542 = vmax.f32 %v7536, %v7540
        %7543 = vst.msk [vmem:[#allocation4 + $0x27] sm:$0xff] %vm7051, %v7541
        %7544 = vst.msk [vmem:[#allocation4 + $0x2f] sm:$0x1f] %vm7507, %v7542
        %s7545 = scalar_lea.vmem [#allocation3], 224
        %v7546 = vld [vmem:[%s7545] ss:$2 sm:$0xff]
        %s7547 = scalar_lea.vmem [#allocation3], 240
        %v7548 = vld [vmem:[%s7547] ss:$2 sm:$0x1f]
        %s7549 = scalar_lea.vmem [#allocation3], 225
        %v7550 = vld [vmem:[%s7549] ss:$2 sm:$0xff]
        %s7551 = scalar_lea.vmem [#allocation3], 241
        %v7552 = vld [vmem:[%s7551] ss:$2 sm:$0x1f]
        %v7553 = vmax.f32 %v7546, %v7550
        %v7554 = vmax.f32 %v7548, %v7552
        %7555 = vst.msk [vmem:[#allocation4 + $0x34] sm:$0xff] %vm7051, %v7553
        %7556 = vst.msk [vmem:[#allocation4 + $0x3c] sm:$0x1f] %vm7507, %v7554
        %s7557 = scalar_lea.vmem [#allocation3], 280
        %v7558 = vld [vmem:[%s7557] ss:$2 sm:$0xff]
        %s7559 = scalar_lea.vmem [#allocation3], 296
        %v7560 = vld [vmem:[%s7559] ss:$2 sm:$0x1f]
        %s7561 = scalar_lea.vmem [#allocation3], 281
        %v7562 = vld [vmem:[%s7561] ss:$2 sm:$0xff]
        %s7563 = scalar_lea.vmem [#allocation3], 297
        %v7564 = vld [vmem:[%s7563] ss:$2 sm:$0x1f]
        %v7565 = vmax.f32 %v7558, %v7562
        %v7566 = vmax.f32 %v7560, %v7564
        %7567 = vst.msk [vmem:[#allocation4 + $0x41] sm:$0xff] %vm7051, %v7565
        %7568 = vst.msk [vmem:[#allocation4 + $0x49] sm:$0x1f] %vm7507, %v7566
        %s7569 = scalar_lea.vmem [#allocation3], 336
        %v7570 = vld [vmem:[%s7569] ss:$2 sm:$0xff]
        %s7571 = scalar_lea.vmem [#allocation3], 352
        %v7572 = vld [vmem:[%s7571] ss:$2 sm:$0x1f]
        %s7573 = scalar_lea.vmem [#allocation3], 337
        %v7574 = vld [vmem:[%s7573] ss:$2 sm:$0xff]
        %s7575 = scalar_lea.vmem [#allocation3], 353
        %v7576 = vld [vmem:[%s7575] ss:$2 sm:$0x1f]
        %v7577 = vmax.f32 %v7570, %v7574
        %v7578 = vmax.f32 %v7572, %v7576
        %7579 = vst.msk [vmem:[#allocation4 + $0x4e] sm:$0xff] %vm7051, %v7577
        %7580 = vst.msk [vmem:[#allocation4 + $0x56] sm:$0x1f] %vm7507, %v7578
        %s7581 = scalar_lea.vmem [#allocation3], 392
        %v7582 = vld [vmem:[%s7581] ss:$2 sm:$0xff]
        %s7583 = scalar_lea.vmem [#allocation3], 408
        %v7584 = vld [vmem:[%s7583] ss:$2 sm:$0x1f]
        %s7585 = scalar_lea.vmem [#allocation3], 393
        %v7586 = vld [vmem:[%s7585] ss:$2 sm:$0xff]
        %s7587 = scalar_lea.vmem [#allocation3], 409
        %v7588 = vld [vmem:[%s7587] ss:$2 sm:$0x1f]
        %v7589 = vmax.f32 %v7582, %v7586
        %v7590 = vmax.f32 %v7584, %v7588
        %7591 = vst.msk [vmem:[#allocation4 + $0x5b] sm:$0xff] %vm7051, %v7589
        %7592 = vst.msk [vmem:[#allocation4 + $0x63] sm:$0x1f] %vm7507, %v7590
        %s7593 = scalar_lea.vmem [#allocation3], 448
        %v7594 = vld [vmem:[%s7593] ss:$2 sm:$0xff]
        %s7595 = scalar_lea.vmem [#allocation3], 464
        %v7596 = vld [vmem:[%s7595] ss:$2 sm:$0x1f]
        %s7597 = scalar_lea.vmem [#allocation3], 449
        %v7598 = vld [vmem:[%s7597] ss:$2 sm:$0xff]
        %s7599 = scalar_lea.vmem [#allocation3], 465
        %v7600 = vld [vmem:[%s7599] ss:$2 sm:$0x1f]
        %v7601 = vmax.f32 %v7594, %v7598
        %v7602 = vmax.f32 %v7596, %v7600
        %7603 = vst.msk [vmem:[#allocation4 + $0x68] sm:$0xff] %vm7051, %v7601
        %7604 = vst.msk [vmem:[#allocation4 + $0x70] sm:$0x1f] %vm7507, %v7602
        %s7605 = scalar_lea.vmem [#allocation3], 504
        %v7606 = vld [vmem:[%s7605] ss:$2 sm:$0xff]
        %s7607 = scalar_lea.vmem [#allocation3], 520
        %v7608 = vld [vmem:[%s7607] ss:$2 sm:$0x1f]
        %s7609 = scalar_lea.vmem [#allocation3], 505
        %v7610 = vld [vmem:[%s7609] ss:$2 sm:$0xff]
        %s7611 = scalar_lea.vmem [#allocation3], 521
        %v7612 = vld [vmem:[%s7611] ss:$2 sm:$0x1f]
        %v7613 = vmax.f32 %v7606, %v7610
        %v7614 = vmax.f32 %v7608, %v7612
        %7615 = vst.msk [vmem:[#allocation4 + $0x75] sm:$0xff] %vm7051, %v7613
        %7616 = vst.msk [vmem:[#allocation4 + $0x7d] sm:$0x1f] %vm7507, %v7614
        %s7617 = scalar_lea.vmem [#allocation3], 560
        %v7618 = vld [vmem:[%s7617] ss:$2 sm:$0xff]
        %s7619 = scalar_lea.vmem [#allocation3], 576
        %v7620 = vld [vmem:[%s7619] ss:$2 sm:$0x1f]
        %s7621 = scalar_lea.vmem [#allocation3], 561
        %v7622 = vld [vmem:[%s7621] ss:$2 sm:$0xff]
        %s7623 = scalar_lea.vmem [#allocation3], 577
        %v7624 = vld [vmem:[%s7623] ss:$2 sm:$0x1f]
        %v7625 = vmax.f32 %v7618, %v7622
        %v7626 = vmax.f32 %v7620, %v7624
        %7627 = vst.msk [vmem:[#allocation4 + $0x82] sm:$0xff] %vm7051, %v7625
        %7628 = vst.msk [vmem:[#allocation4 + $0x8a] sm:$0x1f] %vm7507, %v7626
        %s7629 = scalar_lea.vmem [#allocation3], 616
        %v7630 = vld [vmem:[%s7629] ss:$2 sm:$0xff]
        %s7631 = scalar_lea.vmem [#allocation3], 632
        %v7632 = vld [vmem:[%s7631] ss:$2 sm:$0x1f]
        %s7633 = scalar_lea.vmem [#allocation3], 617
        %v7634 = vld [vmem:[%s7633] ss:$2 sm:$0xff]
        %s7635 = scalar_lea.vmem [#allocation3], 633
        %v7636 = vld [vmem:[%s7635] ss:$2 sm:$0x1f]
        %v7637 = vmax.f32 %v7630, %v7634
        %v7638 = vmax.f32 %v7632, %v7636
        %7639 = vst.msk [vmem:[#allocation4 + $0x8f] sm:$0xff] %vm7051, %v7637
        %7640 = vst.msk [vmem:[#allocation4 + $0x97] sm:$0x1f] %vm7507, %v7638
        %s7641 = scalar_lea.vmem [#allocation3], 672
        %v7642 = vld [vmem:[%s7641] ss:$2 sm:$0xff]
        %s7643 = scalar_lea.vmem [#allocation3], 688
        %v7644 = vld [vmem:[%s7643] ss:$2 sm:$0x1f]
        %s7645 = scalar_lea.vmem [#allocation3], 673
        %v7646 = vld [vmem:[%s7645] ss:$2 sm:$0xff]
        %s7647 = scalar_lea.vmem [#allocation3], 689
        %v7648 = vld [vmem:[%s7647] ss:$2 sm:$0x1f]
        %v7649 = vmax.f32 %v7642, %v7646
        %v7650 = vmax.f32 %v7644, %v7648
        %7651 = vst.msk [vmem:[#allocation4 + $0x9c] sm:$0xff] %vm7051, %v7649
        %7652 = vst.msk [vmem:[#allocation4 + $0xa4] sm:$0x1f] %vm7507, %v7650
        %v7653 = vld [vmem:[#allocation4] sm:$0xff]
        %v7654 = vld [vmem:[#allocation4 + $0x8] sm:$0xff]
        %v7655 = vld [vmem:[#allocation4 + $0x10] sm:$0xff]
        %v7656 = vld [vmem:[#allocation4 + $0x18] sm:$0xff]
        %v7657 = vld [vmem:[#allocation4 + $0x20] sm:$0xff]
        %v7658 = vld [vmem:[#allocation4 + $0x28] sm:$0xff]
        %v7659 = vld [vmem:[#allocation4 + $0x30] sm:$0xff]
        %v7660 = vld [vmem:[#allocation4 + $0x38] sm:$0xff]
        %v7661 = vld [vmem:[#allocation4 + $0x40] sm:$0xff]
        %v7662 = vld [vmem:[#allocation4 + $0x48] sm:$0xff]
        %v7663 = vld [vmem:[#allocation4 + $0x50] sm:$0xff]
        %v7664 = vld [vmem:[#allocation4 + $0x58] sm:$0xff]
        %v7665 = vld [vmem:[#allocation4 + $0x60] sm:$0xff]
        %v7666 = vld [vmem:[#allocation4 + $0x68] sm:$0xff]
        %v7667 = vld [vmem:[#allocation4 + $0x70] sm:$0xff]
        %v7668 = vld [vmem:[#allocation4 + $0x78] sm:$0xff]
        %v7669 = vld [vmem:[#allocation4 + $0x80] sm:$0xff]
        %v7670 = vld [vmem:[#allocation4 + $0x88] sm:$0x1f]
        %7671 = vst.msk [vmem:[#allocation5] sm:$0xff] %vm7051, %v7653
        %7672 = vst.msk [vmem:[#allocation5 + $0x18] sm:$0xff] %vm7051, %v7654
        %7673 = vst.msk [vmem:[#allocation5 + $0x30] sm:$0xff] %vm7051, %v7655
        %7674 = vst.msk [vmem:[#allocation5 + $0x48] sm:$0xff] %vm7051, %v7656
        %7675 = vst.msk [vmem:[#allocation5 + $0x60] sm:$0xff] %vm7051, %v7657
        %7676 = vst.msk [vmem:[#allocation5 + $0x78] sm:$0xff] %vm7051, %v7658
        %7677 = vst.msk [vmem:[#allocation5 + $0x90] sm:$0xff] %vm7051, %v7659
        %7678 = vst.msk [vmem:[#allocation5 + $0xa8] sm:$0xff] %vm7051, %v7660
        %7679 = vst.msk [vmem:[#allocation5 + $0xc0] sm:$0xff] %vm7051, %v7661
        %7680 = vst.msk [vmem:[#allocation5 + $0xd8] sm:$0xff] %vm7051, %v7662
        %7681 = vst.msk [vmem:[#allocation5 + $0xf0] sm:$0xff] %vm7051, %v7663
        %7682 = vst.msk [vmem:[#allocation5 + $0x108] sm:$0xff] %vm7051, %v7664
        %7683 = vst.msk [vmem:[#allocation5 + $0x120] sm:$0xff] %vm7051, %v7665
        %7684 = vst.msk [vmem:[#allocation5 + $0x138] sm:$0xff] %vm7051, %v7666
        %7685 = vst.msk [vmem:[#allocation5 + $0x150] sm:$0xff] %vm7051, %v7667
        %7686 = vst.msk [vmem:[#allocation5 + $0x168] sm:$0xff] %vm7051, %v7668
        %7687 = vst.msk [vmem:[#allocation5 + $0x180] sm:$0xff] %vm7051, %v7669
        %7688 = vst.msk [vmem:[#allocation5 + $0x198] sm:$0x1f] %vm7507, %v7670
        %v7689 = vld [vmem:[#allocation4 + $0x1] sm:$0xff]
        %v7690 = vld [vmem:[#allocation4 + $0x9] sm:$0xff]
        %v7691 = vld [vmem:[#allocation4 + $0x11] sm:$0xff]
        %v7692 = vld [vmem:[#allocation4 + $0x19] sm:$0xff]
        %v7693 = vld [vmem:[#allocation4 + $0x21] sm:$0xff]
        %v7694 = vld [vmem:[#allocation4 + $0x29] sm:$0xff]
        %v7695 = vld [vmem:[#allocation4 + $0x31] sm:$0xff]
        %v7696 = vld [vmem:[#allocation4 + $0x39] sm:$0xff]
        %v7697 = vld [vmem:[#allocation4 + $0x41] sm:$0xff]
        %v7698 = vld [vmem:[#allocation4 + $0x49] sm:$0xff]
        %v7699 = vld [vmem:[#allocation4 + $0x51] sm:$0xff]
        %v7700 = vld [vmem:[#allocation4 + $0x59] sm:$0xff]
        %v7701 = vld [vmem:[#allocation4 + $0x61] sm:$0xff]
        %v7702 = vld [vmem:[#allocation4 + $0x69] sm:$0xff]
        %v7703 = vld [vmem:[#allocation4 + $0x71] sm:$0xff]
        %v7704 = vld [vmem:[#allocation4 + $0x79] sm:$0xff]
        %v7705 = vld [vmem:[#allocation4 + $0x81] sm:$0xff]
        %v7706 = vld [vmem:[#allocation4 + $0x89] sm:$0x1f]
        %7725 = vrot.lane.b32.xlu0 %v7689, 32
        %v7726 = vpop.permute.xlu0 %7725
        %7727 = vrot.lane.b32.xlu0 %v7690, 32
        %v7728 = vpop.permute.xlu0 %7727
        %7729 = vrot.lane.b32.xlu0 %v7691, 32
        %v7730 = vpop.permute.xlu0 %7729
        %7731 = vrot.lane.b32.xlu0 %v7692, 32
        %v7732 = vpop.permute.xlu0 %7731
        %7733 = vrot.lane.b32.xlu0 %v7693, 32
        %v7734 = vpop.permute.xlu0 %7733
        %7735 = vrot.lane.b32.xlu0 %v7694, 32
        %v7736 = vpop.permute.xlu0 %7735
        %7737 = vrot.lane.b32.xlu0 %v7695, 32
        %v7738 = vpop.permute.xlu0 %7737
        %7739 = vrot.lane.b32.xlu0 %v7696, 32
        %v7740 = vpop.permute.xlu0 %7739
        %7741 = vrot.lane.b32.xlu0 %v7697, 32
        %v7742 = vpop.permute.xlu0 %7741
        %7743 = vrot.lane.b32.xlu0 %v7698, 32
        %v7744 = vpop.permute.xlu0 %7743
        %7745 = vrot.lane.b32.xlu0 %v7699, 32
        %v7746 = vpop.permute.xlu0 %7745
        %7747 = vrot.lane.b32.xlu0 %v7700, 32
        %v7748 = vpop.permute.xlu0 %7747
        %7749 = vrot.lane.b32.xlu0 %v7701, 32
        %v7750 = vpop.permute.xlu0 %7749
        %7751 = vrot.lane.b32.xlu0 %v7702, 32
        %v7752 = vpop.permute.xlu0 %7751
        %7753 = vrot.lane.b32.xlu0 %v7703, 32
        %v7754 = vpop.permute.xlu0 %7753
        %7755 = vrot.lane.b32.xlu0 %v7704, 32
        %v7756 = vpop.permute.xlu0 %7755
        %7757 = vrot.lane.b32.xlu0 %v7705, 32
        %v7758 = vpop.permute.xlu0 %7757
        %7759 = vrot.lane.b32.xlu0 %v7706, 32
        %v7760 = vpop.permute.xlu0 %7759
        %vm7779 = vcmask 523520
        %7780 = vst.msk [vmem:[#allocation5] sm:$0xff] %vm7779, %v7726
        %7781 = vst.msk [vmem:[#allocation5 + $0x18] sm:$0xff] %vm7779, %v7728
        %7782 = vst.msk [vmem:[#allocation5 + $0x30] sm:$0xff] %vm7779, %v7730
        %7783 = vst.msk [vmem:[#allocation5 + $0x48] sm:$0xff] %vm7779, %v7732
        %7784 = vst.msk [vmem:[#allocation5 + $0x60] sm:$0xff] %vm7779, %v7734
        %7785 = vst.msk [vmem:[#allocation5 + $0x78] sm:$0xff] %vm7779, %v7736
        %7786 = vst.msk [vmem:[#allocation5 + $0x90] sm:$0xff] %vm7779, %v7738
        %7787 = vst.msk [vmem:[#allocation5 + $0xa8] sm:$0xff] %vm7779, %v7740
        %7788 = vst.msk [vmem:[#allocation5 + $0xc0] sm:$0xff] %vm7779, %v7742
        %7789 = vst.msk [vmem:[#allocation5 + $0xd8] sm:$0xff] %vm7779, %v7744
        %7790 = vst.msk [vmem:[#allocation5 + $0xf0] sm:$0xff] %vm7779, %v7746
        %7791 = vst.msk [vmem:[#allocation5 + $0x108] sm:$0xff] %vm7779, %v7748
        %7792 = vst.msk [vmem:[#allocation5 + $0x120] sm:$0xff] %vm7779, %v7750
        %7793 = vst.msk [vmem:[#allocation5 + $0x138] sm:$0xff] %vm7779, %v7752
        %7794 = vst.msk [vmem:[#allocation5 + $0x150] sm:$0xff] %vm7779, %v7754
        %7795 = vst.msk [vmem:[#allocation5 + $0x168] sm:$0xff] %vm7779, %v7756
        %7796 = vst.msk [vmem:[#allocation5 + $0x180] sm:$0xff] %vm7779, %v7758
        %vm7797 = vcmask 520448
        %7798 = vst.msk [vmem:[#allocation5 + $0x198] sm:$0x1f] %vm7797, %v7760
        %v7799 = vld [vmem:[#allocation4 + $0x2] sm:$0xff]
        %v7800 = vld [vmem:[#allocation4 + $0xa] sm:$0xff]
        %v7801 = vld [vmem:[#allocation4 + $0x12] sm:$0xff]
        %v7802 = vld [vmem:[#allocation4 + $0x1a] sm:$0xff]
        %v7803 = vld [vmem:[#allocation4 + $0x22] sm:$0xff]
        %v7804 = vld [vmem:[#allocation4 + $0x2a] sm:$0xff]
        %v7805 = vld [vmem:[#allocation4 + $0x32] sm:$0xff]
        %v7806 = vld [vmem:[#allocation4 + $0x3a] sm:$0xff]
        %v7807 = vld [vmem:[#allocation4 + $0x42] sm:$0xff]
        %v7808 = vld [vmem:[#allocation4 + $0x4a] sm:$0xff]
        %v7809 = vld [vmem:[#allocation4 + $0x52] sm:$0xff]
        %v7810 = vld [vmem:[#allocation4 + $0x5a] sm:$0xff]
        %v7811 = vld [vmem:[#allocation4 + $0x62] sm:$0xff]
        %v7812 = vld [vmem:[#allocation4 + $0x6a] sm:$0xff]
        %v7813 = vld [vmem:[#allocation4 + $0x72] sm:$0xff]
        %v7814 = vld [vmem:[#allocation4 + $0x7a] sm:$0xff]
        %v7815 = vld [vmem:[#allocation4 + $0x82] sm:$0xff]
        %v7816 = vld [vmem:[#allocation4 + $0x8a] sm:$0x1f]
        %7835 = vrot.lane.b32.xlu0 %v7799, 64
        %v7836 = vpop.permute.xlu0 %7835
        %7837 = vrot.lane.b32.xlu0 %v7800, 64
        %v7838 = vpop.permute.xlu0 %7837
        %7839 = vrot.lane.b32.xlu0 %v7801, 64
        %v7840 = vpop.permute.xlu0 %7839
        %7841 = vrot.lane.b32.xlu0 %v7802, 64
        %v7842 = vpop.permute.xlu0 %7841
        %7843 = vrot.lane.b32.xlu0 %v7803, 64
        %v7844 = vpop.permute.xlu0 %7843
        %7845 = vrot.lane.b32.xlu0 %v7804, 64
        %v7846 = vpop.permute.xlu0 %7845
        %7847 = vrot.lane.b32.xlu0 %v7805, 64
        %v7848 = vpop.permute.xlu0 %7847
        %7849 = vrot.lane.b32.xlu0 %v7806, 64
        %v7850 = vpop.permute.xlu0 %7849
        %7851 = vrot.lane.b32.xlu0 %v7807, 64
        %v7852 = vpop.permute.xlu0 %7851
        %7853 = vrot.lane.b32.xlu0 %v7808, 64
        %v7854 = vpop.permute.xlu0 %7853
        %7855 = vrot.lane.b32.xlu0 %v7809, 64
        %v7856 = vpop.permute.xlu0 %7855
        %7857 = vrot.lane.b32.xlu0 %v7810, 64
        %v7858 = vpop.permute.xlu0 %7857
        %7859 = vrot.lane.b32.xlu0 %v7811, 64
        %v7860 = vpop.permute.xlu0 %7859
        %7861 = vrot.lane.b32.xlu0 %v7812, 64
        %v7862 = vpop.permute.xlu0 %7861
        %7863 = vrot.lane.b32.xlu0 %v7813, 64
        %v7864 = vpop.permute.xlu0 %7863
        %7865 = vrot.lane.b32.xlu0 %v7814, 64
        %v7866 = vpop.permute.xlu0 %7865
        %7867 = vrot.lane.b32.xlu0 %v7815, 64
        %v7868 = vpop.permute.xlu0 %7867
        %7869 = vrot.lane.b32.xlu0 %v7816, 64
        %v7870 = vpop.permute.xlu0 %7869
        %vm7889 = vcmask 785920
        %7890 = vst.msk [vmem:[#allocation5] sm:$0xff] %vm7889, %v7836
        %7891 = vst.msk [vmem:[#allocation5 + $0x18] sm:$0xff] %vm7889, %v7838
        %7892 = vst.msk [vmem:[#allocation5 + $0x30] sm:$0xff] %vm7889, %v7840
        %7893 = vst.msk [vmem:[#allocation5 + $0x48] sm:$0xff] %vm7889, %v7842
        %7894 = vst.msk [vmem:[#allocation5 + $0x60] sm:$0xff] %vm7889, %v7844
        %7895 = vst.msk [vmem:[#allocation5 + $0x78] sm:$0xff] %vm7889, %v7846
        %7896 = vst.msk [vmem:[#allocation5 + $0x90] sm:$0xff] %vm7889, %v7848
        %7897 = vst.msk [vmem:[#allocation5 + $0xa8] sm:$0xff] %vm7889, %v7850
        %7898 = vst.msk [vmem:[#allocation5 + $0xc0] sm:$0xff] %vm7889, %v7852
        %7899 = vst.msk [vmem:[#allocation5 + $0xd8] sm:$0xff] %vm7889, %v7854
        %7900 = vst.msk [vmem:[#allocation5 + $0xf0] sm:$0xff] %vm7889, %v7856
        %7901 = vst.msk [vmem:[#allocation5 + $0x108] sm:$0xff] %vm7889, %v7858
        %7902 = vst.msk [vmem:[#allocation5 + $0x120] sm:$0xff] %vm7889, %v7860
        %7903 = vst.msk [vmem:[#allocation5 + $0x138] sm:$0xff] %vm7889, %v7862
        %7904 = vst.msk [vmem:[#allocation5 + $0x150] sm:$0xff] %vm7889, %v7864
        %7905 = vst.msk [vmem:[#allocation5 + $0x168] sm:$0xff] %vm7889, %v7866
        %7906 = vst.msk [vmem:[#allocation5 + $0x180] sm:$0xff] %vm7889, %v7868
        %vm7907 = vcmask 782848
        %7908 = vst.msk [vmem:[#allocation5 + $0x198] sm:$0x1f] %vm7907, %v7870
        %v7909 = vld [vmem:[#allocation4 + $0xd] sm:$0xff]
        %v7910 = vld [vmem:[#allocation4 + $0x15] sm:$0xff]
        %v7911 = vld [vmem:[#allocation4 + $0x1d] sm:$0xff]
        %v7912 = vld [vmem:[#allocation4 + $0x25] sm:$0xff]
        %v7913 = vld [vmem:[#allocation4 + $0x2d] sm:$0xff]
        %v7914 = vld [vmem:[#allocation4 + $0x35] sm:$0xff]
        %v7915 = vld [vmem:[#allocation4 + $0x3d] sm:$0xff]
        %v7916 = vld [vmem:[#allocation4 + $0x45] sm:$0xff]
        %v7917 = vld [vmem:[#allocation4 + $0x4d] sm:$0xff]
        %v7918 = vld [vmem:[#allocation4 + $0x55] sm:$0xff]
        %v7919 = vld [vmem:[#allocation4 + $0x5d] sm:$0xff]
        %v7920 = vld [vmem:[#allocation4 + $0x65] sm:$0xff]
        %v7921 = vld [vmem:[#allocation4 + $0x6d] sm:$0xff]
        %v7922 = vld [vmem:[#allocation4 + $0x75] sm:$0xff]
        %v7923 = vld [vmem:[#allocation4 + $0x7d] sm:$0xff]
        %v7924 = vld [vmem:[#allocation4 + $0x85] sm:$0xff]
        %v7925 = vld [vmem:[#allocation4 + $0x8d] sm:$0xff]
        %v7926 = vld [vmem:[#allocation4 + $0x95] sm:$0x1f]
        %7945 = vrot.lane.b32.xlu0 %v7909, 96
        %v7946 = vpop.permute.xlu0 %7945
        %7947 = vrot.lane.b32.xlu0 %v7910, 96
        %v7948 = vpop.permute.xlu0 %7947
        %7949 = vrot.lane.b32.xlu0 %v7911, 96
        %v7950 = vpop.permute.xlu0 %7949
        %7951 = vrot.lane.b32.xlu0 %v7912, 96
        %v7952 = vpop.permute.xlu0 %7951
        %7953 = vrot.lane.b32.xlu0 %v7913, 96
        %v7954 = vpop.permute.xlu0 %7953
        %7955 = vrot.lane.b32.xlu0 %v7914, 96
        %v7956 = vpop.permute.xlu0 %7955
        %7957 = vrot.lane.b32.xlu0 %v7915, 96
        %v7958 = vpop.permute.xlu0 %7957
        %7959 = vrot.lane.b32.xlu0 %v7916, 96
        %v7960 = vpop.permute.xlu0 %7959
        %7961 = vrot.lane.b32.xlu0 %v7917, 96
        %v7962 = vpop.permute.xlu0 %7961
        %7963 = vrot.lane.b32.xlu0 %v7918, 96
        %v7964 = vpop.permute.xlu0 %7963
        %7965 = vrot.lane.b32.xlu0 %v7919, 96
        %v7966 = vpop.permute.xlu0 %7965
        %7967 = vrot.lane.b32.xlu0 %v7920, 96
        %v7968 = vpop.permute.xlu0 %7967
        %7969 = vrot.lane.b32.xlu0 %v7921, 96
        %v7970 = vpop.permute.xlu0 %7969
        %7971 = vrot.lane.b32.xlu0 %v7922, 96
        %v7972 = vpop.permute.xlu0 %7971
        %7973 = vrot.lane.b32.xlu0 %v7923, 96
        %v7974 = vpop.permute.xlu0 %7973
        %7975 = vrot.lane.b32.xlu0 %v7924, 96
        %v7976 = vpop.permute.xlu0 %7975
        %7977 = vrot.lane.b32.xlu0 %v7925, 96
        %v7978 = vpop.permute.xlu0 %7977
        %7979 = vrot.lane.b32.xlu0 %v7926, 96
        %v7980 = vpop.permute.xlu0 %7979
        %vm7999 = vcmask 1048320
        %8000 = vst.msk [vmem:[#allocation5] sm:$0xff] %vm7999, %v7946
        %8001 = vst.msk [vmem:[#allocation5 + $0x18] sm:$0xff] %vm7999, %v7948
        %8002 = vst.msk [vmem:[#allocation5 + $0x30] sm:$0xff] %vm7999, %v7950
        %8003 = vst.msk [vmem:[#allocation5 + $0x48] sm:$0xff] %vm7999, %v7952
        %8004 = vst.msk [vmem:[#allocation5 + $0x60] sm:$0xff] %vm7999, %v7954
        %8005 = vst.msk [vmem:[#allocation5 + $0x78] sm:$0xff] %vm7999, %v7956
        %8006 = vst.msk [vmem:[#allocation5 + $0x90] sm:$0xff] %vm7999, %v7958
        %8007 = vst.msk [vmem:[#allocation5 + $0xa8] sm:$0xff] %vm7999, %v7960
        %8008 = vst.msk [vmem:[#allocation5 + $0xc0] sm:$0xff] %vm7999, %v7962
        %8009 = vst.msk [vmem:[#allocation5 + $0xd8] sm:$0xff] %vm7999, %v7964
        %8010 = vst.msk [vmem:[#allocation5 + $0xf0] sm:$0xff] %vm7999, %v7966
        %8011 = vst.msk [vmem:[#allocation5 + $0x108] sm:$0xff] %vm7999, %v7968
        %8012 = vst.msk [vmem:[#allocation5 + $0x120] sm:$0xff] %vm7999, %v7970
        %8013 = vst.msk [vmem:[#allocation5 + $0x138] sm:$0xff] %vm7999, %v7972
        %8014 = vst.msk [vmem:[#allocation5 + $0x150] sm:$0xff] %vm7999, %v7974
        %8015 = vst.msk [vmem:[#allocation5 + $0x168] sm:$0xff] %vm7999, %v7976
        %8016 = vst.msk [vmem:[#allocation5 + $0x180] sm:$0xff] %vm7999, %v7978
        %vm8017 = vcmask 1045248
        %8018 = vst.msk [vmem:[#allocation5 + $0x198] sm:$0x1f] %vm8017, %v7980
        %v8019 = vld [vmem:[#allocation4 + $0xe] sm:$0xff]
        %v8020 = vld [vmem:[#allocation4 + $0x16] sm:$0xff]
        %v8021 = vld [vmem:[#allocation4 + $0x1e] sm:$0xff]
        %v8022 = vld [vmem:[#allocation4 + $0x26] sm:$0xff]
        %v8023 = vld [vmem:[#allocation4 + $0x2e] sm:$0xff]
        %v8024 = vld [vmem:[#allocation4 + $0x36] sm:$0xff]
        %v8025 = vld [vmem:[#allocation4 + $0x3e] sm:$0xff]
        %v8026 = vld [vmem:[#allocation4 + $0x46] sm:$0xff]
        %v8027 = vld [vmem:[#allocation4 + $0x4e] sm:$0xff]
        %v8028 = vld [vmem:[#allocation4 + $0x56] sm:$0xff]
        %v8029 = vld [vmem:[#allocation4 + $0x5e] sm:$0xff]
        %v8030 = vld [vmem:[#allocation4 + $0x66] sm:$0xff]
        %v8031 = vld [vmem:[#allocation4 + $0x6e] sm:$0xff]
        %v8032 = vld [vmem:[#allocation4 + $0x76] sm:$0xff]
        %v8033 = vld [vmem:[#allocation4 + $0x7e] sm:$0xff]
        %v8034 = vld [vmem:[#allocation4 + $0x86] sm:$0xff]
        %v8035 = vld [vmem:[#allocation4 + $0x8e] sm:$0xff]
        %v8036 = vld [vmem:[#allocation4 + $0x96] sm:$0x1f]
        %8037 = vst.msk [vmem:[#allocation5 + $0x8] sm:$0xff] %vm7051, %v8019
        %8038 = vst.msk [vmem:[#allocation5 + $0x20] sm:$0xff] %vm7051, %v8020
        %8039 = vst.msk [vmem:[#allocation5 + $0x38] sm:$0xff] %vm7051, %v8021
        %8040 = vst.msk [vmem:[#allocation5 + $0x50] sm:$0xff] %vm7051, %v8022
        %8041 = vst.msk [vmem:[#allocation5 + $0x68] sm:$0xff] %vm7051, %v8023
        %8042 = vst.msk [vmem:[#allocation5 + $0x80] sm:$0xff] %vm7051, %v8024
        %8043 = vst.msk [vmem:[#allocation5 + $0x98] sm:$0xff] %vm7051, %v8025
        %8044 = vst.msk [vmem:[#allocation5 + $0xb0] sm:$0xff] %vm7051, %v8026
        %8045 = vst.msk [vmem:[#allocation5 + $0xc8] sm:$0xff] %vm7051, %v8027
        %8046 = vst.msk [vmem:[#allocation5 + $0xe0] sm:$0xff] %vm7051, %v8028
        %8047 = vst.msk [vmem:[#allocation5 + $0xf8] sm:$0xff] %vm7051, %v8029
        %8048 = vst.msk [vmem:[#allocation5 + $0x110] sm:$0xff] %vm7051, %v8030
        %8049 = vst.msk [vmem:[#allocation5 + $0x128] sm:$0xff] %vm7051, %v8031
        %8050 = vst.msk [vmem:[#allocation5 + $0x140] sm:$0xff] %vm7051, %v8032
        %8051 = vst.msk [vmem:[#allocation5 + $0x158] sm:$0xff] %vm7051, %v8033
        %8052 = vst.msk [vmem:[#allocation5 + $0x170] sm:$0xff] %vm7051, %v8034
        %8053 = vst.msk [vmem:[#allocation5 + $0x188] sm:$0xff] %vm7051, %v8035
        %8054 = vst.msk [vmem:[#allocation5 + $0x1a0] sm:$0x1f] %vm7507, %v8036
        %v8055 = vld [vmem:[#allocation4 + $0xf] sm:$0xff]
        %v8056 = vld [vmem:[#allocation4 + $0x17] sm:$0xff]
        %v8057 = vld [vmem:[#allocation4 + $0x1f] sm:$0xff]
        %v8058 = vld [vmem:[#allocation4 + $0x27] sm:$0xff]
        %v8059 = vld [vmem:[#allocation4 + $0x2f] sm:$0xff]
        %v8060 = vld [vmem:[#allocation4 + $0x37] sm:$0xff]
        %v8061 = vld [vmem:[#allocation4 + $0x3f] sm:$0xff]
        %v8062 = vld [vmem:[#allocation4 + $0x47] sm:$0xff]
        %v8063 = vld [vmem:[#allocation4 + $0x4f] sm:$0xff]
        %v8064 = vld [vmem:[#allocation4 + $0x57] sm:$0xff]
        %v8065 = vld [vmem:[#allocation4 + $0x5f] sm:$0xff]
        %v8066 = vld [vmem:[#allocation4 + $0x67] sm:$0xff]
        %v8067 = vld [vmem:[#allocation4 + $0x6f] sm:$0xff]
        %v8068 = vld [vmem:[#allocation4 + $0x77] sm:$0xff]
        %v8069 = vld [vmem:[#allocation4 + $0x7f] sm:$0xff]
        %v8070 = vld [vmem:[#allocation4 + $0x87] sm:$0xff]
        %v8071 = vld [vmem:[#allocation4 + $0x8f] sm:$0xff]
        %v8072 = vld [vmem:[#allocation4 + $0x97] sm:$0x1f]
        %8091 = vrot.lane.b32.xlu0 %v8055, 32
        %v8092 = vpop.permute.xlu0 %8091
        %8093 = vrot.lane.b32.xlu0 %v8056, 32
        %v8094 = vpop.permute.xlu0 %8093
        %8095 = vrot.lane.b32.xlu0 %v8057, 32
        %v8096 = vpop.permute.xlu0 %8095
        %8097 = vrot.lane.b32.xlu0 %v8058, 32
        %v8098 = vpop.permute.xlu0 %8097
        %8099 = vrot.lane.b32.xlu0 %v8059, 32
        %v8100 = vpop.permute.xlu0 %8099
        %8101 = vrot.lane.b32.xlu0 %v8060, 32
        %v8102 = vpop.permute.xlu0 %8101
        %8103 = vrot.lane.b32.xlu0 %v8061, 32
        %v8104 = vpop.permute.xlu0 %8103
        %8105 = vrot.lane.b32.xlu0 %v8062, 32
        %v8106 = vpop.permute.xlu0 %8105
        %8107 = vrot.lane.b32.xlu0 %v8063, 32
        %v8108 = vpop.permute.xlu0 %8107
        %8109 = vrot.lane.b32.xlu0 %v8064, 32
        %v8110 = vpop.permute.xlu0 %8109
        %8111 = vrot.lane.b32.xlu0 %v8065, 32
        %v8112 = vpop.permute.xlu0 %8111
        %8113 = vrot.lane.b32.xlu0 %v8066, 32
        %v8114 = vpop.permute.xlu0 %8113
        %8115 = vrot.lane.b32.xlu0 %v8067, 32
        %v8116 = vpop.permute.xlu0 %8115
        %8117 = vrot.lane.b32.xlu0 %v8068, 32
        %v8118 = vpop.permute.xlu0 %8117
        %8119 = vrot.lane.b32.xlu0 %v8069, 32
        %v8120 = vpop.permute.xlu0 %8119
        %8121 = vrot.lane.b32.xlu0 %v8070, 32
        %v8122 = vpop.permute.xlu0 %8121
        %8123 = vrot.lane.b32.xlu0 %v8071, 32
        %v8124 = vpop.permute.xlu0 %8123
        %8125 = vrot.lane.b32.xlu0 %v8072, 32
        %v8126 = vpop.permute.xlu0 %8125
        %8145 = vst.msk [vmem:[#allocation5 + $0x8] sm:$0xff] %vm7779, %v8092
        %8146 = vst.msk [vmem:[#allocation5 + $0x20] sm:$0xff] %vm7779, %v8094
        %8147 = vst.msk [vmem:[#allocation5 + $0x38] sm:$0xff] %vm7779, %v8096
        %8148 = vst.msk [vmem:[#allocation5 + $0x50] sm:$0xff] %vm7779, %v8098
        %8149 = vst.msk [vmem:[#allocation5 + $0x68] sm:$0xff] %vm7779, %v8100
        %8150 = vst.msk [vmem:[#allocation5 + $0x80] sm:$0xff] %vm7779, %v8102
        %8151 = vst.msk [vmem:[#allocation5 + $0x98] sm:$0xff] %vm7779, %v8104
        %8152 = vst.msk [vmem:[#allocation5 + $0xb0] sm:$0xff] %vm7779, %v8106
        %8153 = vst.msk [vmem:[#allocation5 + $0xc8] sm:$0xff] %vm7779, %v8108
        %8154 = vst.msk [vmem:[#allocation5 + $0xe0] sm:$0xff] %vm7779, %v8110
        %8155 = vst.msk [vmem:[#allocation5 + $0xf8] sm:$0xff] %vm7779, %v8112
        %8156 = vst.msk [vmem:[#allocation5 + $0x110] sm:$0xff] %vm7779, %v8114
        %8157 = vst.msk [vmem:[#allocation5 + $0x128] sm:$0xff] %vm7779, %v8116
        %8158 = vst.msk [vmem:[#allocation5 + $0x140] sm:$0xff] %vm7779, %v8118
        %8159 = vst.msk [vmem:[#allocation5 + $0x158] sm:$0xff] %vm7779, %v8120
        %8160 = vst.msk [vmem:[#allocation5 + $0x170] sm:$0xff] %vm7779, %v8122
        %8161 = vst.msk [vmem:[#allocation5 + $0x188] sm:$0xff] %vm7779, %v8124
        %8162 = vst.msk [vmem:[#allocation5 + $0x1a0] sm:$0x1f] %vm7797, %v8126
        %v8163 = vld [vmem:[#allocation4 + $0x1a] sm:$0xff]
        %v8164 = vld [vmem:[#allocation4 + $0x22] sm:$0xff]
        %v8165 = vld [vmem:[#allocation4 + $0x2a] sm:$0xff]
        %v8166 = vld [vmem:[#allocation4 + $0x32] sm:$0xff]
        %v8167 = vld [vmem:[#allocation4 + $0x3a] sm:$0xff]
        %v8168 = vld [vmem:[#allocation4 + $0x42] sm:$0xff]
        %v8169 = vld [vmem:[#allocation4 + $0x4a] sm:$0xff]
        %v8170 = vld [vmem:[#allocation4 + $0x52] sm:$0xff]
        %v8171 = vld [vmem:[#allocation4 + $0x5a] sm:$0xff]
        %v8172 = vld [vmem:[#allocation4 + $0x62] sm:$0xff]
        %v8173 = vld [vmem:[#allocation4 + $0x6a] sm:$0xff]
        %v8174 = vld [vmem:[#allocation4 + $0x72] sm:$0xff]
        %v8175 = vld [vmem:[#allocation4 + $0x7a] sm:$0xff]
        %v8176 = vld [vmem:[#allocation4 + $0x82] sm:$0xff]
        %v8177 = vld [vmem:[#allocation4 + $0x8a] sm:$0xff]
        %v8178 = vld [vmem:[#allocation4 + $0x92] sm:$0xff]
        %v8179 = vld [vmem:[#allocation4 + $0x9a] sm:$0xff]
        %v8180 = vld [vmem:[#allocation4 + $0xa2] sm:$0x1f]
        %8199 = vrot.lane.b32.xlu0 %v8163, 64
        %v8200 = vpop.permute.xlu0 %8199
        %8201 = vrot.lane.b32.xlu0 %v8164, 64
        %v8202 = vpop.permute.xlu0 %8201
        %8203 = vrot.lane.b32.xlu0 %v8165, 64
        %v8204 = vpop.permute.xlu0 %8203
        %8205 = vrot.lane.b32.xlu0 %v8166, 64
        %v8206 = vpop.permute.xlu0 %8205
        %8207 = vrot.lane.b32.xlu0 %v8167, 64
        %v8208 = vpop.permute.xlu0 %8207
        %8209 = vrot.lane.b32.xlu0 %v8168, 64
        %v8210 = vpop.permute.xlu0 %8209
        %8211 = vrot.lane.b32.xlu0 %v8169, 64
        %v8212 = vpop.permute.xlu0 %8211
        %8213 = vrot.lane.b32.xlu0 %v8170, 64
        %v8214 = vpop.permute.xlu0 %8213
        %8215 = vrot.lane.b32.xlu0 %v8171, 64
        %v8216 = vpop.permute.xlu0 %8215
        %8217 = vrot.lane.b32.xlu0 %v8172, 64
        %v8218 = vpop.permute.xlu0 %8217
        %8219 = vrot.lane.b32.xlu0 %v8173, 64
        %v8220 = vpop.permute.xlu0 %8219
        %8221 = vrot.lane.b32.xlu0 %v8174, 64
        %v8222 = vpop.permute.xlu0 %8221
        %8223 = vrot.lane.b32.xlu0 %v8175, 64
        %v8224 = vpop.permute.xlu0 %8223
        %8225 = vrot.lane.b32.xlu0 %v8176, 64
        %v8226 = vpop.permute.xlu0 %8225
        %8227 = vrot.lane.b32.xlu0 %v8177, 64
        %v8228 = vpop.permute.xlu0 %8227
        %8229 = vrot.lane.b32.xlu0 %v8178, 64
        %v8230 = vpop.permute.xlu0 %8229
        %8231 = vrot.lane.b32.xlu0 %v8179, 64
        %v8232 = vpop.permute.xlu0 %8231
        %8233 = vrot.lane.b32.xlu0 %v8180, 64
        %v8234 = vpop.permute.xlu0 %8233
        %8253 = vst.msk [vmem:[#allocation5 + $0x8] sm:$0xff] %vm7889, %v8200
        %8254 = vst.msk [vmem:[#allocation5 + $0x20] sm:$0xff] %vm7889, %v8202
        %8255 = vst.msk [vmem:[#allocation5 + $0x38] sm:$0xff] %vm7889, %v8204
        %8256 = vst.msk [vmem:[#allocation5 + $0x50] sm:$0xff] %vm7889, %v8206
        %8257 = vst.msk [vmem:[#allocation5 + $0x68] sm:$0xff] %vm7889, %v8208
        %8258 = vst.msk [vmem:[#allocation5 + $0x80] sm:$0xff] %vm7889, %v8210
        %8259 = vst.msk [vmem:[#allocation5 + $0x98] sm:$0xff] %vm7889, %v8212
        %8260 = vst.msk [vmem:[#allocation5 + $0xb0] sm:$0xff] %vm7889, %v8214
        %8261 = vst.msk [vmem:[#allocation5 + $0xc8] sm:$0xff] %vm7889, %v8216
        %8262 = vst.msk [vmem:[#allocation5 + $0xe0] sm:$0xff] %vm7889, %v8218
        %8263 = vst.msk [vmem:[#allocation5 + $0xf8] sm:$0xff] %vm7889, %v8220
        %8264 = vst.msk [vmem:[#allocation5 + $0x110] sm:$0xff] %vm7889, %v8222
        %8265 = vst.msk [vmem:[#allocation5 + $0x128] sm:$0xff] %vm7889, %v8224
        %8266 = vst.msk [vmem:[#allocation5 + $0x140] sm:$0xff] %vm7889, %v8226
        %8267 = vst.msk [vmem:[#allocation5 + $0x158] sm:$0xff] %vm7889, %v8228
        %8268 = vst.msk [vmem:[#allocation5 + $0x170] sm:$0xff] %vm7889, %v8230
        %8269 = vst.msk [vmem:[#allocation5 + $0x188] sm:$0xff] %vm7889, %v8232
        %8270 = vst.msk [vmem:[#allocation5 + $0x1a0] sm:$0x1f] %vm7907, %v8234
        %v8271 = vld [vmem:[#allocation4 + $0x1b] sm:$0xff]
        %v8272 = vld [vmem:[#allocation4 + $0x23] sm:$0xff]
        %v8273 = vld [vmem:[#allocation4 + $0x2b] sm:$0xff]
        %v8274 = vld [vmem:[#allocation4 + $0x33] sm:$0xff]
        %v8275 = vld [vmem:[#allocation4 + $0x3b] sm:$0xff]
        %v8276 = vld [vmem:[#allocation4 + $0x43] sm:$0xff]
        %v8277 = vld [vmem:[#allocation4 + $0x4b] sm:$0xff]
        %v8278 = vld [vmem:[#allocation4 + $0x53] sm:$0xff]
        %v8279 = vld [vmem:[#allocation4 + $0x5b] sm:$0xff]
        %v8280 = vld [vmem:[#allocation4 + $0x63] sm:$0xff]
        %v8281 = vld [vmem:[#allocation4 + $0x6b] sm:$0xff]
        %v8282 = vld [vmem:[#allocation4 + $0x73] sm:$0xff]
        %v8283 = vld [vmem:[#allocation4 + $0x7b] sm:$0xff]
        %v8284 = vld [vmem:[#allocation4 + $0x83] sm:$0xff]
        %v8285 = vld [vmem:[#allocation4 + $0x8b] sm:$0xff]
        %v8286 = vld [vmem:[#allocation4 + $0x93] sm:$0xff]
        %v8287 = vld [vmem:[#allocation4 + $0x9b] sm:$0xff]
        %v8288 = vld [vmem:[#allocation4 + $0xa3] sm:$0x1f]
        %8307 = vrot.lane.b32.xlu0 %v8271, 96
        %v8308 = vpop.permute.xlu0 %8307
        %8309 = vrot.lane.b32.xlu0 %v8272, 96
        %v8310 = vpop.permute.xlu0 %8309
        %8311 = vrot.lane.b32.xlu0 %v8273, 96
        %v8312 = vpop.permute.xlu0 %8311
        %8313 = vrot.lane.b32.xlu0 %v8274, 96
        %v8314 = vpop.permute.xlu0 %8313
        %8315 = vrot.lane.b32.xlu0 %v8275, 96
        %v8316 = vpop.permute.xlu0 %8315
        %8317 = vrot.lane.b32.xlu0 %v8276, 96
        %v8318 = vpop.permute.xlu0 %8317
        %8319 = vrot.lane.b32.xlu0 %v8277, 96
        %v8320 = vpop.permute.xlu0 %8319
        %8321 = vrot.lane.b32.xlu0 %v8278, 96
        %v8322 = vpop.permute.xlu0 %8321
        %8323 = vrot.lane.b32.xlu0 %v8279, 96
        %v8324 = vpop.permute.xlu0 %8323
        %8325 = vrot.lane.b32.xlu0 %v8280, 96
        %v8326 = vpop.permute.xlu0 %8325
        %8327 = vrot.lane.b32.xlu0 %v8281, 96
        %v8328 = vpop.permute.xlu0 %8327
        %8329 = vrot.lane.b32.xlu0 %v8282, 96
        %v8330 = vpop.permute.xlu0 %8329
        %8331 = vrot.lane.b32.xlu0 %v8283, 96
        %v8332 = vpop.permute.xlu0 %8331
        %8333 = vrot.lane.b32.xlu0 %v8284, 96
        %v8334 = vpop.permute.xlu0 %8333
        %8335 = vrot.lane.b32.xlu0 %v8285, 96
        %v8336 = vpop.permute.xlu0 %8335
        %8337 = vrot.lane.b32.xlu0 %v8286, 96
        %v8338 = vpop.permute.xlu0 %8337
        %8339 = vrot.lane.b32.xlu0 %v8287, 96
        %v8340 = vpop.permute.xlu0 %8339
        %8341 = vrot.lane.b32.xlu0 %v8288, 96
        %v8342 = vpop.permute.xlu0 %8341
        %8361 = vst.msk [vmem:[#allocation5 + $0x8] sm:$0xff] %vm7999, %v8308
        %8362 = vst.msk [vmem:[#allocation5 + $0x20] sm:$0xff] %vm7999, %v8310
        %8363 = vst.msk [vmem:[#allocation5 + $0x38] sm:$0xff] %vm7999, %v8312
        %8364 = vst.msk [vmem:[#allocation5 + $0x50] sm:$0xff] %vm7999, %v8314
        %8365 = vst.msk [vmem:[#allocation5 + $0x68] sm:$0xff] %vm7999, %v8316
        %8366 = vst.msk [vmem:[#allocation5 + $0x80] sm:$0xff] %vm7999, %v8318
        %8367 = vst.msk [vmem:[#allocation5 + $0x98] sm:$0xff] %vm7999, %v8320
        %8368 = vst.msk [vmem:[#allocation5 + $0xb0] sm:$0xff] %vm7999, %v8322
        %8369 = vst.msk [vmem:[#allocation5 + $0xc8] sm:$0xff] %vm7999, %v8324
        %8370 = vst.msk [vmem:[#allocation5 + $0xe0] sm:$0xff] %vm7999, %v8326
        %8371 = vst.msk [vmem:[#allocation5 + $0xf8] sm:$0xff] %vm7999, %v8328
        %8372 = vst.msk [vmem:[#allocation5 + $0x110] sm:$0xff] %vm7999, %v8330
        %8373 = vst.msk [vmem:[#allocation5 + $0x128] sm:$0xff] %vm7999, %v8332
        %8374 = vst.msk [vmem:[#allocation5 + $0x140] sm:$0xff] %vm7999, %v8334
        %8375 = vst.msk [vmem:[#allocation5 + $0x158] sm:$0xff] %vm7999, %v8336
        %8376 = vst.msk [vmem:[#allocation5 + $0x170] sm:$0xff] %vm7999, %v8338
        %8377 = vst.msk [vmem:[#allocation5 + $0x188] sm:$0xff] %vm7999, %v8340
        %8378 = vst.msk [vmem:[#allocation5 + $0x1a0] sm:$0x1f] %vm8017, %v8342
        %v8379 = vld [vmem:[#allocation4 + $0x1c] sm:$0xff]
        %v8380 = vld [vmem:[#allocation4 + $0x24] sm:$0xff]
        %v8381 = vld [vmem:[#allocation4 + $0x2c] sm:$0xff]
        %v8382 = vld [vmem:[#allocation4 + $0x34] sm:$0xff]
        %v8383 = vld [vmem:[#allocation4 + $0x3c] sm:$0xff]
        %v8384 = vld [vmem:[#allocation4 + $0x44] sm:$0xff]
        %v8385 = vld [vmem:[#allocation4 + $0x4c] sm:$0xff]
        %v8386 = vld [vmem:[#allocation4 + $0x54] sm:$0xff]
        %v8387 = vld [vmem:[#allocation4 + $0x5c] sm:$0xff]
        %v8388 = vld [vmem:[#allocation4 + $0x64] sm:$0xff]
        %v8389 = vld [vmem:[#allocation4 + $0x6c] sm:$0xff]
        %v8390 = vld [vmem:[#allocation4 + $0x74] sm:$0xff]
        %v8391 = vld [vmem:[#allocation4 + $0x7c] sm:$0xff]
        %v8392 = vld [vmem:[#allocation4 + $0x84] sm:$0xff]
        %v8393 = vld [vmem:[#allocation4 + $0x8c] sm:$0xff]
        %v8394 = vld [vmem:[#allocation4 + $0x94] sm:$0xff]
        %v8395 = vld [vmem:[#allocation4 + $0x9c] sm:$0xff]
        %v8396 = vld [vmem:[#allocation4 + $0xa4] sm:$0x1f]
        %8397 = vst.msk [vmem:[#allocation5 + $0x10] sm:$0xff] %vm7051, %v8379
        %8398 = vst.msk [vmem:[#allocation5 + $0x28] sm:$0xff] %vm7051, %v8380
        %8399 = vst.msk [vmem:[#allocation5 + $0x40] sm:$0xff] %vm7051, %v8381
        %8400 = vst.msk [vmem:[#allocation5 + $0x58] sm:$0xff] %vm7051, %v8382
        %8401 = vst.msk [vmem:[#allocation5 + $0x70] sm:$0xff] %vm7051, %v8383
        %8402 = vst.msk [vmem:[#allocation5 + $0x88] sm:$0xff] %vm7051, %v8384
        %8403 = vst.msk [vmem:[#allocation5 + $0xa0] sm:$0xff] %vm7051, %v8385
        %8404 = vst.msk [vmem:[#allocation5 + $0xb8] sm:$0xff] %vm7051, %v8386
        %8405 = vst.msk [vmem:[#allocation5 + $0xd0] sm:$0xff] %vm7051, %v8387
        %8406 = vst.msk [vmem:[#allocation5 + $0xe8] sm:$0xff] %vm7051, %v8388
        %8407 = vst.msk [vmem:[#allocation5 + $0x100] sm:$0xff] %vm7051, %v8389
        %8408 = vst.msk [vmem:[#allocation5 + $0x118] sm:$0xff] %vm7051, %v8390
        %8409 = vst.msk [vmem:[#allocation5 + $0x130] sm:$0xff] %vm7051, %v8391
        %8410 = vst.msk [vmem:[#allocation5 + $0x148] sm:$0xff] %vm7051, %v8392
        %8411 = vst.msk [vmem:[#allocation5 + $0x160] sm:$0xff] %vm7051, %v8393
        %8412 = vst.msk [vmem:[#allocation5 + $0x178] sm:$0xff] %vm7051, %v8394
        %8413 = vst.msk [vmem:[#allocation5 + $0x190] sm:$0xff] %vm7051, %v8395
        %8414 = vst.msk [vmem:[#allocation5 + $0x1a8] sm:$0x1f] %vm7507, %v8396
        %v8415 = vld [vmem:[#allocation5] sm:$0xff]
        %v8416 = vld [vmem:[#allocation5 + $0x8] sm:$0xff]
        %v8417 = vld [vmem:[#allocation5 + $0x10] sm:$0xff]
        %v8418 = vld [vmem:[#allocation5 + $0x18] sm:$0xff]
        %v8419 = vld [vmem:[#allocation5 + $0x20] sm:$0xff]
        %v8420 = vld [vmem:[#allocation5 + $0x28] sm:$0xff]
        %v8421 = vld [vmem:[#allocation5 + $0x30] sm:$0xff]
        %v8422 = vld [vmem:[#allocation5 + $0x38] sm:$0xff]
        %v8423 = vld [vmem:[#allocation5 + $0x40] sm:$0xff]
        %v8424 = vld [vmem:[#allocation5 + $0x48] sm:$0xff]
        %v8425 = vld [vmem:[#allocation5 + $0x50] sm:$0xff]
        %v8426 = vld [vmem:[#allocation5 + $0x58] sm:$0xff]
        %v8427 = vld [vmem:[#allocation5 + $0x60] sm:$0xff]
        %v8428 = vld [vmem:[#allocation5 + $0x68] sm:$0xff]
        %v8429 = vld [vmem:[#allocation5 + $0x70] sm:$0xff]
        %v8430 = vld [vmem:[#allocation5 + $0x78] sm:$0xff]
        %v8431 = vld [vmem:[#allocation5 + $0x80] sm:$0xff]
        %v8432 = vld [vmem:[#allocation5 + $0x88] sm:$0xff]
        %v8433 = vld [vmem:[#allocation5 + $0x90] sm:$0xff]
        %v8434 = vld [vmem:[#allocation5 + $0x98] sm:$0xff]
        %v8435 = vld [vmem:[#allocation5 + $0xa0] sm:$0xff]
        %v8436 = vld [vmem:[#allocation5 + $0xa8] sm:$0xff]
        %v8437 = vld [vmem:[#allocation5 + $0xb0] sm:$0xff]
        %v8438 = vld [vmem:[#allocation5 + $0xb8] sm:$0xff]
        %v8439 = vld [vmem:[#allocation5 + $0xc0] sm:$0xff]
        %v8440 = vld [vmem:[#allocation5 + $0xc8] sm:$0xff]
        %v8441 = vld [vmem:[#allocation5 + $0xd0] sm:$0xff]
        %v8442 = vld [vmem:[#allocation5 + $0xd8] sm:$0xff]
        %v8443 = vld [vmem:[#allocation5 + $0xe0] sm:$0xff]
        %v8444 = vld [vmem:[#allocation5 + $0xe8] sm:$0xff]
        %v8445 = vld [vmem:[#allocation5 + $0xf0] sm:$0xff]
        %v8446 = vld [vmem:[#allocation5 + $0xf8] sm:$0xff]
        %v8447 = vld [vmem:[#allocation5 + $0x100] sm:$0xff]
        %v8448 = vld [vmem:[#allocation5 + $0x108] sm:$0xff]
        %v8449 = vld [vmem:[#allocation5 + $0x110] sm:$0xff]
        %v8450 = vld [vmem:[#allocation5 + $0x118] sm:$0xff]
        %v8451 = vld [vmem:[#allocation5 + $0x120] sm:$0xff]
        %v8452 = vld [vmem:[#allocation5 + $0x128] sm:$0xff]
        %v8453 = vld [vmem:[#allocation5 + $0x130] sm:$0xff]
        %v8454 = vld [vmem:[#allocation5 + $0x138] sm:$0xff]
        %v8455 = vld [vmem:[#allocation5 + $0x140] sm:$0xff]
        %v8456 = vld [vmem:[#allocation5 + $0x148] sm:$0xff]
        %v8457 = vld [vmem:[#allocation5 + $0x150] sm:$0xff]
        %v8458 = vld [vmem:[#allocation5 + $0x158] sm:$0xff]
        %v8459 = vld [vmem:[#allocation5 + $0x160] sm:$0xff]
        %v8460 = vld [vmem:[#allocation5 + $0x168] sm:$0xff]
        %v8461 = vld [vmem:[#allocation5 + $0x170] sm:$0xff]
        %v8462 = vld [vmem:[#allocation5 + $0x178] sm:$0xff]
        %v8463 = vld [vmem:[#allocation5 + $0x180] sm:$0xff]
        %v8464 = vld [vmem:[#allocation5 + $0x188] sm:$0xff]
        %v8465 = vld [vmem:[#allocation5 + $0x190] sm:$0xff]
        %v8466 = vld [vmem:[#allocation5 + $0x198] sm:$0x1f]
        %v8467 = vld [vmem:[#allocation5 + $0x1a0] sm:$0x1f]
        %v8468 = vld [vmem:[#allocation5 + $0x1a8] sm:$0x1f]
        %v8469 = vld [vmem:[%s3] sm:$0xff]
        %v8470 = vld [vmem:[%s3 + $0x8] sm:$0xff]
        %v8471 = vld [vmem:[%s3 + $0x10] sm:$0xff]
        %v8472 = vld [vmem:[%s3 + $0x18] sm:$0xff]
        %v8473 = vld [vmem:[%s3 + $0x20] sm:$0xff]
        %v8474 = vld [vmem:[%s3 + $0x28] sm:$0xff]
        %v8475 = vld [vmem:[%s3 + $0x30] sm:$0xff]
        %v8476 = vld [vmem:[%s3 + $0x38] sm:$0xff]
        %v8477 = vld [vmem:[%s3 + $0x40] sm:$0xff]
        %v8478 = vld [vmem:[%s3 + $0x48] sm:$0xff]
        %v8479 = vld [vmem:[%s3 + $0x50] sm:$0xff]
        %v8480 = vld [vmem:[%s3 + $0x58] sm:$0xff]
        %v8481 = vld [vmem:[%s3 + $0x60] sm:$0xff]
        %v8482 = vld [vmem:[%s3 + $0x68] sm:$0xff]
        %v8483 = vld [vmem:[%s3 + $0x70] sm:$0xff]
        %v8484 = vld [vmem:[%s3 + $0x78] sm:$0xff]
        %v8485 = vld [vmem:[%s3 + $0x80] sm:$0xff]
        %v8486 = vld [vmem:[%s3 + $0x88] sm:$0xff]
        %v8487 = vld [vmem:[%s3 + $0x90] sm:$0xff]
        %v8488 = vld [vmem:[%s3 + $0x98] sm:$0xff]
        %v8489 = vld [vmem:[%s3 + $0xa0] sm:$0xff]
        %v8490 = vld [vmem:[%s3 + $0xa8] sm:$0xff]
        %v8491 = vld [vmem:[%s3 + $0xb0] sm:$0xff]
        %v8492 = vld [vmem:[%s3 + $0xb8] sm:$0xff]
        %v8493 = vld [vmem:[%s3 + $0xc0] sm:$0xff]
        %v8494 = vld [vmem:[%s3 + $0xc8] sm:$0xff]
        %v8495 = vld [vmem:[%s3 + $0xd0] sm:$0xff]
        %v8496 = vld [vmem:[%s3 + $0xd8] sm:$0xff]
        %v8497 = vld [vmem:[%s3 + $0xe0] sm:$0xff]
        %v8498 = vld [vmem:[%s3 + $0xe8] sm:$0xff]
        %v8499 = vld [vmem:[%s3 + $0xf0] sm:$0xff]
        %v8500 = vld [vmem:[%s3 + $0xf8] sm:$0xff]
        %v8501 = vld [vmem:[%s3 + $0x100] sm:$0xff]
        %v8502 = vld [vmem:[%s3 + $0x108] sm:$0xff]
        %v8503 = vld [vmem:[%s3 + $0x110] sm:$0xff]
        %v8504 = vld [vmem:[%s3 + $0x118] sm:$0xff]
        %v8505 = vld [vmem:[%s4] sm:$0x1]
        %v8507 = vlaneseq
        %v8508 = vshrl.u32 %v8507, 7
        %v8509 = vsub.s32 0, %v8508
        %v8510 = vrot.slane %v8505, %v8509
        %v8513 = vsel %vm7051, %v8417, 0
        %v8516 = vsel %vm7051, %v8420, 0
        %v8519 = vsel %vm7051, %v8423, 0
        %v8522 = vsel %vm7051, %v8426, 0
        %v8525 = vsel %vm7051, %v8429, 0
        %v8528 = vsel %vm7051, %v8432, 0
        %v8531 = vsel %vm7051, %v8435, 0
        %v8534 = vsel %vm7051, %v8438, 0
        %v8537 = vsel %vm7051, %v8441, 0
        %v8540 = vsel %vm7051, %v8444, 0
        %v8543 = vsel %vm7051, %v8447, 0
        %v8546 = vsel %vm7051, %v8450, 0
        %v8549 = vsel %vm7051, %v8453, 0
        %v8552 = vsel %vm7051, %v8456, 0
        %v8555 = vsel %vm7051, %v8459, 0
        %v8558 = vsel %vm7051, %v8462, 0
        %v8561 = vsel %vm7051, %v8465, 0
        %v8564 = vsel %vm7051, %v8468, 0
        %8566 = vmatprep.subr.mxu0 0.0
        %8567 = vmatpush1.msra.mxu0 %v8484
        %8568 = vmatprep.subr.mxu0 0.0
        %8569 = vmatpush1.msra.mxu0 %v8483
        %8570 = vmatprep.subr.mxu0 0.0
        %8571 = vmatpush1.msra.mxu0 %v8482
        %8572 = vmatprep.subr.mxu0 0.0
        %8573 = vmatpush1.msra.mxu0 %v8481
        %8574 = vmatprep.subr.mxu0 0.0
        %8575 = vmatpush1.msra.mxu0 %v8480
        %8576 = vmatprep.subr.mxu0 0.0
        %8577 = vmatpush1.msra.mxu0 %v8479
        %8578 = vmatprep.subr.mxu0 0.0
        %8579 = vmatpush1.msra.mxu0 %v8478
        %8580 = vmatprep.subr.mxu0 0.0
        %8581 = vmatpush1.msra.mxu0 %v8477
        %8582 = vmatprep.subr.mxu0 0.0
        %8583 = vmatpush1.msra.mxu0 %v8476
        %8584 = vmatprep.subr.mxu0 0.0
        %8585 = vmatpush1.msra.mxu0 %v8475
        %8586 = vmatprep.subr.mxu0 0.0
        %8587 = vmatpush1.msra.mxu0 %v8474
        %8588 = vmatprep.subr.mxu0 0.0
        %8589 = vmatpush1.msra.mxu0 %v8473
        %8590 = vmatprep.subr.mxu0 0.0
        %8591 = vmatpush1.msra.mxu0 %v8472
        %8592 = vmatprep.subr.mxu0 0.0
        %8593 = vmatpush1.msra.mxu0 %v8471
        %8594 = vmatprep.subr.mxu0 0.0
        %8595 = vmatpush1.msra.mxu0 %v8470
        %8596 = vmatprep.subr.mxu0 0.0
        %8597 = vmatpush1.msra.mxu0 %v8469
        %8598 = vmatprep.subr.mxu0 0.0
        %8599 = vmatpush2.msra.mxu0 %v8500
        %8600 = vmatprep.subr.mxu0 0.0
        %8601 = vmatpush2.msra.mxu0 %v8499
        %8602 = vmatprep.subr.mxu0 0.0
        %8603 = vmatpush2.msra.mxu0 %v8498
        %8604 = vmatprep.subr.mxu0 0.0
        %8605 = vmatpush2.msra.mxu0 %v8497
        %8606 = vmatprep.subr.mxu0 0.0
        %8607 = vmatpush2.msra.mxu0 %v8496
        %8608 = vmatprep.subr.mxu0 0.0
        %8609 = vmatpush2.msra.mxu0 %v8495
        %8610 = vmatprep.subr.mxu0 0.0
        %8611 = vmatpush2.msra.mxu0 %v8494
        %8612 = vmatprep.subr.mxu0 0.0
        %8613 = vmatpush2.msra.mxu0 %v8493
        %8614 = vmatprep.subr.mxu0 0.0
        %8615 = vmatpush2.msra.mxu0 %v8492
        %8616 = vmatprep.subr.mxu0 0.0
        %8617 = vmatpush2.msra.mxu0 %v8491
        %8618 = vmatprep.subr.mxu0 0.0
        %8619 = vmatpush2.msra.mxu0 %v8490
        %8620 = vmatprep.subr.mxu0 0.0
        %8621 = vmatpush2.msra.mxu0 %v8489
        %8622 = vmatprep.subr.mxu0 0.0
        %8623 = vmatpush2.msra.mxu0 %v8488
        %8624 = vmatprep.subr.mxu0 0.0
        %8625 = vmatpush2.msra.mxu0 %v8487
        %8626 = vmatprep.subr.mxu0 0.0
        %8627 = vmatpush2.msra.mxu0 %v8486
        %8628 = vmatprep.subr.mxu0 0.0
        %8629 = vmatpush2.msra.mxu0 %v8485
        %8630 = vmatprep.mubr.f32.mxu0 %v8416
        %8631 = vmatmul.mubr.f32.gmra.mxu0 %v8415
        %v8632 = vpop.f32.mrf.mxu0
        %v8633 = vadd.f32 %v8510, %v8632
        %v8634 = vpop.f32.mrf.mxu0
        %8635 = vmatprep.mubr.f32.mxu0 %v8419
        %8636 = vmatmul.mubr.f32.gmra.mxu0 %v8418
        %v8637 = vpop.f32.mrf.mxu0
        %v8638 = vadd.f32 %v8510, %v8637
        %v8639 = vpop.f32.mrf.mxu0
        %8640 = vmatprep.mubr.f32.mxu0 %v8422
        %8641 = vmatmul.mubr.f32.gmra.mxu0 %v8421
        %v8642 = vpop.f32.mrf.mxu0
        %v8643 = vadd.f32 %v8510, %v8642
        %v8644 = vpop.f32.mrf.mxu0
        %8645 = vmatprep.mubr.f32.mxu0 %v8425
        %8646 = vmatmul.mubr.f32.gmra.mxu0 %v8424
        %v8647 = vpop.f32.mrf.mxu0
        %v8648 = vadd.f32 %v8510, %v8647
        %v8649 = vpop.f32.mrf.mxu0
        %8650 = vmatprep.mubr.f32.mxu0 %v8428
        %8651 = vmatmul.mubr.f32.gmra.mxu0 %v8427
        %v8652 = vpop.f32.mrf.mxu0
        %v8653 = vadd.f32 %v8510, %v8652
        %v8654 = vpop.f32.mrf.mxu0
        %8655 = vmatprep.mubr.f32.mxu0 %v8431
        %8656 = vmatmul.mubr.f32.gmra.mxu0 %v8430
        %v8657 = vpop.f32.mrf.mxu0
        %v8658 = vadd.f32 %v8510, %v8657
        %v8659 = vpop.f32.mrf.mxu0
        %8660 = vmatprep.mubr.f32.mxu0 %v8434
        %8661 = vmatmul.mubr.f32.gmra.mxu0 %v8433
        %v8662 = vpop.f32.mrf.mxu0
        %v8663 = vadd.f32 %v8510, %v8662
        %v8664 = vpop.f32.mrf.mxu0
        %8665 = vmatprep.mubr.f32.mxu0 %v8437
        %8666 = vmatmul.mubr.f32.gmra.mxu0 %v8436
        %v8667 = vpop.f32.mrf.mxu0
        %v8668 = vadd.f32 %v8510, %v8667
        %v8669 = vpop.f32.mrf.mxu0
        %8670 = vmatprep.mubr.f32.mxu0 %v8440
        %8671 = vmatmul.mubr.f32.gmra.mxu0 %v8439
        %v8672 = vpop.f32.mrf.mxu0
        %v8673 = vadd.f32 %v8510, %v8672
        %v8674 = vpop.f32.mrf.mxu0
        %8675 = vmatprep.mubr.f32.mxu0 %v8443
        %8676 = vmatmul.mubr.f32.gmra.mxu0 %v8442
        %v8677 = vpop.f32.mrf.mxu0
        %v8678 = vadd.f32 %v8510, %v8677
        %v8679 = vpop.f32.mrf.mxu0
        %8680 = vmatprep.mubr.f32.mxu0 %v8446
        %8681 = vmatmul.mubr.f32.gmra.mxu0 %v8445
        %v8682 = vpop.f32.mrf.mxu0
        %v8683 = vadd.f32 %v8510, %v8682
        %v8684 = vpop.f32.mrf.mxu0
        %8685 = vmatprep.mubr.f32.mxu0 %v8449
        %8686 = vmatmul.mubr.f32.gmra.mxu0 %v8448
        %v8687 = vpop.f32.mrf.mxu0
        %v8688 = vadd.f32 %v8510, %v8687
        %v8689 = vpop.f32.mrf.mxu0
        %8690 = vmatprep.mubr.f32.mxu0 %v8452
        %8691 = vmatmul.mubr.f32.gmra.mxu0 %v8451
        %v8692 = vpop.f32.mrf.mxu0
        %v8693 = vadd.f32 %v8510, %v8692
        %v8694 = vpop.f32.mrf.mxu0
        %8695 = vmatprep.mubr.f32.mxu0 %v8455
        %8696 = vmatmul.mubr.f32.gmra.mxu0 %v8454
        %v8697 = vpop.f32.mrf.mxu0
        %v8698 = vadd.f32 %v8510, %v8697
        %v8699 = vpop.f32.mrf.mxu0
        %8700 = vmatprep.mubr.f32.mxu0 %v8458
        %8701 = vmatmul.mubr.f32.gmra.mxu0 %v8457
        %v8702 = vpop.f32.mrf.mxu0
        %v8703 = vadd.f32 %v8510, %v8702
        %v8704 = vpop.f32.mrf.mxu0
        %8705 = vmatprep.mubr.f32.mxu0 %v8461
        %8706 = vmatmul.mubr.f32.gmra.mxu0 %v8460
        %v8707 = vpop.f32.mrf.mxu0
        %v8708 = vadd.f32 %v8510, %v8707
        %v8709 = vpop.f32.mrf.mxu0
        %8710 = vmatprep.mubr.f32.mxu0 %v8464
        %8711 = vmatmul.mubr.f32.gmra.mxu0 %v8463
        %v8712 = vpop.f32.mrf.mxu0
        %v8713 = vadd.f32 %v8510, %v8712
        %v8714 = vpop.f32.mrf.mxu0
        %8715 = vmatprep.mubr.f32.mxu0 %v8467
        %8716 = vmatmul.mubr.f32.gmra.mxu0 %v8466
        %v8717 = vpop.f32.mrf.mxu0
        %v8718 = vadd.f32 %v8510, %v8717
        %v8719 = vpop.f32.mrf.mxu0
        %8720 = vdwg.mxu0
        %8721 = vmatprep.subr.mxu0 0.0
        %8722 = vmatpush1.msra.mxu0 0.0
        %8723 = vmatprep.subr.mxu0 0.0
        %8724 = vmatpush1.msra.mxu0 0.0
        %8725 = vmatprep.subr.mxu0 0.0
        %8726 = vmatpush1.msra.mxu0 0.0
        %8727 = vmatprep.subr.mxu0 0.0
        %8728 = vmatpush1.msra.mxu0 0.0
        %8729 = vmatprep.subr.mxu0 0.0
        %8730 = vmatpush1.msra.mxu0 0.0
        %8731 = vmatprep.subr.mxu0 0.0
        %8732 = vmatpush1.msra.mxu0 0.0
        %8733 = vmatprep.subr.mxu0 0.0
        %8734 = vmatpush1.msra.mxu0 0.0
        %8735 = vmatprep.subr.mxu0 0.0
        %8736 = vmatpush1.msra.mxu0 0.0
        %8737 = vmatprep.subr.mxu0 0.0
        %8738 = vmatpush1.msra.mxu0 0.0
        %8739 = vmatprep.subr.mxu0 0.0
        %8740 = vmatpush1.msra.mxu0 0.0
        %8741 = vmatprep.subr.mxu0 0.0
        %8742 = vmatpush1.msra.mxu0 0.0
        %8743 = vmatprep.subr.mxu0 0.0
        %8744 = vmatpush1.msra.mxu0 0.0
        %8745 = vmatprep.subr.mxu0 0.0
        %8746 = vmatpush1.msra.mxu0 %v8504
        %8747 = vmatprep.subr.mxu0 0.0
        %8748 = vmatpush1.msra.mxu0 %v8503
        %8749 = vmatprep.subr.mxu0 0.0
        %8750 = vmatpush1.msra.mxu0 %v8502
        %8751 = vmatprep.subr.mxu0 0.0
        %8752 = vmatpush1.msra.mxu0 %v8501
        %8753 = vmatprep.subr.mxu0 0.0
        %8754 = vmatpush2.msra.mxu0 0.0
        %8755 = vmatprep.subr.mxu0 0.0
        %8756 = vmatpush2.msra.mxu0 0.0
        %8757 = vmatprep.subr.mxu0 0.0
        %8758 = vmatpush2.msra.mxu0 0.0
        %8759 = vmatprep.subr.mxu0 0.0
        %8760 = vmatpush2.msra.mxu0 0.0
        %8761 = vmatprep.subr.mxu0 0.0
        %8762 = vmatpush2.msra.mxu0 0.0
        %8763 = vmatprep.subr.mxu0 0.0
        %8764 = vmatpush2.msra.mxu0 0.0
        %8765 = vmatprep.subr.mxu0 0.0
        %8766 = vmatpush2.msra.mxu0 0.0
        %8767 = vmatprep.subr.mxu0 0.0
        %8768 = vmatpush2.msra.mxu0 0.0
        %8769 = vmatprep.subr.mxu0 0.0
        %8770 = vmatpush2.msra.mxu0 0.0
        %8771 = vmatprep.subr.mxu0 0.0
        %8772 = vmatpush2.msra.mxu0 0.0
        %8773 = vmatprep.subr.mxu0 0.0
        %8774 = vmatpush2.msra.mxu0 0.0
        %8775 = vmatprep.subr.mxu0 0.0
        %8776 = vmatpush2.msra.mxu0 0.0
        %8777 = vmatprep.subr.mxu0 0.0
        %8778 = vmatpush2.msra.mxu0 0.0
        %8779 = vmatprep.subr.mxu0 0.0
        %8780 = vmatpush2.msra.mxu0 0.0
        %8781 = vmatprep.subr.mxu0 0.0
        %8782 = vmatpush2.msra.mxu0 0.0
        %8783 = vmatprep.subr.mxu0 0.0
        %8784 = vmatpush2.msra.mxu0 0.0
        %8785 = vmatprep.mubr.f32.mxu0 0.0
        %8786 = vmatmul.mubr.f32.gmra.mxu0 %v8513
        %v8787 = vpop.f32.mrf.mxu0
        %v8788 = vadd.f32 %v8633, %v8787
        %v8789 = vpop.f32.mrf.mxu0
        %8790 = vmatprep.mubr.f32.mxu0 0.0
        %8791 = vmatmul.mubr.f32.gmra.mxu0 %v8516
        %v8792 = vpop.f32.mrf.mxu0
        %v8793 = vadd.f32 %v8638, %v8792
        %v8794 = vpop.f32.mrf.mxu0
        %8795 = vmatprep.mubr.f32.mxu0 0.0
        %8796 = vmatmul.mubr.f32.gmra.mxu0 %v8519
        %v8797 = vpop.f32.mrf.mxu0
        %v8798 = vadd.f32 %v8643, %v8797
        %v8799 = vpop.f32.mrf.mxu0
        %8800 = vmatprep.mubr.f32.mxu0 0.0
        %8801 = vmatmul.mubr.f32.gmra.mxu0 %v8522
        %v8802 = vpop.f32.mrf.mxu0
        %v8803 = vadd.f32 %v8648, %v8802
        %v8804 = vpop.f32.mrf.mxu0
        %8805 = vmatprep.mubr.f32.mxu0 0.0
        %8806 = vmatmul.mubr.f32.gmra.mxu0 %v8525
        %v8807 = vpop.f32.mrf.mxu0
        %v8808 = vadd.f32 %v8653, %v8807
        %v8809 = vpop.f32.mrf.mxu0
        %8810 = vmatprep.mubr.f32.mxu0 0.0
        %8811 = vmatmul.mubr.f32.gmra.mxu0 %v8528
        %v8812 = vpop.f32.mrf.mxu0
        %v8813 = vadd.f32 %v8658, %v8812
        %v8814 = vpop.f32.mrf.mxu0
        %8815 = vmatprep.mubr.f32.mxu0 0.0
        %8816 = vmatmul.mubr.f32.gmra.mxu0 %v8531
        %v8817 = vpop.f32.mrf.mxu0
        %v8818 = vadd.f32 %v8663, %v8817
        %v8819 = vpop.f32.mrf.mxu0
        %8820 = vmatprep.mubr.f32.mxu0 0.0
        %8821 = vmatmul.mubr.f32.gmra.mxu0 %v8534
        %v8822 = vpop.f32.mrf.mxu0
        %v8823 = vadd.f32 %v8668, %v8822
        %v8824 = vpop.f32.mrf.mxu0
        %8825 = vmatprep.mubr.f32.mxu0 0.0
        %8826 = vmatmul.mubr.f32.gmra.mxu0 %v8537
        %v8827 = vpop.f32.mrf.mxu0
        %v8828 = vadd.f32 %v8673, %v8827
        %v8829 = vpop.f32.mrf.mxu0
        %8830 = vmatprep.mubr.f32.mxu0 0.0
        %8831 = vmatmul.mubr.f32.gmra.mxu0 %v8540
        %v8832 = vpop.f32.mrf.mxu0
        %v8833 = vadd.f32 %v8678, %v8832
        %v8834 = vpop.f32.mrf.mxu0
        %8835 = vmatprep.mubr.f32.mxu0 0.0
        %8836 = vmatmul.mubr.f32.gmra.mxu0 %v8543
        %v8837 = vpop.f32.mrf.mxu0
        %v8838 = vadd.f32 %v8683, %v8837
        %v8839 = vpop.f32.mrf.mxu0
        %8840 = vmatprep.mubr.f32.mxu0 0.0
        %8841 = vmatmul.mubr.f32.gmra.mxu0 %v8546
        %v8842 = vpop.f32.mrf.mxu0
        %v8843 = vadd.f32 %v8688, %v8842
        %v8844 = vpop.f32.mrf.mxu0
        %8845 = vmatprep.mubr.f32.mxu0 0.0
        %8846 = vmatmul.mubr.f32.gmra.mxu0 %v8549
        %v8847 = vpop.f32.mrf.mxu0
        %v8848 = vadd.f32 %v8693, %v8847
        %v8849 = vpop.f32.mrf.mxu0
        %8850 = vmatprep.mubr.f32.mxu0 0.0
        %8851 = vmatmul.mubr.f32.gmra.mxu0 %v8552
        %v8852 = vpop.f32.mrf.mxu0
        %v8853 = vadd.f32 %v8698, %v8852
        %v8854 = vpop.f32.mrf.mxu0
        %8855 = vmatprep.mubr.f32.mxu0 0.0
        %8856 = vmatmul.mubr.f32.gmra.mxu0 %v8555
        %v8857 = vpop.f32.mrf.mxu0
        %v8858 = vadd.f32 %v8703, %v8857
        %v8859 = vpop.f32.mrf.mxu0
        %8860 = vmatprep.mubr.f32.mxu0 0.0
        %8861 = vmatmul.mubr.f32.gmra.mxu0 %v8558
        %v8862 = vpop.f32.mrf.mxu0
        %v8863 = vadd.f32 %v8708, %v8862
        %v8864 = vpop.f32.mrf.mxu0
        %8865 = vmatprep.mubr.f32.mxu0 0.0
        %8866 = vmatmul.mubr.f32.gmra.mxu0 %v8561
        %v8867 = vpop.f32.mrf.mxu0
        %v8868 = vadd.f32 %v8713, %v8867
        %v8869 = vpop.f32.mrf.mxu0
        %8870 = vmatprep.mubr.f32.mxu0 0.0
        %8871 = vmatmul.mubr.f32.gmra.mxu0 %v8564
        %v8872 = vpop.f32.mrf.mxu0
        %v8873 = vadd.f32 %v8718, %v8872
        %v8874 = vpop.f32.mrf.mxu0
        %8875 = vdwg.mxu0
        %v8876 = vmax.f32 %v8788, 0.0
        %v8877 = vmax.f32 %v8793, 0.0
        %v8878 = vmax.f32 %v8798, 0.0
        %v8879 = vmax.f32 %v8803, 0.0
        %v8880 = vmax.f32 %v8808, 0.0
        %v8881 = vmax.f32 %v8813, 0.0
        %v8882 = vmax.f32 %v8818, 0.0
        %v8883 = vmax.f32 %v8823, 0.0
        %v8884 = vmax.f32 %v8828, 0.0
        %v8885 = vmax.f32 %v8833, 0.0
        %v8886 = vmax.f32 %v8838, 0.0
        %v8887 = vmax.f32 %v8843, 0.0
        %v8888 = vmax.f32 %v8848, 0.0
        %v8889 = vmax.f32 %v8853, 0.0
        %v8890 = vmax.f32 %v8858, 0.0
        %v8891 = vmax.f32 %v8863, 0.0
        %v8892 = vmax.f32 %v8868, 0.0
        %v8893 = vmax.f32 %v8873, 0.0
        %vm8894 = vcmask 523264
        %8895 = vst.msk [vmem:[#allocation6] sm:$0xff] %vm8894, %v8876
        %8896 = vst.msk [vmem:[#allocation6 + $0x8] sm:$0xff] %vm8894, %v8877
        %8897 = vst.msk [vmem:[#allocation6 + $0x10] sm:$0xff] %vm8894, %v8878
        %8898 = vst.msk [vmem:[#allocation6 + $0x18] sm:$0xff] %vm8894, %v8879
        %8899 = vst.msk [vmem:[#allocation6 + $0x20] sm:$0xff] %vm8894, %v8880
        %8900 = vst.msk [vmem:[#allocation6 + $0x28] sm:$0xff] %vm8894, %v8881
        %8901 = vst.msk [vmem:[#allocation6 + $0x30] sm:$0xff] %vm8894, %v8882
        %8902 = vst.msk [vmem:[#allocation6 + $0x38] sm:$0xff] %vm8894, %v8883
        %8903 = vst.msk [vmem:[#allocation6 + $0x40] sm:$0xff] %vm8894, %v8884
        %8904 = vst.msk [vmem:[#allocation6 + $0x48] sm:$0xff] %vm8894, %v8885
        %8905 = vst.msk [vmem:[#allocation6 + $0x50] sm:$0xff] %vm8894, %v8886
        %8906 = vst.msk [vmem:[#allocation6 + $0x58] sm:$0xff] %vm8894, %v8887
        %8907 = vst.msk [vmem:[#allocation6 + $0x60] sm:$0xff] %vm8894, %v8888
        %8908 = vst.msk [vmem:[#allocation6 + $0x68] sm:$0xff] %vm8894, %v8889
        %8909 = vst.msk [vmem:[#allocation6 + $0x70] sm:$0xff] %vm8894, %v8890
        %8910 = vst.msk [vmem:[#allocation6 + $0x78] sm:$0xff] %vm8894, %v8891
        %8911 = vst.msk [vmem:[#allocation6 + $0x80] sm:$0xff] %vm8894, %v8892
        %vm8912 = vcmask 520192
        %8913 = vst.msk [vmem:[#allocation6 + $0x88] sm:$0x1f] %vm8912, %v8893
        %v8914 = vld [vmem:[#allocation6] sm:$0xff]
        %v8915 = vld [vmem:[#allocation6 + $0x8] sm:$0xff]
        %v8916 = vld [vmem:[#allocation6 + $0x10] sm:$0xff]
        %v8917 = vld [vmem:[#allocation6 + $0x18] sm:$0xff]
        %v8918 = vld [vmem:[#allocation6 + $0x20] sm:$0xff]
        %v8919 = vld [vmem:[#allocation6 + $0x28] sm:$0xff]
        %v8920 = vld [vmem:[#allocation6 + $0x30] sm:$0xff]
        %v8921 = vld [vmem:[#allocation6 + $0x38] sm:$0xff]
        %v8922 = vld [vmem:[#allocation6 + $0x40] sm:$0xff]
        %v8923 = vld [vmem:[#allocation6 + $0x48] sm:$0xff]
        %v8924 = vld [vmem:[#allocation6 + $0x50] sm:$0xff]
        %v8925 = vld [vmem:[#allocation6 + $0x58] sm:$0xff]
        %v8926 = vld [vmem:[#allocation6 + $0x60] sm:$0xff]
        %v8927 = vld [vmem:[#allocation6 + $0x68] sm:$0xff]
        %v8928 = vld [vmem:[#allocation6 + $0x70] sm:$0x7]
        %v8929 = vld [vmem:[#allocation6 + $0xd] sm:$0xff]
        %v8930 = vld [vmem:[#allocation6 + $0x15] sm:$0xff]
        %v8931 = vld [vmem:[#allocation6 + $0x1d] sm:$0xff]
        %v8932 = vld [vmem:[#allocation6 + $0x25] sm:$0xff]
        %v8933 = vld [vmem:[#allocation6 + $0x2d] sm:$0xff]
        %v8934 = vld [vmem:[#allocation6 + $0x35] sm:$0xff]
        %v8935 = vld [vmem:[#allocation6 + $0x3d] sm:$0xff]
        %v8936 = vld [vmem:[#allocation6 + $0x45] sm:$0xff]
        %v8937 = vld [vmem:[#allocation6 + $0x4d] sm:$0xff]
        %v8938 = vld [vmem:[#allocation6 + $0x55] sm:$0xff]
        %v8939 = vld [vmem:[#allocation6 + $0x5d] sm:$0xff]
        %v8940 = vld [vmem:[#allocation6 + $0x65] sm:$0xff]
        %v8941 = vld [vmem:[#allocation6 + $0x6d] sm:$0xff]
        %v8942 = vld [vmem:[#allocation6 + $0x75] sm:$0xff]
        %v8943 = vld [vmem:[#allocation6 + $0x7d] sm:$0x7]
        %v8944 = vmax.f32 %v8914, %v8929
        %v8945 = vmax.f32 %v8915, %v8930
        %v8946 = vmax.f32 %v8916, %v8931
        %v8947 = vmax.f32 %v8917, %v8932
        %v8948 = vmax.f32 %v8918, %v8933
        %v8949 = vmax.f32 %v8919, %v8934
        %v8950 = vmax.f32 %v8920, %v8935
        %v8951 = vmax.f32 %v8921, %v8936
        %v8952 = vmax.f32 %v8922, %v8937
        %v8953 = vmax.f32 %v8923, %v8938
        %v8954 = vmax.f32 %v8924, %v8939
        %v8955 = vmax.f32 %v8925, %v8940
        %v8956 = vmax.f32 %v8926, %v8941
        %v8957 = vmax.f32 %v8927, %v8942
        %v8958 = vmax.f32 %v8928, %v8943
        %8959 = vst.msk [vmem:[#allocation7] sm:$0xff] %vm8894, %v8944
        %8960 = vst.msk [vmem:[#allocation7 + $0x8] sm:$0xff] %vm8894, %v8945
        %8961 = vst.msk [vmem:[#allocation7 + $0x10] sm:$0xff] %vm8894, %v8946
        %8962 = vst.msk [vmem:[#allocation7 + $0x18] sm:$0xff] %vm8894, %v8947
        %8963 = vst.msk [vmem:[#allocation7 + $0x20] sm:$0xff] %vm8894, %v8948
        %8964 = vst.msk [vmem:[#allocation7 + $0x28] sm:$0xff] %vm8894, %v8949
        %8965 = vst.msk [vmem:[#allocation7 + $0x30] sm:$0xff] %vm8894, %v8950
        %8966 = vst.msk [vmem:[#allocation7 + $0x38] sm:$0xff] %vm8894, %v8951
        %8967 = vst.msk [vmem:[#allocation7 + $0x40] sm:$0xff] %vm8894, %v8952
        %8968 = vst.msk [vmem:[#allocation7 + $0x48] sm:$0xff] %vm8894, %v8953
        %8969 = vst.msk [vmem:[#allocation7 + $0x50] sm:$0xff] %vm8894, %v8954
        %8970 = vst.msk [vmem:[#allocation7 + $0x58] sm:$0xff] %vm8894, %v8955
        %8971 = vst.msk [vmem:[#allocation7 + $0x60] sm:$0xff] %vm8894, %v8956
        %8972 = vst.msk [vmem:[#allocation7 + $0x68] sm:$0xff] %vm8894, %v8957
        %vm8973 = vcmask 518144
        %8974 = vst.msk [vmem:[#allocation7 + $0x70] sm:$0x7] %vm8973, %v8958
        %v8975 = vld [vmem:[#allocation7] sm:$0x1]
        %v8976 = vld [vmem:[#allocation7 + $0x1] sm:$0x1]
        %v8977 = vmax.f32 %v8975, %v8976
        %v8978 = vlaneseq
        %vm8979 = vcmp.ge.s32.totalorder %v8978, 0
        %vm8980 = vcmp.lt.s32.totalorder %v8978, 64
        %vm8981 = vmand %vm8979, %vm8980
        %8982 = vst.msk [vmem:[#allocation8] sm:$0x1] %vm8981, %v8977
        %v8983 = vld [vmem:[#allocation7 + $0x2] sm:$0x1]
        %v8984 = vld [vmem:[#allocation7 + $0x3] sm:$0x1]
        %v8985 = vmax.f32 %v8983, %v8984
        %v8988 = vunpack.c.l.s4 1966171168
        %v8989 = vunpack.c.0.s8 %v8988
        %v8990 = vlaneseq
        %v8991 = vshrl.u32 %v8990, 7
        %v8992 = vsub.s32 %v8989, %v8991
        %v8993 = vrot.slane %v8985, %v8992
        %v8995 = vunpack.c.l.s4 1966171168
        %v8996 = vunpack.c.0.s8 %v8995
        %v8997 = vlaneseq
        %v8998 = vshrl.u32 %v8997, 7
        %v8999 = vsub.s32 %v8996, %v8998
        %v9000 = vrot.slane %v8993, %v8999
        %9001 = vrot.lane.b32.xlu0 %v9000, 64
        %v9002 = vpop.permute.xlu0 %9001
        %vm9004 = vcmp.ge.s32.totalorder %v8978, 64
        %vm9005 = vcmp.lt.s32.totalorder %v8978, 128
        %vm9006 = vmand %vm9004, %vm9005
        %9007 = vst.msk [vmem:[#allocation8] sm:$0x1] %vm9006, %v9002
        %v9008 = vld [vmem:[#allocation7 + $0x4] sm:$0x1]
        %v9009 = vld [vmem:[#allocation7 + $0x5] sm:$0x1]
        %v9010 = vmax.f32 %v9008, %v9009
        %9011 = vst.msk [vmem:[#allocation8 + $0x1] sm:$0x1] %vm8981, %v9010
        %v9012 = vld [vmem:[#allocation7 + $0x6] sm:$0x1]
        %v9013 = vld [vmem:[#allocation7 + $0x7] sm:$0x1]
        %v9014 = vmax.f32 %v9012, %v9013
        %v9017 = vunpack.c.l.s4 1966171168
        %v9018 = vunpack.c.0.s8 %v9017
        %v9019 = vlaneseq
        %v9020 = vshrl.u32 %v9019, 7
        %v9021 = vsub.s32 %v9018, %v9020
        %v9022 = vrot.slane %v9014, %v9021
        %v9024 = vunpack.c.l.s4 1966171168
        %v9025 = vunpack.c.0.s8 %v9024
        %v9026 = vlaneseq
        %v9027 = vshrl.u32 %v9026, 7
        %v9028 = vsub.s32 %v9025, %v9027
        %v9029 = vrot.slane %v9022, %v9028
        %9030 = vrot.lane.b32.xlu0 %v9029, 64
        %v9031 = vpop.permute.xlu0 %9030
        %9033 = vst.msk [vmem:[#allocation8 + $0x1] sm:$0x1] %vm9006, %v9031
        %v9034 = vld [vmem:[#allocation7 + $0x8] sm:$0x1]
        %v9035 = vld [vmem:[#allocation7 + $0x9] sm:$0x1]
        %v9036 = vmax.f32 %v9034, %v9035
        %9037 = vst.msk [vmem:[#allocation8 + $0x2] sm:$0x1] %vm8981, %v9036
        %v9038 = vld [vmem:[#allocation7 + $0x1a] sm:$0x1]
        %v9039 = vld [vmem:[#allocation7 + $0x1b] sm:$0x1]
        %v9040 = vmax.f32 %v9038, %v9039
        %v9043 = vunpack.c.l.s4 1966171168
        %v9044 = vunpack.c.0.s8 %v9043
        %v9045 = vlaneseq
        %v9046 = vshrl.u32 %v9045, 7
        %v9047 = vsub.s32 %v9044, %v9046
        %v9048 = vrot.slane %v9040, %v9047
        %v9050 = vunpack.c.l.s4 1966171168
        %v9051 = vunpack.c.0.s8 %v9050
        %v9052 = vlaneseq
        %v9053 = vshrl.u32 %v9052, 7
        %v9054 = vsub.s32 %v9051, %v9053
        %v9055 = vrot.slane %v9048, %v9054
        %9056 = vrot.lane.b32.xlu0 %v9055, 64
        %v9057 = vpop.permute.xlu0 %9056
        %9059 = vst.msk [vmem:[#allocation8 + $0x2] sm:$0x1] %vm9006, %v9057
        %v9060 = vld [vmem:[#allocation7 + $0x1c] sm:$0x1]
        %v9061 = vld [vmem:[#allocation7 + $0x1d] sm:$0x1]
        %v9062 = vmax.f32 %v9060, %v9061
        %9063 = vst.msk [vmem:[#allocation8 + $0x3] sm:$0x1] %vm8981, %v9062
        %v9064 = vld [vmem:[#allocation7 + $0x1e] sm:$0x1]
        %v9065 = vld [vmem:[#allocation7 + $0x1f] sm:$0x1]
        %v9066 = vmax.f32 %v9064, %v9065
        %v9069 = vunpack.c.l.s4 1966171168
        %v9070 = vunpack.c.0.s8 %v9069
        %v9071 = vlaneseq
        %v9072 = vshrl.u32 %v9071, 7
        %v9073 = vsub.s32 %v9070, %v9072
        %v9074 = vrot.slane %v9066, %v9073
        %v9076 = vunpack.c.l.s4 1966171168
        %v9077 = vunpack.c.0.s8 %v9076
        %v9078 = vlaneseq
        %v9079 = vshrl.u32 %v9078, 7
        %v9080 = vsub.s32 %v9077, %v9079
        %v9081 = vrot.slane %v9074, %v9080
        %9082 = vrot.lane.b32.xlu0 %v9081, 64
        %v9083 = vpop.permute.xlu0 %9082
        %9085 = vst.msk [vmem:[#allocation8 + $0x3] sm:$0x1] %vm9006, %v9083
        %v9086 = vld [vmem:[#allocation7 + $0x20] sm:$0x1]
        %v9087 = vld [vmem:[#allocation7 + $0x21] sm:$0x1]
        %v9088 = vmax.f32 %v9086, %v9087
        %9089 = vst.msk [vmem:[#allocation8 + $0x4] sm:$0x1] %vm8981, %v9088
        %v9090 = vld [vmem:[#allocation7 + $0x22] sm:$0x1]
        %v9091 = vld [vmem:[#allocation7 + $0x23] sm:$0x1]
        %v9092 = vmax.f32 %v9090, %v9091
        %v9095 = vunpack.c.l.s4 1966171168
        %v9096 = vunpack.c.0.s8 %v9095
        %v9097 = vlaneseq
        %v9098 = vshrl.u32 %v9097, 7
        %v9099 = vsub.s32 %v9096, %v9098
        %v9100 = vrot.slane %v9092, %v9099
        %v9102 = vunpack.c.l.s4 1966171168
        %v9103 = vunpack.c.0.s8 %v9102
        %v9104 = vlaneseq
        %v9105 = vshrl.u32 %v9104, 7
        %v9106 = vsub.s32 %v9103, %v9105
        %v9107 = vrot.slane %v9100, %v9106
        %9108 = vrot.lane.b32.xlu0 %v9107, 64
        %v9109 = vpop.permute.xlu0 %9108
        %9111 = vst.msk [vmem:[#allocation8 + $0x4] sm:$0x1] %vm9006, %v9109
        %v9112 = vld [vmem:[#allocation7 + $0x34] sm:$0x1]
        %v9113 = vld [vmem:[#allocation7 + $0x35] sm:$0x1]
        %v9114 = vmax.f32 %v9112, %v9113
        %9115 = vst.msk [vmem:[#allocation8 + $0x5] sm:$0x1] %vm8981, %v9114
        %v9116 = vld [vmem:[#allocation7 + $0x36] sm:$0x1]
        %v9117 = vld [vmem:[#allocation7 + $0x37] sm:$0x1]
        %v9118 = vmax.f32 %v9116, %v9117
        %v9121 = vunpack.c.l.s4 1966171168
        %v9122 = vunpack.c.0.s8 %v9121
        %v9123 = vlaneseq
        %v9124 = vshrl.u32 %v9123, 7
        %v9125 = vsub.s32 %v9122, %v9124
        %v9126 = vrot.slane %v9118, %v9125
        %v9128 = vunpack.c.l.s4 1966171168
        %v9129 = vunpack.c.0.s8 %v9128
        %v9130 = vlaneseq
        %v9131 = vshrl.u32 %v9130, 7
        %v9132 = vsub.s32 %v9129, %v9131
        %v9133 = vrot.slane %v9126, %v9132
        %9134 = vrot.lane.b32.xlu0 %v9133, 64
        %v9135 = vpop.permute.xlu0 %9134
        %9137 = vst.msk [vmem:[#allocation8 + $0x5] sm:$0x1] %vm9006, %v9135
        %v9138 = vld [vmem:[#allocation7 + $0x38] sm:$0x1]
        %v9139 = vld [vmem:[#allocation7 + $0x39] sm:$0x1]
        %v9140 = vmax.f32 %v9138, %v9139
        %9141 = vst.msk [vmem:[#allocation8 + $0x6] sm:$0x1] %vm8981, %v9140
        %v9142 = vld [vmem:[#allocation7 + $0x3a] sm:$0x1]
        %v9143 = vld [vmem:[#allocation7 + $0x3b] sm:$0x1]
        %v9144 = vmax.f32 %v9142, %v9143
        %v9147 = vunpack.c.l.s4 1966171168
        %v9148 = vunpack.c.0.s8 %v9147
        %v9149 = vlaneseq
        %v9150 = vshrl.u32 %v9149, 7
        %v9151 = vsub.s32 %v9148, %v9150
        %v9152 = vrot.slane %v9144, %v9151
        %v9154 = vunpack.c.l.s4 1966171168
        %v9155 = vunpack.c.0.s8 %v9154
        %v9156 = vlaneseq
        %v9157 = vshrl.u32 %v9156, 7
        %v9158 = vsub.s32 %v9155, %v9157
        %v9159 = vrot.slane %v9152, %v9158
        %9160 = vrot.lane.b32.xlu0 %v9159, 64
        %v9161 = vpop.permute.xlu0 %9160
        %9163 = vst.msk [vmem:[#allocation8 + $0x6] sm:$0x1] %vm9006, %v9161
        %v9164 = vld [vmem:[#allocation7 + $0x3c] sm:$0x1]
        %v9165 = vld [vmem:[#allocation7 + $0x3d] sm:$0x1]
        %v9166 = vmax.f32 %v9164, %v9165
        %9167 = vst.msk [vmem:[#allocation8 + $0x7] sm:$0x1] %vm8981, %v9166
        %v9168 = vld [vmem:[#allocation7 + $0x4e] sm:$0x1]
        %v9169 = vld [vmem:[#allocation7 + $0x4f] sm:$0x1]
        %v9170 = vmax.f32 %v9168, %v9169
        %v9173 = vunpack.c.l.s4 1966171168
        %v9174 = vunpack.c.0.s8 %v9173
        %v9175 = vlaneseq
        %v9176 = vshrl.u32 %v9175, 7
        %v9177 = vsub.s32 %v9174, %v9176
        %v9178 = vrot.slane %v9170, %v9177
        %v9180 = vunpack.c.l.s4 1966171168
        %v9181 = vunpack.c.0.s8 %v9180
        %v9182 = vlaneseq
        %v9183 = vshrl.u32 %v9182, 7
        %v9184 = vsub.s32 %v9181, %v9183
        %v9185 = vrot.slane %v9178, %v9184
        %9186 = vrot.lane.b32.xlu0 %v9185, 64
        %v9187 = vpop.permute.xlu0 %9186
        %9189 = vst.msk [vmem:[#allocation8 + $0x7] sm:$0x1] %vm9006, %v9187
        %v9190 = vld [vmem:[#allocation7 + $0x50] sm:$0x1]
        %v9191 = vld [vmem:[#allocation7 + $0x51] sm:$0x1]
        %v9192 = vmax.f32 %v9190, %v9191
        %9193 = vst.msk [vmem:[#allocation8 + $0x8] sm:$0x1] %vm8981, %v9192
        %v9194 = vld [vmem:[#allocation7 + $0x52] sm:$0x1]
        %v9195 = vld [vmem:[#allocation7 + $0x53] sm:$0x1]
        %v9196 = vmax.f32 %v9194, %v9195
        %v9199 = vunpack.c.l.s4 1966171168
        %v9200 = vunpack.c.0.s8 %v9199
        %v9201 = vlaneseq
        %v9202 = vshrl.u32 %v9201, 7
        %v9203 = vsub.s32 %v9200, %v9202
        %v9204 = vrot.slane %v9196, %v9203
        %v9206 = vunpack.c.l.s4 1966171168
        %v9207 = vunpack.c.0.s8 %v9206
        %v9208 = vlaneseq
        %v9209 = vshrl.u32 %v9208, 7
        %v9210 = vsub.s32 %v9207, %v9209
        %v9211 = vrot.slane %v9204, %v9210
        %9212 = vrot.lane.b32.xlu0 %v9211, 64
        %v9213 = vpop.permute.xlu0 %9212
        %9215 = vst.msk [vmem:[#allocation8 + $0x8] sm:$0x1] %vm9006, %v9213
        %v9216 = vld [vmem:[#allocation7 + $0x54] sm:$0x1]
        %v9217 = vld [vmem:[#allocation7 + $0x55] sm:$0x1]
        %v9218 = vmax.f32 %v9216, %v9217
        %9219 = vst.msk [vmem:[#allocation8 + $0x9] sm:$0x1] %vm8981, %v9218
        %v9220 = vld [vmem:[#allocation7 + $0x56] sm:$0x1]
        %v9221 = vld [vmem:[#allocation7 + $0x57] sm:$0x1]
        %v9222 = vmax.f32 %v9220, %v9221
        %v9225 = vunpack.c.l.s4 1966171168
        %v9226 = vunpack.c.0.s8 %v9225
        %v9227 = vlaneseq
        %v9228 = vshrl.u32 %v9227, 7
        %v9229 = vsub.s32 %v9226, %v9228
        %v9230 = vrot.slane %v9222, %v9229
        %v9232 = vunpack.c.l.s4 1966171168
        %v9233 = vunpack.c.0.s8 %v9232
        %v9234 = vlaneseq
        %v9235 = vshrl.u32 %v9234, 7
        %v9236 = vsub.s32 %v9233, %v9235
        %v9237 = vrot.slane %v9230, %v9236
        %9238 = vrot.lane.b32.xlu0 %v9237, 64
        %v9239 = vpop.permute.xlu0 %9238
        %9241 = vst.msk [vmem:[#allocation8 + $0x9] sm:$0x1] %vm9006, %v9239
        %v9242 = vld [vmem:[#allocation7 + $0x68] sm:$0x1]
        %v9243 = vld [vmem:[#allocation7 + $0x69] sm:$0x1]
        %v9244 = vmax.f32 %v9242, %v9243
        %9245 = vst.msk [vmem:[#allocation8 + $0xa] sm:$0x1] %vm8981, %v9244
        %v9246 = vld [vmem:[#allocation7 + $0x6a] sm:$0x1]
        %v9247 = vld [vmem:[#allocation7 + $0x6b] sm:$0x1]
        %v9248 = vmax.f32 %v9246, %v9247
        %v9251 = vunpack.c.l.s4 1966171168
        %v9252 = vunpack.c.0.s8 %v9251
        %v9253 = vlaneseq
        %v9254 = vshrl.u32 %v9253, 7
        %v9255 = vsub.s32 %v9252, %v9254
        %v9256 = vrot.slane %v9248, %v9255
        %v9258 = vunpack.c.l.s4 1966171168
        %v9259 = vunpack.c.0.s8 %v9258
        %v9260 = vlaneseq
        %v9261 = vshrl.u32 %v9260, 7
        %v9262 = vsub.s32 %v9259, %v9261
        %v9263 = vrot.slane %v9256, %v9262
        %9264 = vrot.lane.b32.xlu0 %v9263, 64
        %v9265 = vpop.permute.xlu0 %9264
        %9267 = vst.msk [vmem:[#allocation8 + $0xa] sm:$0x1] %vm9006, %v9265
        %v9268 = vld [vmem:[#allocation7 + $0x6c] sm:$0x1]
        %v9269 = vld [vmem:[#allocation7 + $0x6d] sm:$0x1]
        %v9270 = vmax.f32 %v9268, %v9269
        %9271 = vst.msk [vmem:[#allocation8 + $0xb] sm:$0x1] %vm8981, %v9270
        %v9272 = vld [vmem:[#allocation7 + $0x6e] sm:$0x1]
        %v9273 = vld [vmem:[#allocation7 + $0x6f] sm:$0x1]
        %v9274 = vmax.f32 %v9272, %v9273
        %v9277 = vunpack.c.l.s4 1966171168
        %v9278 = vunpack.c.0.s8 %v9277
        %v9279 = vlaneseq
        %v9280 = vshrl.u32 %v9279, 7
        %v9281 = vsub.s32 %v9278, %v9280
        %v9282 = vrot.slane %v9274, %v9281
        %v9284 = vunpack.c.l.s4 1966171168
        %v9285 = vunpack.c.0.s8 %v9284
        %v9286 = vlaneseq
        %v9287 = vshrl.u32 %v9286, 7
        %v9288 = vsub.s32 %v9285, %v9287
        %v9289 = vrot.slane %v9282, %v9288
        %9290 = vrot.lane.b32.xlu0 %v9289, 64
        %v9291 = vpop.permute.xlu0 %9290
        %9293 = vst.msk [vmem:[#allocation8 + $0xb] sm:$0x1] %vm9006, %v9291
        %v9294 = vld [vmem:[#allocation7 + $0x70] sm:$0x1]
        %v9295 = vld [vmem:[#allocation7 + $0x71] sm:$0x1]
        %v9296 = vmax.f32 %v9294, %v9295
        %9297 = vst.msk [vmem:[#allocation8 + $0xc] sm:$0x1] %vm8981, %v9296
        %v9298 = vld [vmem:[#allocation8] sm:$0xff]
        %v9299 = vld [vmem:[#allocation8 + $0x8] sm:$0x1f]
        %v9300 = vld [vmem:[%s5] sm:$0xff]
        %v9301 = vld [vmem:[%s5 + $0x8] sm:$0xff]
        %v9302 = vld [vmem:[%s5 + $0x10] sm:$0xff]
        %v9303 = vld [vmem:[%s5 + $0x18] sm:$0xff]
        %v9304 = vld [vmem:[%s5 + $0x20] sm:$0xff]
        %v9305 = vld [vmem:[%s5 + $0x28] sm:$0xff]
        %v9306 = vld [vmem:[%s5 + $0x30] sm:$0xff]
        %v9307 = vld [vmem:[%s5 + $0x38] sm:$0xff]
        %v9308 = vld [vmem:[%s5 + $0x40] sm:$0xff]
        %v9309 = vld [vmem:[%s5 + $0x48] sm:$0xff]
        %v9310 = vld [vmem:[%s5 + $0x50] sm:$0xff]
        %v9311 = vld [vmem:[%s5 + $0x58] sm:$0xff]
        %v9312 = vld [vmem:[%s5 + $0x60] sm:$0xff]
        %v9313 = vld [vmem:[%s5 + $0x68] sm:$0xff]
        %v9314 = vld [vmem:[%s5 + $0x70] sm:$0xff]
        %v9315 = vld [vmem:[%s5 + $0x78] sm:$0xff]
        %v9316 = vld [vmem:[%s5 + $0x80] sm:$0xff]
        %v9317 = vld [vmem:[%s5 + $0x88] sm:$0xff]
        %v9318 = vld [vmem:[%s5 + $0x90] sm:$0xff]
        %v9319 = vld [vmem:[%s5 + $0x98] sm:$0xff]
        %v9320 = vld [vmem:[%s5 + $0xa0] sm:$0xff]
        %v9321 = vld [vmem:[%s5 + $0xa8] sm:$0xff]
        %v9322 = vld [vmem:[%s5 + $0xb0] sm:$0xff]
        %v9323 = vld [vmem:[%s5 + $0xb8] sm:$0xff]
        %v9324 = vld [vmem:[%s5 + $0xc0] sm:$0xff]
        %v9325 = vld [vmem:[%s5 + $0xc8] sm:$0xff]
        %v9326 = vld [vmem:[%s5 + $0xd0] sm:$0xff]
        %v9327 = vld [vmem:[%s5 + $0xd8] sm:$0xff]
        %v9328 = vld [vmem:[%s5 + $0xe0] sm:$0xff]
        %v9329 = vld [vmem:[%s5 + $0xe8] sm:$0xff]
        %v9330 = vld [vmem:[%s5 + $0xf0] sm:$0xff]
        %v9331 = vld [vmem:[%s5 + $0xf8] sm:$0xff]
        %v9332 = vld [vmem:[%s5 + $0x100] sm:$0xff]
        %v9333 = vld [vmem:[%s5 + $0x108] sm:$0xff]
        %v9334 = vld [vmem:[%s5 + $0x110] sm:$0xff]
        %v9335 = vld [vmem:[%s5 + $0x118] sm:$0xff]
        %v9336 = vld [vmem:[%s5 + $0x120] sm:$0xff]
        %v9337 = vld [vmem:[%s5 + $0x128] sm:$0xff]
        %v9338 = vld [vmem:[%s5 + $0x130] sm:$0xff]
        %v9339 = vld [vmem:[%s5 + $0x138] sm:$0xff]
        %v9340 = vld [vmem:[%s5 + $0x140] sm:$0xff]
        %v9341 = vld [vmem:[%s5 + $0x148] sm:$0xff]
        %v9342 = vld [vmem:[%s5 + $0x150] sm:$0xff]
        %v9343 = vld [vmem:[%s5 + $0x158] sm:$0xff]
        %v9344 = vld [vmem:[%s5 + $0x160] sm:$0xff]
        %v9345 = vld [vmem:[%s5 + $0x168] sm:$0xff]
        %v9346 = vld [vmem:[%s5 + $0x170] sm:$0xff]
        %v9347 = vld [vmem:[%s5 + $0x178] sm:$0xff]
        %v9348 = vld [vmem:[%s5 + $0x180] sm:$0xff]
        %v9349 = vld [vmem:[%s5 + $0x188] sm:$0xff]
        %v9350 = vld [vmem:[%s5 + $0x190] sm:$0xff]
        %v9351 = vld [vmem:[%s5 + $0x198] sm:$0xff]
        %v9352 = vld [vmem:[%s5 + $0x1a0] sm:$0xff]
        %v9353 = vld [vmem:[%s5 + $0x1a8] sm:$0xff]
        %v9354 = vld [vmem:[%s5 + $0x1b0] sm:$0xff]
        %v9355 = vld [vmem:[%s5 + $0x1b8] sm:$0xff]
        %v9356 = vld [vmem:[%s5 + $0x1c0] sm:$0xff]
        %v9357 = vld [vmem:[%s5 + $0x1c8] sm:$0xff]
        %v9358 = vld [vmem:[%s5 + $0x1d0] sm:$0xff]
        %v9359 = vld [vmem:[%s5 + $0x1d8] sm:$0xff]
        %v9360 = vld [vmem:[%s5 + $0x1e0] sm:$0xff]
        %v9361 = vld [vmem:[%s5 + $0x1e8] sm:$0xff]
        %v9362 = vld [vmem:[%s5 + $0x1f0] sm:$0xff]
        %v9363 = vld [vmem:[%s5 + $0x1f8] sm:$0xff]
        %v9364 = vld [vmem:[%s5 + $0x200] sm:$0xff]
        %v9365 = vld [vmem:[%s5 + $0x208] sm:$0xff]
        %v9366 = vld [vmem:[%s5 + $0x210] sm:$0xff]
        %v9367 = vld [vmem:[%s5 + $0x218] sm:$0xff]
        %v9368 = vld [vmem:[%s5 + $0x220] sm:$0xff]
        %v9369 = vld [vmem:[%s5 + $0x228] sm:$0xff]
        %v9370 = vld [vmem:[%s5 + $0x230] sm:$0xff]
        %v9371 = vld [vmem:[%s5 + $0x238] sm:$0xff]
        %v9372 = vld [vmem:[%s5 + $0x240] sm:$0xff]
        %v9373 = vld [vmem:[%s5 + $0x248] sm:$0xff]
        %v9374 = vld [vmem:[%s5 + $0x250] sm:$0xff]
        %v9375 = vld [vmem:[%s5 + $0x258] sm:$0xff]
        %v9376 = vld [vmem:[%s5 + $0x260] sm:$0xff]
        %v9377 = vld [vmem:[%s5 + $0x268] sm:$0xff]
        %v9378 = vld [vmem:[%s5 + $0x270] sm:$0xff]
        %v9379 = vld [vmem:[%s5 + $0x278] sm:$0xff]
        %v9380 = vld [vmem:[%s5 + $0x280] sm:$0xff]
        %v9381 = vld [vmem:[%s5 + $0x288] sm:$0xff]
        %v9382 = vld [vmem:[%s5 + $0x290] sm:$0xff]
        %v9383 = vld [vmem:[%s5 + $0x298] sm:$0xff]
        %v9384 = vld [vmem:[%s5 + $0x2a0] sm:$0xff]
        %v9385 = vld [vmem:[%s5 + $0x2a8] sm:$0xff]
        %v9386 = vld [vmem:[%s5 + $0x2b0] sm:$0xff]
        %v9387 = vld [vmem:[%s5 + $0x2b8] sm:$0xff]
        %v9388 = vld [vmem:[%s5 + $0x2c0] sm:$0xff]
        %v9389 = vld [vmem:[%s5 + $0x2c8] sm:$0xff]
        %v9390 = vld [vmem:[%s5 + $0x2d0] sm:$0xff]
        %v9391 = vld [vmem:[%s5 + $0x2d8] sm:$0xff]
        %v9392 = vld [vmem:[%s5 + $0x2e0] sm:$0xff]
        %v9393 = vld [vmem:[%s5 + $0x2e8] sm:$0xff]
        %v9394 = vld [vmem:[%s5 + $0x2f0] sm:$0xff]
        %v9395 = vld [vmem:[%s5 + $0x2f8] sm:$0xff]
        %v9396 = vld [vmem:[%s5 + $0x300] sm:$0xff]
        %v9397 = vld [vmem:[%s5 + $0x308] sm:$0xff]
        %v9398 = vld [vmem:[%s5 + $0x310] sm:$0xff]
        %v9399 = vld [vmem:[%s5 + $0x318] sm:$0xff]
        %v9400 = vld [vmem:[%s5 + $0x320] sm:$0xff]
        %v9401 = vld [vmem:[%s5 + $0x328] sm:$0xff]
        %v9402 = vld [vmem:[%s5 + $0x330] sm:$0xff]
        %v9403 = vld [vmem:[%s5 + $0x338] sm:$0xff]
        %v9404 = vld [vmem:[%s5 + $0x340] sm:$0xff]
        %v9405 = vld [vmem:[%s5 + $0x348] sm:$0xff]
        %v9406 = vld [vmem:[%s5 + $0x350] sm:$0xff]
        %v9407 = vld [vmem:[%s5 + $0x358] sm:$0xff]
        %v9408 = vld [vmem:[%s5 + $0x360] sm:$0xff]
        %v9409 = vld [vmem:[%s5 + $0x368] sm:$0xff]
        %v9410 = vld [vmem:[%s5 + $0x370] sm:$0xff]
        %v9411 = vld [vmem:[%s5 + $0x378] sm:$0xff]
        %v9412 = vld [vmem:[%s5 + $0x380] sm:$0xff]
        %v9413 = vld [vmem:[%s5 + $0x388] sm:$0xff]
        %v9414 = vld [vmem:[%s5 + $0x390] sm:$0xff]
        %v9415 = vld [vmem:[%s5 + $0x398] sm:$0xff]
        %v9416 = vld [vmem:[%s5 + $0x3a0] sm:$0xff]
        %v9417 = vld [vmem:[%s5 + $0x3a8] sm:$0xff]
        %v9418 = vld [vmem:[%s5 + $0x3b0] sm:$0xff]
        %v9419 = vld [vmem:[%s5 + $0x3b8] sm:$0xff]
        %v9420 = vld [vmem:[%s5 + $0x3c0] sm:$0xff]
        %v9421 = vld [vmem:[%s5 + $0x3c8] sm:$0xff]
        %v9422 = vld [vmem:[%s5 + $0x3d0] sm:$0xff]
        %v9423 = vld [vmem:[%s5 + $0x3d8] sm:$0xff]
        %v9424 = vld [vmem:[%s5 + $0x3e0] sm:$0xff]
        %v9425 = vld [vmem:[%s5 + $0x3e8] sm:$0xff]
        %v9426 = vld [vmem:[%s5 + $0x3f0] sm:$0xff]
        %v9427 = vld [vmem:[%s5 + $0x3f8] sm:$0xff]
        %v9428 = vld [vmem:[%s5 + $0x400] sm:$0xff]
        %v9429 = vld [vmem:[%s5 + $0x408] sm:$0xff]
        %v9430 = vld [vmem:[%s5 + $0x410] sm:$0xff]
        %v9431 = vld [vmem:[%s5 + $0x418] sm:$0xff]
        %v9432 = vld [vmem:[%s5 + $0x420] sm:$0xff]
        %v9433 = vld [vmem:[%s5 + $0x428] sm:$0xff]
        %v9434 = vld [vmem:[%s5 + $0x430] sm:$0xff]
        %v9435 = vld [vmem:[%s5 + $0x438] sm:$0xff]
        %v9436 = vld [vmem:[%s5 + $0x440] sm:$0xff]
        %v9437 = vld [vmem:[%s5 + $0x448] sm:$0xff]
        %v9438 = vld [vmem:[%s5 + $0x450] sm:$0xff]
        %v9439 = vld [vmem:[%s5 + $0x458] sm:$0xff]
        %v9440 = vld [vmem:[%s5 + $0x460] sm:$0xff]
        %v9441 = vld [vmem:[%s5 + $0x468] sm:$0xff]
        %v9442 = vld [vmem:[%s5 + $0x470] sm:$0xff]
        %v9443 = vld [vmem:[%s5 + $0x478] sm:$0xff]
        %v9444 = vld [vmem:[%s5 + $0x480] sm:$0xff]
        %v9445 = vld [vmem:[%s5 + $0x488] sm:$0xff]
        %v9446 = vld [vmem:[%s5 + $0x490] sm:$0xff]
        %v9447 = vld [vmem:[%s5 + $0x498] sm:$0xff]
        %v9448 = vld [vmem:[%s5 + $0x4a0] sm:$0xff]
        %v9449 = vld [vmem:[%s5 + $0x4a8] sm:$0xff]
        %v9450 = vld [vmem:[%s5 + $0x4b0] sm:$0xff]
        %v9451 = vld [vmem:[%s5 + $0x4b8] sm:$0xff]
        %v9452 = vld [vmem:[%s5 + $0x4c0] sm:$0xff]
        %v9453 = vld [vmem:[%s5 + $0x4c8] sm:$0xff]
        %v9454 = vld [vmem:[%s5 + $0x4d0] sm:$0xff]
        %v9455 = vld [vmem:[%s5 + $0x4d8] sm:$0xff]
        %v9456 = vld [vmem:[%s5 + $0x4e0] sm:$0xff]
        %v9457 = vld [vmem:[%s5 + $0x4e8] sm:$0xff]
        %v9458 = vld [vmem:[%s5 + $0x4f0] sm:$0xff]
        %v9459 = vld [vmem:[%s5 + $0x4f8] sm:$0xff]
        %v9460 = vld [vmem:[%s5 + $0x500] sm:$0xff]
        %v9461 = vld [vmem:[%s5 + $0x508] sm:$0xff]
        %v9462 = vld [vmem:[%s5 + $0x510] sm:$0xff]
        %v9463 = vld [vmem:[%s5 + $0x518] sm:$0xff]
        %v9464 = vld [vmem:[%s5 + $0x520] sm:$0xff]
        %v9465 = vld [vmem:[%s5 + $0x528] sm:$0xff]
        %v9466 = vld [vmem:[%s5 + $0x530] sm:$0xff]
        %v9467 = vld [vmem:[%s5 + $0x538] sm:$0xff]
        %v9468 = vld [vmem:[%s5 + $0x540] sm:$0xff]
        %v9469 = vld [vmem:[%s5 + $0x548] sm:$0xff]
        %v9470 = vld [vmem:[%s5 + $0x550] sm:$0xff]
        %v9471 = vld [vmem:[%s5 + $0x558] sm:$0xff]
        %v9472 = vld [vmem:[%s5 + $0x560] sm:$0xff]
        %v9473 = vld [vmem:[%s5 + $0x568] sm:$0xff]
        %v9474 = vld [vmem:[%s5 + $0x570] sm:$0xff]
        %v9475 = vld [vmem:[%s5 + $0x578] sm:$0xff]
        %v9476 = vld [vmem:[%s5 + $0x580] sm:$0xff]
        %v9477 = vld [vmem:[%s5 + $0x588] sm:$0xff]
        %v9478 = vld [vmem:[%s5 + $0x590] sm:$0xff]
        %v9479 = vld [vmem:[%s5 + $0x598] sm:$0xff]
        %v9480 = vld [vmem:[%s5 + $0x5a0] sm:$0xff]
        %v9481 = vld [vmem:[%s5 + $0x5a8] sm:$0xff]
        %v9482 = vld [vmem:[%s5 + $0x5b0] sm:$0xff]
        %v9483 = vld [vmem:[%s5 + $0x5b8] sm:$0xff]
        %v9484 = vld [vmem:[%s5 + $0x5c0] sm:$0xff]
        %v9485 = vld [vmem:[%s5 + $0x5c8] sm:$0xff]
        %v9486 = vld [vmem:[%s5 + $0x5d0] sm:$0xff]
        %v9487 = vld [vmem:[%s5 + $0x5d8] sm:$0xff]
        %v9488 = vld [vmem:[%s5 + $0x5e0] sm:$0xff]
        %v9489 = vld [vmem:[%s5 + $0x5e8] sm:$0xff]
        %v9490 = vld [vmem:[%s5 + $0x5f0] sm:$0xff]
        %v9491 = vld [vmem:[%s5 + $0x5f8] sm:$0xff]
        %v9492 = vld [vmem:[%s5 + $0x600] sm:$0xff]
        %v9493 = vld [vmem:[%s5 + $0x608] sm:$0xff]
        %v9494 = vld [vmem:[%s5 + $0x610] sm:$0xff]
        %v9495 = vld [vmem:[%s5 + $0x618] sm:$0xff]
        %v9496 = vld [vmem:[%s5 + $0x620] sm:$0xff]
        %v9497 = vld [vmem:[%s5 + $0x628] sm:$0xff]
        %v9498 = vld [vmem:[%s5 + $0x630] sm:$0xff]
        %v9499 = vld [vmem:[%s5 + $0x638] sm:$0xff]
        %v9500 = vld [vmem:[%s6] sm:$0x1]
        %v9503 = vlaneseq
        %v9504 = vshrl.u32 %v9503, 7
        %v9505 = vsub.s32 0, %v9504
        %v9506 = vrot.slane %v9298, %v9505
        %v9507 = vlaneseq
        %v9508 = vshrl.u32 %v9507, 7
        %v9509 = vsub.s32 1, %v9508
        %v9510 = vrot.slane %v9298, %v9509
        %v9511 = vlaneseq
        %v9512 = vshrl.u32 %v9511, 7
        %v9513 = vsub.s32 2, %v9512
        %v9514 = vrot.slane %v9298, %v9513
        %v9515 = vlaneseq
        %v9516 = vshrl.u32 %v9515, 7
        %v9517 = vsub.s32 3, %v9516
        %v9518 = vrot.slane %v9298, %v9517
        %v9519 = vlaneseq
        %v9520 = vshrl.u32 %v9519, 7
        %v9521 = vsub.s32 4, %v9520
        %v9522 = vrot.slane %v9298, %v9521
        %v9523 = vlaneseq
        %v9524 = vshrl.u32 %v9523, 7
        %v9525 = vsub.s32 5, %v9524
        %v9526 = vrot.slane %v9298, %v9525
        %v9527 = vlaneseq
        %v9528 = vshrl.u32 %v9527, 7
        %v9529 = vsub.s32 6, %v9528
        %v9530 = vrot.slane %v9298, %v9529
        %v9531 = vlaneseq
        %v9532 = vshrl.u32 %v9531, 7
        %v9533 = vsub.s32 7, %v9532
        %v9534 = vrot.slane %v9298, %v9533
        %v9535 = vlaneseq
        %v9536 = vshrl.u32 %v9535, 7
        %v9537 = vsub.s32 0, %v9536
        %v9538 = vrot.slane %v9299, %v9537
        %v9539 = vlaneseq
        %v9540 = vshrl.u32 %v9539, 7
        %v9541 = vsub.s32 1, %v9540
        %v9542 = vrot.slane %v9299, %v9541
        %v9543 = vlaneseq
        %v9544 = vshrl.u32 %v9543, 7
        %v9545 = vsub.s32 2, %v9544
        %v9546 = vrot.slane %v9299, %v9545
        %v9547 = vlaneseq
        %v9548 = vshrl.u32 %v9547, 7
        %v9549 = vsub.s32 3, %v9548
        %v9550 = vrot.slane %v9299, %v9549
        %v9551 = vlaneseq
        %v9552 = vshrl.u32 %v9551, 7
        %v9553 = vsub.s32 4, %v9552
        %v9554 = vrot.slane %v9299, %v9553
        %v9567 = vsel %vm8894, %v9554, 0
        %9569 = vmatprep.subr.mxu0 0.0
        %9570 = vmatpush1.msra.mxu0 %v9315
        %9571 = vmatprep.subr.mxu0 0.0
        %9572 = vmatpush1.msra.mxu0 %v9314
        %9573 = vmatprep.subr.mxu0 0.0
        %9574 = vmatpush1.msra.mxu0 %v9313
        %9575 = vmatprep.subr.mxu0 0.0
        %9576 = vmatpush1.msra.mxu0 %v9312
        %9577 = vmatprep.subr.mxu0 0.0
        %9578 = vmatpush1.msra.mxu0 %v9311
        %9579 = vmatprep.subr.mxu0 0.0
        %9580 = vmatpush1.msra.mxu0 %v9310
        %9581 = vmatprep.subr.mxu0 0.0
        %9582 = vmatpush1.msra.mxu0 %v9309
        %9583 = vmatprep.subr.mxu0 0.0
        %9584 = vmatpush1.msra.mxu0 %v9308
        %9585 = vmatprep.subr.mxu0 0.0
        %9586 = vmatpush1.msra.mxu0 %v9307
        %9587 = vmatprep.subr.mxu0 0.0
        %9588 = vmatpush1.msra.mxu0 %v9306
        %9589 = vmatprep.subr.mxu0 0.0
        %9590 = vmatpush1.msra.mxu0 %v9305
        %9591 = vmatprep.subr.mxu0 0.0
        %9592 = vmatpush1.msra.mxu0 %v9304
        %9593 = vmatprep.subr.mxu0 0.0
        %9594 = vmatpush1.msra.mxu0 %v9303
        %9595 = vmatprep.subr.mxu0 0.0
        %9596 = vmatpush1.msra.mxu0 %v9302
        %9597 = vmatprep.subr.mxu0 0.0
        %9598 = vmatpush1.msra.mxu0 %v9301
        %9599 = vmatprep.subr.mxu0 0.0
        %9600 = vmatpush1.msra.mxu0 %v9300
        %9601 = vmatprep.subr.mxu0 0.0
        %9602 = vmatpush2.msra.mxu0 %v9331
        %9603 = vmatprep.subr.mxu0 0.0
        %9604 = vmatpush2.msra.mxu0 %v9330
        %9605 = vmatprep.subr.mxu0 0.0
        %9606 = vmatpush2.msra.mxu0 %v9329
        %9607 = vmatprep.subr.mxu0 0.0
        %9608 = vmatpush2.msra.mxu0 %v9328
        %9609 = vmatprep.subr.mxu0 0.0
        %9610 = vmatpush2.msra.mxu0 %v9327
        %9611 = vmatprep.subr.mxu0 0.0
        %9612 = vmatpush2.msra.mxu0 %v9326
        %9613 = vmatprep.subr.mxu0 0.0
        %9614 = vmatpush2.msra.mxu0 %v9325
        %9615 = vmatprep.subr.mxu0 0.0
        %9616 = vmatpush2.msra.mxu0 %v9324
        %9617 = vmatprep.subr.mxu0 0.0
        %9618 = vmatpush2.msra.mxu0 %v9323
        %9619 = vmatprep.subr.mxu0 0.0
        %9620 = vmatpush2.msra.mxu0 %v9322
        %9621 = vmatprep.subr.mxu0 0.0
        %9622 = vmatpush2.msra.mxu0 %v9321
        %9623 = vmatprep.subr.mxu0 0.0
        %9624 = vmatpush2.msra.mxu0 %v9320
        %9625 = vmatprep.subr.mxu0 0.0
        %9626 = vmatpush2.msra.mxu0 %v9319
        %9627 = vmatprep.subr.mxu0 0.0
        %9628 = vmatpush2.msra.mxu0 %v9318
        %9629 = vmatprep.subr.mxu0 0.0
        %9630 = vmatpush2.msra.mxu0 %v9317
        %9631 = vmatprep.subr.mxu0 0.0
        %9632 = vmatpush2.msra.mxu0 %v9316
        %9633 = vmatprep.mubr.f32.mxu0 %v9510
        %9634 = vmatmul.mubr.f32.gmra.mxu0 %v9506
        %v9635 = vpop.f32.mrf.mxu0
        %v9636 = vadd.f32 %v9500, %v9635
        %v9637 = vpop.f32.mrf.mxu0
        %9638 = vdwg.mxu0
        %9639 = vmatprep.subr.mxu0 0.0
        %9640 = vmatpush1.msra.mxu0 %v9347
        %9641 = vmatprep.subr.mxu0 0.0
        %9642 = vmatpush1.msra.mxu0 %v9346
        %9643 = vmatprep.subr.mxu0 0.0
        %9644 = vmatpush1.msra.mxu0 %v9345
        %9645 = vmatprep.subr.mxu0 0.0
        %9646 = vmatpush1.msra.mxu0 %v9344
        %9647 = vmatprep.subr.mxu0 0.0
        %9648 = vmatpush1.msra.mxu0 %v9343
        %9649 = vmatprep.subr.mxu0 0.0
        %9650 = vmatpush1.msra.mxu0 %v9342
        %9651 = vmatprep.subr.mxu0 0.0
        %9652 = vmatpush1.msra.mxu0 %v9341
        %9653 = vmatprep.subr.mxu0 0.0
        %9654 = vmatpush1.msra.mxu0 %v9340
        %9655 = vmatprep.subr.mxu0 0.0
        %9656 = vmatpush1.msra.mxu0 %v9339
        %9657 = vmatprep.subr.mxu0 0.0
        %9658 = vmatpush1.msra.mxu0 %v9338
        %9659 = vmatprep.subr.mxu0 0.0
        %9660 = vmatpush1.msra.mxu0 %v9337
        %9661 = vmatprep.subr.mxu0 0.0
        %9662 = vmatpush1.msra.mxu0 %v9336
        %9663 = vmatprep.subr.mxu0 0.0
        %9664 = vmatpush1.msra.mxu0 %v9335
        %9665 = vmatprep.subr.mxu0 0.0
        %9666 = vmatpush1.msra.mxu0 %v9334
        %9667 = vmatprep.subr.mxu0 0.0
        %9668 = vmatpush1.msra.mxu0 %v9333
        %9669 = vmatprep.subr.mxu0 0.0
        %9670 = vmatpush1.msra.mxu0 %v9332
        %9671 = vmatprep.subr.mxu0 0.0
        %9672 = vmatpush2.msra.mxu0 %v9363
        %9673 = vmatprep.subr.mxu0 0.0
        %9674 = vmatpush2.msra.mxu0 %v9362
        %9675 = vmatprep.subr.mxu0 0.0
        %9676 = vmatpush2.msra.mxu0 %v9361
        %9677 = vmatprep.subr.mxu0 0.0
        %9678 = vmatpush2.msra.mxu0 %v9360
        %9679 = vmatprep.subr.mxu0 0.0
        %9680 = vmatpush2.msra.mxu0 %v9359
        %9681 = vmatprep.subr.mxu0 0.0
        %9682 = vmatpush2.msra.mxu0 %v9358
        %9683 = vmatprep.subr.mxu0 0.0
        %9684 = vmatpush2.msra.mxu0 %v9357
        %9685 = vmatprep.subr.mxu0 0.0
        %9686 = vmatpush2.msra.mxu0 %v9356
        %9687 = vmatprep.subr.mxu0 0.0
        %9688 = vmatpush2.msra.mxu0 %v9355
        %9689 = vmatprep.subr.mxu0 0.0
        %9690 = vmatpush2.msra.mxu0 %v9354
        %9691 = vmatprep.subr.mxu0 0.0
        %9692 = vmatpush2.msra.mxu0 %v9353
        %9693 = vmatprep.subr.mxu0 0.0
        %9694 = vmatpush2.msra.mxu0 %v9352
        %9695 = vmatprep.subr.mxu0 0.0
        %9696 = vmatpush2.msra.mxu0 %v9351
        %9697 = vmatprep.subr.mxu0 0.0
        %9698 = vmatpush2.msra.mxu0 %v9350
        %9699 = vmatprep.subr.mxu0 0.0
        %9700 = vmatpush2.msra.mxu0 %v9349
        %9701 = vmatprep.subr.mxu0 0.0
        %9702 = vmatpush2.msra.mxu0 %v9348
        %9703 = vmatprep.mubr.f32.mxu0 %v9518
        %9704 = vmatmul.mubr.f32.gmra.mxu0 %v9514
        %v9705 = vpop.f32.mrf.mxu0
        %v9706 = vadd.f32 %v9636, %v9705
        %v9707 = vpop.f32.mrf.mxu0
        %9708 = vdwg.mxu0
        %9709 = vmatprep.subr.mxu0 0.0
        %9710 = vmatpush1.msra.mxu0 %v9379
        %9711 = vmatprep.subr.mxu0 0.0
        %9712 = vmatpush1.msra.mxu0 %v9378
        %9713 = vmatprep.subr.mxu0 0.0
        %9714 = vmatpush1.msra.mxu0 %v9377
        %9715 = vmatprep.subr.mxu0 0.0
        %9716 = vmatpush1.msra.mxu0 %v9376
        %9717 = vmatprep.subr.mxu0 0.0
        %9718 = vmatpush1.msra.mxu0 %v9375
        %9719 = vmatprep.subr.mxu0 0.0
        %9720 = vmatpush1.msra.mxu0 %v9374
        %9721 = vmatprep.subr.mxu0 0.0
        %9722 = vmatpush1.msra.mxu0 %v9373
        %9723 = vmatprep.subr.mxu0 0.0
        %9724 = vmatpush1.msra.mxu0 %v9372
        %9725 = vmatprep.subr.mxu0 0.0
        %9726 = vmatpush1.msra.mxu0 %v9371
        %9727 = vmatprep.subr.mxu0 0.0
        %9728 = vmatpush1.msra.mxu0 %v9370
        %9729 = vmatprep.subr.mxu0 0.0
        %9730 = vmatpush1.msra.mxu0 %v9369
        %9731 = vmatprep.subr.mxu0 0.0
        %9732 = vmatpush1.msra.mxu0 %v9368
        %9733 = vmatprep.subr.mxu0 0.0
        %9734 = vmatpush1.msra.mxu0 %v9367
        %9735 = vmatprep.subr.mxu0 0.0
        %9736 = vmatpush1.msra.mxu0 %v9366
        %9737 = vmatprep.subr.mxu0 0.0
        %9738 = vmatpush1.msra.mxu0 %v9365
        %9739 = vmatprep.subr.mxu0 0.0
        %9740 = vmatpush1.msra.mxu0 %v9364
        %9741 = vmatprep.subr.mxu0 0.0
        %9742 = vmatpush2.msra.mxu0 %v9395
        %9743 = vmatprep.subr.mxu0 0.0
        %9744 = vmatpush2.msra.mxu0 %v9394
        %9745 = vmatprep.subr.mxu0 0.0
        %9746 = vmatpush2.msra.mxu0 %v9393
        %9747 = vmatprep.subr.mxu0 0.0
        %9748 = vmatpush2.msra.mxu0 %v9392
        %9749 = vmatprep.subr.mxu0 0.0
        %9750 = vmatpush2.msra.mxu0 %v9391
        %9751 = vmatprep.subr.mxu0 0.0
        %9752 = vmatpush2.msra.mxu0 %v9390
        %9753 = vmatprep.subr.mxu0 0.0
        %9754 = vmatpush2.msra.mxu0 %v9389
        %9755 = vmatprep.subr.mxu0 0.0
        %9756 = vmatpush2.msra.mxu0 %v9388
        %9757 = vmatprep.subr.mxu0 0.0
        %9758 = vmatpush2.msra.mxu0 %v9387
        %9759 = vmatprep.subr.mxu0 0.0
        %9760 = vmatpush2.msra.mxu0 %v9386
        %9761 = vmatprep.subr.mxu0 0.0
        %9762 = vmatpush2.msra.mxu0 %v9385
        %9763 = vmatprep.subr.mxu0 0.0
        %9764 = vmatpush2.msra.mxu0 %v9384
        %9765 = vmatprep.subr.mxu0 0.0
        %9766 = vmatpush2.msra.mxu0 %v9383
        %9767 = vmatprep.subr.mxu0 0.0
        %9768 = vmatpush2.msra.mxu0 %v9382
        %9769 = vmatprep.subr.mxu0 0.0
        %9770 = vmatpush2.msra.mxu0 %v9381
        %9771 = vmatprep.subr.mxu0 0.0
        %9772 = vmatpush2.msra.mxu0 %v9380
        %9773 = vmatprep.mubr.f32.mxu0 %v9526
        %9774 = vmatmul.mubr.f32.gmra.mxu0 %v9522
        %v9775 = vpop.f32.mrf.mxu0
        %v9776 = vadd.f32 %v9706, %v9775
        %v9777 = vpop.f32.mrf.mxu0
        %9778 = vdwg.mxu0
        %9779 = vmatprep.subr.mxu0 0.0
        %9780 = vmatpush1.msra.mxu0 %v9411
        %9781 = vmatprep.subr.mxu0 0.0
        %9782 = vmatpush1.msra.mxu0 %v9410
        %9783 = vmatprep.subr.mxu0 0.0
        %9784 = vmatpush1.msra.mxu0 %v9409
        %9785 = vmatprep.subr.mxu0 0.0
        %9786 = vmatpush1.msra.mxu0 %v9408
        %9787 = vmatprep.subr.mxu0 0.0
        %9788 = vmatpush1.msra.mxu0 %v9407
        %9789 = vmatprep.subr.mxu0 0.0
        %9790 = vmatpush1.msra.mxu0 %v9406
        %9791 = vmatprep.subr.mxu0 0.0
        %9792 = vmatpush1.msra.mxu0 %v9405
        %9793 = vmatprep.subr.mxu0 0.0
        %9794 = vmatpush1.msra.mxu0 %v9404
        %9795 = vmatprep.subr.mxu0 0.0
        %9796 = vmatpush1.msra.mxu0 %v9403
        %9797 = vmatprep.subr.mxu0 0.0
        %9798 = vmatpush1.msra.mxu0 %v9402
        %9799 = vmatprep.subr.mxu0 0.0
        %9800 = vmatpush1.msra.mxu0 %v9401
        %9801 = vmatprep.subr.mxu0 0.0
        %9802 = vmatpush1.msra.mxu0 %v9400
        %9803 = vmatprep.subr.mxu0 0.0
        %9804 = vmatpush1.msra.mxu0 %v9399
        %9805 = vmatprep.subr.mxu0 0.0
        %9806 = vmatpush1.msra.mxu0 %v9398
        %9807 = vmatprep.subr.mxu0 0.0
        %9808 = vmatpush1.msra.mxu0 %v9397
        %9809 = vmatprep.subr.mxu0 0.0
        %9810 = vmatpush1.msra.mxu0 %v9396
        %9811 = vmatprep.subr.mxu0 0.0
        %9812 = vmatpush2.msra.mxu0 %v9427
        %9813 = vmatprep.subr.mxu0 0.0
        %9814 = vmatpush2.msra.mxu0 %v9426
        %9815 = vmatprep.subr.mxu0 0.0
        %9816 = vmatpush2.msra.mxu0 %v9425
        %9817 = vmatprep.subr.mxu0 0.0
        %9818 = vmatpush2.msra.mxu0 %v9424
        %9819 = vmatprep.subr.mxu0 0.0
        %9820 = vmatpush2.msra.mxu0 %v9423
        %9821 = vmatprep.subr.mxu0 0.0
        %9822 = vmatpush2.msra.mxu0 %v9422
        %9823 = vmatprep.subr.mxu0 0.0
        %9824 = vmatpush2.msra.mxu0 %v9421
        %9825 = vmatprep.subr.mxu0 0.0
        %9826 = vmatpush2.msra.mxu0 %v9420
        %9827 = vmatprep.subr.mxu0 0.0
        %9828 = vmatpush2.msra.mxu0 %v9419
        %9829 = vmatprep.subr.mxu0 0.0
        %9830 = vmatpush2.msra.mxu0 %v9418
        %9831 = vmatprep.subr.mxu0 0.0
        %9832 = vmatpush2.msra.mxu0 %v9417
        %9833 = vmatprep.subr.mxu0 0.0
        %9834 = vmatpush2.msra.mxu0 %v9416
        %9835 = vmatprep.subr.mxu0 0.0
        %9836 = vmatpush2.msra.mxu0 %v9415
        %9837 = vmatprep.subr.mxu0 0.0
        %9838 = vmatpush2.msra.mxu0 %v9414
        %9839 = vmatprep.subr.mxu0 0.0
        %9840 = vmatpush2.msra.mxu0 %v9413
        %9841 = vmatprep.subr.mxu0 0.0
        %9842 = vmatpush2.msra.mxu0 %v9412
        %9843 = vmatprep.mubr.f32.mxu0 %v9534
        %9844 = vmatmul.mubr.f32.gmra.mxu0 %v9530
        %v9845 = vpop.f32.mrf.mxu0
        %v9846 = vadd.f32 %v9776, %v9845
        %v9847 = vpop.f32.mrf.mxu0
        %9848 = vdwg.mxu0
        %9849 = vmatprep.subr.mxu0 0.0
        %9850 = vmatpush1.msra.mxu0 %v9443
        %9851 = vmatprep.subr.mxu0 0.0
        %9852 = vmatpush1.msra.mxu0 %v9442
        %9853 = vmatprep.subr.mxu0 0.0
        %9854 = vmatpush1.msra.mxu0 %v9441
        %9855 = vmatprep.subr.mxu0 0.0
        %9856 = vmatpush1.msra.mxu0 %v9440
        %9857 = vmatprep.subr.mxu0 0.0
        %9858 = vmatpush1.msra.mxu0 %v9439
        %9859 = vmatprep.subr.mxu0 0.0
        %9860 = vmatpush1.msra.mxu0 %v9438
        %9861 = vmatprep.subr.mxu0 0.0
        %9862 = vmatpush1.msra.mxu0 %v9437
        %9863 = vmatprep.subr.mxu0 0.0
        %9864 = vmatpush1.msra.mxu0 %v9436
        %9865 = vmatprep.subr.mxu0 0.0
        %9866 = vmatpush1.msra.mxu0 %v9435
        %9867 = vmatprep.subr.mxu0 0.0
        %9868 = vmatpush1.msra.mxu0 %v9434
        %9869 = vmatprep.subr.mxu0 0.0
        %9870 = vmatpush1.msra.mxu0 %v9433
        %9871 = vmatprep.subr.mxu0 0.0
        %9872 = vmatpush1.msra.mxu0 %v9432
        %9873 = vmatprep.subr.mxu0 0.0
        %9874 = vmatpush1.msra.mxu0 %v9431
        %9875 = vmatprep.subr.mxu0 0.0
        %9876 = vmatpush1.msra.mxu0 %v9430
        %9877 = vmatprep.subr.mxu0 0.0
        %9878 = vmatpush1.msra.mxu0 %v9429
        %9879 = vmatprep.subr.mxu0 0.0
        %9880 = vmatpush1.msra.mxu0 %v9428
        %9881 = vmatprep.subr.mxu0 0.0
        %9882 = vmatpush2.msra.mxu0 %v9459
        %9883 = vmatprep.subr.mxu0 0.0
        %9884 = vmatpush2.msra.mxu0 %v9458
        %9885 = vmatprep.subr.mxu0 0.0
        %9886 = vmatpush2.msra.mxu0 %v9457
        %9887 = vmatprep.subr.mxu0 0.0
        %9888 = vmatpush2.msra.mxu0 %v9456
        %9889 = vmatprep.subr.mxu0 0.0
        %9890 = vmatpush2.msra.mxu0 %v9455
        %9891 = vmatprep.subr.mxu0 0.0
        %9892 = vmatpush2.msra.mxu0 %v9454
        %9893 = vmatprep.subr.mxu0 0.0
        %9894 = vmatpush2.msra.mxu0 %v9453
        %9895 = vmatprep.subr.mxu0 0.0
        %9896 = vmatpush2.msra.mxu0 %v9452
        %9897 = vmatprep.subr.mxu0 0.0
        %9898 = vmatpush2.msra.mxu0 %v9451
        %9899 = vmatprep.subr.mxu0 0.0
        %9900 = vmatpush2.msra.mxu0 %v9450
        %9901 = vmatprep.subr.mxu0 0.0
        %9902 = vmatpush2.msra.mxu0 %v9449
        %9903 = vmatprep.subr.mxu0 0.0
        %9904 = vmatpush2.msra.mxu0 %v9448
        %9905 = vmatprep.subr.mxu0 0.0
        %9906 = vmatpush2.msra.mxu0 %v9447
        %9907 = vmatprep.subr.mxu0 0.0
        %9908 = vmatpush2.msra.mxu0 %v9446
        %9909 = vmatprep.subr.mxu0 0.0
        %9910 = vmatpush2.msra.mxu0 %v9445
        %9911 = vmatprep.subr.mxu0 0.0
        %9912 = vmatpush2.msra.mxu0 %v9444
        %9913 = vmatprep.mubr.f32.mxu0 %v9542
        %9914 = vmatmul.mubr.f32.gmra.mxu0 %v9538
        %v9915 = vpop.f32.mrf.mxu0
        %v9916 = vadd.f32 %v9846, %v9915
        %v9917 = vpop.f32.mrf.mxu0
        %9918 = vdwg.mxu0
        %9919 = vmatprep.subr.mxu0 0.0
        %9920 = vmatpush1.msra.mxu0 %v9475
        %9921 = vmatprep.subr.mxu0 0.0
        %9922 = vmatpush1.msra.mxu0 %v9474
        %9923 = vmatprep.subr.mxu0 0.0
        %9924 = vmatpush1.msra.mxu0 %v9473
        %9925 = vmatprep.subr.mxu0 0.0
        %9926 = vmatpush1.msra.mxu0 %v9472
        %9927 = vmatprep.subr.mxu0 0.0
        %9928 = vmatpush1.msra.mxu0 %v9471
        %9929 = vmatprep.subr.mxu0 0.0
        %9930 = vmatpush1.msra.mxu0 %v9470
        %9931 = vmatprep.subr.mxu0 0.0
        %9932 = vmatpush1.msra.mxu0 %v9469
        %9933 = vmatprep.subr.mxu0 0.0
        %9934 = vmatpush1.msra.mxu0 %v9468
        %9935 = vmatprep.subr.mxu0 0.0
        %9936 = vmatpush1.msra.mxu0 %v9467
        %9937 = vmatprep.subr.mxu0 0.0
        %9938 = vmatpush1.msra.mxu0 %v9466
        %9939 = vmatprep.subr.mxu0 0.0
        %9940 = vmatpush1.msra.mxu0 %v9465
        %9941 = vmatprep.subr.mxu0 0.0
        %9942 = vmatpush1.msra.mxu0 %v9464
        %9943 = vmatprep.subr.mxu0 0.0
        %9944 = vmatpush1.msra.mxu0 %v9463
        %9945 = vmatprep.subr.mxu0 0.0
        %9946 = vmatpush1.msra.mxu0 %v9462
        %9947 = vmatprep.subr.mxu0 0.0
        %9948 = vmatpush1.msra.mxu0 %v9461
        %9949 = vmatprep.subr.mxu0 0.0
        %9950 = vmatpush1.msra.mxu0 %v9460
        %9951 = vmatprep.subr.mxu0 0.0
        %9952 = vmatpush2.msra.mxu0 %v9491
        %9953 = vmatprep.subr.mxu0 0.0
        %9954 = vmatpush2.msra.mxu0 %v9490
        %9955 = vmatprep.subr.mxu0 0.0
        %9956 = vmatpush2.msra.mxu0 %v9489
        %9957 = vmatprep.subr.mxu0 0.0
        %9958 = vmatpush2.msra.mxu0 %v9488
        %9959 = vmatprep.subr.mxu0 0.0
        %9960 = vmatpush2.msra.mxu0 %v9487
        %9961 = vmatprep.subr.mxu0 0.0
        %9962 = vmatpush2.msra.mxu0 %v9486
        %9963 = vmatprep.subr.mxu0 0.0
        %9964 = vmatpush2.msra.mxu0 %v9485
        %9965 = vmatprep.subr.mxu0 0.0
        %9966 = vmatpush2.msra.mxu0 %v9484
        %9967 = vmatprep.subr.mxu0 0.0
        %9968 = vmatpush2.msra.mxu0 %v9483
        %9969 = vmatprep.subr.mxu0 0.0
        %9970 = vmatpush2.msra.mxu0 %v9482
        %9971 = vmatprep.subr.mxu0 0.0
        %9972 = vmatpush2.msra.mxu0 %v9481
        %9973 = vmatprep.subr.mxu0 0.0
        %9974 = vmatpush2.msra.mxu0 %v9480
        %9975 = vmatprep.subr.mxu0 0.0
        %9976 = vmatpush2.msra.mxu0 %v9479
        %9977 = vmatprep.subr.mxu0 0.0
        %9978 = vmatpush2.msra.mxu0 %v9478
        %9979 = vmatprep.subr.mxu0 0.0
        %9980 = vmatpush2.msra.mxu0 %v9477
        %9981 = vmatprep.subr.mxu0 0.0
        %9982 = vmatpush2.msra.mxu0 %v9476
        %9983 = vmatprep.mubr.f32.mxu0 %v9550
        %9984 = vmatmul.mubr.f32.gmra.mxu0 %v9546
        %v9985 = vpop.f32.mrf.mxu0
        %v9986 = vadd.f32 %v9916, %v9985
        %v9987 = vpop.f32.mrf.mxu0
        %9988 = vdwg.mxu0
        %9989 = vmatprep.subr.mxu0 0.0
        %9990 = vmatpush1.msra.mxu0 0.0
        %9991 = vmatprep.subr.mxu0 0.0
        %9992 = vmatpush1.msra.mxu0 0.0
        %9993 = vmatprep.subr.mxu0 0.0
        %9994 = vmatpush1.msra.mxu0 0.0
        %9995 = vmatprep.subr.mxu0 0.0
        %9996 = vmatpush1.msra.mxu0 0.0
        %9997 = vmatprep.subr.mxu0 0.0
        %9998 = vmatpush1.msra.mxu0 0.0
        %9999 = vmatprep.subr.mxu0 0.0
        %10000 = vmatpush1.msra.mxu0 0.0
        %10001 = vmatprep.subr.mxu0 0.0
        %10002 = vmatpush1.msra.mxu0 0.0
        %10003 = vmatprep.subr.mxu0 0.0
        %10004 = vmatpush1.msra.mxu0 0.0
        %10005 = vmatprep.subr.mxu0 0.0
        %10006 = vmatpush1.msra.mxu0 %v9499
        %10007 = vmatprep.subr.mxu0 0.0
        %10008 = vmatpush1.msra.mxu0 %v9498
        %10009 = vmatprep.subr.mxu0 0.0
        %10010 = vmatpush1.msra.mxu0 %v9497
        %10011 = vmatprep.subr.mxu0 0.0
        %10012 = vmatpush1.msra.mxu0 %v9496
        %10013 = vmatprep.subr.mxu0 0.0
        %10014 = vmatpush1.msra.mxu0 %v9495
        %10015 = vmatprep.subr.mxu0 0.0
        %10016 = vmatpush1.msra.mxu0 %v9494
        %10017 = vmatprep.subr.mxu0 0.0
        %10018 = vmatpush1.msra.mxu0 %v9493
        %10019 = vmatprep.subr.mxu0 0.0
        %10020 = vmatpush1.msra.mxu0 %v9492
        %10021 = vmatprep.subr.mxu0 0.0
        %10022 = vmatpush2.msra.mxu0 0.0
        %10023 = vmatprep.subr.mxu0 0.0
        %10024 = vmatpush2.msra.mxu0 0.0
        %10025 = vmatprep.subr.mxu0 0.0
        %10026 = vmatpush2.msra.mxu0 0.0
        %10027 = vmatprep.subr.mxu0 0.0
        %10028 = vmatpush2.msra.mxu0 0.0
        %10029 = vmatprep.subr.mxu0 0.0
        %10030 = vmatpush2.msra.mxu0 0.0
        %10031 = vmatprep.subr.mxu0 0.0
        %10032 = vmatpush2.msra.mxu0 0.0
        %10033 = vmatprep.subr.mxu0 0.0
        %10034 = vmatpush2.msra.mxu0 0.0
        %10035 = vmatprep.subr.mxu0 0.0
        %10036 = vmatpush2.msra.mxu0 0.0
        %10037 = vmatprep.subr.mxu0 0.0
        %10038 = vmatpush2.msra.mxu0 0.0
        %10039 = vmatprep.subr.mxu0 0.0
        %10040 = vmatpush2.msra.mxu0 0.0
        %10041 = vmatprep.subr.mxu0 0.0
        %10042 = vmatpush2.msra.mxu0 0.0
        %10043 = vmatprep.subr.mxu0 0.0
        %10044 = vmatpush2.msra.mxu0 0.0
        %10045 = vmatprep.subr.mxu0 0.0
        %10046 = vmatpush2.msra.mxu0 0.0
        %10047 = vmatprep.subr.mxu0 0.0
        %10048 = vmatpush2.msra.mxu0 0.0
        %10049 = vmatprep.subr.mxu0 0.0
        %10050 = vmatpush2.msra.mxu0 0.0
        %10051 = vmatprep.subr.mxu0 0.0
        %10052 = vmatpush2.msra.mxu0 0.0
        %10053 = vmatprep.mubr.f32.mxu0 0.0
        %10054 = vmatmul.mubr.f32.gmra.mxu0 %v9567
        %v10055 = vpop.f32.mrf.mxu0
        %v10056 = vadd.f32 %v9986, %v10055
        %v10057 = vpop.f32.mrf.mxu0
        %10058 = vdwg.mxu0
        %v10059 = vmax.f32 %v10056, 0.0
        %v10060 = vld [vmem:[%s7] sm:$0xff]
        %v10061 = vld [vmem:[%s7 + $0x8] sm:$0xff]
        %v10062 = vld [vmem:[%s7 + $0x10] sm:$0xff]
        %v10063 = vld [vmem:[%s7 + $0x18] sm:$0xff]
        %v10064 = vld [vmem:[%s7 + $0x20] sm:$0xff]
        %v10065 = vld [vmem:[%s7 + $0x28] sm:$0xff]
        %v10066 = vld [vmem:[%s7 + $0x30] sm:$0xff]
        %v10067 = vld [vmem:[%s7 + $0x38] sm:$0xff]
        %v10068 = vld [vmem:[%s7 + $0x40] sm:$0xff]
        %v10069 = vld [vmem:[%s7 + $0x48] sm:$0xff]
        %v10070 = vld [vmem:[%s7 + $0x50] sm:$0xff]
        %v10071 = vld [vmem:[%s7 + $0x58] sm:$0xff]
        %v10072 = vld [vmem:[%s7 + $0x60] sm:$0xff]
        %v10073 = vld [vmem:[%s7 + $0x68] sm:$0xff]
        %v10074 = vld [vmem:[%s7 + $0x70] sm:$0xff]
        %v10075 = vld [vmem:[%s7 + $0x78] sm:$0xff]
        %v10076 = vld [vmem:[%s8] sm:$0x1]
        %10077 = vmatprep.subr.mxu0 0.0
        %10078 = vmatpush1.msra.mxu0 %v10075
        %10079 = vmatprep.subr.mxu0 0.0
        %10080 = vmatpush1.msra.mxu0 %v10074
        %10081 = vmatprep.subr.mxu0 0.0
        %10082 = vmatpush1.msra.mxu0 %v10073
        %10083 = vmatprep.subr.mxu0 0.0
        %10084 = vmatpush1.msra.mxu0 %v10072
        %10085 = vmatprep.subr.mxu0 0.0
        %10086 = vmatpush1.msra.mxu0 %v10071
        %10087 = vmatprep.subr.mxu0 0.0
        %10088 = vmatpush1.msra.mxu0 %v10070
        %10089 = vmatprep.subr.mxu0 0.0
        %10090 = vmatpush1.msra.mxu0 %v10069
        %10091 = vmatprep.subr.mxu0 0.0
        %10092 = vmatpush1.msra.mxu0 %v10068
        %10093 = vmatprep.subr.mxu0 0.0
        %10094 = vmatpush1.msra.mxu0 %v10067
        %10095 = vmatprep.subr.mxu0 0.0
        %10096 = vmatpush1.msra.mxu0 %v10066
        %10097 = vmatprep.subr.mxu0 0.0
        %10098 = vmatpush1.msra.mxu0 %v10065
        %10099 = vmatprep.subr.mxu0 0.0
        %10100 = vmatpush1.msra.mxu0 %v10064
        %10101 = vmatprep.subr.mxu0 0.0
        %10102 = vmatpush1.msra.mxu0 %v10063
        %10103 = vmatprep.subr.mxu0 0.0
        %10104 = vmatpush1.msra.mxu0 %v10062
        %10105 = vmatprep.subr.mxu0 0.0
        %10106 = vmatpush1.msra.mxu0 %v10061
        %10107 = vmatprep.subr.mxu0 0.0
        %10108 = vmatpush1.msra.mxu0 %v10060
        %10109 = vmatprep.subr.mxu0 0.0
        %10110 = vmatpush2.msra.mxu0 0.0
        %10111 = vmatprep.subr.mxu0 0.0
        %10112 = vmatpush2.msra.mxu0 0.0
        %10113 = vmatprep.subr.mxu0 0.0
        %10114 = vmatpush2.msra.mxu0 0.0
        %10115 = vmatprep.subr.mxu0 0.0
        %10116 = vmatpush2.msra.mxu0 0.0
        %10117 = vmatprep.subr.mxu0 0.0
        %10118 = vmatpush2.msra.mxu0 0.0
        %10119 = vmatprep.subr.mxu0 0.0
        %10120 = vmatpush2.msra.mxu0 0.0
        %10121 = vmatprep.subr.mxu0 0.0
        %10122 = vmatpush2.msra.mxu0 0.0
        %10123 = vmatprep.subr.mxu0 0.0
        %10124 = vmatpush2.msra.mxu0 0.0
        %10125 = vmatprep.subr.mxu0 0.0
        %10126 = vmatpush2.msra.mxu0 0.0
        %10127 = vmatprep.subr.mxu0 0.0
        %10128 = vmatpush2.msra.mxu0 0.0
        %10129 = vmatprep.subr.mxu0 0.0
        %10130 = vmatpush2.msra.mxu0 0.0
        %10131 = vmatprep.subr.mxu0 0.0
        %10132 = vmatpush2.msra.mxu0 0.0
        %10133 = vmatprep.subr.mxu0 0.0
        %10134 = vmatpush2.msra.mxu0 0.0
        %10135 = vmatprep.subr.mxu0 0.0
        %10136 = vmatpush2.msra.mxu0 0.0
        %10137 = vmatprep.subr.mxu0 0.0
        %10138 = vmatpush2.msra.mxu0 0.0
        %10139 = vmatprep.subr.mxu0 0.0
        %10140 = vmatpush2.msra.mxu0 0.0
        %10141 = vmatprep.mubr.f32.mxu0 0.0
        %10142 = vmatmul.mubr.f32.gmra.mxu0 %v10059
        %v10143 = vpop.f32.mrf.mxu0
        %v10144 = vadd.f32 %v10076, %v10143
        %v10145 = vpop.f32.mrf.mxu0
        %10146 = vdwg.mxu0
        %vm10147 = vcmask 73728
        %10148 = vst.msk [vmem:[%s324] sm:$0x1] %vm10147, %v10144
        %s10149 = sand.u32 %s225, 1
        %s10150 = scalar_lea.sflag [#allocation10], %s10149
        %s10151 = sand.u32 %s225, 1
        %s10152 = scalar_lea.vmem [#allocation9], %s10151
        // Predicated region
        $region57: #{net_forward.1} parent=55 // pred_check
          %p10153 = pneg %p235
        $region58: #{net_forward.1} parent=55 // pred_check_branch
          %10155 = sbr.rel (%p10153) target = $region60
        $region59: #{net_forward.1} parent=55 // pred_region
          %s10157 = ssub.s32 16, 16
          %10158 = vsyncadd %s10150, %s10157
          %s10159 = smul.addr %s23, 16
          %s10160 = scalar_lea.hbm %s9, %s10159
          %s10162 = sshll.u32 %s10152, 4
          %s10163 = int_to_ptr.vmem [resolvable:$true] %s10162
          %10165 = dma.vmem_to_hbm [thread:$0]  %s10163, 16, %s10160, %s10150
        $region60: #{net_forward.1} parent=55 // pred_fallthru
          _
      $region56: #{net_forward.1} parent=5 // pred_fallthru
        _
      %p10166 = scmp.le.s32.totalorder 2, %s18
      // Predicated region
      $region61: #{net_forward.1} parent=5 // pred_check
        %p10167 = pneg %p10166
      $region62: #{net_forward.1} parent=5 // pred_check_branch
        %10169 = sbr.rel (%p10167) target = $region64
      $region63: #{net_forward.1} parent=5 // pred_region
        %s10170 = ssub.s32 %s18, 2
        // Predicated region
        $region65: #{net_forward.1} parent=63 // pred_check
          %p10171 = pneg %p241
        $region66: #{net_forward.1} parent=63 // pred_check_branch
          %10173 = sbr.rel (%p10171) target = $region68
        $region67: #{net_forward.1} parent=63 // pred_region
          %s10174 = sand.u32 %s226, 1
          %s10175 = scalar_lea.sflag [#allocation10], %s10174
          %s10176 = sand.u32 %s226, 1
          %s10177 = scalar_lea.vmem [#allocation9], %s10176
          %10178 = dma.done %s10175, 16
        $region68: #{net_forward.1} parent=63 // pred_fallthru
          _
      $region64: #{net_forward.1} parent=5 // pred_fallthru
        _
    $region6: #{net_forward.1} parent=1 // loop_footer
      %s22 = sadd.s32 1, %s18
    $region7: #{net_forward.1} parent=1 // loop_footer_branch
      %17 = sbr.rel target = $region3
    $region8: #{net_forward.1} parent=1 // loop_exit
      _
    %10179 = vsyncpa [#allocation10], 1
    %s10180 = scalar_lea.sflag [#allocation10], 1
    %10181 = vsyncpa %s10180, 1

</llo_original>
